<compile_context>
chip_gen: v7x
topology: tpu7x:2x2x1
jax: 0.10.0
libtpu: 0.0.40
codegen_flags: <defaults>
</compile_context>

<pallas_src>
import functools

import jax
import jax.numpy as jnp
from jax.experimental import pallas as pl
from jax.experimental.pallas import tpu as pltpu


# Static architecture (config = 1): (Cin, Cout, kernel, stride, padding)
CONV_CFG = [
    (1, 16, 5, 2, 1),
    (16, 32, 3, 2, 1),
    (32, 64, 3, 1, 1),
    (64, 128, 3, 1, 1),
    (128, 256, 3, 1, 1),
]
POOL_AFTER = (0, 1)            # MaxPool2d(2,2) after conv blocks 0 and 1
FC_DIM = 256 * 5 * 5           # 90x90 input under config 1 -> 5x5x256 = 6400
NUM_CLASSES = 3036

# FC GEMM tiling: single K step (tk = full K), lane-dense N tiles.
#   B tile = 6400x384 int8 = 2.46 MB (x2 buffers) + 4.9 MB bf16 dequant temp
#   -> ~10 MB VMEM total, safe on every generation's default scoped VMEM.
FC_TM = 16                     # batch 2 padded to a bf16-friendly sublane tile
FC_TN = 384
FC_KP = FC_DIM                 # 6400, already a multiple of 128
FC_NP = 3072                   # 3036 padded to a multiple of FC_TN (and 128)


def _round_up(x, m):
    return (x + m - 1) // m * m


# ----------------------------------------------------------------------------
# Unified Pallas kernel: single-K-step GEMM tile with fused epilogue
#   out = relu?( (A @ dequant(B)) * scale[n] + bias[n] )
# B is bf16 (conv weights; astype is a no-op) or int8 (quantized FC weight;
# per-output-column dequant scale folded into `scale`).  No accumulator
# scratch: each output tile is produced and stored in one shot.
# ----------------------------------------------------------------------------
def _mm_epilogue_kernel(a_ref, b_ref, s_ref, c_ref, o_ref, *, relu):
    b = b_ref[...].astype(jnp.bfloat16)
    y = jnp.dot(a_ref[...], b, preferred_element_type=jnp.float32)
    y = y * s_ref[...] + c_ref[...]
    if relu:
        y = jnp.maximum(y, 0.0)
    o_ref[...] = y.astype(o_ref.dtype)


def pallas_matmul_fused(A, Bp, scale_row, bias_row, *, relu, n_valid,
                        tm=None, tn=None):
    """A: [M, K] f32 activations.  Bp: [Kp, Np] pre-padded weight (bf16/int8).
    scale_row / bias_row: [1, Np] f32.  Returns f32 [M, n_valid]."""
    M, K = A.shape
    Kp, Np = Bp.shape
    assert K <= Kp

    if tm is None:
        tm = min(512, _round_up(M, 16))
    if tn is None:
        tn = Np                        # conv layers: single N tile (Np <= 256)
    tk = Kp                            # single K step everywhere
    assert Np % tn == 0 and tn % 128 == 0 and tm % 8 == 0 and Kp % 128 == 0

    Mp = _round_up(M, tm)
    Ap = jnp.pad(A, ((0, Mp - M), (0, Kp - K))).astype(jnp.bfloat16)

    grid = (Mp // tm, Np // tn)
    kernel = functools.partial(_mm_epilogue_kernel, relu=relu)

    out = pl.pallas_call(
        kernel,
        out_shape=jax.ShapeDtypeStruct((Mp, Np), jnp.float32),
        grid_spec=pltpu.PrefetchScalarGridSpec(
            num_scalar_prefetch=0,
            grid=grid,
            in_specs=[
                pl.BlockSpec((tm, tk), lambda i, j: (i, 0)),
                pl.BlockSpec((tk, tn), lambda i, j: (0, j)),
                pl.BlockSpec((1, tn), lambda i, j: (0, j)),
                pl.BlockSpec((1, tn), lambda i, j: (0, j)),
            ],
            out_specs=pl.BlockSpec((tm, tn), lambda i, j: (i, j)),
        ),
        compiler_params=pltpu.CompilerParams(
            dimension_semantics=("parallel", "parallel")),
    )(Ap, Bp, scale_row, bias_row)
    return out[:M, :n_valid]


# ----------------------------------------------------------------------------
# Conv (im2col glue, fuses under jit) + folded BN + ReLU via the Pallas matmul
# ----------------------------------------------------------------------------
def conv_bn_relu(x_nhwc, Bp, scale_row, bias_row, *, cout, k, stride, padding):
    N, H, W, Cin = x_nhwc.shape
    xp = jnp.pad(x_nhwc, ((0, 0), (padding, padding), (padding, padding), (0, 0)))
    Hp, Wp = H + 2 * padding, W + 2 * padding
    Ho = (Hp - k) // stride + 1
    Wo = (Wp - k) // stride + 1

    cols = []
    for dy in range(k):
        for dx in range(k):
            sl = jax.lax.slice(
                xp,
                (0, dy, dx, 0),
                (N, dy + (Ho - 1) * stride + 1, dx + (Wo - 1) * stride + 1, Cin),
                (1, stride, stride, 1))
            cols.append(sl)
    # feature ordering (kh, kw, cin) matches the weight matrix built at init
    patches = jnp.concatenate(cols, axis=-1)              # [N, Ho, Wo, k*k*Cin]
    A = patches.reshape(N * Ho * Wo, k * k * Cin)

    out = pallas_matmul_fused(A, Bp, scale_row, bias_row, relu=True,
                              n_valid=cout)
    return out.reshape(N, Ho, Wo, cout)


def maxpool2x2(x_nhwc):
    # MaxPool2d(kernel=2, stride=2), floor semantics.  Plain jnp fuses under
    # jit and avoids lane-sparse (<128-channel) Pallas stores.
    N, H, W, C = x_nhwc.shape
    Ho, Wo = H // 2, W // 2
    x = x_nhwc[:, :Ho * 2, :Wo * 2, :].reshape(N, Ho, 2, Wo, 2, C)
    return jnp.max(x, axis=(2, 4))


def fold_bn(conv_b, gamma, beta, mean, var, eps=1e-5):
    scale = gamma / jnp.sqrt(var + eps)
    bias = beta + (conv_b - mean) * scale
    return scale, bias


# ----------------------------------------------------------------------------
# Parameter construction (deterministic) -- all layout work done ONCE here.
# ----------------------------------------------------------------------------
def init_params(key):
    keys = jax.random.split(key, len(CONV_CFG) * 6 + 2)
    ki = 0
    conv_params = []
    for (cin, cout, k, s, p) in CONV_CFG:
        w = 0.05 * jax.random.normal(keys[ki], (cout, cin, k, k), jnp.float32); ki += 1
        b = 0.05 * jax.random.normal(keys[ki], (cout,), jnp.float32); ki += 1
        gamma = 1.0 + 0.05 * jax.random.normal(keys[ki], (cout,), jnp.float32); ki += 1
        beta = 0.05 * jax.random.normal(keys[ki], (cout,), jnp.float32); ki += 1
        mean = 0.05 * jax.random.normal(keys[ki], (cout,), jnp.float32); ki += 1
        var = 1.0 + 0.1 * jnp.abs(jax.random.normal(keys[ki], (cout,), jnp.float32)); ki += 1

        K = k * k * cin
        Kp, Np = _round_up(K, 128), _round_up(cout, 128)
        # OIHW -> (kh, kw, cin, cout) -> [K, Cout]; matches im2col concat order.
        Bmat = jnp.transpose(w, (2, 3, 1, 0)).reshape(K, cout)
        Bmat = jnp.pad(Bmat, ((0, Kp - K), (0, Np - cout))).astype(jnp.bfloat16)
        scale, bias = fold_bn(b, gamma, beta, mean, var)
        scale_row = jnp.pad(scale, (0, Np - cout)).reshape(1, Np)
        bias_row = jnp.pad(bias, (0, Np - cout)).reshape(1, Np)
        conv_params.append((Bmat, scale_row, bias_row))

    # FC weight generated directly in K-major [FC_DIM, 3036] layout (the
    # transpose of torch's Linear.weight), quantized per-output-column to
    # int8 once at init.  Dequant scale is applied in the kernel epilogue
    # (f32), so the HBM weight stream is halved vs bf16 on every generation.
    fc_w = 0.02 * jax.random.normal(keys[ki], (FC_DIM, NUM_CLASSES), jnp.float32); ki += 1
    fc_b = 0.02 * jax.random.normal(keys[ki], (NUM_CLASSES,), jnp.float32)
    col_scale = jnp.maximum(jnp.max(jnp.abs(fc_w), axis=0), 1e-8) / 127.0
    fc_wq = jnp.clip(jnp.round(fc_w / col_scale[None, :]), -127.0, 127.0)
    fc_wq = fc_wq.astype(jnp.int8)
    fc_wq = jnp.pad(fc_wq, ((0, FC_KP - FC_DIM), (0, FC_NP - NUM_CLASSES)))
    fc_scale_row = jnp.pad(col_scale, (0, FC_NP - NUM_CLASSES)).reshape(1, FC_NP)
    fc_scale_row = fc_scale_row.astype(jnp.float32)
    fc_bias_row = jnp.pad(fc_b, (0, FC_NP - NUM_CLASSES)).reshape(1, FC_NP)

    return {"conv": conv_params, "fc": (fc_wq, fc_scale_row, fc_bias_row)}


# ----------------------------------------------------------------------------
# Recognizer forward (config 1, eval mode)
# ----------------------------------------------------------------------------
def recognizer_forward(params, x_nchw):
    x = jnp.transpose(x_nchw, (0, 2, 3, 1)).astype(jnp.float32)   # NCHW -> NHWC

    for idx, (cin, cout, k, s, p) in enumerate(CONV_CFG):
        Bmat, scale_row, bias_row = params["conv"][idx]
        x = conv_bn_relu(x, Bmat, scale_row, bias_row,
                         cout=cout, k=k, stride=s, padding=p)
        # Dropout2d is identity in eval mode
        if idx in POOL_AFTER:
            x = maxpool2x2(x)

    # flatten in NCHW order to match torch's x.view(-1, FC_DIM)
    N = x.shape[0]
    feats = jnp.transpose(x, (0, 3, 1, 2)).reshape(N, FC_DIM)

    fc_wq, fc_scale_row, fc_bias_row = params["fc"]
    logits = pallas_matmul_fused(feats, fc_wq, fc_scale_row, fc_bias_row,
                                 relu=False, n_valid=NUM_CLASSES,
                                 tm=FC_TM, tn=FC_TN)
    return logits   # final Dropout(dr/2) is identity in eval mode


if __name__ == "__main__":
    key = jax.random.PRNGKey(0)
    pkey, xkey = jax.random.split(key)
    params = init_params(pkey)

    # module-consistent input: batch=2, greyscale 90x90 (NCHW)
    x = jax.random.normal(xkey, (2, 1, 90, 90), jnp.float32)

    fwd = jax.jit(recognizer_forward)
    logits = jax.block_until_ready(fwd(params, x))

    assert logits.shape == (2, NUM_CLASSES), logits.shape
    assert bool(jnp.all(jnp.isfinite(logits)))
    print("KERNEL_OK")
</pallas_src>

<mosaic_0001>
module attributes {stable_mosaic.version = 11 : i64} {
  func.func @_mm_epilogue_kernel(%arg0: i32, %arg1: i32, %arg2: memref<512x128xbf16, #tpu.memory_space<vmem>>, %arg3: memref<128x128xbf16, #tpu.memory_space<vmem>>, %arg4: memref<1x128xf32, #tpu.memory_space<vmem>>, %arg5: memref<1x128xf32, #tpu.memory_space<vmem>>, %arg6: memref<512x128xf32, #tpu.memory_space<vmem>>) attributes {dimension_semantics = [#tpu.dimension_semantics<parallel>, #tpu.dimension_semantics<parallel>], iteration_bounds = array<i64: 8, 1>, scalar_prefetch = 0 : i64, scratch_operands = 0 : i64, tpu.core_type = #tpu.core_type<tc>, window_params = [{transform_indices = @transform_0, window_bounds = array<i64: 512, 128>}, {transform_indices = @transform_1, window_bounds = array<i64: 128, 128>}, {transform_indices = @transform_2, window_bounds = array<i64: 1, 128>}, {transform_indices = @transform_3, window_bounds = array<i64: 1, 128>}, {transform_indices = @transform_4, window_bounds = array<i64: 512, 128>}]} {
    %c0 = arith.constant 0 : index
    %c0_0 = arith.constant 0 : index
    %0 = vector.load %arg3[%c0, %c0_0] : memref<128x128xbf16, #tpu.memory_space<vmem>>, vector<128x128xbf16>
    %c0_1 = arith.constant 0 : index
    %c0_2 = arith.constant 0 : index
    %1 = vector.load %arg2[%c0_1, %c0_2] : memref<512x128xbf16, #tpu.memory_space<vmem>>, vector<512x128xbf16>
    %cst = arith.constant dense<0.000000e+00> : vector<512x128xf32>
    %2 = tpu.matmul %1, %0, %cst {dimension_numbers = #tpu.dot_dimension_numbers<[1], [0], [0], [1], [0, 0, 1, 1], [], []>} : vector<512x128xbf16>, vector<128x128xbf16>, vector<512x128xf32> -> vector<512x128xf32>
    %c0_3 = arith.constant 0 : index
    %c0_4 = arith.constant 0 : index
    %3 = vector.load %arg4[%c0_3, %c0_4] : memref<1x128xf32, #tpu.memory_space<vmem>>, vector<1x128xf32>
    %4 = vector.broadcast %3 : vector<1x128xf32> to vector<512x128xf32>
    %5 = arith.mulf %2, %4 : vector<512x128xf32>
    %c0_5 = arith.constant 0 : index
    %c0_6 = arith.constant 0 : index
    %6 = vector.load %arg5[%c0_5, %c0_6] : memref<1x128xf32, #tpu.memory_space<vmem>>, vector<1x128xf32>
    %7 = vector.broadcast %6 : vector<1x128xf32> to vector<512x128xf32>
    %8 = arith.addf %5, %7 : vector<512x128xf32>
    %cst_7 = arith.constant 0.000000e+00 : f32
    %9 = vector.broadcast %cst_7 : f32 to vector<512x128xf32>
    %10 = arith.maximumf %8, %9 : vector<512x128xf32>
    %c0_8 = arith.constant 0 : index
    %c0_9 = arith.constant 0 : index
    %11 = vector.load %arg6[%c0_8, %c0_9] : memref<512x128xf32, #tpu.memory_space<vmem>>, vector<512x128xf32>
    tpu.vector_store %arg6[%c0_8, %c0_9], %10 {strides = array<i32>} : memref<512x128xf32, #tpu.memory_space<vmem>>, vector<512x128xf32>,
    return
  }
  func.func @transform_0(%arg0: i32, %arg1: i32) -> (i32, i32) {
    %c0_i32 = arith.constant 0 : i32
    %c0_i32_0 = arith.constant 0 : i32
    return %arg0, %c0_i32 : i32, i32
  }
  func.func @transform_1(%arg0: i32, %arg1: i32) -> (i32, i32) {
    %c0_i32 = arith.constant 0 : i32
    %c0_i32_0 = arith.constant 0 : i32
    return %c0_i32, %arg1 : i32, i32
  }
  func.func @transform_2(%arg0: i32, %arg1: i32) -> (i32, i32) {
    %c0_i32 = arith.constant 0 : i32
    %c0_i32_0 = arith.constant 0 : i32
    return %c0_i32, %arg1 : i32, i32
  }
  func.func @transform_3(%arg0: i32, %arg1: i32) -> (i32, i32) {
    %c0_i32 = arith.constant 0 : i32
    %c0_i32_0 = arith.constant 0 : i32
    return %c0_i32, %arg1 : i32, i32
  }
  func.func @transform_4(%arg0: i32, %arg1: i32) -> (i32, i32) {
    %c0_i32 = arith.constant 0 : i32
    return %arg0, %arg1 : i32, i32
  }
}

module attributes {stable_mosaic.version = 11 : i64} {
  func.func @_mm_epilogue_kernel(%arg0: i32, %arg1: i32, %arg2: memref<256x256xbf16, #tpu.memory_space<vmem>>, %arg3: memref<256x128xbf16, #tpu.memory_space<vmem>>, %arg4: memref<1x128xf32, #tpu.memory_space<vmem>>, %arg5: memref<1x128xf32, #tpu.memory_space<vmem>>, %arg6: memref<256x128xf32, #tpu.memory_space<vmem>>) attributes {dimension_semantics = [#tpu.dimension_semantics<parallel>, #tpu.dimension_semantics<parallel>], iteration_bounds = array<i64: 1, 1>, scalar_prefetch = 0 : i64, scratch_operands = 0 : i64, tpu.core_type = #tpu.core_type<tc>, window_params = [{transform_indices = @transform_0, window_bounds = array<i64: 256, 256>}, {transform_indices = @transform_1, window_bounds = array<i64: 256, 128>}, {transform_indices = @transform_2, window_bounds = array<i64: 1, 128>}, {transform_indices = @transform_3, window_bounds = array<i64: 1, 128>}, {transform_indices = @transform_4, window_bounds = array<i64: 256, 128>}]} {
    %c0 = arith.constant 0 : index
    %c0_0 = arith.constant 0 : index
    %0 = vector.load %arg3[%c0, %c0_0] : memref<256x128xbf16, #tpu.memory_space<vmem>>, vector<256x128xbf16>
    %c0_1 = arith.constant 0 : index
    %c0_2 = arith.constant 0 : index
    %1 = vector.load %arg2[%c0_1, %c0_2] : memref<256x256xbf16, #tpu.memory_space<vmem>>, vector<256x256xbf16>
    %cst = arith.constant dense<0.000000e+00> : vector<256x128xf32>
    %2 = tpu.matmul %1, %0, %cst {dimension_numbers = #tpu.dot_dimension_numbers<[1], [0], [0], [1], [0, 0, 1, 1], [], []>} : vector<256x256xbf16>, vector<256x128xbf16>, vector<256x128xf32> -> vector<256x128xf32>
    %c0_3 = arith.constant 0 : index
    %c0_4 = arith.constant 0 : index
    %3 = vector.load %arg4[%c0_3, %c0_4] : memref<1x128xf32, #tpu.memory_space<vmem>>, vector<1x128xf32>
    %4 = vector.broadcast %3 : vector<1x128xf32> to vector<256x128xf32>
    %5 = arith.mulf %2, %4 : vector<256x128xf32>
    %c0_5 = arith.constant 0 : index
    %c0_6 = arith.constant 0 : index
    %6 = vector.load %arg5[%c0_5, %c0_6] : memref<1x128xf32, #tpu.memory_space<vmem>>, vector<1x128xf32>
    %7 = vector.broadcast %6 : vector<1x128xf32> to vector<256x128xf32>
    %8 = arith.addf %5, %7 : vector<256x128xf32>
    %cst_7 = arith.constant 0.000000e+00 : f32
    %9 = vector.broadcast %cst_7 : f32 to vector<256x128xf32>
    %10 = arith.maximumf %8, %9 : vector<256x128xf32>
    %c0_8 = arith.constant 0 : index
    %c0_9 = arith.constant 0 : index
    %11 = vector.load %arg6[%c0_8, %c0_9] : memref<256x128xf32, #tpu.memory_space<vmem>>, vector<256x128xf32>
    tpu.vector_store %arg6[%c0_8, %c0_9], %10 {strides = array<i32>} : memref<256x128xf32, #tpu.memory_space<vmem>>, vector<256x128xf32>,
    return
  }
  func.func @transform_0(%arg0: i32, %arg1: i32) -> (i32, i32) {
    %c0_i32 = arith.constant 0 : i32
    %c0_i32_0 = arith.constant 0 : i32
    return %arg0, %c0_i32 : i32, i32
  }
  func.func @transform_1(%arg0: i32, %arg1: i32) -> (i32, i32) {
    %c0_i32 = arith.constant 0 : i32
    %c0_i32_0 = arith.constant 0 : i32
    return %c0_i32, %arg1 : i32, i32
  }
  func.func @transform_2(%arg0: i32, %arg1: i32) -> (i32, i32) {
    %c0_i32 = arith.constant 0 : i32
    %c0_i32_0 = arith.constant 0 : i32
    return %c0_i32, %arg1 : i32, i32
  }
  func.func @transform_3(%arg0: i32, %arg1: i32) -> (i32, i32) {
    %c0_i32 = arith.constant 0 : i32
    %c0_i32_0 = arith.constant 0 : i32
    return %c0_i32, %arg1 : i32, i32
  }
  func.func @transform_4(%arg0: i32, %arg1: i32) -> (i32, i32) {
    %c0_i32 = arith.constant 0 : i32
    return %arg0, %arg1 : i32, i32
  }
}

module attributes {stable_mosaic.version = 11 : i64} {
  func.func @_mm_epilogue_kernel(%arg0: i32, %arg1: i32, %arg2: memref<64x384xbf16, #tpu.memory_space<vmem>>, %arg3: memref<384x128xbf16, #tpu.memory_space<vmem>>, %arg4: memref<1x128xf32, #tpu.memory_space<vmem>>, %arg5: memref<1x128xf32, #tpu.memory_space<vmem>>, %arg6: memref<64x128xf32, #tpu.memory_space<vmem>>) attributes {dimension_semantics = [#tpu.dimension_semantics<parallel>, #tpu.dimension_semantics<parallel>], iteration_bounds = array<i64: 1, 1>, scalar_prefetch = 0 : i64, scratch_operands = 0 : i64, tpu.core_type = #tpu.core_type<tc>, window_params = [{transform_indices = @transform_0, window_bounds = array<i64: 64, 384>}, {transform_indices = @transform_1, window_bounds = array<i64: 384, 128>}, {transform_indices = @transform_2, window_bounds = array<i64: 1, 128>}, {transform_indices = @transform_3, window_bounds = array<i64: 1, 128>}, {transform_indices = @transform_4, window_bounds = array<i64: 64, 128>}]} {
    %c0 = arith.constant 0 : index
    %c0_0 = arith.constant 0 : index
    %0 = vector.load %arg3[%c0, %c0_0] : memref<384x128xbf16, #tpu.memory_space<vmem>>, vector<384x128xbf16>
    %c0_1 = arith.constant 0 : index
    %c0_2 = arith.constant 0 : index
    %1 = vector.load %arg2[%c0_1, %c0_2] : memref<64x384xbf16, #tpu.memory_space<vmem>>, vector<64x384xbf16>
    %cst = arith.constant dense<0.000000e+00> : vector<64x128xf32>
    %2 = tpu.matmul %1, %0, %cst {dimension_numbers = #tpu.dot_dimension_numbers<[1], [0], [0], [1], [0, 0, 1, 1], [], []>} : vector<64x384xbf16>, vector<384x128xbf16>, vector<64x128xf32> -> vector<64x128xf32>
    %c0_3 = arith.constant 0 : index
    %c0_4 = arith.constant 0 : index
    %3 = vector.load %arg4[%c0_3, %c0_4] : memref<1x128xf32, #tpu.memory_space<vmem>>, vector<1x128xf32>
    %4 = vector.broadcast %3 : vector<1x128xf32> to vector<64x128xf32>
    %5 = arith.mulf %2, %4 : vector<64x128xf32>
    %c0_5 = arith.constant 0 : index
    %c0_6 = arith.constant 0 : index
    %6 = vector.load %arg5[%c0_5, %c0_6] : memref<1x128xf32, #tpu.memory_space<vmem>>, vector<1x128xf32>
    %7 = vector.broadcast %6 : vector<1x128xf32> to vector<64x128xf32>
    %8 = arith.addf %5, %7 : vector<64x128xf32>
    %cst_7 = arith.constant 0.000000e+00 : f32
    %9 = vector.broadcast %cst_7 : f32 to vector<64x128xf32>
    %10 = arith.maximumf %8, %9 : vector<64x128xf32>
    %c0_8 = arith.constant 0 : index
    %c0_9 = arith.constant 0 : index
    %11 = vector.load %arg6[%c0_8, %c0_9] : memref<64x128xf32, #tpu.memory_space<vmem>>, vector<64x128xf32>
    tpu.vector_store %arg6[%c0_8, %c0_9], %10 {strides = array<i32>} : memref<64x128xf32, #tpu.memory_space<vmem>>, vector<64x128xf32>,
    return
  }
  func.func @transform_0(%arg0: i32, %arg1: i32) -> (i32, i32) {
    %c0_i32 = arith.constant 0 : i32
    %c0_i32_0 = arith.constant 0 : i32
    return %arg0, %c0_i32 : i32, i32
  }
  func.func @transform_1(%arg0: i32, %arg1: i32) -> (i32, i32) {
    %c0_i32 = arith.constant 0 : i32
    %c0_i32_0 = arith.constant 0 : i32
    return %c0_i32, %arg1 : i32, i32
  }
  func.func @transform_2(%arg0: i32, %arg1: i32) -> (i32, i32) {
    %c0_i32 = arith.constant 0 : i32
    %c0_i32_0 = arith.constant 0 : i32
    return %c0_i32, %arg1 : i32, i32
  }
  func.func @transform_3(%arg0: i32, %arg1: i32) -> (i32, i32) {
    %c0_i32 = arith.constant 0 : i32
    %c0_i32_0 = arith.constant 0 : i32
    return %c0_i32, %arg1 : i32, i32
  }
  func.func @transform_4(%arg0: i32, %arg1: i32) -> (i32, i32) {
    %c0_i32 = arith.constant 0 : i32
    return %arg0, %arg1 : i32, i32
  }
}

module attributes {stable_mosaic.version = 11 : i64} {
  func.func @_mm_epilogue_kernel(%arg0: i32, %arg1: i32, %arg2: memref<64x640xbf16, #tpu.memory_space<vmem>>, %arg3: memref<640x128xbf16, #tpu.memory_space<vmem>>, %arg4: memref<1x128xf32, #tpu.memory_space<vmem>>, %arg5: memref<1x128xf32, #tpu.memory_space<vmem>>, %arg6: memref<64x128xf32, #tpu.memory_space<vmem>>) attributes {dimension_semantics = [#tpu.dimension_semantics<parallel>, #tpu.dimension_semantics<parallel>], iteration_bounds = array<i64: 1, 1>, scalar_prefetch = 0 : i64, scratch_operands = 0 : i64, tpu.core_type = #tpu.core_type<tc>, window_params = [{transform_indices = @transform_0, window_bounds = array<i64: 64, 640>}, {transform_indices = @transform_1, window_bounds = array<i64: 640, 128>}, {transform_indices = @transform_2, window_bounds = array<i64: 1, 128>}, {transform_indices = @transform_3, window_bounds = array<i64: 1, 128>}, {transform_indices = @transform_4, window_bounds = array<i64: 64, 128>}]} {
    %c0 = arith.constant 0 : index
    %c0_0 = arith.constant 0 : index
    %0 = vector.load %arg3[%c0, %c0_0] : memref<640x128xbf16, #tpu.memory_space<vmem>>, vector<640x128xbf16>
    %c0_1 = arith.constant 0 : index
    %c0_2 = arith.constant 0 : index
    %1 = vector.load %arg2[%c0_1, %c0_2] : memref<64x640xbf16, #tpu.memory_space<vmem>>, vector<64x640xbf16>
    %cst = arith.constant dense<0.000000e+00> : vector<64x128xf32>
    %2 = tpu.matmul %1, %0, %cst {dimension_numbers = #tpu.dot_dimension_numbers<[1], [0], [0], [1], [0, 0, 1, 1], [], []>} : vector<64x640xbf16>, vector<640x128xbf16>, vector<64x128xf32> -> vector<64x128xf32>
    %c0_3 = arith.constant 0 : index
    %c0_4 = arith.constant 0 : index
    %3 = vector.load %arg4[%c0_3, %c0_4] : memref<1x128xf32, #tpu.memory_space<vmem>>, vector<1x128xf32>
    %4 = vector.broadcast %3 : vector<1x128xf32> to vector<64x128xf32>
    %5 = arith.mulf %2, %4 : vector<64x128xf32>
    %c0_5 = arith.constant 0 : index
    %c0_6 = arith.constant 0 : index
    %6 = vector.load %arg5[%c0_5, %c0_6] : memref<1x128xf32, #tpu.memory_space<vmem>>, vector<1x128xf32>
    %7 = vector.broadcast %6 : vector<1x128xf32> to vector<64x128xf32>
    %8 = arith.addf %5, %7 : vector<64x128xf32>
    %cst_7 = arith.constant 0.000000e+00 : f32
    %9 = vector.broadcast %cst_7 : f32 to vector<64x128xf32>
    %10 = arith.maximumf %8, %9 : vector<64x128xf32>
    %c0_8 = arith.constant 0 : index
    %c0_9 = arith.constant 0 : index
    %11 = vector.load %arg6[%c0_8, %c0_9] : memref<64x128xf32, #tpu.memory_space<vmem>>, vector<64x128xf32>
    tpu.vector_store %arg6[%c0_8, %c0_9], %10 {strides = array<i32>} : memref<64x128xf32, #tpu.memory_space<vmem>>, vector<64x128xf32>,
    return
  }
  func.func @transform_0(%arg0: i32, %arg1: i32) -> (i32, i32) {
    %c0_i32 = arith.constant 0 : i32
    %c0_i32_0 = arith.constant 0 : i32
    return %arg0, %c0_i32 : i32, i32
  }
  func.func @transform_1(%arg0: i32, %arg1: i32) -> (i32, i32) {
    %c0_i32 = arith.constant 0 : i32
    %c0_i32_0 = arith.constant 0 : i32
    return %c0_i32, %arg1 : i32, i32
  }
  func.func @transform_2(%arg0: i32, %arg1: i32) -> (i32, i32) {
    %c0_i32 = arith.constant 0 : i32
    %c0_i32_0 = arith.constant 0 : i32
    return %c0_i32, %arg1 : i32, i32
  }
  func.func @transform_3(%arg0: i32, %arg1: i32) -> (i32, i32) {
    %c0_i32 = arith.constant 0 : i32
    %c0_i32_0 = arith.constant 0 : i32
    return %c0_i32, %arg1 : i32, i32
  }
  func.func @transform_4(%arg0: i32, %arg1: i32) -> (i32, i32) {
    %c0_i32 = arith.constant 0 : i32
    return %arg0, %arg1 : i32, i32
  }
}

module attributes {stable_mosaic.version = 11 : i64} {
  func.func @_mm_epilogue_kernel(%arg0: i32, %arg1: i32, %arg2: memref<64x1152xbf16, #tpu.memory_space<vmem>>, %arg3: memref<1152x256xbf16, #tpu.memory_space<vmem>>, %arg4: memref<1x256xf32, #tpu.memory_space<vmem>>, %arg5: memref<1x256xf32, #tpu.memory_space<vmem>>, %arg6: memref<64x256xf32, #tpu.memory_space<vmem>>) attributes {dimension_semantics = [#tpu.dimension_semantics<parallel>, #tpu.dimension_semantics<parallel>], iteration_bounds = array<i64: 1, 1>, scalar_prefetch = 0 : i64, scratch_operands = 0 : i64, tpu.core_type = #tpu.core_type<tc>, window_params = [{transform_indices = @transform_0, window_bounds = array<i64: 64, 1152>}, {transform_indices = @transform_1, window_bounds = array<i64: 1152, 256>}, {transform_indices = @transform_2, window_bounds = array<i64: 1, 256>}, {transform_indices = @transform_3, window_bounds = array<i64: 1, 256>}, {transform_indices = @transform_4, window_bounds = array<i64: 64, 256>}]} {
    %c0 = arith.constant 0 : index
    %c0_0 = arith.constant 0 : index
    %0 = vector.load %arg3[%c0, %c0_0] : memref<1152x256xbf16, #tpu.memory_space<vmem>>, vector<1152x256xbf16>
    %c0_1 = arith.constant 0 : index
    %c0_2 = arith.constant 0 : index
    %1 = vector.load %arg2[%c0_1, %c0_2] : memref<64x1152xbf16, #tpu.memory_space<vmem>>, vector<64x1152xbf16>
    %cst = arith.constant dense<0.000000e+00> : vector<64x256xf32>
    %2 = tpu.matmul %1, %0, %cst {dimension_numbers = #tpu.dot_dimension_numbers<[1], [0], [0], [1], [0, 0, 1, 1], [], []>} : vector<64x1152xbf16>, vector<1152x256xbf16>, vector<64x256xf32> -> vector<64x256xf32>
    %c0_3 = arith.constant 0 : index
    %c0_4 = arith.constant 0 : index
    %3 = vector.load %arg4[%c0_3, %c0_4] : memref<1x256xf32, #tpu.memory_space<vmem>>, vector<1x256xf32>
    %4 = vector.broadcast %3 : vector<1x256xf32> to vector<64x256xf32>
    %5 = arith.mulf %2, %4 : vector<64x256xf32>
    %c0_5 = arith.constant 0 : index
    %c0_6 = arith.constant 0 : index
    %6 = vector.load %arg5[%c0_5, %c0_6] : memref<1x256xf32, #tpu.memory_space<vmem>>, vector<1x256xf32>
    %7 = vector.broadcast %6 : vector<1x256xf32> to vector<64x256xf32>
    %8 = arith.addf %5, %7 : vector<64x256xf32>
    %cst_7 = arith.constant 0.000000e+00 : f32
    %9 = vector.broadcast %cst_7 : f32 to vector<64x256xf32>
    %10 = arith.maximumf %8, %9 : vector<64x256xf32>
    %c0_8 = arith.constant 0 : index
    %c0_9 = arith.constant 0 : index
    %11 = vector.load %arg6[%c0_8, %c0_9] : memref<64x256xf32, #tpu.memory_space<vmem>>, vector<64x256xf32>
    tpu.vector_store %arg6[%c0_8, %c0_9], %10 {strides = array<i32>} : memref<64x256xf32, #tpu.memory_space<vmem>>, vector<64x256xf32>,
    return
  }
  func.func @transform_0(%arg0: i32, %arg1: i32) -> (i32, i32) {
    %c0_i32 = arith.constant 0 : i32
    %c0_i32_0 = arith.constant 0 : i32
    return %arg0, %c0_i32 : i32, i32
  }
  func.func @transform_1(%arg0: i32, %arg1: i32) -> (i32, i32) {
    %c0_i32 = arith.constant 0 : i32
    %c0_i32_0 = arith.constant 0 : i32
    return %c0_i32, %arg1 : i32, i32
  }
  func.func @transform_2(%arg0: i32, %arg1: i32) -> (i32, i32) {
    %c0_i32 = arith.constant 0 : i32
    %c0_i32_0 = arith.constant 0 : i32
    return %c0_i32, %arg1 : i32, i32
  }
  func.func @transform_3(%arg0: i32, %arg1: i32) -> (i32, i32) {
    %c0_i32 = arith.constant 0 : i32
    %c0_i32_0 = arith.constant 0 : i32
    return %c0_i32, %arg1 : i32, i32
  }
  func.func @transform_4(%arg0: i32, %arg1: i32) -> (i32, i32) {
    %c0_i32 = arith.constant 0 : i32
    return %arg0, %arg1 : i32, i32
  }
}

module attributes {stable_mosaic.version = 11 : i64} {
  func.func @_mm_epilogue_kernel(%arg0: i32, %arg1: i32, %arg2: memref<16x6400xbf16, #tpu.memory_space<vmem>>, %arg3: memref<6400x384xi8, #tpu.memory_space<vmem>>, %arg4: memref<1x384xf32, #tpu.memory_space<vmem>>, %arg5: memref<1x384xf32, #tpu.memory_space<vmem>>, %arg6: memref<16x384xf32, #tpu.memory_space<vmem>>) attributes {dimension_semantics = [#tpu.dimension_semantics<parallel>, #tpu.dimension_semantics<parallel>], iteration_bounds = array<i64: 1, 8>, scalar_prefetch = 0 : i64, scratch_operands = 0 : i64, tpu.core_type = #tpu.core_type<tc>, window_params = [{transform_indices = @transform_0, window_bounds = array<i64: 16, 6400>}, {transform_indices = @transform_1, window_bounds = array<i64: 6400, 384>}, {transform_indices = @transform_2, window_bounds = array<i64: 1, 384>}, {transform_indices = @transform_3, window_bounds = array<i64: 1, 384>}, {transform_indices = @transform_4, window_bounds = array<i64: 16, 384>}]} {
    %c0 = arith.constant 0 : index
    %c0_0 = arith.constant 0 : index
    %0 = vector.load %arg3[%c0, %c0_0] : memref<6400x384xi8, #tpu.memory_space<vmem>>, vector<6400x384xi8>
    %1 = arith.sitofp %0 : vector<6400x384xi8> to vector<6400x384xbf16>
    %c0_1 = arith.constant 0 : index
    %c0_2 = arith.constant 0 : index
    %2 = vector.load %arg2[%c0_1, %c0_2] : memref<16x6400xbf16, #tpu.memory_space<vmem>>, vector<16x6400xbf16>
    %cst = arith.constant dense<0.000000e+00> : vector<16x384xf32>
    %3 = tpu.matmul %2, %1, %cst {dimension_numbers = #tpu.dot_dimension_numbers<[1], [0], [0], [1], [0, 0, 1, 1], [], []>} : vector<16x6400xbf16>, vector<6400x384xbf16>, vector<16x384xf32> -> vector<16x384xf32>
    %c0_3 = arith.constant 0 : index
    %c0_4 = arith.constant 0 : index
    %4 = vector.load %arg4[%c0_3, %c0_4] : memref<1x384xf32, #tpu.memory_space<vmem>>, vector<1x384xf32>
    %5 = vector.broadcast %4 : vector<1x384xf32> to vector<16x384xf32>
    %6 = arith.mulf %3, %5 : vector<16x384xf32>
    %c0_5 = arith.constant 0 : index
    %c0_6 = arith.constant 0 : index
    %7 = vector.load %arg5[%c0_5, %c0_6] : memref<1x384xf32, #tpu.memory_space<vmem>>, vector<1x384xf32>
    %8 = vector.broadcast %7 : vector<1x384xf32> to vector<16x384xf32>
    %9 = arith.addf %6, %8 : vector<16x384xf32>
    %c0_7 = arith.constant 0 : index
    %c0_8 = arith.constant 0 : index
    %10 = vector.load %arg6[%c0_7, %c0_8] : memref<16x384xf32, #tpu.memory_space<vmem>>, vector<16x384xf32>
    tpu.vector_store %arg6[%c0_7, %c0_8], %9 {strides = array<i32>} : memref<16x384xf32, #tpu.memory_space<vmem>>, vector<16x384xf32>,
    return
  }
  func.func @transform_0(%arg0: i32, %arg1: i32) -> (i32, i32) {
    %c0_i32 = arith.constant 0 : i32
    %c0_i32_0 = arith.constant 0 : i32
    return %arg0, %c0_i32 : i32, i32
  }
  func.func @transform_1(%arg0: i32, %arg1: i32) -> (i32, i32) {
    %c0_i32 = arith.constant 0 : i32
    %c0_i32_0 = arith.constant 0 : i32
    return %c0_i32, %arg1 : i32, i32
  }
  func.func @transform_2(%arg0: i32, %arg1: i32) -> (i32, i32) {
    %c0_i32 = arith.constant 0 : i32
    %c0_i32_0 = arith.constant 0 : i32
    return %c0_i32, %arg1 : i32, i32
  }
  func.func @transform_3(%arg0: i32, %arg1: i32) -> (i32, i32) {
    %c0_i32 = arith.constant 0 : i32
    %c0_i32_0 = arith.constant 0 : i32
    return %c0_i32, %arg1 : i32, i32
  }
  func.func @transform_4(%arg0: i32, %arg1: i32) -> (i32, i32) {
    %c0_i32 = arith.constant 0 : i32
    return %arg0, %arg1 : i32, i32
  }
}

</mosaic_0001>

<llo_original>
// kernel: recognizer_forward.6
$region0: #{recognizer_forward.6}
  #allocation0 [shape = 'u32[]', space=smem, size = 0x4, offset = 0x4, fixed_abs, tag = 'smem constant byte address 0x4 - core index']
  #allocation1 [shape = 'u32[144,128]{1,0:T(1,128)}', space=vmem, size = 0x12000, scoped, tag = 'internal scratch']
  %s0 = inlined_call_operand.vmem [shape: bf16[4096,128], index: 0, kind: input, shape index: {}]
  %s1 = inlined_call_operand.hbm [shape: bf16[128,128], index: 1, kind: input, shape index: {}]
  %s2 = inlined_call_operand.hbm [shape: f32[1,128], index: 2, kind: input, shape index: {}]
  %s3 = inlined_call_operand.hbm [shape: f32[1,128], index: 3, kind: input, shape index: {}]
  %s4 = inlined_call_operand.vmem [shape: f32[4096,128], index: 4, kind: output, shape index: {}]
  %s5 = sld [smem:[#allocation0]]
  $region61: #{recognizer_forward.6} parent=0
    _
  %s7 = ssub.s32 1, %s5
  %s8 = scalar_select 0, %s7, %s5
  $region1: #{recognizer_forward.6} parent=0
    #allocation2 [shape = 'u8[32768]{0}', space=vmem, size = 0x8000, scoped, tag = 'input window, operand 1, single buffered']
    #allocation3 [shape = 's32[2]{0}', space=sflag, size = 0x8, scoped, tag = 'scoped memory for recognizer_forward.6']
    #allocation4 [shape = 'u8[512]{0}', space=vmem, size = 0x400, scoped, tag = 'input window, operand 2, single buffered']
    #allocation5 [shape = 's32[1]{0}', space=sflag, size = 0x4, scoped, tag = 'scoped memory for recognizer_forward.6']
    #allocation6 [shape = 'u8[512]{0}', space=vmem, size = 0x400, scoped, tag = 'input window, operand 3, single buffered']
    %9 = vsyncpa [#allocation3], 0
    %10 = vsyncpa [#allocation5], 0
    loop: start=0, step=1, limit=10
    $region2: #{recognizer_forward.6} parent=1 // loop_pre_header
      _
    $region3: #{recognizer_forward.6} parent=1 // loop_header
      %s12 = sphi 0, %s16
      %p13 = scmp.ge.s32.totalorder %s12, 10
      %s19 = sphi 0, %s31
      %s20 = sphi 0, %s27
      %s21 = sphi 0, %s19
      %s22 = sphi 0, %s20
      %s23 = sphi 0, %s21
      %s24 = sphi 0, %s22
      %s34 = sphi 0, %s36
      %s37 = sphi 0, %s34
      %s38 = sphi 0, %s37
      %s54 = sphi 0, %s38
      %s60 = sphi 0, %s62
      %s63 = sphi 0, %s60
      %s64 = sphi 0, %s63
      %s80 = sphi 0, %s64
      %s86 = sphi 0, %s88
      %s89 = sphi 0, %s86
      %s90 = sphi 0, %s89
      %s106 = sphi 0, %s90
      %s112 = sphi 0, %s114
      %s115 = sphi 0, %s112
      %s116 = sphi 0, %s115
      %s132 = sphi 0, %s116
      %s140 = sphi 0, %s142
      %s143 = sphi 0, %s140
      %s144 = sphi 0, %s143
      %s160 = sphi 0, %s144
    $region4: #{recognizer_forward.6} parent=1 // loop_header_branch
      %15 = sbr.rel (%p13) target = $region8
    $region5: #{recognizer_forward.6} parent=1 // loop_body
      %s17 = ssub.s32 %s12, 1
      %s18 = ssub.s32 %s12, 2
      %s25 = sadd.s32 1, %s20
      %p26 = scmp.ge.s32.totalorder %s25, 1
      %s27 = scalar_select %p26, 0, %s25
      %s28 = sadd.s32 1, %s19
      %s29 = scalar_select %p26, %s28, %s19
      %p30 = scmp.ge.s32.totalorder %s29, 8
      %s31 = scalar_select %p30, 0, %s29
      %s32 = ssub.s32 %s19, %s31
      %p33 = scmp.eq.s32.totalorder %s32, 0
      %s35 = sadd.s32 %s34, 1
      %s36 = scalar_select %p33, %s34, %s35
      %p39 = pneg %p33
      %p40 = scmp.eq.s32.totalorder %s12, 7
      %p41 = por %p39, %p40
      %p42 = scmp.ne.s32.totalorder %s34, %s37
      %p43 = scmp.eq.s32.totalorder %s12, 0
      %p44 = por %p42, %p43
      %p45 = scmp.ne.s32.totalorder %s34, %s37
      %p46 = scmp.eq.s32.totalorder %s17, 7
      %p47 = por %p45, %p46
      %p48 = scmp.ne.s32.totalorder %s37, %s38
      %p49 = scmp.eq.s32.totalorder %s17, 0
      %p50 = por %p48, %p49
      %p51 = scmp.ne.s32.totalorder %s37, %s38
      %p52 = scmp.eq.s32.totalorder %s18, 7
      %p53 = por %p51, %p52
      %p55 = scmp.ne.s32.totalorder %s38, %s54
      %p56 = scmp.eq.s32.totalorder %s18, 0
      %p57 = por %p55, %p56
      %s58 = ssub.s32 %s20, %s27
      %p59 = scmp.eq.s32.totalorder %s58, 0
      %s61 = sadd.s32 %s60, 1
      %s62 = scalar_select %p59, %s60, %s61
      %p65 = pneg %p59
      %p66 = scmp.eq.s32.totalorder %s12, 7
      %p67 = por %p65, %p66
      %p68 = scmp.ne.s32.totalorder %s60, %s63
      %p69 = scmp.eq.s32.totalorder %s12, 0
      %p70 = por %p68, %p69
      %p71 = scmp.ne.s32.totalorder %s60, %s63
      %p72 = scmp.eq.s32.totalorder %s17, 7
      %p73 = por %p71, %p72
      %p74 = scmp.ne.s32.totalorder %s63, %s64
      %p75 = scmp.eq.s32.totalorder %s17, 0
      %p76 = por %p74, %p75
      %p77 = scmp.ne.s32.totalorder %s63, %s64
      %p78 = scmp.eq.s32.totalorder %s18, 7
      %p79 = por %p77, %p78
      %p81 = scmp.ne.s32.totalorder %s64, %s80
      %p82 = scmp.eq.s32.totalorder %s18, 0
      %p83 = por %p81, %p82
      %s84 = ssub.s32 %s20, %s27
      %p85 = scmp.eq.s32.totalorder %s84, 0
      %s87 = sadd.s32 %s86, 1
      %s88 = scalar_select %p85, %s86, %s87
      %p91 = pneg %p85
      %p92 = scmp.eq.s32.totalorder %s12, 7
      %p93 = por %p91, %p92
      %p94 = scmp.ne.s32.totalorder %s86, %s89
      %p95 = scmp.eq.s32.totalorder %s12, 0
      %p96 = por %p94, %p95
      %p97 = scmp.ne.s32.totalorder %s86, %s89
      %p98 = scmp.eq.s32.totalorder %s17, 7
      %p99 = por %p97, %p98
      %p100 = scmp.ne.s32.totalorder %s89, %s90
      %p101 = scmp.eq.s32.totalorder %s17, 0
      %p102 = por %p100, %p101
      %p103 = scmp.ne.s32.totalorder %s89, %s90
      %p104 = scmp.eq.s32.totalorder %s18, 7
      %p105 = por %p103, %p104
      %p107 = scmp.ne.s32.totalorder %s90, %s106
      %p108 = scmp.eq.s32.totalorder %s18, 0
      %p109 = por %p107, %p108
      %s110 = ssub.s32 %s20, %s27
      %p111 = scmp.eq.s32.totalorder %s110, 0
      %s113 = sadd.s32 %s112, 1
      %s114 = scalar_select %p111, %s112, %s113
      %p117 = pneg %p111
      %p118 = scmp.eq.s32.totalorder %s12, 7
      %p119 = por %p117, %p118
      %p120 = scmp.ne.s32.totalorder %s112, %s115
      %p121 = scmp.eq.s32.totalorder %s12, 0
      %p122 = por %p120, %p121
      %p123 = scmp.ne.s32.totalorder %s112, %s115
      %p124 = scmp.eq.s32.totalorder %s17, 7
      %p125 = por %p123, %p124
      %p126 = scmp.ne.s32.totalorder %s115, %s116
      %p127 = scmp.eq.s32.totalorder %s17, 0
      %p128 = por %p126, %p127
      %p129 = scmp.ne.s32.totalorder %s115, %s116
      %p130 = scmp.eq.s32.totalorder %s18, 7
      %p131 = por %p129, %p130
      %p133 = scmp.ne.s32.totalorder %s116, %s132
      %p134 = scmp.eq.s32.totalorder %s18, 0
      %p135 = por %p133, %p134
      %s136 = ssub.s32 %s19, %s31
      %s137 = ssub.s32 %s20, %s27
      %s138 = sor.u32 %s136, %s137
      %p139 = scmp.eq.s32.totalorder %s138, 0
      %s141 = sadd.s32 %s140, 1
      %s142 = scalar_select %p139, %s140, %s141
      %p145 = pneg %p139
      %p146 = scmp.eq.s32.totalorder %s12, 7
      %p147 = por %p145, %p146
      %p148 = scmp.ne.s32.totalorder %s140, %s143
      %p149 = scmp.eq.s32.totalorder %s12, 0
      %p150 = por %p148, %p149
      %p151 = scmp.ne.s32.totalorder %s140, %s143
      %p152 = scmp.eq.s32.totalorder %s17, 7
      %p153 = por %p151, %p152
      %p154 = scmp.ne.s32.totalorder %s143, %s144
      %p155 = scmp.eq.s32.totalorder %s17, 0
      %p156 = por %p154, %p155
      %p157 = scmp.ne.s32.totalorder %s143, %s144
      %p158 = scmp.eq.s32.totalorder %s18, 7
      %p159 = por %p157, %p158
      %p161 = scmp.ne.s32.totalorder %s144, %s160
      %p162 = scmp.eq.s32.totalorder %s18, 0
      %p163 = por %p161, %p162
      %p164 = scmp.le.s32.totalorder 1, %s12
      %p165 = scmp.lt.s32.totalorder %s12, 9
      %p166 = pnand %p164, %p165
      %p167 = pneg %p166
      // Predicated region
      $region9: #{recognizer_forward.6} parent=5 // pred_check
        _
      $region10: #{recognizer_forward.6} parent=5 // pred_check_branch
        %169 = sbr.rel (%p166) target = $region12
      $region11: #{recognizer_forward.6} parent=5 // pred_region
        %s170 = ssub.s32 %s12, 1
        // Predicated region
        $region13: #{recognizer_forward.6} parent=11 // pred_check
          %p171 = pneg %p76
        $region14: #{recognizer_forward.6} parent=11 // pred_check_branch
          %173 = sbr.rel (%p171) target = $region16
        $region15: #{recognizer_forward.6} parent=11 // pred_region
          %s175 = ssub.s32 1024, 1024
          %176 = vsyncadd [#allocation3], %s175
          %s177 = smul.addr %s22, 64
          %s178 = scalar_lea.hbm %s1, %s177
          %s179 = sshll.u32 [#allocation2], 4
          %s180 = int_to_ptr.vmem [resolvable:$true] %s179
          %185 = dma.hbm_to_vmem [thread:$0]  %s178, 1024, %s180, [#allocation3], 64, 64, 4
        $region16: #{recognizer_forward.6} parent=11 // pred_fallthru
          _
        // Predicated region
        $region17: #{recognizer_forward.6} parent=11 // pred_check
          %p186 = pneg %p102
        $region18: #{recognizer_forward.6} parent=11 // pred_check_branch
          %188 = sbr.rel (%p186) target = $region20
        $region19: #{recognizer_forward.6} parent=11 // pred_region
          %s190 = ssub.s32 16, 16
          %191 = vsyncadd [#allocation5], %s190
          %s192 = smul.addr %s22, 16
          %s193 = scalar_lea.hbm %s2, %s192
          %s195 = sshll.u32 [#allocation4], 4
          %s196 = int_to_ptr.vmem [resolvable:$true] %s195
          %198 = dma.hbm_to_vmem [thread:$0]  %s193, 16, %s196, [#allocation5]
        $region20: #{recognizer_forward.6} parent=11 // pred_fallthru
          _
        // Predicated region
        $region21: #{recognizer_forward.6} parent=11 // pred_check
          %p199 = pneg %p128
        $region22: #{recognizer_forward.6} parent=11 // pred_check_branch
          %201 = sbr.rel (%p199) target = $region24
        $region23: #{recognizer_forward.6} parent=11 // pred_region
          %s203 = ssub.s32 16, 16
          %204 = vsyncadd [#allocation5], %s203
          %s205 = smul.addr %s22, 16
          %s206 = scalar_lea.hbm %s3, %s205
          %s208 = sshll.u32 [#allocation6], 4
          %s209 = int_to_ptr.vmem [resolvable:$true] %s208
          %211 = dma.hbm_to_vmem [thread:$0]  %s206, 16, %s209, [#allocation5]
        $region24: #{recognizer_forward.6} parent=11 // pred_fallthru
          _
      $region12: #{recognizer_forward.6} parent=5 // pred_fallthru
        _
      %p212 = scmp.lt.s32.totalorder %s12, 8
      // Predicated region
      $region25: #{recognizer_forward.6} parent=5 // pred_check
        %p213 = pneg %p212
      $region26: #{recognizer_forward.6} parent=5 // pred_check_branch
        %215 = sbr.rel (%p213) target = $region28
      $region27: #{recognizer_forward.6} parent=5 // pred_region
        // Predicated region
        $region29: #{recognizer_forward.6} parent=27 // pred_check
          %p216 = pneg %p44
        $region30: #{recognizer_forward.6} parent=27 // pred_check_branch
          %218 = sbr.rel (%p216) target = $region32
        $region31: #{recognizer_forward.6} parent=27 // pred_region
          %s219 = smul.u32 64, %s19
          %p220 = scmp.lt.s32.totalorder %s219, 511
          %s221 = scalar_select %p220, %s219, 511
          %s222 = smul.addr %s221, 4
          %s223 = scalar_lea.vmem %s0, %s222
          %s224 = smul.u32 64, %s19
        $region32: #{recognizer_forward.6} parent=27 // pred_fallthru
          _
      $region28: #{recognizer_forward.6} parent=5 // pred_fallthru
        _
      %p225 = scmp.le.s32.totalorder 1, %s12
      %p226 = scmp.lt.s32.totalorder %s12, 9
      %p227 = pnand %p225, %p226
      %p228 = pneg %p227
      // Predicated region
      $region33: #{recognizer_forward.6} parent=5 // pred_check
        _
      $region34: #{recognizer_forward.6} parent=5 // pred_check_branch
        %230 = sbr.rel (%p227) target = $region36
      $region35: #{recognizer_forward.6} parent=5 // pred_region
        %s231 = ssub.s32 %s12, 1
        // Predicated region
        $region37: #{recognizer_forward.6} parent=35 // pred_check
          %p232 = pneg %p76
        $region38: #{recognizer_forward.6} parent=35 // pred_check_branch
          %234 = sbr.rel (%p232) target = $region40
        $region39: #{recognizer_forward.6} parent=35 // pred_region
          %235 = dma.done [#allocation3], 1024
        $region40: #{recognizer_forward.6} parent=35 // pred_fallthru
          _
        // Predicated region
        $region41: #{recognizer_forward.6} parent=35 // pred_check
          %p236 = pneg %p102
        $region42: #{recognizer_forward.6} parent=35 // pred_check_branch
          %238 = sbr.rel (%p236) target = $region44
        $region43: #{recognizer_forward.6} parent=35 // pred_region
          %239 = dma.done [#allocation5], 16
        $region44: #{recognizer_forward.6} parent=35 // pred_fallthru
          _
        // Predicated region
        $region45: #{recognizer_forward.6} parent=35 // pred_check
          %p240 = pneg %p128
        $region46: #{recognizer_forward.6} parent=35 // pred_check_branch
          %242 = sbr.rel (%p240) target = $region48
        $region47: #{recognizer_forward.6} parent=35 // pred_region
          %243 = dma.done [#allocation5], 16
        $region48: #{recognizer_forward.6} parent=35 // pred_fallthru
          _
        %s244 = smul.u32 64, %s21
        %p245 = scmp.lt.s32.totalorder %s244, 511
        %s246 = scalar_select %p245, %s244, 511
        %s247 = smul.addr %s246, 4
        %s248 = scalar_lea.vmem %s0, %s247
        %p249 = pneg %p50
        %p250 = pneg %p47
        %p251 = pneg %p76
        %p252 = pneg %p73
        %p253 = pneg %p102
        %p254 = pneg %p99
        %p255 = pneg %p128
        %p256 = pneg %p125
        %p257 = pneg %p156
        %p258 = pneg %p153
        %s259 = smul.u32 64, %s21
        %p260 = scmp.lt.s32.totalorder %s259, 511
        %s261 = scalar_select %p260, %s259, 511
        %p262 = scmp.lt.s32.totalorder %s22, 0
        %s263 = scalar_select %p262, %s22, 0
        %s264 = sadd.s32 %s263, %s261
        %s265 = smul.addr %s264, 8
        %s266 = scalar_lea.vmem %s4, %s265
        %s267 = smul.u32 64, %s21
        %p268 = scmp.lt.s32.totalorder %s267, 511
        %s269 = scalar_select %p268, %s267, 511
        %s270 = smul.addr %s269, 4
        %s271 = scalar_lea.vmem %s0, %s270
        %s272 = smul.u32 64, %s21
        %s273 = smul.u32 64, %s21
        %p274 = scmp.lt.s32.totalorder %s273, 511
        %s275 = scalar_select %p274, %s273, 511
        %p276 = scmp.lt.s32.totalorder %s22, 0
        %s277 = scalar_select %p276, %s22, 0
        %s278 = sadd.s32 %s277, %s275
        %s279 = smul.addr %s278, 8
        %s280 = scalar_lea.vmem %s4, %s279
        %s281 = smul.u32 64, %s21
        %v283 = vld [vmem:[#allocation2] sm:$0xf]
        %v284 = vld [vmem:[#allocation2 + $0x4] sm:$0xf]
        %v285 = vld [vmem:[#allocation2 + $0x8] sm:$0xf]
        %v286 = vld [vmem:[#allocation2 + $0xc] sm:$0xf]
        %v287 = vld [vmem:[#allocation2 + $0x10] sm:$0xf]
        %v288 = vld [vmem:[#allocation2 + $0x14] sm:$0xf]
        %v289 = vld [vmem:[#allocation2 + $0x18] sm:$0xf]
        %v290 = vld [vmem:[#allocation2 + $0x1c] sm:$0xf]
        %v291 = vld [vmem:[#allocation2 + $0x20] sm:$0xf]
        %v292 = vld [vmem:[#allocation2 + $0x24] sm:$0xf]
        %v293 = vld [vmem:[#allocation2 + $0x28] sm:$0xf]
        %v294 = vld [vmem:[#allocation2 + $0x2c] sm:$0xf]
        %v295 = vld [vmem:[#allocation2 + $0x30] sm:$0xf]
        %v296 = vld [vmem:[#allocation2 + $0x34] sm:$0xf]
        %v297 = vld [vmem:[#allocation2 + $0x38] sm:$0xf]
        %v298 = vld [vmem:[#allocation2 + $0x3c] sm:$0xf]
        %v299 = vld [vmem:[%s271] sm:$0xf]
        %v300 = vld [vmem:[%s271 + $0x4] sm:$0xf]
        %v301 = vld [vmem:[%s271 + $0x8] sm:$0xf]
        %v302 = vld [vmem:[%s271 + $0xc] sm:$0xf]
        %v303 = vld [vmem:[%s271 + $0x10] sm:$0xf]
        %v304 = vld [vmem:[%s271 + $0x14] sm:$0xf]
        %v305 = vld [vmem:[%s271 + $0x18] sm:$0xf]
        %v306 = vld [vmem:[%s271 + $0x1c] sm:$0xf]
        %v307 = vld [vmem:[%s271 + $0x20] sm:$0xf]
        %v308 = vld [vmem:[%s271 + $0x24] sm:$0xf]
        %v309 = vld [vmem:[%s271 + $0x28] sm:$0xf]
        %v310 = vld [vmem:[%s271 + $0x2c] sm:$0xf]
        %v311 = vld [vmem:[%s271 + $0x30] sm:$0xf]
        %v312 = vld [vmem:[%s271 + $0x34] sm:$0xf]
        %v313 = vld [vmem:[%s271 + $0x38] sm:$0xf]
        %v314 = vld [vmem:[%s271 + $0x3c] sm:$0xf]
        %v315 = vld [vmem:[%s271 + $0x40] sm:$0xf]
        %v316 = vld [vmem:[%s271 + $0x44] sm:$0xf]
        %v317 = vld [vmem:[%s271 + $0x48] sm:$0xf]
        %v318 = vld [vmem:[%s271 + $0x4c] sm:$0xf]
        %v319 = vld [vmem:[%s271 + $0x50] sm:$0xf]
        %v320 = vld [vmem:[%s271 + $0x54] sm:$0xf]
        %v321 = vld [vmem:[%s271 + $0x58] sm:$0xf]
        %v322 = vld [vmem:[%s271 + $0x5c] sm:$0xf]
        %v323 = vld [vmem:[%s271 + $0x60] sm:$0xf]
        %v324 = vld [vmem:[%s271 + $0x64] sm:$0xf]
        %v325 = vld [vmem:[%s271 + $0x68] sm:$0xf]
        %v326 = vld [vmem:[%s271 + $0x6c] sm:$0xf]
        %v327 = vld [vmem:[%s271 + $0x70] sm:$0xf]
        %v328 = vld [vmem:[%s271 + $0x74] sm:$0xf]
        %v329 = vld [vmem:[%s271 + $0x78] sm:$0xf]
        %v330 = vld [vmem:[%s271 + $0x7c] sm:$0xf]
        %v331 = vld [vmem:[%s271 + $0x80] sm:$0xf]
        %v332 = vld [vmem:[%s271 + $0x84] sm:$0xf]
        %v333 = vld [vmem:[%s271 + $0x88] sm:$0xf]
        %v334 = vld [vmem:[%s271 + $0x8c] sm:$0xf]
        %v335 = vld [vmem:[%s271 + $0x90] sm:$0xf]
        %v336 = vld [vmem:[%s271 + $0x94] sm:$0xf]
        %v337 = vld [vmem:[%s271 + $0x98] sm:$0xf]
        %v338 = vld [vmem:[%s271 + $0x9c] sm:$0xf]
        %v339 = vld [vmem:[%s271 + $0xa0] sm:$0xf]
        %v340 = vld [vmem:[%s271 + $0xa4] sm:$0xf]
        %v341 = vld [vmem:[%s271 + $0xa8] sm:$0xf]
        %v342 = vld [vmem:[%s271 + $0xac] sm:$0xf]
        %v343 = vld [vmem:[%s271 + $0xb0] sm:$0xf]
        %v344 = vld [vmem:[%s271 + $0xb4] sm:$0xf]
        %v345 = vld [vmem:[%s271 + $0xb8] sm:$0xf]
        %v346 = vld [vmem:[%s271 + $0xbc] sm:$0xf]
        %v347 = vld [vmem:[%s271 + $0xc0] sm:$0xf]
        %v348 = vld [vmem:[%s271 + $0xc4] sm:$0xf]
        %v349 = vld [vmem:[%s271 + $0xc8] sm:$0xf]
        %v350 = vld [vmem:[%s271 + $0xcc] sm:$0xf]
        %v351 = vld [vmem:[%s271 + $0xd0] sm:$0xf]
        %v352 = vld [vmem:[%s271 + $0xd4] sm:$0xf]
        %v353 = vld [vmem:[%s271 + $0xd8] sm:$0xf]
        %v354 = vld [vmem:[%s271 + $0xdc] sm:$0xf]
        %v355 = vld [vmem:[%s271 + $0xe0] sm:$0xf]
        %v356 = vld [vmem:[%s271 + $0xe4] sm:$0xf]
        %v357 = vld [vmem:[%s271 + $0xe8] sm:$0xf]
        %v358 = vld [vmem:[%s271 + $0xec] sm:$0xf]
        %v359 = vld [vmem:[%s271 + $0xf0] sm:$0xf]
        %v360 = vld [vmem:[%s271 + $0xf4] sm:$0xf]
        %v361 = vld [vmem:[%s271 + $0xf8] sm:$0xf]
        %v362 = vld [vmem:[%s271 + $0xfc] sm:$0xf]
        %v427 = vunpack.c.l.b16 %v299
        %v428 = vunpack.c.l.b16 %v300
        %v429 = vunpack.c.l.b16 %v301
        %v430 = vunpack.c.l.b16 %v302
        %v431 = vunpack.c.l.b16 %v303
        %v432 = vunpack.c.l.b16 %v304
        %v433 = vunpack.c.l.b16 %v305
        %v434 = vunpack.c.l.b16 %v306
        %v435 = vunpack.c.l.b16 %v307
        %v436 = vunpack.c.l.b16 %v308
        %v437 = vunpack.c.l.b16 %v309
        %v438 = vunpack.c.l.b16 %v310
        %v439 = vunpack.c.l.b16 %v311
        %v440 = vunpack.c.l.b16 %v312
        %v441 = vunpack.c.l.b16 %v313
        %v442 = vunpack.c.l.b16 %v314
        %v443 = vunpack.c.l.b16 %v315
        %v444 = vunpack.c.l.b16 %v316
        %v445 = vunpack.c.l.b16 %v317
        %v446 = vunpack.c.l.b16 %v318
        %v447 = vunpack.c.l.b16 %v319
        %v448 = vunpack.c.l.b16 %v320
        %v449 = vunpack.c.l.b16 %v321
        %v450 = vunpack.c.l.b16 %v322
        %v451 = vunpack.c.l.b16 %v323
        %v452 = vunpack.c.l.b16 %v324
        %v453 = vunpack.c.l.b16 %v325
        %v454 = vunpack.c.l.b16 %v326
        %v455 = vunpack.c.l.b16 %v327
        %v456 = vunpack.c.l.b16 %v328
        %v457 = vunpack.c.l.b16 %v329
        %v458 = vunpack.c.l.b16 %v330
        %v459 = vunpack.c.l.b16 %v331
        %v460 = vunpack.c.l.b16 %v332
        %v461 = vunpack.c.l.b16 %v333
        %v462 = vunpack.c.l.b16 %v334
        %v463 = vunpack.c.l.b16 %v335
        %v464 = vunpack.c.l.b16 %v336
        %v465 = vunpack.c.l.b16 %v337
        %v466 = vunpack.c.l.b16 %v338
        %v467 = vunpack.c.l.b16 %v339
        %v468 = vunpack.c.l.b16 %v340
        %v469 = vunpack.c.l.b16 %v341
        %v470 = vunpack.c.l.b16 %v342
        %v471 = vunpack.c.l.b16 %v343
        %v472 = vunpack.c.l.b16 %v344
        %v473 = vunpack.c.l.b16 %v345
        %v474 = vunpack.c.l.b16 %v346
        %v475 = vunpack.c.l.b16 %v347
        %v476 = vunpack.c.l.b16 %v348
        %v477 = vunpack.c.l.b16 %v349
        %v478 = vunpack.c.l.b16 %v350
        %v479 = vunpack.c.l.b16 %v351
        %v480 = vunpack.c.l.b16 %v352
        %v481 = vunpack.c.l.b16 %v353
        %v482 = vunpack.c.l.b16 %v354
        %v483 = vunpack.c.l.b16 %v355
        %v484 = vunpack.c.l.b16 %v356
        %v485 = vunpack.c.l.b16 %v357
        %v486 = vunpack.c.l.b16 %v358
        %v487 = vunpack.c.l.b16 %v359
        %v488 = vunpack.c.l.b16 %v360
        %v489 = vunpack.c.l.b16 %v361
        %v490 = vunpack.c.l.b16 %v362
        %v491 = vpack.c.b16 %v428, %v427
        %v492 = vpack.c.b16 %v430, %v429
        %v493 = vpack.c.b16 %v432, %v431
        %v494 = vpack.c.b16 %v434, %v433
        %v495 = vpack.c.b16 %v436, %v435
        %v496 = vpack.c.b16 %v438, %v437
        %v497 = vpack.c.b16 %v440, %v439
        %v498 = vpack.c.b16 %v442, %v441
        %v499 = vpack.c.b16 %v444, %v443
        %v500 = vpack.c.b16 %v446, %v445
        %v501 = vpack.c.b16 %v448, %v447
        %v502 = vpack.c.b16 %v450, %v449
        %v503 = vpack.c.b16 %v452, %v451
        %v504 = vpack.c.b16 %v454, %v453
        %v505 = vpack.c.b16 %v456, %v455
        %v506 = vpack.c.b16 %v458, %v457
        %v507 = vpack.c.b16 %v460, %v459
        %v508 = vpack.c.b16 %v462, %v461
        %v509 = vpack.c.b16 %v464, %v463
        %v510 = vpack.c.b16 %v466, %v465
        %v511 = vpack.c.b16 %v468, %v467
        %v512 = vpack.c.b16 %v470, %v469
        %v513 = vpack.c.b16 %v472, %v471
        %v514 = vpack.c.b16 %v474, %v473
        %v515 = vpack.c.b16 %v476, %v475
        %v516 = vpack.c.b16 %v478, %v477
        %v517 = vpack.c.b16 %v480, %v479
        %v518 = vpack.c.b16 %v482, %v481
        %v519 = vpack.c.b16 %v484, %v483
        %v520 = vpack.c.b16 %v486, %v485
        %v521 = vpack.c.b16 %v488, %v487
        %v522 = vpack.c.b16 %v490, %v489
        %v571 = vunpack.c.l.b16 %v283
        %v572 = vunpack.c.l.b16 %v284
        %v573 = vunpack.c.l.b16 %v285
        %v574 = vunpack.c.l.b16 %v286
        %v575 = vunpack.c.l.b16 %v287
        %v576 = vunpack.c.l.b16 %v288
        %v577 = vunpack.c.l.b16 %v289
        %v578 = vunpack.c.l.b16 %v290
        %v579 = vunpack.c.l.b16 %v291
        %v580 = vunpack.c.l.b16 %v292
        %v581 = vunpack.c.l.b16 %v293
        %v582 = vunpack.c.l.b16 %v294
        %v583 = vunpack.c.l.b16 %v295
        %v584 = vunpack.c.l.b16 %v296
        %v585 = vunpack.c.l.b16 %v297
        %v586 = vunpack.c.l.b16 %v298
        %v587 = vpack.c.b16 %v572, %v571
        %v588 = vpack.c.b16 %v574, %v573
        %v589 = vpack.c.b16 %v576, %v575
        %v590 = vpack.c.b16 %v578, %v577
        %v591 = vpack.c.b16 %v580, %v579
        %v592 = vpack.c.b16 %v582, %v581
        %v593 = vpack.c.b16 %v584, %v583
        %v594 = vpack.c.b16 %v586, %v585
        %603 = vmatprep.subr.bf16.mxu0 0
        %604 = vmatpush1.bf16.msra.mxu0 %v587
        %605 = vmatprep.subr.bf16.mxu0 0
        %606 = vmatpush1.bf16.msra.mxu0 %v588
        %607 = vmatprep.subr.bf16.mxu0 0
        %608 = vmatpush1.bf16.msra.mxu0 %v589
        %609 = vmatprep.subr.bf16.mxu0 0
        %610 = vmatpush1.bf16.msra.mxu0 %v590
        %611 = vmatprep.subr.bf16.mxu0 0
        %612 = vmatpush1.bf16.msra.mxu0 %v591
        %613 = vmatprep.subr.bf16.mxu0 0
        %614 = vmatpush1.bf16.msra.mxu0 %v592
        %615 = vmatprep.subr.bf16.mxu0 0
        %616 = vmatpush1.bf16.msra.mxu0 %v593
        %617 = vmatprep.subr.bf16.mxu0 0
        %618 = vmatpush1.bf16.msra.mxu0 %v594
        %619 = vmatprep.subr.bf16.mxu0 0
        %620 = vmatpush1.bf16.msra.mxu0 0
        %621 = vmatprep.subr.bf16.mxu0 0
        %622 = vmatpush1.bf16.msra.mxu0 0
        %623 = vmatprep.subr.bf16.mxu0 0
        %624 = vmatpush1.bf16.msra.mxu0 0
        %625 = vmatprep.subr.bf16.mxu0 0
        %626 = vmatpush1.bf16.msra.mxu0 0
        %627 = vmatprep.subr.bf16.mxu0 0
        %628 = vmatpush1.bf16.msra.mxu0 0
        %629 = vmatprep.subr.bf16.mxu0 0
        %630 = vmatpush1.bf16.msra.mxu0 0
        %631 = vmatprep.subr.bf16.mxu0 0
        %632 = vmatpush1.bf16.msra.mxu0 0
        %633 = vmatprep.subr.bf16.mxu0 0
        %634 = vmatpush1.bf16.msra.mxu0 0
        %635 = vmatprep.mubr.bf16.mxu0 0
        %636 = vmatmul.mubr.bf16.gmra.mrb[0].mxu0 %v491
        %v637 = vpop.f32.mrb[0].mxu0
        %v638 = vadd.f32 0.0, %v637
        %v639 = vpop.f32.mrb[0].mxu0
        %v640 = vpop.f32.mrb[0].mxu0
        %v641 = vadd.f32 0.0, %v640
        %v642 = vpop.f32.mrb[0].mxu0
        %643 = vmatprep.mubr.bf16.mxu0 0
        %644 = vmatmul.mubr.bf16.gmra.mrb[0].mxu0 %v492
        %v645 = vpop.f32.mrb[0].mxu0
        %v646 = vadd.f32 0.0, %v645
        %v647 = vpop.f32.mrb[0].mxu0
        %v648 = vpop.f32.mrb[0].mxu0
        %v649 = vadd.f32 0.0, %v648
        %v650 = vpop.f32.mrb[0].mxu0
        %651 = vmatprep.mubr.bf16.mxu0 0
        %652 = vmatmul.mubr.bf16.gmra.mrb[0].mxu0 %v493
        %v653 = vpop.f32.mrb[0].mxu0
        %v654 = vadd.f32 0.0, %v653
        %v655 = vpop.f32.mrb[0].mxu0
        %v656 = vpop.f32.mrb[0].mxu0
        %v657 = vadd.f32 0.0, %v656
        %v658 = vpop.f32.mrb[0].mxu0
        %659 = vmatprep.mubr.bf16.mxu0 0
        %660 = vmatmul.mubr.bf16.gmra.mrb[0].mxu0 %v494
        %v661 = vpop.f32.mrb[0].mxu0
        %v662 = vadd.f32 0.0, %v661
        %v663 = vpop.f32.mrb[0].mxu0
        %v664 = vpop.f32.mrb[0].mxu0
        %v665 = vadd.f32 0.0, %v664
        %v666 = vpop.f32.mrb[0].mxu0
        %667 = vmatprep.mubr.bf16.mxu0 0
        %668 = vmatmul.mubr.bf16.gmra.mrb[0].mxu0 %v495
        %v669 = vpop.f32.mrb[0].mxu0
        %v670 = vadd.f32 0.0, %v669
        %v671 = vpop.f32.mrb[0].mxu0
        %v672 = vpop.f32.mrb[0].mxu0
        %v673 = vadd.f32 0.0, %v672
        %v674 = vpop.f32.mrb[0].mxu0
        %675 = vmatprep.mubr.bf16.mxu0 0
        %676 = vmatmul.mubr.bf16.gmra.mrb[0].mxu0 %v496
        %v677 = vpop.f32.mrb[0].mxu0
        %v678 = vadd.f32 0.0, %v677
        %v679 = vpop.f32.mrb[0].mxu0
        %v680 = vpop.f32.mrb[0].mxu0
        %v681 = vadd.f32 0.0, %v680
        %v682 = vpop.f32.mrb[0].mxu0
        %683 = vmatprep.mubr.bf16.mxu0 0
        %684 = vmatmul.mubr.bf16.gmra.mrb[0].mxu0 %v497
        %v685 = vpop.f32.mrb[0].mxu0
        %v686 = vadd.f32 0.0, %v685
        %v687 = vpop.f32.mrb[0].mxu0
        %v688 = vpop.f32.mrb[0].mxu0
        %v689 = vadd.f32 0.0, %v688
        %v690 = vpop.f32.mrb[0].mxu0
        %691 = vmatprep.mubr.bf16.mxu0 0
        %692 = vmatmul.mubr.bf16.gmra.mrb[0].mxu0 %v498
        %v693 = vpop.f32.mrb[0].mxu0
        %v694 = vadd.f32 0.0, %v693
        %v695 = vpop.f32.mrb[0].mxu0
        %v696 = vpop.f32.mrb[0].mxu0
        %v697 = vadd.f32 0.0, %v696
        %v698 = vpop.f32.mrb[0].mxu0
        %699 = vmatprep.mubr.bf16.mxu0 0
        %700 = vmatmul.mubr.bf16.gmra.mrb[0].mxu0 %v499
        %v701 = vpop.f32.mrb[0].mxu0
        %v702 = vadd.f32 0.0, %v701
        %v703 = vpop.f32.mrb[0].mxu0
        %v704 = vpop.f32.mrb[0].mxu0
        %v705 = vadd.f32 0.0, %v704
        %v706 = vpop.f32.mrb[0].mxu0
        %707 = vmatprep.mubr.bf16.mxu0 0
        %708 = vmatmul.mubr.bf16.gmra.mrb[0].mxu0 %v500
        %v709 = vpop.f32.mrb[0].mxu0
        %v710 = vadd.f32 0.0, %v709
        %v711 = vpop.f32.mrb[0].mxu0
        %v712 = vpop.f32.mrb[0].mxu0
        %v713 = vadd.f32 0.0, %v712
        %v714 = vpop.f32.mrb[0].mxu0
        %715 = vmatprep.mubr.bf16.mxu0 0
        %716 = vmatmul.mubr.bf16.gmra.mrb[0].mxu0 %v501
        %v717 = vpop.f32.mrb[0].mxu0
        %v718 = vadd.f32 0.0, %v717
        %v719 = vpop.f32.mrb[0].mxu0
        %v720 = vpop.f32.mrb[0].mxu0
        %v721 = vadd.f32 0.0, %v720
        %v722 = vpop.f32.mrb[0].mxu0
        %723 = vmatprep.mubr.bf16.mxu0 0
        %724 = vmatmul.mubr.bf16.gmra.mrb[0].mxu0 %v502
        %v725 = vpop.f32.mrb[0].mxu0
        %v726 = vadd.f32 0.0, %v725
        %v727 = vpop.f32.mrb[0].mxu0
        %v728 = vpop.f32.mrb[0].mxu0
        %v729 = vadd.f32 0.0, %v728
        %v730 = vpop.f32.mrb[0].mxu0
        %731 = vmatprep.mubr.bf16.mxu0 0
        %732 = vmatmul.mubr.bf16.gmra.mrb[0].mxu0 %v503
        %v733 = vpop.f32.mrb[0].mxu0
        %v734 = vadd.f32 0.0, %v733
        %v735 = vpop.f32.mrb[0].mxu0
        %v736 = vpop.f32.mrb[0].mxu0
        %v737 = vadd.f32 0.0, %v736
        %v738 = vpop.f32.mrb[0].mxu0
        %739 = vmatprep.mubr.bf16.mxu0 0
        %740 = vmatmul.mubr.bf16.gmra.mrb[0].mxu0 %v504
        %v741 = vpop.f32.mrb[0].mxu0
        %v742 = vadd.f32 0.0, %v741
        %v743 = vpop.f32.mrb[0].mxu0
        %v744 = vpop.f32.mrb[0].mxu0
        %v745 = vadd.f32 0.0, %v744
        %v746 = vpop.f32.mrb[0].mxu0
        %747 = vmatprep.mubr.bf16.mxu0 0
        %748 = vmatmul.mubr.bf16.gmra.mrb[0].mxu0 %v505
        %v749 = vpop.f32.mrb[0].mxu0
        %v750 = vadd.f32 0.0, %v749
        %v751 = vpop.f32.mrb[0].mxu0
        %v752 = vpop.f32.mrb[0].mxu0
        %v753 = vadd.f32 0.0, %v752
        %v754 = vpop.f32.mrb[0].mxu0
        %755 = vmatprep.mubr.bf16.mxu0 0
        %756 = vmatmul.mubr.bf16.gmra.mrb[0].mxu0 %v506
        %v757 = vpop.f32.mrb[0].mxu0
        %v758 = vadd.f32 0.0, %v757
        %v759 = vpop.f32.mrb[0].mxu0
        %v760 = vpop.f32.mrb[0].mxu0
        %v761 = vadd.f32 0.0, %v760
        %v762 = vpop.f32.mrb[0].mxu0
        %763 = vmatprep.mubr.bf16.mxu0 0
        %764 = vmatmul.mubr.bf16.gmra.mrb[0].mxu0 %v507
        %v765 = vpop.f32.mrb[0].mxu0
        %v766 = vadd.f32 0.0, %v765
        %v767 = vpop.f32.mrb[0].mxu0
        %v768 = vpop.f32.mrb[0].mxu0
        %v769 = vadd.f32 0.0, %v768
        %v770 = vpop.f32.mrb[0].mxu0
        %771 = vmatprep.mubr.bf16.mxu0 0
        %772 = vmatmul.mubr.bf16.gmra.mrb[0].mxu0 %v508
        %v773 = vpop.f32.mrb[0].mxu0
        %v774 = vadd.f32 0.0, %v773
        %v775 = vpop.f32.mrb[0].mxu0
        %v776 = vpop.f32.mrb[0].mxu0
        %v777 = vadd.f32 0.0, %v776
        %v778 = vpop.f32.mrb[0].mxu0
        %779 = vmatprep.mubr.bf16.mxu0 0
        %780 = vmatmul.mubr.bf16.gmra.mrb[0].mxu0 %v509
        %v781 = vpop.f32.mrb[0].mxu0
        %v782 = vadd.f32 0.0, %v781
        %v783 = vpop.f32.mrb[0].mxu0
        %v784 = vpop.f32.mrb[0].mxu0
        %v785 = vadd.f32 0.0, %v784
        %v786 = vpop.f32.mrb[0].mxu0
        %787 = vmatprep.mubr.bf16.mxu0 0
        %788 = vmatmul.mubr.bf16.gmra.mrb[0].mxu0 %v510
        %v789 = vpop.f32.mrb[0].mxu0
        %v790 = vadd.f32 0.0, %v789
        %v791 = vpop.f32.mrb[0].mxu0
        %v792 = vpop.f32.mrb[0].mxu0
        %v793 = vadd.f32 0.0, %v792
        %v794 = vpop.f32.mrb[0].mxu0
        %795 = vmatprep.mubr.bf16.mxu0 0
        %796 = vmatmul.mubr.bf16.gmra.mrb[0].mxu0 %v511
        %v797 = vpop.f32.mrb[0].mxu0
        %v798 = vadd.f32 0.0, %v797
        %v799 = vpop.f32.mrb[0].mxu0
        %v800 = vpop.f32.mrb[0].mxu0
        %v801 = vadd.f32 0.0, %v800
        %v802 = vpop.f32.mrb[0].mxu0
        %803 = vmatprep.mubr.bf16.mxu0 0
        %804 = vmatmul.mubr.bf16.gmra.mrb[0].mxu0 %v512
        %v805 = vpop.f32.mrb[0].mxu0
        %v806 = vadd.f32 0.0, %v805
        %v807 = vpop.f32.mrb[0].mxu0
        %v808 = vpop.f32.mrb[0].mxu0
        %v809 = vadd.f32 0.0, %v808
        %v810 = vpop.f32.mrb[0].mxu0
        %811 = vmatprep.mubr.bf16.mxu0 0
        %812 = vmatmul.mubr.bf16.gmra.mrb[0].mxu0 %v513
        %v813 = vpop.f32.mrb[0].mxu0
        %v814 = vadd.f32 0.0, %v813
        %v815 = vpop.f32.mrb[0].mxu0
        %v816 = vpop.f32.mrb[0].mxu0
        %v817 = vadd.f32 0.0, %v816
        %v818 = vpop.f32.mrb[0].mxu0
        %819 = vmatprep.mubr.bf16.mxu0 0
        %820 = vmatmul.mubr.bf16.gmra.mrb[0].mxu0 %v514
        %v821 = vpop.f32.mrb[0].mxu0
        %v822 = vadd.f32 0.0, %v821
        %v823 = vpop.f32.mrb[0].mxu0
        %v824 = vpop.f32.mrb[0].mxu0
        %v825 = vadd.f32 0.0, %v824
        %v826 = vpop.f32.mrb[0].mxu0
        %827 = vmatprep.mubr.bf16.mxu0 0
        %828 = vmatmul.mubr.bf16.gmra.mrb[0].mxu0 %v515
        %v829 = vpop.f32.mrb[0].mxu0
        %v830 = vadd.f32 0.0, %v829
        %v831 = vpop.f32.mrb[0].mxu0
        %v832 = vpop.f32.mrb[0].mxu0
        %v833 = vadd.f32 0.0, %v832
        %v834 = vpop.f32.mrb[0].mxu0
        %835 = vmatprep.mubr.bf16.mxu0 0
        %836 = vmatmul.mubr.bf16.gmra.mrb[0].mxu0 %v516
        %v837 = vpop.f32.mrb[0].mxu0
        %v838 = vadd.f32 0.0, %v837
        %v839 = vpop.f32.mrb[0].mxu0
        %v840 = vpop.f32.mrb[0].mxu0
        %v841 = vadd.f32 0.0, %v840
        %v842 = vpop.f32.mrb[0].mxu0
        %843 = vmatprep.mubr.bf16.mxu0 0
        %844 = vmatmul.mubr.bf16.gmra.mrb[0].mxu0 %v517
        %v845 = vpop.f32.mrb[0].mxu0
        %v846 = vadd.f32 0.0, %v845
        %v847 = vpop.f32.mrb[0].mxu0
        %v848 = vpop.f32.mrb[0].mxu0
        %v849 = vadd.f32 0.0, %v848
        %v850 = vpop.f32.mrb[0].mxu0
        %851 = vmatprep.mubr.bf16.mxu0 0
        %852 = vmatmul.mubr.bf16.gmra.mrb[0].mxu0 %v518
        %v853 = vpop.f32.mrb[0].mxu0
        %v854 = vadd.f32 0.0, %v853
        %v855 = vpop.f32.mrb[0].mxu0
        %v856 = vpop.f32.mrb[0].mxu0
        %v857 = vadd.f32 0.0, %v856
        %v858 = vpop.f32.mrb[0].mxu0
        %859 = vmatprep.mubr.bf16.mxu0 0
        %860 = vmatmul.mubr.bf16.gmra.mrb[0].mxu0 %v519
        %v861 = vpop.f32.mrb[0].mxu0
        %v862 = vadd.f32 0.0, %v861
        %v863 = vpop.f32.mrb[0].mxu0
        %v864 = vpop.f32.mrb[0].mxu0
        %v865 = vadd.f32 0.0, %v864
        %v866 = vpop.f32.mrb[0].mxu0
        %867 = vmatprep.mubr.bf16.mxu0 0
        %868 = vmatmul.mubr.bf16.gmra.mrb[0].mxu0 %v520
        %v869 = vpop.f32.mrb[0].mxu0
        %v870 = vadd.f32 0.0, %v869
        %v871 = vpop.f32.mrb[0].mxu0
        %v872 = vpop.f32.mrb[0].mxu0
        %v873 = vadd.f32 0.0, %v872
        %v874 = vpop.f32.mrb[0].mxu0
        %875 = vmatprep.mubr.bf16.mxu0 0
        %876 = vmatmul.mubr.bf16.gmra.mrb[0].mxu0 %v521
        %v877 = vpop.f32.mrb[0].mxu0
        %v878 = vadd.f32 0.0, %v877
        %v879 = vpop.f32.mrb[0].mxu0
        %v880 = vpop.f32.mrb[0].mxu0
        %v881 = vadd.f32 0.0, %v880
        %v882 = vpop.f32.mrb[0].mxu0
        %883 = vmatprep.mubr.bf16.mxu0 0
        %884 = vmatmul.mubr.bf16.gmra.mrb[0].mxu0 %v522
        %v885 = vpop.f32.mrb[0].mxu0
        %v886 = vadd.f32 0.0, %v885
        %v887 = vpop.f32.mrb[0].mxu0
        %v888 = vpop.f32.mrb[0].mxu0
        %v889 = vadd.f32 0.0, %v888
        %v890 = vpop.f32.mrb[0].mxu0
        %891 = vdwg.mxu0
        %v892 = vld [vmem:[#allocation4] sm:$0x1]
        %v894 = vlaneseq
        %v895 = vshrl.u32 %v894, 7
        %v896 = vsub.s32 0, %v895
        %v897 = vrot.slane %v892, %v896
        %v899 = vmul.f32 %v638, %v897
        %v900 = vmul.f32 %v641, %v897
        %v901 = vmul.f32 %v646, %v897
        %v902 = vmul.f32 %v649, %v897
        %v903 = vmul.f32 %v654, %v897
        %v904 = vmul.f32 %v657, %v897
        %v905 = vmul.f32 %v662, %v897
        %v906 = vmul.f32 %v665, %v897
        %v907 = vmul.f32 %v670, %v897
        %v908 = vmul.f32 %v673, %v897
        %v909 = vmul.f32 %v678, %v897
        %v910 = vmul.f32 %v681, %v897
        %v911 = vmul.f32 %v686, %v897
        %v912 = vmul.f32 %v689, %v897
        %v913 = vmul.f32 %v694, %v897
        %v914 = vmul.f32 %v697, %v897
        %v915 = vmul.f32 %v702, %v897
        %v916 = vmul.f32 %v705, %v897
        %v917 = vmul.f32 %v710, %v897
        %v918 = vmul.f32 %v713, %v897
        %v919 = vmul.f32 %v718, %v897
        %v920 = vmul.f32 %v721, %v897
        %v921 = vmul.f32 %v726, %v897
        %v922 = vmul.f32 %v729, %v897
        %v923 = vmul.f32 %v734, %v897
        %v924 = vmul.f32 %v737, %v897
        %v925 = vmul.f32 %v742, %v897
        %v926 = vmul.f32 %v745, %v897
        %v927 = vmul.f32 %v750, %v897
        %v928 = vmul.f32 %v753, %v897
        %v929 = vmul.f32 %v758, %v897
        %v930 = vmul.f32 %v761, %v897
        %v931 = vmul.f32 %v766, %v897
        %v932 = vmul.f32 %v769, %v897
        %v933 = vmul.f32 %v774, %v897
        %v934 = vmul.f32 %v777, %v897
        %v935 = vmul.f32 %v782, %v897
        %v936 = vmul.f32 %v785, %v897
        %v937 = vmul.f32 %v790, %v897
        %v938 = vmul.f32 %v793, %v897
        %v939 = vmul.f32 %v798, %v897
        %v940 = vmul.f32 %v801, %v897
        %v941 = vmul.f32 %v806, %v897
        %v942 = vmul.f32 %v809, %v897
        %v943 = vmul.f32 %v814, %v897
        %v944 = vmul.f32 %v817, %v897
        %v945 = vmul.f32 %v822, %v897
        %v946 = vmul.f32 %v825, %v897
        %v947 = vmul.f32 %v830, %v897
        %v948 = vmul.f32 %v833, %v897
        %v949 = vmul.f32 %v838, %v897
        %v950 = vmul.f32 %v841, %v897
        %v951 = vmul.f32 %v846, %v897
        %v952 = vmul.f32 %v849, %v897
        %v953 = vmul.f32 %v854, %v897
        %v954 = vmul.f32 %v857, %v897
        %v955 = vmul.f32 %v862, %v897
        %v956 = vmul.f32 %v865, %v897
        %v957 = vmul.f32 %v870, %v897
        %v958 = vmul.f32 %v873, %v897
        %v959 = vmul.f32 %v878, %v897
        %v960 = vmul.f32 %v881, %v897
        %v961 = vmul.f32 %v886, %v897
        %v962 = vmul.f32 %v889, %v897
        %v963 = vld [vmem:[#allocation6] sm:$0x1]
        %v965 = vlaneseq
        %v966 = vshrl.u32 %v965, 7
        %v967 = vsub.s32 0, %v966
        %v968 = vrot.slane %v963, %v967
        %v970 = vadd.f32 %v899, %v968
        %v971 = vadd.f32 %v900, %v968
        %v972 = vadd.f32 %v901, %v968
        %v973 = vadd.f32 %v902, %v968
        %v974 = vadd.f32 %v903, %v968
        %v975 = vadd.f32 %v904, %v968
        %v976 = vadd.f32 %v905, %v968
        %v977 = vadd.f32 %v906, %v968
        %v978 = vadd.f32 %v907, %v968
        %v979 = vadd.f32 %v908, %v968
        %v980 = vadd.f32 %v909, %v968
        %v981 = vadd.f32 %v910, %v968
        %v982 = vadd.f32 %v911, %v968
        %v983 = vadd.f32 %v912, %v968
        %v984 = vadd.f32 %v913, %v968
        %v985 = vadd.f32 %v914, %v968
        %v986 = vadd.f32 %v915, %v968
        %v987 = vadd.f32 %v916, %v968
        %v988 = vadd.f32 %v917, %v968
        %v989 = vadd.f32 %v918, %v968
        %v990 = vadd.f32 %v919, %v968
        %v991 = vadd.f32 %v920, %v968
        %v992 = vadd.f32 %v921, %v968
        %v993 = vadd.f32 %v922, %v968
        %v994 = vadd.f32 %v923, %v968
        %v995 = vadd.f32 %v924, %v968
        %v996 = vadd.f32 %v925, %v968
        %v997 = vadd.f32 %v926, %v968
        %v998 = vadd.f32 %v927, %v968
        %v999 = vadd.f32 %v928, %v968
        %v1000 = vadd.f32 %v929, %v968
        %v1001 = vadd.f32 %v930, %v968
        %v1002 = vadd.f32 %v931, %v968
        %v1003 = vadd.f32 %v932, %v968
        %v1004 = vadd.f32 %v933, %v968
        %v1005 = vadd.f32 %v934, %v968
        %v1006 = vadd.f32 %v935, %v968
        %v1007 = vadd.f32 %v936, %v968
        %v1008 = vadd.f32 %v937, %v968
        %v1009 = vadd.f32 %v938, %v968
        %v1010 = vadd.f32 %v939, %v968
        %v1011 = vadd.f32 %v940, %v968
        %v1012 = vadd.f32 %v941, %v968
        %v1013 = vadd.f32 %v942, %v968
        %v1014 = vadd.f32 %v943, %v968
        %v1015 = vadd.f32 %v944, %v968
        %v1016 = vadd.f32 %v945, %v968
        %v1017 = vadd.f32 %v946, %v968
        %v1018 = vadd.f32 %v947, %v968
        %v1019 = vadd.f32 %v948, %v968
        %v1020 = vadd.f32 %v949, %v968
        %v1021 = vadd.f32 %v950, %v968
        %v1022 = vadd.f32 %v951, %v968
        %v1023 = vadd.f32 %v952, %v968
        %v1024 = vadd.f32 %v953, %v968
        %v1025 = vadd.f32 %v954, %v968
        %v1026 = vadd.f32 %v955, %v968
        %v1027 = vadd.f32 %v956, %v968
        %v1028 = vadd.f32 %v957, %v968
        %v1029 = vadd.f32 %v958, %v968
        %v1030 = vadd.f32 %v959, %v968
        %v1031 = vadd.f32 %v960, %v968
        %v1032 = vadd.f32 %v961, %v968
        %v1033 = vadd.f32 %v962, %v968
        %v1034 = vmax.f32 %v970, 0.0
        %v1035 = vmax.f32 %v971, 0.0
        %v1036 = vmax.f32 %v972, 0.0
        %v1037 = vmax.f32 %v973, 0.0
        %v1038 = vmax.f32 %v974, 0.0
        %v1039 = vmax.f32 %v975, 0.0
        %v1040 = vmax.f32 %v976, 0.0
        %v1041 = vmax.f32 %v977, 0.0
        %v1042 = vmax.f32 %v978, 0.0
        %v1043 = vmax.f32 %v979, 0.0
        %v1044 = vmax.f32 %v980, 0.0
        %v1045 = vmax.f32 %v981, 0.0
        %v1046 = vmax.f32 %v982, 0.0
        %v1047 = vmax.f32 %v983, 0.0
        %v1048 = vmax.f32 %v984, 0.0
        %v1049 = vmax.f32 %v985, 0.0
        %v1050 = vmax.f32 %v986, 0.0
        %v1051 = vmax.f32 %v987, 0.0
        %v1052 = vmax.f32 %v988, 0.0
        %v1053 = vmax.f32 %v989, 0.0
        %v1054 = vmax.f32 %v990, 0.0
        %v1055 = vmax.f32 %v991, 0.0
        %v1056 = vmax.f32 %v992, 0.0
        %v1057 = vmax.f32 %v993, 0.0
        %v1058 = vmax.f32 %v994, 0.0
        %v1059 = vmax.f32 %v995, 0.0
        %v1060 = vmax.f32 %v996, 0.0
        %v1061 = vmax.f32 %v997, 0.0
        %v1062 = vmax.f32 %v998, 0.0
        %v1063 = vmax.f32 %v999, 0.0
        %v1064 = vmax.f32 %v1000, 0.0
        %v1065 = vmax.f32 %v1001, 0.0
        %v1066 = vmax.f32 %v1002, 0.0
        %v1067 = vmax.f32 %v1003, 0.0
        %v1068 = vmax.f32 %v1004, 0.0
        %v1069 = vmax.f32 %v1005, 0.0
        %v1070 = vmax.f32 %v1006, 0.0
        %v1071 = vmax.f32 %v1007, 0.0
        %v1072 = vmax.f32 %v1008, 0.0
        %v1073 = vmax.f32 %v1009, 0.0
        %v1074 = vmax.f32 %v1010, 0.0
        %v1075 = vmax.f32 %v1011, 0.0
        %v1076 = vmax.f32 %v1012, 0.0
        %v1077 = vmax.f32 %v1013, 0.0
        %v1078 = vmax.f32 %v1014, 0.0
        %v1079 = vmax.f32 %v1015, 0.0
        %v1080 = vmax.f32 %v1016, 0.0
        %v1081 = vmax.f32 %v1017, 0.0
        %v1082 = vmax.f32 %v1018, 0.0
        %v1083 = vmax.f32 %v1019, 0.0
        %v1084 = vmax.f32 %v1020, 0.0
        %v1085 = vmax.f32 %v1021, 0.0
        %v1086 = vmax.f32 %v1022, 0.0
        %v1087 = vmax.f32 %v1023, 0.0
        %v1088 = vmax.f32 %v1024, 0.0
        %v1089 = vmax.f32 %v1025, 0.0
        %v1090 = vmax.f32 %v1026, 0.0
        %v1091 = vmax.f32 %v1027, 0.0
        %v1092 = vmax.f32 %v1028, 0.0
        %v1093 = vmax.f32 %v1029, 0.0
        %v1094 = vmax.f32 %v1030, 0.0
        %v1095 = vmax.f32 %v1031, 0.0
        %v1096 = vmax.f32 %v1032, 0.0
        %v1097 = vmax.f32 %v1033, 0.0
        %1098 = vst [vmem:[%s280] sm:$0xff] %v1034
        %1099 = vst [vmem:[%s280 + $0x8] sm:$0xff] %v1035
        %1100 = vst [vmem:[%s280 + $0x10] sm:$0xff] %v1036
        %1101 = vst [vmem:[%s280 + $0x18] sm:$0xff] %v1037
        %1102 = vst [vmem:[%s280 + $0x20] sm:$0xff] %v1038
        %1103 = vst [vmem:[%s280 + $0x28] sm:$0xff] %v1039
        %1104 = vst [vmem:[%s280 + $0x30] sm:$0xff] %v1040
        %1105 = vst [vmem:[%s280 + $0x38] sm:$0xff] %v1041
        %1106 = vst [vmem:[%s280 + $0x40] sm:$0xff] %v1042
        %1107 = vst [vmem:[%s280 + $0x48] sm:$0xff] %v1043
        %1108 = vst [vmem:[%s280 + $0x50] sm:$0xff] %v1044
        %1109 = vst [vmem:[%s280 + $0x58] sm:$0xff] %v1045
        %1110 = vst [vmem:[%s280 + $0x60] sm:$0xff] %v1046
        %1111 = vst [vmem:[%s280 + $0x68] sm:$0xff] %v1047
        %1112 = vst [vmem:[%s280 + $0x70] sm:$0xff] %v1048
        %1113 = vst [vmem:[%s280 + $0x78] sm:$0xff] %v1049
        %1114 = vst [vmem:[%s280 + $0x80] sm:$0xff] %v1050
        %1115 = vst [vmem:[%s280 + $0x88] sm:$0xff] %v1051
        %1116 = vst [vmem:[%s280 + $0x90] sm:$0xff] %v1052
        %1117 = vst [vmem:[%s280 + $0x98] sm:$0xff] %v1053
        %1118 = vst [vmem:[%s280 + $0xa0] sm:$0xff] %v1054
        %1119 = vst [vmem:[%s280 + $0xa8] sm:$0xff] %v1055
        %1120 = vst [vmem:[%s280 + $0xb0] sm:$0xff] %v1056
        %1121 = vst [vmem:[%s280 + $0xb8] sm:$0xff] %v1057
        %1122 = vst [vmem:[%s280 + $0xc0] sm:$0xff] %v1058
        %1123 = vst [vmem:[%s280 + $0xc8] sm:$0xff] %v1059
        %1124 = vst [vmem:[%s280 + $0xd0] sm:$0xff] %v1060
        %1125 = vst [vmem:[%s280 + $0xd8] sm:$0xff] %v1061
        %1126 = vst [vmem:[%s280 + $0xe0] sm:$0xff] %v1062
        %1127 = vst [vmem:[%s280 + $0xe8] sm:$0xff] %v1063
        %1128 = vst [vmem:[%s280 + $0xf0] sm:$0xff] %v1064
        %1129 = vst [vmem:[%s280 + $0xf8] sm:$0xff] %v1065
        %1130 = vst [vmem:[%s280 + $0x100] sm:$0xff] %v1066
        %1131 = vst [vmem:[%s280 + $0x108] sm:$0xff] %v1067
        %1132 = vst [vmem:[%s280 + $0x110] sm:$0xff] %v1068
        %1133 = vst [vmem:[%s280 + $0x118] sm:$0xff] %v1069
        %1134 = vst [vmem:[%s280 + $0x120] sm:$0xff] %v1070
        %1135 = vst [vmem:[%s280 + $0x128] sm:$0xff] %v1071
        %1136 = vst [vmem:[%s280 + $0x130] sm:$0xff] %v1072
        %1137 = vst [vmem:[%s280 + $0x138] sm:$0xff] %v1073
        %1138 = vst [vmem:[%s280 + $0x140] sm:$0xff] %v1074
        %1139 = vst [vmem:[%s280 + $0x148] sm:$0xff] %v1075
        %1140 = vst [vmem:[%s280 + $0x150] sm:$0xff] %v1076
        %1141 = vst [vmem:[%s280 + $0x158] sm:$0xff] %v1077
        %1142 = vst [vmem:[%s280 + $0x160] sm:$0xff] %v1078
        %1143 = vst [vmem:[%s280 + $0x168] sm:$0xff] %v1079
        %1144 = vst [vmem:[%s280 + $0x170] sm:$0xff] %v1080
        %1145 = vst [vmem:[%s280 + $0x178] sm:$0xff] %v1081
        %1146 = vst [vmem:[%s280 + $0x180] sm:$0xff] %v1082
        %1147 = vst [vmem:[%s280 + $0x188] sm:$0xff] %v1083
        %1148 = vst [vmem:[%s280 + $0x190] sm:$0xff] %v1084
        %1149 = vst [vmem:[%s280 + $0x198] sm:$0xff] %v1085
        %1150 = vst [vmem:[%s280 + $0x1a0] sm:$0xff] %v1086
        %1151 = vst [vmem:[%s280 + $0x1a8] sm:$0xff] %v1087
        %1152 = vst [vmem:[%s280 + $0x1b0] sm:$0xff] %v1088
        %1153 = vst [vmem:[%s280 + $0x1b8] sm:$0xff] %v1089
        %1154 = vst [vmem:[%s280 + $0x1c0] sm:$0xff] %v1090
        %1155 = vst [vmem:[%s280 + $0x1c8] sm:$0xff] %v1091
        %1156 = vst [vmem:[%s280 + $0x1d0] sm:$0xff] %v1092
        %1157 = vst [vmem:[%s280 + $0x1d8] sm:$0xff] %v1093
        %1158 = vst [vmem:[%s280 + $0x1e0] sm:$0xff] %v1094
        %1159 = vst [vmem:[%s280 + $0x1e8] sm:$0xff] %v1095
        %1160 = vst [vmem:[%s280 + $0x1f0] sm:$0xff] %v1096
        %1161 = vst [vmem:[%s280 + $0x1f8] sm:$0xff] %v1097
        %s1162 = smul.u32 64, %s21
        %p1163 = scmp.lt.s32.totalorder %s1162, 511
        %s1164 = scalar_select %p1163, %s1162, 511
        %p1165 = scmp.lt.s32.totalorder %s22, 0
        %s1166 = scalar_select %p1165, %s22, 0
        %s1167 = sadd.s32 %s1166, %s1164
        %s1168 = smul.addr %s1167, 8
        %s1169 = scalar_lea.vmem %s4, %s1168
        // Predicated region
        $region49: #{recognizer_forward.6} parent=35 // pred_check
          %p1170 = pneg %p153
        $region50: #{recognizer_forward.6} parent=35 // pred_check_branch
          %1172 = sbr.rel (%p1170) target = $region52
        $region51: #{recognizer_forward.6} parent=35 // pred_region
          %s1173 = smul.u32 64, %s21
        $region52: #{recognizer_forward.6} parent=35 // pred_fallthru
          _
      $region36: #{recognizer_forward.6} parent=5 // pred_fallthru
        _
      %p1174 = scmp.le.s32.totalorder 2, %s12
      // Predicated region
      $region53: #{recognizer_forward.6} parent=5 // pred_check
        %p1175 = pneg %p1174
      $region54: #{recognizer_forward.6} parent=5 // pred_check_branch
        %1177 = sbr.rel (%p1175) target = $region56
      $region55: #{recognizer_forward.6} parent=5 // pred_region
        %s1178 = ssub.s32 %s12, 2
        // Predicated region
        $region57: #{recognizer_forward.6} parent=55 // pred_check
          %p1179 = pneg %p159
        $region58: #{recognizer_forward.6} parent=55 // pred_check_branch
          %1181 = sbr.rel (%p1179) target = $region60
        $region59: #{recognizer_forward.6} parent=55 // pred_region
          %s1182 = smul.u32 64, %s23
          %p1183 = scmp.lt.s32.totalorder %s1182, 511
          %s1184 = scalar_select %p1183, %s1182, 511
          %p1185 = scmp.lt.s32.totalorder %s24, 0
          %s1186 = scalar_select %p1185, %s24, 0
          %s1187 = sadd.s32 %s1186, %s1184
          %s1188 = smul.addr %s1187, 8
          %s1189 = scalar_lea.vmem %s4, %s1188
        $region60: #{recognizer_forward.6} parent=55 // pred_fallthru
          _
      $region56: #{recognizer_forward.6} parent=5 // pred_fallthru
        _
    $region6: #{recognizer_forward.6} parent=1 // loop_footer
      %s16 = sadd.s32 1, %s12
    $region7: #{recognizer_forward.6} parent=1 // loop_footer_branch
      %11 = sbr.rel target = $region3
    $region8: #{recognizer_forward.6} parent=1 // loop_exit
      _
    %1190 = vsyncpa [#allocation3], 1
    %s1191 = scalar_lea.sflag [#allocation3], 1
    %1192 = vsyncpa %s1191, 1
    %1193 = vsyncpa [#allocation5], 1

// kernel: recognizer_forward.7
$region0: #{recognizer_forward.7}
  #allocation0 [shape = 'u32[]', space=smem, size = 0x4, offset = 0x4, fixed_abs, tag = 'smem constant byte address 0x4 - core index']
  #allocation1 [shape = 'u32[144,128]{1,0:T(1,128)}', space=vmem, size = 0x12000, scoped, tag = 'internal scratch']
  %s0 = inlined_call_operand.vmem [shape: bf16[256,256], index: 0, kind: input, shape index: {}]
  %s1 = inlined_call_operand.hbm [shape: bf16[256,128], index: 1, kind: input, shape index: {}]
  %s2 = inlined_call_operand.hbm [shape: f32[1,128], index: 2, kind: input, shape index: {}]
  %s3 = inlined_call_operand.hbm [shape: f32[1,128], index: 3, kind: input, shape index: {}]
  %s4 = inlined_call_operand.vmem [shape: f32[256,128], index: 4, kind: output, shape index: {}]
  %s5 = sld [smem:[#allocation0]]
  $region38: #{recognizer_forward.7} parent=0
    _
  %s7 = ssub.s32 1, %s5
  %s8 = scalar_select 0, %s7, %s5
  $region1: #{recognizer_forward.7} parent=0
    #allocation2 [shape = 'u8[65536]{0}', space=vmem, size = 0x10000, scoped, tag = 'input window, operand 1, single buffered']
    #allocation3 [shape = 's32[1]{0}', space=sflag, size = 0x4, scoped, tag = 'scoped memory for recognizer_forward.7']
    #allocation4 [shape = 'u8[512]{0}', space=vmem, size = 0x400, scoped, tag = 'input window, operand 2, single buffered']
    #allocation5 [shape = 's32[1]{0}', space=sflag, size = 0x4, scoped, tag = 'scoped memory for recognizer_forward.7']
    #allocation6 [shape = 'u8[512]{0}', space=vmem, size = 0x400, scoped, tag = 'input window, operand 3, single buffered']
    %9 = vsyncpa [#allocation3], 0
    %10 = vsyncpa [#allocation5], 0
    // Predicated region
    $region2: #{recognizer_forward.7} parent=1 // pred_check
      _
    $region3: #{recognizer_forward.7} parent=1 // pred_check_branch
      %12 = sbr.rel (0) target = $region5
    $region4: #{recognizer_forward.7} parent=1 // pred_region
      _
    $region5: #{recognizer_forward.7} parent=1 // pred_fallthru
      _
    // Predicated region
    $region6: #{recognizer_forward.7} parent=1 // pred_check
      _
    $region7: #{recognizer_forward.7} parent=1 // pred_check_branch
      %14 = sbr.rel (0) target = $region9
    $region8: #{recognizer_forward.7} parent=1 // pred_region
      %s16 = ssub.s32 2048, 2048
      %17 = vsyncadd [#allocation3], %s16
      %s18 = sshll.u32 [#allocation2], 4
      %s19 = int_to_ptr.vmem [resolvable:$true] %s18
      %24 = dma.hbm_to_vmem [thread:$0]  %s1, 2048, %s19, [#allocation3], 64, 64, 4
    $region9: #{recognizer_forward.7} parent=1 // pred_fallthru
      _
    // Predicated region
    $region10: #{recognizer_forward.7} parent=1 // pred_check
      _
    $region11: #{recognizer_forward.7} parent=1 // pred_check_branch
      %26 = sbr.rel (0) target = $region13
    $region12: #{recognizer_forward.7} parent=1 // pred_region
      %s28 = ssub.s32 16, 16
      %29 = vsyncadd [#allocation5], %s28
      %s31 = sshll.u32 [#allocation4], 4
      %s32 = int_to_ptr.vmem [resolvable:$true] %s31
      %34 = dma.hbm_to_vmem [thread:$0]  %s2, 16, %s32, [#allocation5]
    $region13: #{recognizer_forward.7} parent=1 // pred_fallthru
      _
    // Predicated region
    $region14: #{recognizer_forward.7} parent=1 // pred_check
      _
    $region15: #{recognizer_forward.7} parent=1 // pred_check_branch
      %36 = sbr.rel (0) target = $region17
    $region16: #{recognizer_forward.7} parent=1 // pred_region
      %s38 = ssub.s32 16, 16
      %39 = vsyncadd [#allocation5], %s38
      %s41 = sshll.u32 [#allocation6], 4
      %s42 = int_to_ptr.vmem [resolvable:$true] %s41
      %44 = dma.hbm_to_vmem [thread:$0]  %s3, 16, %s42, [#allocation5]
    $region17: #{recognizer_forward.7} parent=1 // pred_fallthru
      _
    // Predicated region
    $region18: #{recognizer_forward.7} parent=1 // pred_check
      _
    $region19: #{recognizer_forward.7} parent=1 // pred_check_branch
      %46 = sbr.rel (0) target = $region21
    $region20: #{recognizer_forward.7} parent=1 // pred_region
      %47 = dma.done [#allocation3], 2048
    $region21: #{recognizer_forward.7} parent=1 // pred_fallthru
      _
    // Predicated region
    $region22: #{recognizer_forward.7} parent=1 // pred_check
      _
    $region23: #{recognizer_forward.7} parent=1 // pred_check_branch
      %49 = sbr.rel (0) target = $region25
    $region24: #{recognizer_forward.7} parent=1 // pred_region
      %50 = dma.done [#allocation5], 16
    $region25: #{recognizer_forward.7} parent=1 // pred_fallthru
      _
    // Predicated region
    $region26: #{recognizer_forward.7} parent=1 // pred_check
      _
    $region27: #{recognizer_forward.7} parent=1 // pred_check_branch
      %52 = sbr.rel (0) target = $region29
    $region28: #{recognizer_forward.7} parent=1 // pred_region
      %53 = dma.done [#allocation5], 16
    $region29: #{recognizer_forward.7} parent=1 // pred_fallthru
      _
    %v55 = vld [vmem:[#allocation2] sm:$0xf]
    %v56 = vld [vmem:[#allocation2 + $0x4] sm:$0xf]
    %v57 = vld [vmem:[#allocation2 + $0x8] sm:$0xf]
    %v58 = vld [vmem:[#allocation2 + $0xc] sm:$0xf]
    %v59 = vld [vmem:[#allocation2 + $0x10] sm:$0xf]
    %v60 = vld [vmem:[#allocation2 + $0x14] sm:$0xf]
    %v61 = vld [vmem:[#allocation2 + $0x18] sm:$0xf]
    %v62 = vld [vmem:[#allocation2 + $0x1c] sm:$0xf]
    %v63 = vld [vmem:[#allocation2 + $0x20] sm:$0xf]
    %v64 = vld [vmem:[#allocation2 + $0x24] sm:$0xf]
    %v65 = vld [vmem:[#allocation2 + $0x28] sm:$0xf]
    %v66 = vld [vmem:[#allocation2 + $0x2c] sm:$0xf]
    %v67 = vld [vmem:[#allocation2 + $0x30] sm:$0xf]
    %v68 = vld [vmem:[#allocation2 + $0x34] sm:$0xf]
    %v69 = vld [vmem:[#allocation2 + $0x38] sm:$0xf]
    %v70 = vld [vmem:[#allocation2 + $0x3c] sm:$0xf]
    %v71 = vld [vmem:[#allocation2 + $0x40] sm:$0xf]
    %v72 = vld [vmem:[#allocation2 + $0x44] sm:$0xf]
    %v73 = vld [vmem:[#allocation2 + $0x48] sm:$0xf]
    %v74 = vld [vmem:[#allocation2 + $0x4c] sm:$0xf]
    %v75 = vld [vmem:[#allocation2 + $0x50] sm:$0xf]
    %v76 = vld [vmem:[#allocation2 + $0x54] sm:$0xf]
    %v77 = vld [vmem:[#allocation2 + $0x58] sm:$0xf]
    %v78 = vld [vmem:[#allocation2 + $0x5c] sm:$0xf]
    %v79 = vld [vmem:[#allocation2 + $0x60] sm:$0xf]
    %v80 = vld [vmem:[#allocation2 + $0x64] sm:$0xf]
    %v81 = vld [vmem:[#allocation2 + $0x68] sm:$0xf]
    %v82 = vld [vmem:[#allocation2 + $0x6c] sm:$0xf]
    %v83 = vld [vmem:[#allocation2 + $0x70] sm:$0xf]
    %v84 = vld [vmem:[#allocation2 + $0x74] sm:$0xf]
    %v85 = vld [vmem:[#allocation2 + $0x78] sm:$0xf]
    %v86 = vld [vmem:[#allocation2 + $0x7c] sm:$0xf]
    %v87 = vld [vmem:[%s0] sm:$0xff]
    %v88 = vld [vmem:[%s0 + $0x8] sm:$0xff]
    %v89 = vld [vmem:[%s0 + $0x10] sm:$0xff]
    %v90 = vld [vmem:[%s0 + $0x18] sm:$0xff]
    %v91 = vld [vmem:[%s0 + $0x20] sm:$0xff]
    %v92 = vld [vmem:[%s0 + $0x28] sm:$0xff]
    %v93 = vld [vmem:[%s0 + $0x30] sm:$0xff]
    %v94 = vld [vmem:[%s0 + $0x38] sm:$0xff]
    %v95 = vld [vmem:[%s0 + $0x40] sm:$0xff]
    %v96 = vld [vmem:[%s0 + $0x48] sm:$0xff]
    %v97 = vld [vmem:[%s0 + $0x50] sm:$0xff]
    %v98 = vld [vmem:[%s0 + $0x58] sm:$0xff]
    %v99 = vld [vmem:[%s0 + $0x60] sm:$0xff]
    %v100 = vld [vmem:[%s0 + $0x68] sm:$0xff]
    %v101 = vld [vmem:[%s0 + $0x70] sm:$0xff]
    %v102 = vld [vmem:[%s0 + $0x78] sm:$0xff]
    %v103 = vld [vmem:[%s0 + $0x80] sm:$0xff]
    %v104 = vld [vmem:[%s0 + $0x88] sm:$0xff]
    %v105 = vld [vmem:[%s0 + $0x90] sm:$0xff]
    %v106 = vld [vmem:[%s0 + $0x98] sm:$0xff]
    %v107 = vld [vmem:[%s0 + $0xa0] sm:$0xff]
    %v108 = vld [vmem:[%s0 + $0xa8] sm:$0xff]
    %v109 = vld [vmem:[%s0 + $0xb0] sm:$0xff]
    %v110 = vld [vmem:[%s0 + $0xb8] sm:$0xff]
    %v111 = vld [vmem:[%s0 + $0xc0] sm:$0xff]
    %v112 = vld [vmem:[%s0 + $0xc8] sm:$0xff]
    %v113 = vld [vmem:[%s0 + $0xd0] sm:$0xff]
    %v114 = vld [vmem:[%s0 + $0xd8] sm:$0xff]
    %v115 = vld [vmem:[%s0 + $0xe0] sm:$0xff]
    %v116 = vld [vmem:[%s0 + $0xe8] sm:$0xff]
    %v117 = vld [vmem:[%s0 + $0xf0] sm:$0xff]
    %v118 = vld [vmem:[%s0 + $0xf8] sm:$0xff]
    %v151 = vunpack.c.l.b16 %v87
    %v152 = vunpack.c.h.b16 %v87
    %v153 = vunpack.c.l.b16 %v88
    %v154 = vunpack.c.h.b16 %v88
    %v155 = vunpack.c.l.b16 %v89
    %v156 = vunpack.c.h.b16 %v89
    %v157 = vunpack.c.l.b16 %v90
    %v158 = vunpack.c.h.b16 %v90
    %v159 = vunpack.c.l.b16 %v91
    %v160 = vunpack.c.h.b16 %v91
    %v161 = vunpack.c.l.b16 %v92
    %v162 = vunpack.c.h.b16 %v92
    %v163 = vunpack.c.l.b16 %v93
    %v164 = vunpack.c.h.b16 %v93
    %v165 = vunpack.c.l.b16 %v94
    %v166 = vunpack.c.h.b16 %v94
    %v167 = vunpack.c.l.b16 %v95
    %v168 = vunpack.c.h.b16 %v95
    %v169 = vunpack.c.l.b16 %v96
    %v170 = vunpack.c.h.b16 %v96
    %v171 = vunpack.c.l.b16 %v97
    %v172 = vunpack.c.h.b16 %v97
    %v173 = vunpack.c.l.b16 %v98
    %v174 = vunpack.c.h.b16 %v98
    %v175 = vunpack.c.l.b16 %v99
    %v176 = vunpack.c.h.b16 %v99
    %v177 = vunpack.c.l.b16 %v100
    %v178 = vunpack.c.h.b16 %v100
    %v179 = vunpack.c.l.b16 %v101
    %v180 = vunpack.c.h.b16 %v101
    %v181 = vunpack.c.l.b16 %v102
    %v182 = vunpack.c.h.b16 %v102
    %v183 = vunpack.c.l.b16 %v103
    %v184 = vunpack.c.h.b16 %v103
    %v185 = vunpack.c.l.b16 %v104
    %v186 = vunpack.c.h.b16 %v104
    %v187 = vunpack.c.l.b16 %v105
    %v188 = vunpack.c.h.b16 %v105
    %v189 = vunpack.c.l.b16 %v106
    %v190 = vunpack.c.h.b16 %v106
    %v191 = vunpack.c.l.b16 %v107
    %v192 = vunpack.c.h.b16 %v107
    %v193 = vunpack.c.l.b16 %v108
    %v194 = vunpack.c.h.b16 %v108
    %v195 = vunpack.c.l.b16 %v109
    %v196 = vunpack.c.h.b16 %v109
    %v197 = vunpack.c.l.b16 %v110
    %v198 = vunpack.c.h.b16 %v110
    %v199 = vunpack.c.l.b16 %v111
    %v200 = vunpack.c.h.b16 %v111
    %v201 = vunpack.c.l.b16 %v112
    %v202 = vunpack.c.h.b16 %v112
    %v203 = vunpack.c.l.b16 %v113
    %v204 = vunpack.c.h.b16 %v113
    %v205 = vunpack.c.l.b16 %v114
    %v206 = vunpack.c.h.b16 %v114
    %v207 = vunpack.c.l.b16 %v115
    %v208 = vunpack.c.h.b16 %v115
    %v209 = vunpack.c.l.b16 %v116
    %v210 = vunpack.c.h.b16 %v116
    %v211 = vunpack.c.l.b16 %v117
    %v212 = vunpack.c.h.b16 %v117
    %v213 = vunpack.c.l.b16 %v118
    %v214 = vunpack.c.h.b16 %v118
    %v215 = vpack.c.b16 %v153, %v151
    %v216 = vpack.c.b16 %v154, %v152
    %v217 = vpack.c.b16 %v157, %v155
    %v218 = vpack.c.b16 %v158, %v156
    %v219 = vpack.c.b16 %v161, %v159
    %v220 = vpack.c.b16 %v162, %v160
    %v221 = vpack.c.b16 %v165, %v163
    %v222 = vpack.c.b16 %v166, %v164
    %v223 = vpack.c.b16 %v169, %v167
    %v224 = vpack.c.b16 %v170, %v168
    %v225 = vpack.c.b16 %v173, %v171
    %v226 = vpack.c.b16 %v174, %v172
    %v227 = vpack.c.b16 %v177, %v175
    %v228 = vpack.c.b16 %v178, %v176
    %v229 = vpack.c.b16 %v181, %v179
    %v230 = vpack.c.b16 %v182, %v180
    %v231 = vpack.c.b16 %v185, %v183
    %v232 = vpack.c.b16 %v186, %v184
    %v233 = vpack.c.b16 %v189, %v187
    %v234 = vpack.c.b16 %v190, %v188
    %v235 = vpack.c.b16 %v193, %v191
    %v236 = vpack.c.b16 %v194, %v192
    %v237 = vpack.c.b16 %v197, %v195
    %v238 = vpack.c.b16 %v198, %v196
    %v239 = vpack.c.b16 %v201, %v199
    %v240 = vpack.c.b16 %v202, %v200
    %v241 = vpack.c.b16 %v205, %v203
    %v242 = vpack.c.b16 %v206, %v204
    %v243 = vpack.c.b16 %v209, %v207
    %v244 = vpack.c.b16 %v210, %v208
    %v245 = vpack.c.b16 %v213, %v211
    %v246 = vpack.c.b16 %v214, %v212
    %v311 = vunpack.c.l.b16 %v55
    %v312 = vunpack.c.l.b16 %v56
    %v313 = vunpack.c.l.b16 %v57
    %v314 = vunpack.c.l.b16 %v58
    %v315 = vunpack.c.l.b16 %v59
    %v316 = vunpack.c.l.b16 %v60
    %v317 = vunpack.c.l.b16 %v61
    %v318 = vunpack.c.l.b16 %v62
    %v319 = vunpack.c.l.b16 %v63
    %v320 = vunpack.c.l.b16 %v64
    %v321 = vunpack.c.l.b16 %v65
    %v322 = vunpack.c.l.b16 %v66
    %v323 = vunpack.c.l.b16 %v67
    %v324 = vunpack.c.l.b16 %v68
    %v325 = vunpack.c.l.b16 %v69
    %v326 = vunpack.c.l.b16 %v70
    %v327 = vunpack.c.l.b16 %v71
    %v328 = vunpack.c.l.b16 %v72
    %v329 = vunpack.c.l.b16 %v73
    %v330 = vunpack.c.l.b16 %v74
    %v331 = vunpack.c.l.b16 %v75
    %v332 = vunpack.c.l.b16 %v76
    %v333 = vunpack.c.l.b16 %v77
    %v334 = vunpack.c.l.b16 %v78
    %v335 = vunpack.c.l.b16 %v79
    %v336 = vunpack.c.l.b16 %v80
    %v337 = vunpack.c.l.b16 %v81
    %v338 = vunpack.c.l.b16 %v82
    %v339 = vunpack.c.l.b16 %v83
    %v340 = vunpack.c.l.b16 %v84
    %v341 = vunpack.c.l.b16 %v85
    %v342 = vunpack.c.l.b16 %v86
    %v343 = vpack.c.b16 %v312, %v311
    %v344 = vpack.c.b16 %v314, %v313
    %v345 = vpack.c.b16 %v316, %v315
    %v346 = vpack.c.b16 %v318, %v317
    %v347 = vpack.c.b16 %v320, %v319
    %v348 = vpack.c.b16 %v322, %v321
    %v349 = vpack.c.b16 %v324, %v323
    %v350 = vpack.c.b16 %v326, %v325
    %v351 = vpack.c.b16 %v328, %v327
    %v352 = vpack.c.b16 %v330, %v329
    %v353 = vpack.c.b16 %v332, %v331
    %v354 = vpack.c.b16 %v334, %v333
    %v355 = vpack.c.b16 %v336, %v335
    %v356 = vpack.c.b16 %v338, %v337
    %v357 = vpack.c.b16 %v340, %v339
    %v358 = vpack.c.b16 %v342, %v341
    %375 = vmatprep.subr.bf16.mxu0 0
    %376 = vmatpush1.bf16.msra.mxu0 %v343
    %377 = vmatprep.subr.bf16.mxu0 0
    %378 = vmatpush1.bf16.msra.mxu0 %v344
    %379 = vmatprep.subr.bf16.mxu0 0
    %380 = vmatpush1.bf16.msra.mxu0 %v345
    %381 = vmatprep.subr.bf16.mxu0 0
    %382 = vmatpush1.bf16.msra.mxu0 %v346
    %383 = vmatprep.subr.bf16.mxu0 0
    %384 = vmatpush1.bf16.msra.mxu0 %v347
    %385 = vmatprep.subr.bf16.mxu0 0
    %386 = vmatpush1.bf16.msra.mxu0 %v348
    %387 = vmatprep.subr.bf16.mxu0 0
    %388 = vmatpush1.bf16.msra.mxu0 %v349
    %389 = vmatprep.subr.bf16.mxu0 0
    %390 = vmatpush1.bf16.msra.mxu0 %v350
    %391 = vmatprep.subr.bf16.mxu0 0
    %392 = vmatpush1.bf16.msra.mxu0 %v351
    %393 = vmatprep.subr.bf16.mxu0 0
    %394 = vmatpush1.bf16.msra.mxu0 %v352
    %395 = vmatprep.subr.bf16.mxu0 0
    %396 = vmatpush1.bf16.msra.mxu0 %v353
    %397 = vmatprep.subr.bf16.mxu0 0
    %398 = vmatpush1.bf16.msra.mxu0 %v354
    %399 = vmatprep.subr.bf16.mxu0 0
    %400 = vmatpush1.bf16.msra.mxu0 %v355
    %401 = vmatprep.subr.bf16.mxu0 0
    %402 = vmatpush1.bf16.msra.mxu0 %v356
    %403 = vmatprep.subr.bf16.mxu0 0
    %404 = vmatpush1.bf16.msra.mxu0 %v357
    %405 = vmatprep.subr.bf16.mxu0 0
    %406 = vmatpush1.bf16.msra.mxu0 %v358
    %407 = vmatprep.mubr.bf16.mxu0 %v216
    %408 = vmatmul.mubr.bf16.gmra.mrb[0].mxu0 %v215
    %v409 = vpop.f32.mrb[0].mxu0
    %v410 = vadd.f32 0.0, %v409
    %v411 = vpop.f32.mrb[0].mxu0
    %v412 = vpop.f32.mrb[0].mxu0
    %v413 = vadd.f32 0.0, %v412
    %v414 = vpop.f32.mrb[0].mxu0
    %415 = vmatprep.mubr.bf16.mxu0 %v218
    %416 = vmatmul.mubr.bf16.gmra.mrb[0].mxu0 %v217
    %v417 = vpop.f32.mrb[0].mxu0
    %v418 = vadd.f32 0.0, %v417
    %v419 = vpop.f32.mrb[0].mxu0
    %v420 = vpop.f32.mrb[0].mxu0
    %v421 = vadd.f32 0.0, %v420
    %v422 = vpop.f32.mrb[0].mxu0
    %423 = vmatprep.mubr.bf16.mxu0 %v220
    %424 = vmatmul.mubr.bf16.gmra.mrb[0].mxu0 %v219
    %v425 = vpop.f32.mrb[0].mxu0
    %v426 = vadd.f32 0.0, %v425
    %v427 = vpop.f32.mrb[0].mxu0
    %v428 = vpop.f32.mrb[0].mxu0
    %v429 = vadd.f32 0.0, %v428
    %v430 = vpop.f32.mrb[0].mxu0
    %431 = vmatprep.mubr.bf16.mxu0 %v222
    %432 = vmatmul.mubr.bf16.gmra.mrb[0].mxu0 %v221
    %v433 = vpop.f32.mrb[0].mxu0
    %v434 = vadd.f32 0.0, %v433
    %v435 = vpop.f32.mrb[0].mxu0
    %v436 = vpop.f32.mrb[0].mxu0
    %v437 = vadd.f32 0.0, %v436
    %v438 = vpop.f32.mrb[0].mxu0
    %439 = vmatprep.mubr.bf16.mxu0 %v224
    %440 = vmatmul.mubr.bf16.gmra.mrb[0].mxu0 %v223
    %v441 = vpop.f32.mrb[0].mxu0
    %v442 = vadd.f32 0.0, %v441
    %v443 = vpop.f32.mrb[0].mxu0
    %v444 = vpop.f32.mrb[0].mxu0
    %v445 = vadd.f32 0.0, %v444
    %v446 = vpop.f32.mrb[0].mxu0
    %447 = vmatprep.mubr.bf16.mxu0 %v226
    %448 = vmatmul.mubr.bf16.gmra.mrb[0].mxu0 %v225
    %v449 = vpop.f32.mrb[0].mxu0
    %v450 = vadd.f32 0.0, %v449
    %v451 = vpop.f32.mrb[0].mxu0
    %v452 = vpop.f32.mrb[0].mxu0
    %v453 = vadd.f32 0.0, %v452
    %v454 = vpop.f32.mrb[0].mxu0
    %455 = vmatprep.mubr.bf16.mxu0 %v228
    %456 = vmatmul.mubr.bf16.gmra.mrb[0].mxu0 %v227
    %v457 = vpop.f32.mrb[0].mxu0
    %v458 = vadd.f32 0.0, %v457
    %v459 = vpop.f32.mrb[0].mxu0
    %v460 = vpop.f32.mrb[0].mxu0
    %v461 = vadd.f32 0.0, %v460
    %v462 = vpop.f32.mrb[0].mxu0
    %463 = vmatprep.mubr.bf16.mxu0 %v230
    %464 = vmatmul.mubr.bf16.gmra.mrb[0].mxu0 %v229
    %v465 = vpop.f32.mrb[0].mxu0
    %v466 = vadd.f32 0.0, %v465
    %v467 = vpop.f32.mrb[0].mxu0
    %v468 = vpop.f32.mrb[0].mxu0
    %v469 = vadd.f32 0.0, %v468
    %v470 = vpop.f32.mrb[0].mxu0
    %471 = vmatprep.mubr.bf16.mxu0 %v232
    %472 = vmatmul.mubr.bf16.gmra.mrb[0].mxu0 %v231
    %v473 = vpop.f32.mrb[0].mxu0
    %v474 = vadd.f32 0.0, %v473
    %v475 = vpop.f32.mrb[0].mxu0
    %v476 = vpop.f32.mrb[0].mxu0
    %v477 = vadd.f32 0.0, %v476
    %v478 = vpop.f32.mrb[0].mxu0
    %479 = vmatprep.mubr.bf16.mxu0 %v234
    %480 = vmatmul.mubr.bf16.gmra.mrb[0].mxu0 %v233
    %v481 = vpop.f32.mrb[0].mxu0
    %v482 = vadd.f32 0.0, %v481
    %v483 = vpop.f32.mrb[0].mxu0
    %v484 = vpop.f32.mrb[0].mxu0
    %v485 = vadd.f32 0.0, %v484
    %v486 = vpop.f32.mrb[0].mxu0
    %487 = vmatprep.mubr.bf16.mxu0 %v236
    %488 = vmatmul.mubr.bf16.gmra.mrb[0].mxu0 %v235
    %v489 = vpop.f32.mrb[0].mxu0
    %v490 = vadd.f32 0.0, %v489
    %v491 = vpop.f32.mrb[0].mxu0
    %v492 = vpop.f32.mrb[0].mxu0
    %v493 = vadd.f32 0.0, %v492
    %v494 = vpop.f32.mrb[0].mxu0
    %495 = vmatprep.mubr.bf16.mxu0 %v238
    %496 = vmatmul.mubr.bf16.gmra.mrb[0].mxu0 %v237
    %v497 = vpop.f32.mrb[0].mxu0
    %v498 = vadd.f32 0.0, %v497
    %v499 = vpop.f32.mrb[0].mxu0
    %v500 = vpop.f32.mrb[0].mxu0
    %v501 = vadd.f32 0.0, %v500
    %v502 = vpop.f32.mrb[0].mxu0
    %503 = vmatprep.mubr.bf16.mxu0 %v240
    %504 = vmatmul.mubr.bf16.gmra.mrb[0].mxu0 %v239
    %v505 = vpop.f32.mrb[0].mxu0
    %v506 = vadd.f32 0.0, %v505
    %v507 = vpop.f32.mrb[0].mxu0
    %v508 = vpop.f32.mrb[0].mxu0
    %v509 = vadd.f32 0.0, %v508
    %v510 = vpop.f32.mrb[0].mxu0
    %511 = vmatprep.mubr.bf16.mxu0 %v242
    %512 = vmatmul.mubr.bf16.gmra.mrb[0].mxu0 %v241
    %v513 = vpop.f32.mrb[0].mxu0
    %v514 = vadd.f32 0.0, %v513
    %v515 = vpop.f32.mrb[0].mxu0
    %v516 = vpop.f32.mrb[0].mxu0
    %v517 = vadd.f32 0.0, %v516
    %v518 = vpop.f32.mrb[0].mxu0
    %519 = vmatprep.mubr.bf16.mxu0 %v244
    %520 = vmatmul.mubr.bf16.gmra.mrb[0].mxu0 %v243
    %v521 = vpop.f32.mrb[0].mxu0
    %v522 = vadd.f32 0.0, %v521
    %v523 = vpop.f32.mrb[0].mxu0
    %v524 = vpop.f32.mrb[0].mxu0
    %v525 = vadd.f32 0.0, %v524
    %v526 = vpop.f32.mrb[0].mxu0
    %527 = vmatprep.mubr.bf16.mxu0 %v246
    %528 = vmatmul.mubr.bf16.gmra.mrb[0].mxu0 %v245
    %v529 = vpop.f32.mrb[0].mxu0
    %v530 = vadd.f32 0.0, %v529
    %v531 = vpop.f32.mrb[0].mxu0
    %v532 = vpop.f32.mrb[0].mxu0
    %v533 = vadd.f32 0.0, %v532
    %v534 = vpop.f32.mrb[0].mxu0
    %535 = vdwg.mxu0
    %v536 = vld [vmem:[#allocation4] sm:$0x1]
    %v538 = vlaneseq
    %v539 = vshrl.u32 %v538, 7
    %v540 = vsub.s32 0, %v539
    %v541 = vrot.slane %v536, %v540
    %v543 = vmul.f32 %v410, %v541
    %v544 = vmul.f32 %v413, %v541
    %v545 = vmul.f32 %v418, %v541
    %v546 = vmul.f32 %v421, %v541
    %v547 = vmul.f32 %v426, %v541
    %v548 = vmul.f32 %v429, %v541
    %v549 = vmul.f32 %v434, %v541
    %v550 = vmul.f32 %v437, %v541
    %v551 = vmul.f32 %v442, %v541
    %v552 = vmul.f32 %v445, %v541
    %v553 = vmul.f32 %v450, %v541
    %v554 = vmul.f32 %v453, %v541
    %v555 = vmul.f32 %v458, %v541
    %v556 = vmul.f32 %v461, %v541
    %v557 = vmul.f32 %v466, %v541
    %v558 = vmul.f32 %v469, %v541
    %v559 = vmul.f32 %v474, %v541
    %v560 = vmul.f32 %v477, %v541
    %v561 = vmul.f32 %v482, %v541
    %v562 = vmul.f32 %v485, %v541
    %v563 = vmul.f32 %v490, %v541
    %v564 = vmul.f32 %v493, %v541
    %v565 = vmul.f32 %v498, %v541
    %v566 = vmul.f32 %v501, %v541
    %v567 = vmul.f32 %v506, %v541
    %v568 = vmul.f32 %v509, %v541
    %v569 = vmul.f32 %v514, %v541
    %v570 = vmul.f32 %v517, %v541
    %v571 = vmul.f32 %v522, %v541
    %v572 = vmul.f32 %v525, %v541
    %v573 = vmul.f32 %v530, %v541
    %v574 = vmul.f32 %v533, %v541
    %v575 = vld [vmem:[#allocation6] sm:$0x1]
    %v577 = vlaneseq
    %v578 = vshrl.u32 %v577, 7
    %v579 = vsub.s32 0, %v578
    %v580 = vrot.slane %v575, %v579
    %v582 = vadd.f32 %v543, %v580
    %v583 = vadd.f32 %v544, %v580
    %v584 = vadd.f32 %v545, %v580
    %v585 = vadd.f32 %v546, %v580
    %v586 = vadd.f32 %v547, %v580
    %v587 = vadd.f32 %v548, %v580
    %v588 = vadd.f32 %v549, %v580
    %v589 = vadd.f32 %v550, %v580
    %v590 = vadd.f32 %v551, %v580
    %v591 = vadd.f32 %v552, %v580
    %v592 = vadd.f32 %v553, %v580
    %v593 = vadd.f32 %v554, %v580
    %v594 = vadd.f32 %v555, %v580
    %v595 = vadd.f32 %v556, %v580
    %v596 = vadd.f32 %v557, %v580
    %v597 = vadd.f32 %v558, %v580
    %v598 = vadd.f32 %v559, %v580
    %v599 = vadd.f32 %v560, %v580
    %v600 = vadd.f32 %v561, %v580
    %v601 = vadd.f32 %v562, %v580
    %v602 = vadd.f32 %v563, %v580
    %v603 = vadd.f32 %v564, %v580
    %v604 = vadd.f32 %v565, %v580
    %v605 = vadd.f32 %v566, %v580
    %v606 = vadd.f32 %v567, %v580
    %v607 = vadd.f32 %v568, %v580
    %v608 = vadd.f32 %v569, %v580
    %v609 = vadd.f32 %v570, %v580
    %v610 = vadd.f32 %v571, %v580
    %v611 = vadd.f32 %v572, %v580
    %v612 = vadd.f32 %v573, %v580
    %v613 = vadd.f32 %v574, %v580
    %v614 = vmax.f32 %v582, 0.0
    %v615 = vmax.f32 %v583, 0.0
    %v616 = vmax.f32 %v584, 0.0
    %v617 = vmax.f32 %v585, 0.0
    %v618 = vmax.f32 %v586, 0.0
    %v619 = vmax.f32 %v587, 0.0
    %v620 = vmax.f32 %v588, 0.0
    %v621 = vmax.f32 %v589, 0.0
    %v622 = vmax.f32 %v590, 0.0
    %v623 = vmax.f32 %v591, 0.0
    %v624 = vmax.f32 %v592, 0.0
    %v625 = vmax.f32 %v593, 0.0
    %v626 = vmax.f32 %v594, 0.0
    %v627 = vmax.f32 %v595, 0.0
    %v628 = vmax.f32 %v596, 0.0
    %v629 = vmax.f32 %v597, 0.0
    %v630 = vmax.f32 %v598, 0.0
    %v631 = vmax.f32 %v599, 0.0
    %v632 = vmax.f32 %v600, 0.0
    %v633 = vmax.f32 %v601, 0.0
    %v634 = vmax.f32 %v602, 0.0
    %v635 = vmax.f32 %v603, 0.0
    %v636 = vmax.f32 %v604, 0.0
    %v637 = vmax.f32 %v605, 0.0
    %v638 = vmax.f32 %v606, 0.0
    %v639 = vmax.f32 %v607, 0.0
    %v640 = vmax.f32 %v608, 0.0
    %v641 = vmax.f32 %v609, 0.0
    %v642 = vmax.f32 %v610, 0.0
    %v643 = vmax.f32 %v611, 0.0
    %v644 = vmax.f32 %v612, 0.0
    %v645 = vmax.f32 %v613, 0.0
    %646 = vst [vmem:[%s4] sm:$0xff] %v614
    %647 = vst [vmem:[%s4 + $0x8] sm:$0xff] %v615
    %648 = vst [vmem:[%s4 + $0x10] sm:$0xff] %v616
    %649 = vst [vmem:[%s4 + $0x18] sm:$0xff] %v617
    %650 = vst [vmem:[%s4 + $0x20] sm:$0xff] %v618
    %651 = vst [vmem:[%s4 + $0x28] sm:$0xff] %v619
    %652 = vst [vmem:[%s4 + $0x30] sm:$0xff] %v620
    %653 = vst [vmem:[%s4 + $0x38] sm:$0xff] %v621
    %654 = vst [vmem:[%s4 + $0x40] sm:$0xff] %v622
    %655 = vst [vmem:[%s4 + $0x48] sm:$0xff] %v623
    %656 = vst [vmem:[%s4 + $0x50] sm:$0xff] %v624
    %657 = vst [vmem:[%s4 + $0x58] sm:$0xff] %v625
    %658 = vst [vmem:[%s4 + $0x60] sm:$0xff] %v626
    %659 = vst [vmem:[%s4 + $0x68] sm:$0xff] %v627
    %660 = vst [vmem:[%s4 + $0x70] sm:$0xff] %v628
    %661 = vst [vmem:[%s4 + $0x78] sm:$0xff] %v629
    %662 = vst [vmem:[%s4 + $0x80] sm:$0xff] %v630
    %663 = vst [vmem:[%s4 + $0x88] sm:$0xff] %v631
    %664 = vst [vmem:[%s4 + $0x90] sm:$0xff] %v632
    %665 = vst [vmem:[%s4 + $0x98] sm:$0xff] %v633
    %666 = vst [vmem:[%s4 + $0xa0] sm:$0xff] %v634
    %667 = vst [vmem:[%s4 + $0xa8] sm:$0xff] %v635
    %668 = vst [vmem:[%s4 + $0xb0] sm:$0xff] %v636
    %669 = vst [vmem:[%s4 + $0xb8] sm:$0xff] %v637
    %670 = vst [vmem:[%s4 + $0xc0] sm:$0xff] %v638
    %671 = vst [vmem:[%s4 + $0xc8] sm:$0xff] %v639
    %672 = vst [vmem:[%s4 + $0xd0] sm:$0xff] %v640
    %673 = vst [vmem:[%s4 + $0xd8] sm:$0xff] %v641
    %674 = vst [vmem:[%s4 + $0xe0] sm:$0xff] %v642
    %675 = vst [vmem:[%s4 + $0xe8] sm:$0xff] %v643
    %676 = vst [vmem:[%s4 + $0xf0] sm:$0xff] %v644
    %677 = vst [vmem:[%s4 + $0xf8] sm:$0xff] %v645
    // Predicated region
    $region30: #{recognizer_forward.7} parent=1 // pred_check
      _
    $region31: #{recognizer_forward.7} parent=1 // pred_check_branch
      %679 = sbr.rel (0) target = $region33
    $region32: #{recognizer_forward.7} parent=1 // pred_region
      _
    $region33: #{recognizer_forward.7} parent=1 // pred_fallthru
      _
    // Predicated region
    $region34: #{recognizer_forward.7} parent=1 // pred_check
      _
    $region35: #{recognizer_forward.7} parent=1 // pred_check_branch
      %681 = sbr.rel (0) target = $region37
    $region36: #{recognizer_forward.7} parent=1 // pred_region
      _
    $region37: #{recognizer_forward.7} parent=1 // pred_fallthru
      _
    %682 = vsyncpa [#allocation3], 1
    %683 = vsyncpa [#allocation5], 1

// kernel: recognizer_forward.8
$region0: #{recognizer_forward.8}
  #allocation0 [shape = 'u32[]', space=smem, size = 0x4, offset = 0x4, fixed_abs, tag = 'smem constant byte address 0x4 - core index']
  #allocation1 [shape = 'u32[144,128]{1,0:T(1,128)}', space=vmem, size = 0x12000, scoped, tag = 'internal scratch']
  %s0 = inlined_call_operand.vmem [shape: bf16[64,384], index: 0, kind: input, shape index: {}]
  %s1 = inlined_call_operand.vmem [shape: bf16[384,128], index: 1, kind: input, shape index: {}]
  %s2 = inlined_call_operand.vmem [shape: f32[1,128], index: 2, kind: input, shape index: {}]
  %s3 = inlined_call_operand.vmem [shape: f32[1,128], index: 3, kind: input, shape index: {}]
  %s4 = inlined_call_operand.vmem [shape: f32[64,128], index: 4, kind: output, shape index: {}]
  %s5 = sld [smem:[#allocation0]]
  $region26: #{recognizer_forward.8} parent=0
    _
  %s7 = ssub.s32 1, %s5
  %s8 = scalar_select 0, %s7, %s5
  // Predicated region
  $region2: #{recognizer_forward.8} parent=0 // pred_check
    _
  $region3: #{recognizer_forward.8} parent=0 // pred_check_branch
    %10 = sbr.rel (0) target = $region5
  $region4: #{recognizer_forward.8} parent=0 // pred_region
    _
  $region5: #{recognizer_forward.8} parent=0 // pred_fallthru
    _
  // Predicated region
  $region6: #{recognizer_forward.8} parent=0 // pred_check
    _
  $region7: #{recognizer_forward.8} parent=0 // pred_check_branch
    %12 = sbr.rel (0) target = $region9
  $region8: #{recognizer_forward.8} parent=0 // pred_region
    _
  $region9: #{recognizer_forward.8} parent=0 // pred_fallthru
    _
  // Predicated region
  $region10: #{recognizer_forward.8} parent=0 // pred_check
    _
  $region11: #{recognizer_forward.8} parent=0 // pred_check_branch
    %14 = sbr.rel (0) target = $region13
  $region12: #{recognizer_forward.8} parent=0 // pred_region
    _
  $region13: #{recognizer_forward.8} parent=0 // pred_fallthru
    _
  // Predicated region
  $region14: #{recognizer_forward.8} parent=0 // pred_check
    _
  $region15: #{recognizer_forward.8} parent=0 // pred_check_branch
    %16 = sbr.rel (0) target = $region17
  $region16: #{recognizer_forward.8} parent=0 // pred_region
    _
  $region17: #{recognizer_forward.8} parent=0 // pred_fallthru
    _
  %v18 = vld [vmem:[%s1] sm:$0xf]
  %v19 = vld [vmem:[%s1 + $0x4] sm:$0xf]
  %v20 = vld [vmem:[%s1 + $0x8] sm:$0xf]
  %v21 = vld [vmem:[%s1 + $0xc] sm:$0xf]
  %v22 = vld [vmem:[%s1 + $0x10] sm:$0xf]
  %v23 = vld [vmem:[%s1 + $0x14] sm:$0xf]
  %v24 = vld [vmem:[%s1 + $0x18] sm:$0xf]
  %v25 = vld [vmem:[%s1 + $0x1c] sm:$0xf]
  %v26 = vld [vmem:[%s1 + $0x20] sm:$0xf]
  %v27 = vld [vmem:[%s1 + $0x24] sm:$0xf]
  %v28 = vld [vmem:[%s1 + $0x28] sm:$0xf]
  %v29 = vld [vmem:[%s1 + $0x2c] sm:$0xf]
  %v30 = vld [vmem:[%s1 + $0x30] sm:$0xf]
  %v31 = vld [vmem:[%s1 + $0x34] sm:$0xf]
  %v32 = vld [vmem:[%s1 + $0x38] sm:$0xf]
  %v33 = vld [vmem:[%s1 + $0x3c] sm:$0xf]
  %v34 = vld [vmem:[%s1 + $0x40] sm:$0xf]
  %v35 = vld [vmem:[%s1 + $0x44] sm:$0xf]
  %v36 = vld [vmem:[%s1 + $0x48] sm:$0xf]
  %v37 = vld [vmem:[%s1 + $0x4c] sm:$0xf]
  %v38 = vld [vmem:[%s1 + $0x50] sm:$0xf]
  %v39 = vld [vmem:[%s1 + $0x54] sm:$0xf]
  %v40 = vld [vmem:[%s1 + $0x58] sm:$0xf]
  %v41 = vld [vmem:[%s1 + $0x5c] sm:$0xf]
  %v42 = vld [vmem:[%s1 + $0x60] sm:$0xf]
  %v43 = vld [vmem:[%s1 + $0x64] sm:$0xf]
  %v44 = vld [vmem:[%s1 + $0x68] sm:$0xf]
  %v45 = vld [vmem:[%s1 + $0x6c] sm:$0xf]
  %v46 = vld [vmem:[%s1 + $0x70] sm:$0xf]
  %v47 = vld [vmem:[%s1 + $0x74] sm:$0xf]
  %v48 = vld [vmem:[%s1 + $0x78] sm:$0xf]
  %v49 = vld [vmem:[%s1 + $0x7c] sm:$0xf]
  %v50 = vld [vmem:[%s1 + $0x80] sm:$0xf]
  %v51 = vld [vmem:[%s1 + $0x84] sm:$0xf]
  %v52 = vld [vmem:[%s1 + $0x88] sm:$0xf]
  %v53 = vld [vmem:[%s1 + $0x8c] sm:$0xf]
  %v54 = vld [vmem:[%s1 + $0x90] sm:$0xf]
  %v55 = vld [vmem:[%s1 + $0x94] sm:$0xf]
  %v56 = vld [vmem:[%s1 + $0x98] sm:$0xf]
  %v57 = vld [vmem:[%s1 + $0x9c] sm:$0xf]
  %v58 = vld [vmem:[%s1 + $0xa0] sm:$0xf]
  %v59 = vld [vmem:[%s1 + $0xa4] sm:$0xf]
  %v60 = vld [vmem:[%s1 + $0xa8] sm:$0xf]
  %v61 = vld [vmem:[%s1 + $0xac] sm:$0xf]
  %v62 = vld [vmem:[%s1 + $0xb0] sm:$0xf]
  %v63 = vld [vmem:[%s1 + $0xb4] sm:$0xf]
  %v64 = vld [vmem:[%s1 + $0xb8] sm:$0xf]
  %v65 = vld [vmem:[%s1 + $0xbc] sm:$0xf]
  %v66 = vld [vmem:[%s0] sm:$0xff]
  %v67 = vld [vmem:[%s0 + $0x8] sm:$0xf]
  %v68 = vld [vmem:[%s0 + $0xc] sm:$0xff]
  %v69 = vld [vmem:[%s0 + $0x14] sm:$0xf]
  %v70 = vld [vmem:[%s0 + $0x18] sm:$0xff]
  %v71 = vld [vmem:[%s0 + $0x20] sm:$0xf]
  %v72 = vld [vmem:[%s0 + $0x24] sm:$0xff]
  %v73 = vld [vmem:[%s0 + $0x2c] sm:$0xf]
  %v74 = vld [vmem:[%s0 + $0x30] sm:$0xff]
  %v75 = vld [vmem:[%s0 + $0x38] sm:$0xf]
  %v76 = vld [vmem:[%s0 + $0x3c] sm:$0xff]
  %v77 = vld [vmem:[%s0 + $0x44] sm:$0xf]
  %v78 = vld [vmem:[%s0 + $0x48] sm:$0xff]
  %v79 = vld [vmem:[%s0 + $0x50] sm:$0xf]
  %v80 = vld [vmem:[%s0 + $0x54] sm:$0xff]
  %v81 = vld [vmem:[%s0 + $0x5c] sm:$0xf]
  %v98 = vunpack.c.l.b16 %v66
  %v99 = vunpack.c.h.b16 %v66
  %v100 = vunpack.c.l.b16 %v67
  %v101 = vunpack.c.l.b16 %v68
  %v102 = vunpack.c.h.b16 %v68
  %v103 = vunpack.c.l.b16 %v69
  %v104 = vunpack.c.l.b16 %v70
  %v105 = vunpack.c.h.b16 %v70
  %v106 = vunpack.c.l.b16 %v71
  %v107 = vunpack.c.l.b16 %v72
  %v108 = vunpack.c.h.b16 %v72
  %v109 = vunpack.c.l.b16 %v73
  %v110 = vunpack.c.l.b16 %v74
  %v111 = vunpack.c.h.b16 %v74
  %v112 = vunpack.c.l.b16 %v75
  %v113 = vunpack.c.l.b16 %v76
  %v114 = vunpack.c.h.b16 %v76
  %v115 = vunpack.c.l.b16 %v77
  %v116 = vunpack.c.l.b16 %v78
  %v117 = vunpack.c.h.b16 %v78
  %v118 = vunpack.c.l.b16 %v79
  %v119 = vunpack.c.l.b16 %v80
  %v120 = vunpack.c.h.b16 %v80
  %v121 = vunpack.c.l.b16 %v81
  %v122 = vpack.c.b16 %v101, %v98
  %v123 = vpack.c.b16 %v102, %v99
  %v124 = vpack.c.b16 %v103, %v100
  %v125 = vpack.c.b16 %v107, %v104
  %v126 = vpack.c.b16 %v108, %v105
  %v127 = vpack.c.b16 %v109, %v106
  %v128 = vpack.c.b16 %v113, %v110
  %v129 = vpack.c.b16 %v114, %v111
  %v130 = vpack.c.b16 %v115, %v112
  %v131 = vpack.c.b16 %v119, %v116
  %v132 = vpack.c.b16 %v120, %v117
  %v133 = vpack.c.b16 %v121, %v118
  %v194 = vunpack.c.l.b16 %v18
  %v195 = vunpack.c.l.b16 %v19
  %v196 = vunpack.c.l.b16 %v20
  %v197 = vunpack.c.l.b16 %v21
  %v198 = vunpack.c.l.b16 %v22
  %v199 = vunpack.c.l.b16 %v23
  %v200 = vunpack.c.l.b16 %v24
  %v201 = vunpack.c.l.b16 %v25
  %v202 = vunpack.c.l.b16 %v26
  %v203 = vunpack.c.l.b16 %v27
  %v204 = vunpack.c.l.b16 %v28
  %v205 = vunpack.c.l.b16 %v29
  %v206 = vunpack.c.l.b16 %v30
  %v207 = vunpack.c.l.b16 %v31
  %v208 = vunpack.c.l.b16 %v32
  %v209 = vunpack.c.l.b16 %v33
  %v210 = vunpack.c.l.b16 %v34
  %v211 = vunpack.c.l.b16 %v35
  %v212 = vunpack.c.l.b16 %v36
  %v213 = vunpack.c.l.b16 %v37
  %v214 = vunpack.c.l.b16 %v38
  %v215 = vunpack.c.l.b16 %v39
  %v216 = vunpack.c.l.b16 %v40
  %v217 = vunpack.c.l.b16 %v41
  %v218 = vunpack.c.l.b16 %v42
  %v219 = vunpack.c.l.b16 %v43
  %v220 = vunpack.c.l.b16 %v44
  %v221 = vunpack.c.l.b16 %v45
  %v222 = vunpack.c.l.b16 %v46
  %v223 = vunpack.c.l.b16 %v47
  %v224 = vunpack.c.l.b16 %v48
  %v225 = vunpack.c.l.b16 %v49
  %v226 = vunpack.c.l.b16 %v50
  %v227 = vunpack.c.l.b16 %v51
  %v228 = vunpack.c.l.b16 %v52
  %v229 = vunpack.c.l.b16 %v53
  %v230 = vunpack.c.l.b16 %v54
  %v231 = vunpack.c.l.b16 %v55
  %v232 = vunpack.c.l.b16 %v56
  %v233 = vunpack.c.l.b16 %v57
  %v234 = vunpack.c.l.b16 %v58
  %v235 = vunpack.c.l.b16 %v59
  %v236 = vunpack.c.l.b16 %v60
  %v237 = vunpack.c.l.b16 %v61
  %v238 = vunpack.c.l.b16 %v62
  %v239 = vunpack.c.l.b16 %v63
  %v240 = vunpack.c.l.b16 %v64
  %v241 = vunpack.c.l.b16 %v65
  %v242 = vpack.c.b16 %v195, %v194
  %v243 = vpack.c.b16 %v197, %v196
  %v244 = vpack.c.b16 %v199, %v198
  %v245 = vpack.c.b16 %v201, %v200
  %v246 = vpack.c.b16 %v203, %v202
  %v247 = vpack.c.b16 %v205, %v204
  %v248 = vpack.c.b16 %v207, %v206
  %v249 = vpack.c.b16 %v209, %v208
  %v250 = vpack.c.b16 %v211, %v210
  %v251 = vpack.c.b16 %v213, %v212
  %v252 = vpack.c.b16 %v215, %v214
  %v253 = vpack.c.b16 %v217, %v216
  %v254 = vpack.c.b16 %v219, %v218
  %v255 = vpack.c.b16 %v221, %v220
  %v256 = vpack.c.b16 %v223, %v222
  %v257 = vpack.c.b16 %v225, %v224
  %v258 = vpack.c.b16 %v227, %v226
  %v259 = vpack.c.b16 %v229, %v228
  %v260 = vpack.c.b16 %v231, %v230
  %v261 = vpack.c.b16 %v233, %v232
  %v262 = vpack.c.b16 %v235, %v234
  %v263 = vpack.c.b16 %v237, %v236
  %v264 = vpack.c.b16 %v239, %v238
  %v265 = vpack.c.b16 %v241, %v240
  %290 = vmatprep.subr.bf16.mxu0 0
  %291 = vmatpush1.bf16.msra.mxu0 %v242
  %292 = vmatprep.subr.bf16.mxu0 0
  %293 = vmatpush1.bf16.msra.mxu0 %v243
  %294 = vmatprep.subr.bf16.mxu0 0
  %295 = vmatpush1.bf16.msra.mxu0 %v244
  %296 = vmatprep.subr.bf16.mxu0 0
  %297 = vmatpush1.bf16.msra.mxu0 %v245
  %298 = vmatprep.subr.bf16.mxu0 0
  %299 = vmatpush1.bf16.msra.mxu0 %v246
  %300 = vmatprep.subr.bf16.mxu0 0
  %301 = vmatpush1.bf16.msra.mxu0 %v247
  %302 = vmatprep.subr.bf16.mxu0 0
  %303 = vmatpush1.bf16.msra.mxu0 %v248
  %304 = vmatprep.subr.bf16.mxu0 0
  %305 = vmatpush1.bf16.msra.mxu0 %v249
  %306 = vmatprep.subr.bf16.mxu0 0
  %307 = vmatpush1.bf16.msra.mxu0 %v250
  %308 = vmatprep.subr.bf16.mxu0 0
  %309 = vmatpush1.bf16.msra.mxu0 %v251
  %310 = vmatprep.subr.bf16.mxu0 0
  %311 = vmatpush1.bf16.msra.mxu0 %v252
  %312 = vmatprep.subr.bf16.mxu0 0
  %313 = vmatpush1.bf16.msra.mxu0 %v253
  %314 = vmatprep.subr.bf16.mxu0 0
  %315 = vmatpush1.bf16.msra.mxu0 %v254
  %316 = vmatprep.subr.bf16.mxu0 0
  %317 = vmatpush1.bf16.msra.mxu0 %v255
  %318 = vmatprep.subr.bf16.mxu0 0
  %319 = vmatpush1.bf16.msra.mxu0 %v256
  %320 = vmatprep.subr.bf16.mxu0 0
  %321 = vmatpush1.bf16.msra.mxu0 %v257
  %322 = vmatprep.mubr.bf16.mxu0 %v123
  %323 = vmatmul.mubr.bf16.gmra.mrb[0].mxu0 %v122
  %v324 = vpop.f32.mrb[0].mxu0
  %v325 = vadd.f32 0.0, %v324
  %v326 = vpop.f32.mrb[0].mxu0
  %v327 = vpop.f32.mrb[0].mxu0
  %v328 = vadd.f32 0.0, %v327
  %v329 = vpop.f32.mrb[0].mxu0
  %330 = vmatprep.mubr.bf16.mxu0 %v126
  %331 = vmatmul.mubr.bf16.gmra.mrb[0].mxu0 %v125
  %v332 = vpop.f32.mrb[0].mxu0
  %v333 = vadd.f32 0.0, %v332
  %v334 = vpop.f32.mrb[0].mxu0
  %v335 = vpop.f32.mrb[0].mxu0
  %v336 = vadd.f32 0.0, %v335
  %v337 = vpop.f32.mrb[0].mxu0
  %338 = vmatprep.mubr.bf16.mxu0 %v129
  %339 = vmatmul.mubr.bf16.gmra.mrb[0].mxu0 %v128
  %v340 = vpop.f32.mrb[0].mxu0
  %v341 = vadd.f32 0.0, %v340
  %v342 = vpop.f32.mrb[0].mxu0
  %v343 = vpop.f32.mrb[0].mxu0
  %v344 = vadd.f32 0.0, %v343
  %v345 = vpop.f32.mrb[0].mxu0
  %346 = vmatprep.mubr.bf16.mxu0 %v132
  %347 = vmatmul.mubr.bf16.gmra.mrb[0].mxu0 %v131
  %v348 = vpop.f32.mrb[0].mxu0
  %v349 = vadd.f32 0.0, %v348
  %v350 = vpop.f32.mrb[0].mxu0
  %v351 = vpop.f32.mrb[0].mxu0
  %v352 = vadd.f32 0.0, %v351
  %v353 = vpop.f32.mrb[0].mxu0
  %354 = vdwg.mxu0
  %355 = vmatprep.subr.bf16.mxu0 0
  %356 = vmatpush1.bf16.msra.mxu0 %v258
  %357 = vmatprep.subr.bf16.mxu0 0
  %358 = vmatpush1.bf16.msra.mxu0 %v259
  %359 = vmatprep.subr.bf16.mxu0 0
  %360 = vmatpush1.bf16.msra.mxu0 %v260
  %361 = vmatprep.subr.bf16.mxu0 0
  %362 = vmatpush1.bf16.msra.mxu0 %v261
  %363 = vmatprep.subr.bf16.mxu0 0
  %364 = vmatpush1.bf16.msra.mxu0 %v262
  %365 = vmatprep.subr.bf16.mxu0 0
  %366 = vmatpush1.bf16.msra.mxu0 %v263
  %367 = vmatprep.subr.bf16.mxu0 0
  %368 = vmatpush1.bf16.msra.mxu0 %v264
  %369 = vmatprep.subr.bf16.mxu0 0
  %370 = vmatpush1.bf16.msra.mxu0 %v265
  %371 = vmatprep.subr.bf16.mxu0 0
  %372 = vmatpush1.bf16.msra.mxu0 0
  %373 = vmatprep.subr.bf16.mxu0 0
  %374 = vmatpush1.bf16.msra.mxu0 0
  %375 = vmatprep.subr.bf16.mxu0 0
  %376 = vmatpush1.bf16.msra.mxu0 0
  %377 = vmatprep.subr.bf16.mxu0 0
  %378 = vmatpush1.bf16.msra.mxu0 0
  %379 = vmatprep.subr.bf16.mxu0 0
  %380 = vmatpush1.bf16.msra.mxu0 0
  %381 = vmatprep.subr.bf16.mxu0 0
  %382 = vmatpush1.bf16.msra.mxu0 0
  %383 = vmatprep.subr.bf16.mxu0 0
  %384 = vmatpush1.bf16.msra.mxu0 0
  %385 = vmatprep.subr.bf16.mxu0 0
  %386 = vmatpush1.bf16.msra.mxu0 0
  %387 = vmatprep.mubr.bf16.mxu0 0
  %388 = vmatmul.mubr.bf16.gmra.mrb[0].mxu0 %v124
  %v389 = vpop.f32.mrb[0].mxu0
  %v390 = vadd.f32 %v325, %v389
  %v391 = vpop.f32.mrb[0].mxu0
  %v392 = vpop.f32.mrb[0].mxu0
  %v393 = vadd.f32 %v328, %v392
  %v394 = vpop.f32.mrb[0].mxu0
  %395 = vmatprep.mubr.bf16.mxu0 0
  %396 = vmatmul.mubr.bf16.gmra.mrb[0].mxu0 %v127
  %v397 = vpop.f32.mrb[0].mxu0
  %v398 = vadd.f32 %v333, %v397
  %v399 = vpop.f32.mrb[0].mxu0
  %v400 = vpop.f32.mrb[0].mxu0
  %v401 = vadd.f32 %v336, %v400
  %v402 = vpop.f32.mrb[0].mxu0
  %403 = vmatprep.mubr.bf16.mxu0 0
  %404 = vmatmul.mubr.bf16.gmra.mrb[0].mxu0 %v130
  %v405 = vpop.f32.mrb[0].mxu0
  %v406 = vadd.f32 %v341, %v405
  %v407 = vpop.f32.mrb[0].mxu0
  %v408 = vpop.f32.mrb[0].mxu0
  %v409 = vadd.f32 %v344, %v408
  %v410 = vpop.f32.mrb[0].mxu0
  %411 = vmatprep.mubr.bf16.mxu0 0
  %412 = vmatmul.mubr.bf16.gmra.mrb[0].mxu0 %v133
  %v413 = vpop.f32.mrb[0].mxu0
  %v414 = vadd.f32 %v349, %v413
  %v415 = vpop.f32.mrb[0].mxu0
  %v416 = vpop.f32.mrb[0].mxu0
  %v417 = vadd.f32 %v352, %v416
  %v418 = vpop.f32.mrb[0].mxu0
  %419 = vdwg.mxu0
  %v420 = vld [vmem:[%s2] sm:$0x1]
  %v422 = vlaneseq
  %v423 = vshrl.u32 %v422, 7
  %v424 = vsub.s32 0, %v423
  %v425 = vrot.slane %v420, %v424
  %v427 = vmul.f32 %v390, %v425
  %v428 = vmul.f32 %v393, %v425
  %v429 = vmul.f32 %v398, %v425
  %v430 = vmul.f32 %v401, %v425
  %v431 = vmul.f32 %v406, %v425
  %v432 = vmul.f32 %v409, %v425
  %v433 = vmul.f32 %v414, %v425
  %v434 = vmul.f32 %v417, %v425
  %v435 = vld [vmem:[%s3] sm:$0x1]
  %v437 = vlaneseq
  %v438 = vshrl.u32 %v437, 7
  %v439 = vsub.s32 0, %v438
  %v440 = vrot.slane %v435, %v439
  %v442 = vadd.f32 %v427, %v440
  %v443 = vadd.f32 %v428, %v440
  %v444 = vadd.f32 %v429, %v440
  %v445 = vadd.f32 %v430, %v440
  %v446 = vadd.f32 %v431, %v440
  %v447 = vadd.f32 %v432, %v440
  %v448 = vadd.f32 %v433, %v440
  %v449 = vadd.f32 %v434, %v440
  %v450 = vmax.f32 %v442, 0.0
  %v451 = vmax.f32 %v443, 0.0
  %v452 = vmax.f32 %v444, 0.0
  %v453 = vmax.f32 %v445, 0.0
  %v454 = vmax.f32 %v446, 0.0
  %v455 = vmax.f32 %v447, 0.0
  %v456 = vmax.f32 %v448, 0.0
  %v457 = vmax.f32 %v449, 0.0
  %458 = vst [vmem:[%s4] sm:$0xff] %v450
  %459 = vst [vmem:[%s4 + $0x8] sm:$0xff] %v451
  %460 = vst [vmem:[%s4 + $0x10] sm:$0xff] %v452
  %461 = vst [vmem:[%s4 + $0x18] sm:$0xff] %v453
  %462 = vst [vmem:[%s4 + $0x20] sm:$0xff] %v454
  %463 = vst [vmem:[%s4 + $0x28] sm:$0xff] %v455
  %464 = vst [vmem:[%s4 + $0x30] sm:$0xff] %v456
  %465 = vst [vmem:[%s4 + $0x38] sm:$0xff] %v457
  // Predicated region
  $region18: #{recognizer_forward.8} parent=0 // pred_check
    _
  $region19: #{recognizer_forward.8} parent=0 // pred_check_branch
    %467 = sbr.rel (0) target = $region21
  $region20: #{recognizer_forward.8} parent=0 // pred_region
    _
  $region21: #{recognizer_forward.8} parent=0 // pred_fallthru
    _
  // Predicated region
  $region22: #{recognizer_forward.8} parent=0 // pred_check
    _
  $region23: #{recognizer_forward.8} parent=0 // pred_check_branch
    %469 = sbr.rel (0) target = $region25
  $region24: #{recognizer_forward.8} parent=0 // pred_region
    _
  $region25: #{recognizer_forward.8} parent=0 // pred_fallthru
    _

// kernel: recognizer_forward.9
$region0: #{recognizer_forward.9}
  #allocation0 [shape = 'u32[]', space=smem, size = 0x4, offset = 0x4, fixed_abs, tag = 'smem constant byte address 0x4 - core index']
  #allocation1 [shape = 'u32[144,128]{1,0:T(1,128)}', space=vmem, size = 0x12000, scoped, tag = 'internal scratch']
  %s0 = inlined_call_operand.vmem [shape: bf16[64,640], index: 0, kind: input, shape index: {}]
  %s1 = inlined_call_operand.vmem [shape: bf16[640,128], index: 1, kind: input, shape index: {}]
  %s2 = inlined_call_operand.vmem [shape: f32[1,128], index: 2, kind: input, shape index: {}]
  %s3 = inlined_call_operand.vmem [shape: f32[1,128], index: 3, kind: input, shape index: {}]
  %s4 = inlined_call_operand.vmem [shape: f32[64,128], index: 4, kind: output, shape index: {}]
  %s5 = sld [smem:[#allocation0]]
  $region26: #{recognizer_forward.9} parent=0
    _
  %s7 = ssub.s32 1, %s5
  %s8 = scalar_select 0, %s7, %s5
  // Predicated region
  $region2: #{recognizer_forward.9} parent=0 // pred_check
    _
  $region3: #{recognizer_forward.9} parent=0 // pred_check_branch
    %10 = sbr.rel (0) target = $region5
  $region4: #{recognizer_forward.9} parent=0 // pred_region
    _
  $region5: #{recognizer_forward.9} parent=0 // pred_fallthru
    _
  // Predicated region
  $region6: #{recognizer_forward.9} parent=0 // pred_check
    _
  $region7: #{recognizer_forward.9} parent=0 // pred_check_branch
    %12 = sbr.rel (0) target = $region9
  $region8: #{recognizer_forward.9} parent=0 // pred_region
    _
  $region9: #{recognizer_forward.9} parent=0 // pred_fallthru
    _
  // Predicated region
  $region10: #{recognizer_forward.9} parent=0 // pred_check
    _
  $region11: #{recognizer_forward.9} parent=0 // pred_check_branch
    %14 = sbr.rel (0) target = $region13
  $region12: #{recognizer_forward.9} parent=0 // pred_region
    _
  $region13: #{recognizer_forward.9} parent=0 // pred_fallthru
    _
  // Predicated region
  $region14: #{recognizer_forward.9} parent=0 // pred_check
    _
  $region15: #{recognizer_forward.9} parent=0 // pred_check_branch
    %16 = sbr.rel (0) target = $region17
  $region16: #{recognizer_forward.9} parent=0 // pred_region
    _
  $region17: #{recognizer_forward.9} parent=0 // pred_fallthru
    _
  %v18 = vld [vmem:[%s1] sm:$0xf]
  %v19 = vld [vmem:[%s1 + $0x4] sm:$0xf]
  %v20 = vld [vmem:[%s1 + $0x8] sm:$0xf]
  %v21 = vld [vmem:[%s1 + $0xc] sm:$0xf]
  %v22 = vld [vmem:[%s1 + $0x10] sm:$0xf]
  %v23 = vld [vmem:[%s1 + $0x14] sm:$0xf]
  %v24 = vld [vmem:[%s1 + $0x18] sm:$0xf]
  %v25 = vld [vmem:[%s1 + $0x1c] sm:$0xf]
  %v26 = vld [vmem:[%s1 + $0x20] sm:$0xf]
  %v27 = vld [vmem:[%s1 + $0x24] sm:$0xf]
  %v28 = vld [vmem:[%s1 + $0x28] sm:$0xf]
  %v29 = vld [vmem:[%s1 + $0x2c] sm:$0xf]
  %v30 = vld [vmem:[%s1 + $0x30] sm:$0xf]
  %v31 = vld [vmem:[%s1 + $0x34] sm:$0xf]
  %v32 = vld [vmem:[%s1 + $0x38] sm:$0xf]
  %v33 = vld [vmem:[%s1 + $0x3c] sm:$0xf]
  %v34 = vld [vmem:[%s1 + $0x40] sm:$0xf]
  %v35 = vld [vmem:[%s1 + $0x44] sm:$0xf]
  %v36 = vld [vmem:[%s1 + $0x48] sm:$0xf]
  %v37 = vld [vmem:[%s1 + $0x4c] sm:$0xf]
  %v38 = vld [vmem:[%s1 + $0x50] sm:$0xf]
  %v39 = vld [vmem:[%s1 + $0x54] sm:$0xf]
  %v40 = vld [vmem:[%s1 + $0x58] sm:$0xf]
  %v41 = vld [vmem:[%s1 + $0x5c] sm:$0xf]
  %v42 = vld [vmem:[%s1 + $0x60] sm:$0xf]
  %v43 = vld [vmem:[%s1 + $0x64] sm:$0xf]
  %v44 = vld [vmem:[%s1 + $0x68] sm:$0xf]
  %v45 = vld [vmem:[%s1 + $0x6c] sm:$0xf]
  %v46 = vld [vmem:[%s1 + $0x70] sm:$0xf]
  %v47 = vld [vmem:[%s1 + $0x74] sm:$0xf]
  %v48 = vld [vmem:[%s1 + $0x78] sm:$0xf]
  %v49 = vld [vmem:[%s1 + $0x7c] sm:$0xf]
  %v50 = vld [vmem:[%s1 + $0x80] sm:$0xf]
  %v51 = vld [vmem:[%s1 + $0x84] sm:$0xf]
  %v52 = vld [vmem:[%s1 + $0x88] sm:$0xf]
  %v53 = vld [vmem:[%s1 + $0x8c] sm:$0xf]
  %v54 = vld [vmem:[%s1 + $0x90] sm:$0xf]
  %v55 = vld [vmem:[%s1 + $0x94] sm:$0xf]
  %v56 = vld [vmem:[%s1 + $0x98] sm:$0xf]
  %v57 = vld [vmem:[%s1 + $0x9c] sm:$0xf]
  %v58 = vld [vmem:[%s1 + $0xa0] sm:$0xf]
  %v59 = vld [vmem:[%s1 + $0xa4] sm:$0xf]
  %v60 = vld [vmem:[%s1 + $0xa8] sm:$0xf]
  %v61 = vld [vmem:[%s1 + $0xac] sm:$0xf]
  %v62 = vld [vmem:[%s1 + $0xb0] sm:$0xf]
  %v63 = vld [vmem:[%s1 + $0xb4] sm:$0xf]
  %v64 = vld [vmem:[%s1 + $0xb8] sm:$0xf]
  %v65 = vld [vmem:[%s1 + $0xbc] sm:$0xf]
  %v66 = vld [vmem:[%s1 + $0xc0] sm:$0xf]
  %v67 = vld [vmem:[%s1 + $0xc4] sm:$0xf]
  %v68 = vld [vmem:[%s1 + $0xc8] sm:$0xf]
  %v69 = vld [vmem:[%s1 + $0xcc] sm:$0xf]
  %v70 = vld [vmem:[%s1 + $0xd0] sm:$0xf]
  %v71 = vld [vmem:[%s1 + $0xd4] sm:$0xf]
  %v72 = vld [vmem:[%s1 + $0xd8] sm:$0xf]
  %v73 = vld [vmem:[%s1 + $0xdc] sm:$0xf]
  %v74 = vld [vmem:[%s1 + $0xe0] sm:$0xf]
  %v75 = vld [vmem:[%s1 + $0xe4] sm:$0xf]
  %v76 = vld [vmem:[%s1 + $0xe8] sm:$0xf]
  %v77 = vld [vmem:[%s1 + $0xec] sm:$0xf]
  %v78 = vld [vmem:[%s1 + $0xf0] sm:$0xf]
  %v79 = vld [vmem:[%s1 + $0xf4] sm:$0xf]
  %v80 = vld [vmem:[%s1 + $0xf8] sm:$0xf]
  %v81 = vld [vmem:[%s1 + $0xfc] sm:$0xf]
  %v82 = vld [vmem:[%s1 + $0x100] sm:$0xf]
  %v83 = vld [vmem:[%s1 + $0x104] sm:$0xf]
  %v84 = vld [vmem:[%s1 + $0x108] sm:$0xf]
  %v85 = vld [vmem:[%s1 + $0x10c] sm:$0xf]
  %v86 = vld [vmem:[%s1 + $0x110] sm:$0xf]
  %v87 = vld [vmem:[%s1 + $0x114] sm:$0xf]
  %v88 = vld [vmem:[%s1 + $0x118] sm:$0xf]
  %v89 = vld [vmem:[%s1 + $0x11c] sm:$0xf]
  %v90 = vld [vmem:[%s1 + $0x120] sm:$0xf]
  %v91 = vld [vmem:[%s1 + $0x124] sm:$0xf]
  %v92 = vld [vmem:[%s1 + $0x128] sm:$0xf]
  %v93 = vld [vmem:[%s1 + $0x12c] sm:$0xf]
  %v94 = vld [vmem:[%s1 + $0x130] sm:$0xf]
  %v95 = vld [vmem:[%s1 + $0x134] sm:$0xf]
  %v96 = vld [vmem:[%s1 + $0x138] sm:$0xf]
  %v97 = vld [vmem:[%s1 + $0x13c] sm:$0xf]
  %v98 = vld [vmem:[%s0] sm:$0xff]
  %v99 = vld [vmem:[%s0 + $0x8] sm:$0xff]
  %v100 = vld [vmem:[%s0 + $0x10] sm:$0xf]
  %v101 = vld [vmem:[%s0 + $0x14] sm:$0xff]
  %v102 = vld [vmem:[%s0 + $0x1c] sm:$0xff]
  %v103 = vld [vmem:[%s0 + $0x24] sm:$0xf]
  %v104 = vld [vmem:[%s0 + $0x28] sm:$0xff]
  %v105 = vld [vmem:[%s0 + $0x30] sm:$0xff]
  %v106 = vld [vmem:[%s0 + $0x38] sm:$0xf]
  %v107 = vld [vmem:[%s0 + $0x3c] sm:$0xff]
  %v108 = vld [vmem:[%s0 + $0x44] sm:$0xff]
  %v109 = vld [vmem:[%s0 + $0x4c] sm:$0xf]
  %v110 = vld [vmem:[%s0 + $0x50] sm:$0xff]
  %v111 = vld [vmem:[%s0 + $0x58] sm:$0xff]
  %v112 = vld [vmem:[%s0 + $0x60] sm:$0xf]
  %v113 = vld [vmem:[%s0 + $0x64] sm:$0xff]
  %v114 = vld [vmem:[%s0 + $0x6c] sm:$0xff]
  %v115 = vld [vmem:[%s0 + $0x74] sm:$0xf]
  %v116 = vld [vmem:[%s0 + $0x78] sm:$0xff]
  %v117 = vld [vmem:[%s0 + $0x80] sm:$0xff]
  %v118 = vld [vmem:[%s0 + $0x88] sm:$0xf]
  %v119 = vld [vmem:[%s0 + $0x8c] sm:$0xff]
  %v120 = vld [vmem:[%s0 + $0x94] sm:$0xff]
  %v121 = vld [vmem:[%s0 + $0x9c] sm:$0xf]
  %v146 = vunpack.c.l.b16 %v98
  %v147 = vunpack.c.h.b16 %v98
  %v148 = vunpack.c.l.b16 %v99
  %v149 = vunpack.c.h.b16 %v99
  %v150 = vunpack.c.l.b16 %v100
  %v151 = vunpack.c.l.b16 %v101
  %v152 = vunpack.c.h.b16 %v101
  %v153 = vunpack.c.l.b16 %v102
  %v154 = vunpack.c.h.b16 %v102
  %v155 = vunpack.c.l.b16 %v103
  %v156 = vunpack.c.l.b16 %v104
  %v157 = vunpack.c.h.b16 %v104
  %v158 = vunpack.c.l.b16 %v105
  %v159 = vunpack.c.h.b16 %v105
  %v160 = vunpack.c.l.b16 %v106
  %v161 = vunpack.c.l.b16 %v107
  %v162 = vunpack.c.h.b16 %v107
  %v163 = vunpack.c.l.b16 %v108
  %v164 = vunpack.c.h.b16 %v108
  %v165 = vunpack.c.l.b16 %v109
  %v166 = vunpack.c.l.b16 %v110
  %v167 = vunpack.c.h.b16 %v110
  %v168 = vunpack.c.l.b16 %v111
  %v169 = vunpack.c.h.b16 %v111
  %v170 = vunpack.c.l.b16 %v112
  %v171 = vunpack.c.l.b16 %v113
  %v172 = vunpack.c.h.b16 %v113
  %v173 = vunpack.c.l.b16 %v114
  %v174 = vunpack.c.h.b16 %v114
  %v175 = vunpack.c.l.b16 %v115
  %v176 = vunpack.c.l.b16 %v116
  %v177 = vunpack.c.h.b16 %v116
  %v178 = vunpack.c.l.b16 %v117
  %v179 = vunpack.c.h.b16 %v117
  %v180 = vunpack.c.l.b16 %v118
  %v181 = vunpack.c.l.b16 %v119
  %v182 = vunpack.c.h.b16 %v119
  %v183 = vunpack.c.l.b16 %v120
  %v184 = vunpack.c.h.b16 %v120
  %v185 = vunpack.c.l.b16 %v121
  %v186 = vpack.c.b16 %v151, %v146
  %v187 = vpack.c.b16 %v152, %v147
  %v188 = vpack.c.b16 %v153, %v148
  %v189 = vpack.c.b16 %v154, %v149
  %v190 = vpack.c.b16 %v155, %v150
  %v191 = vpack.c.b16 %v161, %v156
  %v192 = vpack.c.b16 %v162, %v157
  %v193 = vpack.c.b16 %v163, %v158
  %v194 = vpack.c.b16 %v164, %v159
  %v195 = vpack.c.b16 %v165, %v160
  %v196 = vpack.c.b16 %v171, %v166
  %v197 = vpack.c.b16 %v172, %v167
  %v198 = vpack.c.b16 %v173, %v168
  %v199 = vpack.c.b16 %v174, %v169
  %v200 = vpack.c.b16 %v175, %v170
  %v201 = vpack.c.b16 %v181, %v176
  %v202 = vpack.c.b16 %v182, %v177
  %v203 = vpack.c.b16 %v183, %v178
  %v204 = vpack.c.b16 %v184, %v179
  %v205 = vpack.c.b16 %v185, %v180
  %v306 = vunpack.c.l.b16 %v18
  %v307 = vunpack.c.l.b16 %v19
  %v308 = vunpack.c.l.b16 %v20
  %v309 = vunpack.c.l.b16 %v21
  %v310 = vunpack.c.l.b16 %v22
  %v311 = vunpack.c.l.b16 %v23
  %v312 = vunpack.c.l.b16 %v24
  %v313 = vunpack.c.l.b16 %v25
  %v314 = vunpack.c.l.b16 %v26
  %v315 = vunpack.c.l.b16 %v27
  %v316 = vunpack.c.l.b16 %v28
  %v317 = vunpack.c.l.b16 %v29
  %v318 = vunpack.c.l.b16 %v30
  %v319 = vunpack.c.l.b16 %v31
  %v320 = vunpack.c.l.b16 %v32
  %v321 = vunpack.c.l.b16 %v33
  %v322 = vunpack.c.l.b16 %v34
  %v323 = vunpack.c.l.b16 %v35
  %v324 = vunpack.c.l.b16 %v36
  %v325 = vunpack.c.l.b16 %v37
  %v326 = vunpack.c.l.b16 %v38
  %v327 = vunpack.c.l.b16 %v39
  %v328 = vunpack.c.l.b16 %v40
  %v329 = vunpack.c.l.b16 %v41
  %v330 = vunpack.c.l.b16 %v42
  %v331 = vunpack.c.l.b16 %v43
  %v332 = vunpack.c.l.b16 %v44
  %v333 = vunpack.c.l.b16 %v45
  %v334 = vunpack.c.l.b16 %v46
  %v335 = vunpack.c.l.b16 %v47
  %v336 = vunpack.c.l.b16 %v48
  %v337 = vunpack.c.l.b16 %v49
  %v338 = vunpack.c.l.b16 %v50
  %v339 = vunpack.c.l.b16 %v51
  %v340 = vunpack.c.l.b16 %v52
  %v341 = vunpack.c.l.b16 %v53
  %v342 = vunpack.c.l.b16 %v54
  %v343 = vunpack.c.l.b16 %v55
  %v344 = vunpack.c.l.b16 %v56
  %v345 = vunpack.c.l.b16 %v57
  %v346 = vunpack.c.l.b16 %v58
  %v347 = vunpack.c.l.b16 %v59
  %v348 = vunpack.c.l.b16 %v60
  %v349 = vunpack.c.l.b16 %v61
  %v350 = vunpack.c.l.b16 %v62
  %v351 = vunpack.c.l.b16 %v63
  %v352 = vunpack.c.l.b16 %v64
  %v353 = vunpack.c.l.b16 %v65
  %v354 = vunpack.c.l.b16 %v66
  %v355 = vunpack.c.l.b16 %v67
  %v356 = vunpack.c.l.b16 %v68
  %v357 = vunpack.c.l.b16 %v69
  %v358 = vunpack.c.l.b16 %v70
  %v359 = vunpack.c.l.b16 %v71
  %v360 = vunpack.c.l.b16 %v72
  %v361 = vunpack.c.l.b16 %v73
  %v362 = vunpack.c.l.b16 %v74
  %v363 = vunpack.c.l.b16 %v75
  %v364 = vunpack.c.l.b16 %v76
  %v365 = vunpack.c.l.b16 %v77
  %v366 = vunpack.c.l.b16 %v78
  %v367 = vunpack.c.l.b16 %v79
  %v368 = vunpack.c.l.b16 %v80
  %v369 = vunpack.c.l.b16 %v81
  %v370 = vunpack.c.l.b16 %v82
  %v371 = vunpack.c.l.b16 %v83
  %v372 = vunpack.c.l.b16 %v84
  %v373 = vunpack.c.l.b16 %v85
  %v374 = vunpack.c.l.b16 %v86
  %v375 = vunpack.c.l.b16 %v87
  %v376 = vunpack.c.l.b16 %v88
  %v377 = vunpack.c.l.b16 %v89
  %v378 = vunpack.c.l.b16 %v90
  %v379 = vunpack.c.l.b16 %v91
  %v380 = vunpack.c.l.b16 %v92
  %v381 = vunpack.c.l.b16 %v93
  %v382 = vunpack.c.l.b16 %v94
  %v383 = vunpack.c.l.b16 %v95
  %v384 = vunpack.c.l.b16 %v96
  %v385 = vunpack.c.l.b16 %v97
  %v386 = vpack.c.b16 %v307, %v306
  %v387 = vpack.c.b16 %v309, %v308
  %v388 = vpack.c.b16 %v311, %v310
  %v389 = vpack.c.b16 %v313, %v312
  %v390 = vpack.c.b16 %v315, %v314
  %v391 = vpack.c.b16 %v317, %v316
  %v392 = vpack.c.b16 %v319, %v318
  %v393 = vpack.c.b16 %v321, %v320
  %v394 = vpack.c.b16 %v323, %v322
  %v395 = vpack.c.b16 %v325, %v324
  %v396 = vpack.c.b16 %v327, %v326
  %v397 = vpack.c.b16 %v329, %v328
  %v398 = vpack.c.b16 %v331, %v330
  %v399 = vpack.c.b16 %v333, %v332
  %v400 = vpack.c.b16 %v335, %v334
  %v401 = vpack.c.b16 %v337, %v336
  %v402 = vpack.c.b16 %v339, %v338
  %v403 = vpack.c.b16 %v341, %v340
  %v404 = vpack.c.b16 %v343, %v342
  %v405 = vpack.c.b16 %v345, %v344
  %v406 = vpack.c.b16 %v347, %v346
  %v407 = vpack.c.b16 %v349, %v348
  %v408 = vpack.c.b16 %v351, %v350
  %v409 = vpack.c.b16 %v353, %v352
  %v410 = vpack.c.b16 %v355, %v354
  %v411 = vpack.c.b16 %v357, %v356
  %v412 = vpack.c.b16 %v359, %v358
  %v413 = vpack.c.b16 %v361, %v360
  %v414 = vpack.c.b16 %v363, %v362
  %v415 = vpack.c.b16 %v365, %v364
  %v416 = vpack.c.b16 %v367, %v366
  %v417 = vpack.c.b16 %v369, %v368
  %v418 = vpack.c.b16 %v371, %v370
  %v419 = vpack.c.b16 %v373, %v372
  %v420 = vpack.c.b16 %v375, %v374
  %v421 = vpack.c.b16 %v377, %v376
  %v422 = vpack.c.b16 %v379, %v378
  %v423 = vpack.c.b16 %v381, %v380
  %v424 = vpack.c.b16 %v383, %v382
  %v425 = vpack.c.b16 %v385, %v384
  %466 = vmatprep.subr.bf16.mxu0 0
  %467 = vmatpush1.bf16.msra.mxu0 %v386
  %468 = vmatprep.subr.bf16.mxu0 0
  %469 = vmatpush1.bf16.msra.mxu0 %v387
  %470 = vmatprep.subr.bf16.mxu0 0
  %471 = vmatpush1.bf16.msra.mxu0 %v388
  %472 = vmatprep.subr.bf16.mxu0 0
  %473 = vmatpush1.bf16.msra.mxu0 %v389
  %474 = vmatprep.subr.bf16.mxu0 0
  %475 = vmatpush1.bf16.msra.mxu0 %v390
  %476 = vmatprep.subr.bf16.mxu0 0
  %477 = vmatpush1.bf16.msra.mxu0 %v391
  %478 = vmatprep.subr.bf16.mxu0 0
  %479 = vmatpush1.bf16.msra.mxu0 %v392
  %480 = vmatprep.subr.bf16.mxu0 0
  %481 = vmatpush1.bf16.msra.mxu0 %v393
  %482 = vmatprep.subr.bf16.mxu0 0
  %483 = vmatpush1.bf16.msra.mxu0 %v394
  %484 = vmatprep.subr.bf16.mxu0 0
  %485 = vmatpush1.bf16.msra.mxu0 %v395
  %486 = vmatprep.subr.bf16.mxu0 0
  %487 = vmatpush1.bf16.msra.mxu0 %v396
  %488 = vmatprep.subr.bf16.mxu0 0
  %489 = vmatpush1.bf16.msra.mxu0 %v397
  %490 = vmatprep.subr.bf16.mxu0 0
  %491 = vmatpush1.bf16.msra.mxu0 %v398
  %492 = vmatprep.subr.bf16.mxu0 0
  %493 = vmatpush1.bf16.msra.mxu0 %v399
  %494 = vmatprep.subr.bf16.mxu0 0
  %495 = vmatpush1.bf16.msra.mxu0 %v400
  %496 = vmatprep.subr.bf16.mxu0 0
  %497 = vmatpush1.bf16.msra.mxu0 %v401
  %498 = vmatprep.mubr.bf16.mxu0 %v187
  %499 = vmatmul.mubr.bf16.gmra.mrb[0].mxu0 %v186
  %v500 = vpop.f32.mrb[0].mxu0
  %v501 = vadd.f32 0.0, %v500
  %v502 = vpop.f32.mrb[0].mxu0
  %v503 = vpop.f32.mrb[0].mxu0
  %v504 = vadd.f32 0.0, %v503
  %v505 = vpop.f32.mrb[0].mxu0
  %506 = vmatprep.mubr.bf16.mxu0 %v192
  %507 = vmatmul.mubr.bf16.gmra.mrb[0].mxu0 %v191
  %v508 = vpop.f32.mrb[0].mxu0
  %v509 = vadd.f32 0.0, %v508
  %v510 = vpop.f32.mrb[0].mxu0
  %v511 = vpop.f32.mrb[0].mxu0
  %v512 = vadd.f32 0.0, %v511
  %v513 = vpop.f32.mrb[0].mxu0
  %514 = vmatprep.mubr.bf16.mxu0 %v197
  %515 = vmatmul.mubr.bf16.gmra.mrb[0].mxu0 %v196
  %v516 = vpop.f32.mrb[0].mxu0
  %v517 = vadd.f32 0.0, %v516
  %v518 = vpop.f32.mrb[0].mxu0
  %v519 = vpop.f32.mrb[0].mxu0
  %v520 = vadd.f32 0.0, %v519
  %v521 = vpop.f32.mrb[0].mxu0
  %522 = vmatprep.mubr.bf16.mxu0 %v202
  %523 = vmatmul.mubr.bf16.gmra.mrb[0].mxu0 %v201
  %v524 = vpop.f32.mrb[0].mxu0
  %v525 = vadd.f32 0.0, %v524
  %v526 = vpop.f32.mrb[0].mxu0
  %v527 = vpop.f32.mrb[0].mxu0
  %v528 = vadd.f32 0.0, %v527
  %v529 = vpop.f32.mrb[0].mxu0
  %530 = vdwg.mxu0
  %531 = vmatprep.subr.bf16.mxu0 0
  %532 = vmatpush1.bf16.msra.mxu0 %v402
  %533 = vmatprep.subr.bf16.mxu0 0
  %534 = vmatpush1.bf16.msra.mxu0 %v403
  %535 = vmatprep.subr.bf16.mxu0 0
  %536 = vmatpush1.bf16.msra.mxu0 %v404
  %537 = vmatprep.subr.bf16.mxu0 0
  %538 = vmatpush1.bf16.msra.mxu0 %v405
  %539 = vmatprep.subr.bf16.mxu0 0
  %540 = vmatpush1.bf16.msra.mxu0 %v406
  %541 = vmatprep.subr.bf16.mxu0 0
  %542 = vmatpush1.bf16.msra.mxu0 %v407
  %543 = vmatprep.subr.bf16.mxu0 0
  %544 = vmatpush1.bf16.msra.mxu0 %v408
  %545 = vmatprep.subr.bf16.mxu0 0
  %546 = vmatpush1.bf16.msra.mxu0 %v409
  %547 = vmatprep.subr.bf16.mxu0 0
  %548 = vmatpush1.bf16.msra.mxu0 %v410
  %549 = vmatprep.subr.bf16.mxu0 0
  %550 = vmatpush1.bf16.msra.mxu0 %v411
  %551 = vmatprep.subr.bf16.mxu0 0
  %552 = vmatpush1.bf16.msra.mxu0 %v412
  %553 = vmatprep.subr.bf16.mxu0 0
  %554 = vmatpush1.bf16.msra.mxu0 %v413
  %555 = vmatprep.subr.bf16.mxu0 0
  %556 = vmatpush1.bf16.msra.mxu0 %v414
  %557 = vmatprep.subr.bf16.mxu0 0
  %558 = vmatpush1.bf16.msra.mxu0 %v415
  %559 = vmatprep.subr.bf16.mxu0 0
  %560 = vmatpush1.bf16.msra.mxu0 %v416
  %561 = vmatprep.subr.bf16.mxu0 0
  %562 = vmatpush1.bf16.msra.mxu0 %v417
  %563 = vmatprep.mubr.bf16.mxu0 %v189
  %564 = vmatmul.mubr.bf16.gmra.mrb[0].mxu0 %v188
  %v565 = vpop.f32.mrb[0].mxu0
  %v566 = vadd.f32 %v501, %v565
  %v567 = vpop.f32.mrb[0].mxu0
  %v568 = vpop.f32.mrb[0].mxu0
  %v569 = vadd.f32 %v504, %v568
  %v570 = vpop.f32.mrb[0].mxu0
  %571 = vmatprep.mubr.bf16.mxu0 %v194
  %572 = vmatmul.mubr.bf16.gmra.mrb[0].mxu0 %v193
  %v573 = vpop.f32.mrb[0].mxu0
  %v574 = vadd.f32 %v509, %v573
  %v575 = vpop.f32.mrb[0].mxu0
  %v576 = vpop.f32.mrb[0].mxu0
  %v577 = vadd.f32 %v512, %v576
  %v578 = vpop.f32.mrb[0].mxu0
  %579 = vmatprep.mubr.bf16.mxu0 %v199
  %580 = vmatmul.mubr.bf16.gmra.mrb[0].mxu0 %v198
  %v581 = vpop.f32.mrb[0].mxu0
  %v582 = vadd.f32 %v517, %v581
  %v583 = vpop.f32.mrb[0].mxu0
  %v584 = vpop.f32.mrb[0].mxu0
  %v585 = vadd.f32 %v520, %v584
  %v586 = vpop.f32.mrb[0].mxu0
  %587 = vmatprep.mubr.bf16.mxu0 %v204
  %588 = vmatmul.mubr.bf16.gmra.mrb[0].mxu0 %v203
  %v589 = vpop.f32.mrb[0].mxu0
  %v590 = vadd.f32 %v525, %v589
  %v591 = vpop.f32.mrb[0].mxu0
  %v592 = vpop.f32.mrb[0].mxu0
  %v593 = vadd.f32 %v528, %v592
  %v594 = vpop.f32.mrb[0].mxu0
  %595 = vdwg.mxu0
  %596 = vmatprep.subr.bf16.mxu0 0
  %597 = vmatpush1.bf16.msra.mxu0 %v418
  %598 = vmatprep.subr.bf16.mxu0 0
  %599 = vmatpush1.bf16.msra.mxu0 %v419
  %600 = vmatprep.subr.bf16.mxu0 0
  %601 = vmatpush1.bf16.msra.mxu0 %v420
  %602 = vmatprep.subr.bf16.mxu0 0
  %603 = vmatpush1.bf16.msra.mxu0 %v421
  %604 = vmatprep.subr.bf16.mxu0 0
  %605 = vmatpush1.bf16.msra.mxu0 %v422
  %606 = vmatprep.subr.bf16.mxu0 0
  %607 = vmatpush1.bf16.msra.mxu0 %v423
  %608 = vmatprep.subr.bf16.mxu0 0
  %609 = vmatpush1.bf16.msra.mxu0 %v424
  %610 = vmatprep.subr.bf16.mxu0 0
  %611 = vmatpush1.bf16.msra.mxu0 %v425
  %612 = vmatprep.subr.bf16.mxu0 0
  %613 = vmatpush1.bf16.msra.mxu0 0
  %614 = vmatprep.subr.bf16.mxu0 0
  %615 = vmatpush1.bf16.msra.mxu0 0
  %616 = vmatprep.subr.bf16.mxu0 0
  %617 = vmatpush1.bf16.msra.mxu0 0
  %618 = vmatprep.subr.bf16.mxu0 0
  %619 = vmatpush1.bf16.msra.mxu0 0
  %620 = vmatprep.subr.bf16.mxu0 0
  %621 = vmatpush1.bf16.msra.mxu0 0
  %622 = vmatprep.subr.bf16.mxu0 0
  %623 = vmatpush1.bf16.msra.mxu0 0
  %624 = vmatprep.subr.bf16.mxu0 0
  %625 = vmatpush1.bf16.msra.mxu0 0
  %626 = vmatprep.subr.bf16.mxu0 0
  %627 = vmatpush1.bf16.msra.mxu0 0
  %628 = vmatprep.mubr.bf16.mxu0 0
  %629 = vmatmul.mubr.bf16.gmra.mrb[0].mxu0 %v190
  %v630 = vpop.f32.mrb[0].mxu0
  %v631 = vadd.f32 %v566, %v630
  %v632 = vpop.f32.mrb[0].mxu0
  %v633 = vpop.f32.mrb[0].mxu0
  %v634 = vadd.f32 %v569, %v633
  %v635 = vpop.f32.mrb[0].mxu0
  %636 = vmatprep.mubr.bf16.mxu0 0
  %637 = vmatmul.mubr.bf16.gmra.mrb[0].mxu0 %v195
  %v638 = vpop.f32.mrb[0].mxu0
  %v639 = vadd.f32 %v574, %v638
  %v640 = vpop.f32.mrb[0].mxu0
  %v641 = vpop.f32.mrb[0].mxu0
  %v642 = vadd.f32 %v577, %v641
  %v643 = vpop.f32.mrb[0].mxu0
  %644 = vmatprep.mubr.bf16.mxu0 0
  %645 = vmatmul.mubr.bf16.gmra.mrb[0].mxu0 %v200
  %v646 = vpop.f32.mrb[0].mxu0
  %v647 = vadd.f32 %v582, %v646
  %v648 = vpop.f32.mrb[0].mxu0
  %v649 = vpop.f32.mrb[0].mxu0
  %v650 = vadd.f32 %v585, %v649
  %v651 = vpop.f32.mrb[0].mxu0
  %652 = vmatprep.mubr.bf16.mxu0 0
  %653 = vmatmul.mubr.bf16.gmra.mrb[0].mxu0 %v205
  %v654 = vpop.f32.mrb[0].mxu0
  %v655 = vadd.f32 %v590, %v654
  %v656 = vpop.f32.mrb[0].mxu0
  %v657 = vpop.f32.mrb[0].mxu0
  %v658 = vadd.f32 %v593, %v657
  %v659 = vpop.f32.mrb[0].mxu0
  %660 = vdwg.mxu0
  %v661 = vld [vmem:[%s2] sm:$0x1]
  %v663 = vlaneseq
  %v664 = vshrl.u32 %v663, 7
  %v665 = vsub.s32 0, %v664
  %v666 = vrot.slane %v661, %v665
  %v668 = vmul.f32 %v631, %v666
  %v669 = vmul.f32 %v634, %v666
  %v670 = vmul.f32 %v639, %v666
  %v671 = vmul.f32 %v642, %v666
  %v672 = vmul.f32 %v647, %v666
  %v673 = vmul.f32 %v650, %v666
  %v674 = vmul.f32 %v655, %v666
  %v675 = vmul.f32 %v658, %v666
  %v676 = vld [vmem:[%s3] sm:$0x1]
  %v678 = vlaneseq
  %v679 = vshrl.u32 %v678, 7
  %v680 = vsub.s32 0, %v679
  %v681 = vrot.slane %v676, %v680
  %v683 = vadd.f32 %v668, %v681
  %v684 = vadd.f32 %v669, %v681
  %v685 = vadd.f32 %v670, %v681
  %v686 = vadd.f32 %v671, %v681
  %v687 = vadd.f32 %v672, %v681
  %v688 = vadd.f32 %v673, %v681
  %v689 = vadd.f32 %v674, %v681
  %v690 = vadd.f32 %v675, %v681
  %v691 = vmax.f32 %v683, 0.0
  %v692 = vmax.f32 %v684, 0.0
  %v693 = vmax.f32 %v685, 0.0
  %v694 = vmax.f32 %v686, 0.0
  %v695 = vmax.f32 %v687, 0.0
  %v696 = vmax.f32 %v688, 0.0
  %v697 = vmax.f32 %v689, 0.0
  %v698 = vmax.f32 %v690, 0.0
  %699 = vst [vmem:[%s4] sm:$0xff] %v691
  %700 = vst [vmem:[%s4 + $0x8] sm:$0xff] %v692
  %701 = vst [vmem:[%s4 + $0x10] sm:$0xff] %v693
  %702 = vst [vmem:[%s4 + $0x18] sm:$0xff] %v694
  %703 = vst [vmem:[%s4 + $0x20] sm:$0xff] %v695
  %704 = vst [vmem:[%s4 + $0x28] sm:$0xff] %v696
  %705 = vst [vmem:[%s4 + $0x30] sm:$0xff] %v697
  %706 = vst [vmem:[%s4 + $0x38] sm:$0xff] %v698
  // Predicated region
  $region18: #{recognizer_forward.9} parent=0 // pred_check
    _
  $region19: #{recognizer_forward.9} parent=0 // pred_check_branch
    %708 = sbr.rel (0) target = $region21
  $region20: #{recognizer_forward.9} parent=0 // pred_region
    _
  $region21: #{recognizer_forward.9} parent=0 // pred_fallthru
    _
  // Predicated region
  $region22: #{recognizer_forward.9} parent=0 // pred_check
    _
  $region23: #{recognizer_forward.9} parent=0 // pred_check_branch
    %710 = sbr.rel (0) target = $region25
  $region24: #{recognizer_forward.9} parent=0 // pred_region
    _
  $region25: #{recognizer_forward.9} parent=0 // pred_fallthru
    _

// kernel: recognizer_forward.10
$region0: #{recognizer_forward.10}
  #allocation0 [shape = 'u32[]', space=smem, size = 0x4, offset = 0x4, fixed_abs, tag = 'smem constant byte address 0x4 - core index']
  #allocation1 [shape = 'u32[144,128]{1,0:T(1,128)}', space=vmem, size = 0x12000, scoped, tag = 'internal scratch']
  %s0 = inlined_call_operand.vmem [shape: bf16[64,1152], index: 0, kind: input, shape index: {}]
  %s1 = inlined_call_operand.vmem [shape: bf16[1152,256], index: 1, kind: input, shape index: {}]
  %s2 = inlined_call_operand.vmem [shape: f32[1,256], index: 2, kind: input, shape index: {}]
  %s3 = inlined_call_operand.vmem [shape: f32[1,256], index: 3, kind: input, shape index: {}]
  %s4 = inlined_call_operand.vmem [shape: f32[64,256], index: 4, kind: output, shape index: {}]
  %s5 = sld [smem:[#allocation0]]
  $region26: #{recognizer_forward.10} parent=0
    _
  %s7 = ssub.s32 1, %s5
  %s8 = scalar_select 0, %s7, %s5
  // Predicated region
  $region2: #{recognizer_forward.10} parent=0 // pred_check
    _
  $region3: #{recognizer_forward.10} parent=0 // pred_check_branch
    %10 = sbr.rel (0) target = $region5
  $region4: #{recognizer_forward.10} parent=0 // pred_region
    _
  $region5: #{recognizer_forward.10} parent=0 // pred_fallthru
    _
  // Predicated region
  $region6: #{recognizer_forward.10} parent=0 // pred_check
    _
  $region7: #{recognizer_forward.10} parent=0 // pred_check_branch
    %12 = sbr.rel (0) target = $region9
  $region8: #{recognizer_forward.10} parent=0 // pred_region
    _
  $region9: #{recognizer_forward.10} parent=0 // pred_fallthru
    _
  // Predicated region
  $region10: #{recognizer_forward.10} parent=0 // pred_check
    _
  $region11: #{recognizer_forward.10} parent=0 // pred_check_branch
    %14 = sbr.rel (0) target = $region13
  $region12: #{recognizer_forward.10} parent=0 // pred_region
    _
  $region13: #{recognizer_forward.10} parent=0 // pred_fallthru
    _
  // Predicated region
  $region14: #{recognizer_forward.10} parent=0 // pred_check
    _
  $region15: #{recognizer_forward.10} parent=0 // pred_check_branch
    %16 = sbr.rel (0) target = $region17
  $region16: #{recognizer_forward.10} parent=0 // pred_region
    _
  $region17: #{recognizer_forward.10} parent=0 // pred_fallthru
    _
  %v18 = vld [vmem:[%s1] sm:$0xff]
  %v19 = vld [vmem:[%s1 + $0x8] sm:$0xff]
  %v20 = vld [vmem:[%s1 + $0x10] sm:$0xff]
  %v21 = vld [vmem:[%s1 + $0x18] sm:$0xff]
  %v22 = vld [vmem:[%s1 + $0x20] sm:$0xff]
  %v23 = vld [vmem:[%s1 + $0x28] sm:$0xff]
  %v24 = vld [vmem:[%s1 + $0x30] sm:$0xff]
  %v25 = vld [vmem:[%s1 + $0x38] sm:$0xff]
  %v26 = vld [vmem:[%s1 + $0x40] sm:$0xff]
  %v27 = vld [vmem:[%s1 + $0x48] sm:$0xff]
  %v28 = vld [vmem:[%s1 + $0x50] sm:$0xff]
  %v29 = vld [vmem:[%s1 + $0x58] sm:$0xff]
  %v30 = vld [vmem:[%s1 + $0x60] sm:$0xff]
  %v31 = vld [vmem:[%s1 + $0x68] sm:$0xff]
  %v32 = vld [vmem:[%s1 + $0x70] sm:$0xff]
  %v33 = vld [vmem:[%s1 + $0x78] sm:$0xff]
  %v34 = vld [vmem:[%s1 + $0x80] sm:$0xff]
  %v35 = vld [vmem:[%s1 + $0x88] sm:$0xff]
  %v36 = vld [vmem:[%s1 + $0x90] sm:$0xff]
  %v37 = vld [vmem:[%s1 + $0x98] sm:$0xff]
  %v38 = vld [vmem:[%s1 + $0xa0] sm:$0xff]
  %v39 = vld [vmem:[%s1 + $0xa8] sm:$0xff]
  %v40 = vld [vmem:[%s1 + $0xb0] sm:$0xff]
  %v41 = vld [vmem:[%s1 + $0xb8] sm:$0xff]
  %v42 = vld [vmem:[%s1 + $0xc0] sm:$0xff]
  %v43 = vld [vmem:[%s1 + $0xc8] sm:$0xff]
  %v44 = vld [vmem:[%s1 + $0xd0] sm:$0xff]
  %v45 = vld [vmem:[%s1 + $0xd8] sm:$0xff]
  %v46 = vld [vmem:[%s1 + $0xe0] sm:$0xff]
  %v47 = vld [vmem:[%s1 + $0xe8] sm:$0xff]
  %v48 = vld [vmem:[%s1 + $0xf0] sm:$0xff]
  %v49 = vld [vmem:[%s1 + $0xf8] sm:$0xff]
  %v50 = vld [vmem:[%s1 + $0x100] sm:$0xff]
  %v51 = vld [vmem:[%s1 + $0x108] sm:$0xff]
  %v52 = vld [vmem:[%s1 + $0x110] sm:$0xff]
  %v53 = vld [vmem:[%s1 + $0x118] sm:$0xff]
  %v54 = vld [vmem:[%s1 + $0x120] sm:$0xff]
  %v55 = vld [vmem:[%s1 + $0x128] sm:$0xff]
  %v56 = vld [vmem:[%s1 + $0x130] sm:$0xff]
  %v57 = vld [vmem:[%s1 + $0x138] sm:$0xff]
  %v58 = vld [vmem:[%s1 + $0x140] sm:$0xff]
  %v59 = vld [vmem:[%s1 + $0x148] sm:$0xff]
  %v60 = vld [vmem:[%s1 + $0x150] sm:$0xff]
  %v61 = vld [vmem:[%s1 + $0x158] sm:$0xff]
  %v62 = vld [vmem:[%s1 + $0x160] sm:$0xff]
  %v63 = vld [vmem:[%s1 + $0x168] sm:$0xff]
  %v64 = vld [vmem:[%s1 + $0x170] sm:$0xff]
  %v65 = vld [vmem:[%s1 + $0x178] sm:$0xff]
  %v66 = vld [vmem:[%s1 + $0x180] sm:$0xff]
  %v67 = vld [vmem:[%s1 + $0x188] sm:$0xff]
  %v68 = vld [vmem:[%s1 + $0x190] sm:$0xff]
  %v69 = vld [vmem:[%s1 + $0x198] sm:$0xff]
  %v70 = vld [vmem:[%s1 + $0x1a0] sm:$0xff]
  %v71 = vld [vmem:[%s1 + $0x1a8] sm:$0xff]
  %v72 = vld [vmem:[%s1 + $0x1b0] sm:$0xff]
  %v73 = vld [vmem:[%s1 + $0x1b8] sm:$0xff]
  %v74 = vld [vmem:[%s1 + $0x1c0] sm:$0xff]
  %v75 = vld [vmem:[%s1 + $0x1c8] sm:$0xff]
  %v76 = vld [vmem:[%s1 + $0x1d0] sm:$0xff]
  %v77 = vld [vmem:[%s1 + $0x1d8] sm:$0xff]
  %v78 = vld [vmem:[%s1 + $0x1e0] sm:$0xff]
  %v79 = vld [vmem:[%s1 + $0x1e8] sm:$0xff]
  %v80 = vld [vmem:[%s1 + $0x1f0] sm:$0xff]
  %v81 = vld [vmem:[%s1 + $0x1f8] sm:$0xff]
  %v82 = vld [vmem:[%s1 + $0x200] sm:$0xff]
  %v83 = vld [vmem:[%s1 + $0x208] sm:$0xff]
  %v84 = vld [vmem:[%s1 + $0x210] sm:$0xff]
  %v85 = vld [vmem:[%s1 + $0x218] sm:$0xff]
  %v86 = vld [vmem:[%s1 + $0x220] sm:$0xff]
  %v87 = vld [vmem:[%s1 + $0x228] sm:$0xff]
  %v88 = vld [vmem:[%s1 + $0x230] sm:$0xff]
  %v89 = vld [vmem:[%s1 + $0x238] sm:$0xff]
  %v90 = vld [vmem:[%s1 + $0x240] sm:$0xff]
  %v91 = vld [vmem:[%s1 + $0x248] sm:$0xff]
  %v92 = vld [vmem:[%s1 + $0x250] sm:$0xff]
  %v93 = vld [vmem:[%s1 + $0x258] sm:$0xff]
  %v94 = vld [vmem:[%s1 + $0x260] sm:$0xff]
  %v95 = vld [vmem:[%s1 + $0x268] sm:$0xff]
  %v96 = vld [vmem:[%s1 + $0x270] sm:$0xff]
  %v97 = vld [vmem:[%s1 + $0x278] sm:$0xff]
  %v98 = vld [vmem:[%s1 + $0x280] sm:$0xff]
  %v99 = vld [vmem:[%s1 + $0x288] sm:$0xff]
  %v100 = vld [vmem:[%s1 + $0x290] sm:$0xff]
  %v101 = vld [vmem:[%s1 + $0x298] sm:$0xff]
  %v102 = vld [vmem:[%s1 + $0x2a0] sm:$0xff]
  %v103 = vld [vmem:[%s1 + $0x2a8] sm:$0xff]
  %v104 = vld [vmem:[%s1 + $0x2b0] sm:$0xff]
  %v105 = vld [vmem:[%s1 + $0x2b8] sm:$0xff]
  %v106 = vld [vmem:[%s1 + $0x2c0] sm:$0xff]
  %v107 = vld [vmem:[%s1 + $0x2c8] sm:$0xff]
  %v108 = vld [vmem:[%s1 + $0x2d0] sm:$0xff]
  %v109 = vld [vmem:[%s1 + $0x2d8] sm:$0xff]
  %v110 = vld [vmem:[%s1 + $0x2e0] sm:$0xff]
  %v111 = vld [vmem:[%s1 + $0x2e8] sm:$0xff]
  %v112 = vld [vmem:[%s1 + $0x2f0] sm:$0xff]
  %v113 = vld [vmem:[%s1 + $0x2f8] sm:$0xff]
  %v114 = vld [vmem:[%s1 + $0x300] sm:$0xff]
  %v115 = vld [vmem:[%s1 + $0x308] sm:$0xff]
  %v116 = vld [vmem:[%s1 + $0x310] sm:$0xff]
  %v117 = vld [vmem:[%s1 + $0x318] sm:$0xff]
  %v118 = vld [vmem:[%s1 + $0x320] sm:$0xff]
  %v119 = vld [vmem:[%s1 + $0x328] sm:$0xff]
  %v120 = vld [vmem:[%s1 + $0x330] sm:$0xff]
  %v121 = vld [vmem:[%s1 + $0x338] sm:$0xff]
  %v122 = vld [vmem:[%s1 + $0x340] sm:$0xff]
  %v123 = vld [vmem:[%s1 + $0x348] sm:$0xff]
  %v124 = vld [vmem:[%s1 + $0x350] sm:$0xff]
  %v125 = vld [vmem:[%s1 + $0x358] sm:$0xff]
  %v126 = vld [vmem:[%s1 + $0x360] sm:$0xff]
  %v127 = vld [vmem:[%s1 + $0x368] sm:$0xff]
  %v128 = vld [vmem:[%s1 + $0x370] sm:$0xff]
  %v129 = vld [vmem:[%s1 + $0x378] sm:$0xff]
  %v130 = vld [vmem:[%s1 + $0x380] sm:$0xff]
  %v131 = vld [vmem:[%s1 + $0x388] sm:$0xff]
  %v132 = vld [vmem:[%s1 + $0x390] sm:$0xff]
  %v133 = vld [vmem:[%s1 + $0x398] sm:$0xff]
  %v134 = vld [vmem:[%s1 + $0x3a0] sm:$0xff]
  %v135 = vld [vmem:[%s1 + $0x3a8] sm:$0xff]
  %v136 = vld [vmem:[%s1 + $0x3b0] sm:$0xff]
  %v137 = vld [vmem:[%s1 + $0x3b8] sm:$0xff]
  %v138 = vld [vmem:[%s1 + $0x3c0] sm:$0xff]
  %v139 = vld [vmem:[%s1 + $0x3c8] sm:$0xff]
  %v140 = vld [vmem:[%s1 + $0x3d0] sm:$0xff]
  %v141 = vld [vmem:[%s1 + $0x3d8] sm:$0xff]
  %v142 = vld [vmem:[%s1 + $0x3e0] sm:$0xff]
  %v143 = vld [vmem:[%s1 + $0x3e8] sm:$0xff]
  %v144 = vld [vmem:[%s1 + $0x3f0] sm:$0xff]
  %v145 = vld [vmem:[%s1 + $0x3f8] sm:$0xff]
  %v146 = vld [vmem:[%s1 + $0x400] sm:$0xff]
  %v147 = vld [vmem:[%s1 + $0x408] sm:$0xff]
  %v148 = vld [vmem:[%s1 + $0x410] sm:$0xff]
  %v149 = vld [vmem:[%s1 + $0x418] sm:$0xff]
  %v150 = vld [vmem:[%s1 + $0x420] sm:$0xff]
  %v151 = vld [vmem:[%s1 + $0x428] sm:$0xff]
  %v152 = vld [vmem:[%s1 + $0x430] sm:$0xff]
  %v153 = vld [vmem:[%s1 + $0x438] sm:$0xff]
  %v154 = vld [vmem:[%s1 + $0x440] sm:$0xff]
  %v155 = vld [vmem:[%s1 + $0x448] sm:$0xff]
  %v156 = vld [vmem:[%s1 + $0x450] sm:$0xff]
  %v157 = vld [vmem:[%s1 + $0x458] sm:$0xff]
  %v158 = vld [vmem:[%s1 + $0x460] sm:$0xff]
  %v159 = vld [vmem:[%s1 + $0x468] sm:$0xff]
  %v160 = vld [vmem:[%s1 + $0x470] sm:$0xff]
  %v161 = vld [vmem:[%s1 + $0x478] sm:$0xff]
  %v162 = vld [vmem:[%s0] sm:$0xff]
  %v163 = vld [vmem:[%s0 + $0x8] sm:$0xff]
  %v164 = vld [vmem:[%s0 + $0x10] sm:$0xff]
  %v165 = vld [vmem:[%s0 + $0x18] sm:$0xff]
  %v166 = vld [vmem:[%s0 + $0x20] sm:$0xf]
  %v167 = vld [vmem:[%s0 + $0x24] sm:$0xff]
  %v168 = vld [vmem:[%s0 + $0x2c] sm:$0xff]
  %v169 = vld [vmem:[%s0 + $0x34] sm:$0xff]
  %v170 = vld [vmem:[%s0 + $0x3c] sm:$0xff]
  %v171 = vld [vmem:[%s0 + $0x44] sm:$0xf]
  %v172 = vld [vmem:[%s0 + $0x48] sm:$0xff]
  %v173 = vld [vmem:[%s0 + $0x50] sm:$0xff]
  %v174 = vld [vmem:[%s0 + $0x58] sm:$0xff]
  %v175 = vld [vmem:[%s0 + $0x60] sm:$0xff]
  %v176 = vld [vmem:[%s0 + $0x68] sm:$0xf]
  %v177 = vld [vmem:[%s0 + $0x6c] sm:$0xff]
  %v178 = vld [vmem:[%s0 + $0x74] sm:$0xff]
  %v179 = vld [vmem:[%s0 + $0x7c] sm:$0xff]
  %v180 = vld [vmem:[%s0 + $0x84] sm:$0xff]
  %v181 = vld [vmem:[%s0 + $0x8c] sm:$0xf]
  %v182 = vld [vmem:[%s0 + $0x90] sm:$0xff]
  %v183 = vld [vmem:[%s0 + $0x98] sm:$0xff]
  %v184 = vld [vmem:[%s0 + $0xa0] sm:$0xff]
  %v185 = vld [vmem:[%s0 + $0xa8] sm:$0xff]
  %v186 = vld [vmem:[%s0 + $0xb0] sm:$0xf]
  %v187 = vld [vmem:[%s0 + $0xb4] sm:$0xff]
  %v188 = vld [vmem:[%s0 + $0xbc] sm:$0xff]
  %v189 = vld [vmem:[%s0 + $0xc4] sm:$0xff]
  %v190 = vld [vmem:[%s0 + $0xcc] sm:$0xff]
  %v191 = vld [vmem:[%s0 + $0xd4] sm:$0xf]
  %v192 = vld [vmem:[%s0 + $0xd8] sm:$0xff]
  %v193 = vld [vmem:[%s0 + $0xe0] sm:$0xff]
  %v194 = vld [vmem:[%s0 + $0xe8] sm:$0xff]
  %v195 = vld [vmem:[%s0 + $0xf0] sm:$0xff]
  %v196 = vld [vmem:[%s0 + $0xf8] sm:$0xf]
  %v197 = vld [vmem:[%s0 + $0xfc] sm:$0xff]
  %v198 = vld [vmem:[%s0 + $0x104] sm:$0xff]
  %v199 = vld [vmem:[%s0 + $0x10c] sm:$0xff]
  %v200 = vld [vmem:[%s0 + $0x114] sm:$0xff]
  %v201 = vld [vmem:[%s0 + $0x11c] sm:$0xf]
  %v242 = vunpack.c.l.b16 %v162
  %v243 = vunpack.c.h.b16 %v162
  %v244 = vunpack.c.l.b16 %v163
  %v245 = vunpack.c.h.b16 %v163
  %v246 = vunpack.c.l.b16 %v164
  %v247 = vunpack.c.h.b16 %v164
  %v248 = vunpack.c.l.b16 %v165
  %v249 = vunpack.c.h.b16 %v165
  %v250 = vunpack.c.l.b16 %v166
  %v251 = vunpack.c.l.b16 %v167
  %v252 = vunpack.c.h.b16 %v167
  %v253 = vunpack.c.l.b16 %v168
  %v254 = vunpack.c.h.b16 %v168
  %v255 = vunpack.c.l.b16 %v169
  %v256 = vunpack.c.h.b16 %v169
  %v257 = vunpack.c.l.b16 %v170
  %v258 = vunpack.c.h.b16 %v170
  %v259 = vunpack.c.l.b16 %v171
  %v260 = vunpack.c.l.b16 %v172
  %v261 = vunpack.c.h.b16 %v172
  %v262 = vunpack.c.l.b16 %v173
  %v263 = vunpack.c.h.b16 %v173
  %v264 = vunpack.c.l.b16 %v174
  %v265 = vunpack.c.h.b16 %v174
  %v266 = vunpack.c.l.b16 %v175
  %v267 = vunpack.c.h.b16 %v175
  %v268 = vunpack.c.l.b16 %v176
  %v269 = vunpack.c.l.b16 %v177
  %v270 = vunpack.c.h.b16 %v177
  %v271 = vunpack.c.l.b16 %v178
  %v272 = vunpack.c.h.b16 %v178
  %v273 = vunpack.c.l.b16 %v179
  %v274 = vunpack.c.h.b16 %v179
  %v275 = vunpack.c.l.b16 %v180
  %v276 = vunpack.c.h.b16 %v180
  %v277 = vunpack.c.l.b16 %v181
  %v278 = vunpack.c.l.b16 %v182
  %v279 = vunpack.c.h.b16 %v182
  %v280 = vunpack.c.l.b16 %v183
  %v281 = vunpack.c.h.b16 %v183
  %v282 = vunpack.c.l.b16 %v184
  %v283 = vunpack.c.h.b16 %v184
  %v284 = vunpack.c.l.b16 %v185
  %v285 = vunpack.c.h.b16 %v185
  %v286 = vunpack.c.l.b16 %v186
  %v287 = vunpack.c.l.b16 %v187
  %v288 = vunpack.c.h.b16 %v187
  %v289 = vunpack.c.l.b16 %v188
  %v290 = vunpack.c.h.b16 %v188
  %v291 = vunpack.c.l.b16 %v189
  %v292 = vunpack.c.h.b16 %v189
  %v293 = vunpack.c.l.b16 %v190
  %v294 = vunpack.c.h.b16 %v190
  %v295 = vunpack.c.l.b16 %v191
  %v296 = vunpack.c.l.b16 %v192
  %v297 = vunpack.c.h.b16 %v192
  %v298 = vunpack.c.l.b16 %v193
  %v299 = vunpack.c.h.b16 %v193
  %v300 = vunpack.c.l.b16 %v194
  %v301 = vunpack.c.h.b16 %v194
  %v302 = vunpack.c.l.b16 %v195
  %v303 = vunpack.c.h.b16 %v195
  %v304 = vunpack.c.l.b16 %v196
  %v305 = vunpack.c.l.b16 %v197
  %v306 = vunpack.c.h.b16 %v197
  %v307 = vunpack.c.l.b16 %v198
  %v308 = vunpack.c.h.b16 %v198
  %v309 = vunpack.c.l.b16 %v199
  %v310 = vunpack.c.h.b16 %v199
  %v311 = vunpack.c.l.b16 %v200
  %v312 = vunpack.c.h.b16 %v200
  %v313 = vunpack.c.l.b16 %v201
  %v314 = vpack.c.b16 %v251, %v242
  %v315 = vpack.c.b16 %v252, %v243
  %v316 = vpack.c.b16 %v253, %v244
  %v317 = vpack.c.b16 %v254, %v245
  %v318 = vpack.c.b16 %v255, %v246
  %v319 = vpack.c.b16 %v256, %v247
  %v320 = vpack.c.b16 %v257, %v248
  %v321 = vpack.c.b16 %v258, %v249
  %v322 = vpack.c.b16 %v259, %v250
  %v323 = vpack.c.b16 %v269, %v260
  %v324 = vpack.c.b16 %v270, %v261
  %v325 = vpack.c.b16 %v271, %v262
  %v326 = vpack.c.b16 %v272, %v263
  %v327 = vpack.c.b16 %v273, %v264
  %v328 = vpack.c.b16 %v274, %v265
  %v329 = vpack.c.b16 %v275, %v266
  %v330 = vpack.c.b16 %v276, %v267
  %v331 = vpack.c.b16 %v277, %v268
  %v332 = vpack.c.b16 %v287, %v278
  %v333 = vpack.c.b16 %v288, %v279
  %v334 = vpack.c.b16 %v289, %v280
  %v335 = vpack.c.b16 %v290, %v281
  %v336 = vpack.c.b16 %v291, %v282
  %v337 = vpack.c.b16 %v292, %v283
  %v338 = vpack.c.b16 %v293, %v284
  %v339 = vpack.c.b16 %v294, %v285
  %v340 = vpack.c.b16 %v295, %v286
  %v341 = vpack.c.b16 %v305, %v296
  %v342 = vpack.c.b16 %v306, %v297
  %v343 = vpack.c.b16 %v307, %v298
  %v344 = vpack.c.b16 %v308, %v299
  %v345 = vpack.c.b16 %v309, %v300
  %v346 = vpack.c.b16 %v310, %v301
  %v347 = vpack.c.b16 %v311, %v302
  %v348 = vpack.c.b16 %v312, %v303
  %v349 = vpack.c.b16 %v313, %v304
  %v530 = vunpack.c.l.b16 %v18
  %v531 = vunpack.c.h.b16 %v18
  %v532 = vunpack.c.l.b16 %v19
  %v533 = vunpack.c.h.b16 %v19
  %v534 = vunpack.c.l.b16 %v20
  %v535 = vunpack.c.h.b16 %v20
  %v536 = vunpack.c.l.b16 %v21
  %v537 = vunpack.c.h.b16 %v21
  %v538 = vunpack.c.l.b16 %v22
  %v539 = vunpack.c.h.b16 %v22
  %v540 = vunpack.c.l.b16 %v23
  %v541 = vunpack.c.h.b16 %v23
  %v542 = vunpack.c.l.b16 %v24
  %v543 = vunpack.c.h.b16 %v24
  %v544 = vunpack.c.l.b16 %v25
  %v545 = vunpack.c.h.b16 %v25
  %v546 = vunpack.c.l.b16 %v26
  %v547 = vunpack.c.h.b16 %v26
  %v548 = vunpack.c.l.b16 %v27
  %v549 = vunpack.c.h.b16 %v27
  %v550 = vunpack.c.l.b16 %v28
  %v551 = vunpack.c.h.b16 %v28
  %v552 = vunpack.c.l.b16 %v29
  %v553 = vunpack.c.h.b16 %v29
  %v554 = vunpack.c.l.b16 %v30
  %v555 = vunpack.c.h.b16 %v30
  %v556 = vunpack.c.l.b16 %v31
  %v557 = vunpack.c.h.b16 %v31
  %v558 = vunpack.c.l.b16 %v32
  %v559 = vunpack.c.h.b16 %v32
  %v560 = vunpack.c.l.b16 %v33
  %v561 = vunpack.c.h.b16 %v33
  %v562 = vunpack.c.l.b16 %v34
  %v563 = vunpack.c.h.b16 %v34
  %v564 = vunpack.c.l.b16 %v35
  %v565 = vunpack.c.h.b16 %v35
  %v566 = vunpack.c.l.b16 %v36
  %v567 = vunpack.c.h.b16 %v36
  %v568 = vunpack.c.l.b16 %v37
  %v569 = vunpack.c.h.b16 %v37
  %v570 = vunpack.c.l.b16 %v38
  %v571 = vunpack.c.h.b16 %v38
  %v572 = vunpack.c.l.b16 %v39
  %v573 = vunpack.c.h.b16 %v39
  %v574 = vunpack.c.l.b16 %v40
  %v575 = vunpack.c.h.b16 %v40
  %v576 = vunpack.c.l.b16 %v41
  %v577 = vunpack.c.h.b16 %v41
  %v578 = vunpack.c.l.b16 %v42
  %v579 = vunpack.c.h.b16 %v42
  %v580 = vunpack.c.l.b16 %v43
  %v581 = vunpack.c.h.b16 %v43
  %v582 = vunpack.c.l.b16 %v44
  %v583 = vunpack.c.h.b16 %v44
  %v584 = vunpack.c.l.b16 %v45
  %v585 = vunpack.c.h.b16 %v45
  %v586 = vunpack.c.l.b16 %v46
  %v587 = vunpack.c.h.b16 %v46
  %v588 = vunpack.c.l.b16 %v47
  %v589 = vunpack.c.h.b16 %v47
  %v590 = vunpack.c.l.b16 %v48
  %v591 = vunpack.c.h.b16 %v48
  %v592 = vunpack.c.l.b16 %v49
  %v593 = vunpack.c.h.b16 %v49
  %v594 = vunpack.c.l.b16 %v50
  %v595 = vunpack.c.h.b16 %v50
  %v596 = vunpack.c.l.b16 %v51
  %v597 = vunpack.c.h.b16 %v51
  %v598 = vunpack.c.l.b16 %v52
  %v599 = vunpack.c.h.b16 %v52
  %v600 = vunpack.c.l.b16 %v53
  %v601 = vunpack.c.h.b16 %v53
  %v602 = vunpack.c.l.b16 %v54
  %v603 = vunpack.c.h.b16 %v54
  %v604 = vunpack.c.l.b16 %v55
  %v605 = vunpack.c.h.b16 %v55
  %v606 = vunpack.c.l.b16 %v56
  %v607 = vunpack.c.h.b16 %v56
  %v608 = vunpack.c.l.b16 %v57
  %v609 = vunpack.c.h.b16 %v57
  %v610 = vunpack.c.l.b16 %v58
  %v611 = vunpack.c.h.b16 %v58
  %v612 = vunpack.c.l.b16 %v59
  %v613 = vunpack.c.h.b16 %v59
  %v614 = vunpack.c.l.b16 %v60
  %v615 = vunpack.c.h.b16 %v60
  %v616 = vunpack.c.l.b16 %v61
  %v617 = vunpack.c.h.b16 %v61
  %v618 = vunpack.c.l.b16 %v62
  %v619 = vunpack.c.h.b16 %v62
  %v620 = vunpack.c.l.b16 %v63
  %v621 = vunpack.c.h.b16 %v63
  %v622 = vunpack.c.l.b16 %v64
  %v623 = vunpack.c.h.b16 %v64
  %v624 = vunpack.c.l.b16 %v65
  %v625 = vunpack.c.h.b16 %v65
  %v626 = vunpack.c.l.b16 %v66
  %v627 = vunpack.c.h.b16 %v66
  %v628 = vunpack.c.l.b16 %v67
  %v629 = vunpack.c.h.b16 %v67
  %v630 = vunpack.c.l.b16 %v68
  %v631 = vunpack.c.h.b16 %v68
  %v632 = vunpack.c.l.b16 %v69
  %v633 = vunpack.c.h.b16 %v69
  %v634 = vunpack.c.l.b16 %v70
  %v635 = vunpack.c.h.b16 %v70
  %v636 = vunpack.c.l.b16 %v71
  %v637 = vunpack.c.h.b16 %v71
  %v638 = vunpack.c.l.b16 %v72
  %v639 = vunpack.c.h.b16 %v72
  %v640 = vunpack.c.l.b16 %v73
  %v641 = vunpack.c.h.b16 %v73
  %v642 = vunpack.c.l.b16 %v74
  %v643 = vunpack.c.h.b16 %v74
  %v644 = vunpack.c.l.b16 %v75
  %v645 = vunpack.c.h.b16 %v75
  %v646 = vunpack.c.l.b16 %v76
  %v647 = vunpack.c.h.b16 %v76
  %v648 = vunpack.c.l.b16 %v77
  %v649 = vunpack.c.h.b16 %v77
  %v650 = vunpack.c.l.b16 %v78
  %v651 = vunpack.c.h.b16 %v78
  %v652 = vunpack.c.l.b16 %v79
  %v653 = vunpack.c.h.b16 %v79
  %v654 = vunpack.c.l.b16 %v80
  %v655 = vunpack.c.h.b16 %v80
  %v656 = vunpack.c.l.b16 %v81
  %v657 = vunpack.c.h.b16 %v81
  %v658 = vunpack.c.l.b16 %v82
  %v659 = vunpack.c.h.b16 %v82
  %v660 = vunpack.c.l.b16 %v83
  %v661 = vunpack.c.h.b16 %v83
  %v662 = vunpack.c.l.b16 %v84
  %v663 = vunpack.c.h.b16 %v84
  %v664 = vunpack.c.l.b16 %v85
  %v665 = vunpack.c.h.b16 %v85
  %v666 = vunpack.c.l.b16 %v86
  %v667 = vunpack.c.h.b16 %v86
  %v668 = vunpack.c.l.b16 %v87
  %v669 = vunpack.c.h.b16 %v87
  %v670 = vunpack.c.l.b16 %v88
  %v671 = vunpack.c.h.b16 %v88
  %v672 = vunpack.c.l.b16 %v89
  %v673 = vunpack.c.h.b16 %v89
  %v674 = vunpack.c.l.b16 %v90
  %v675 = vunpack.c.h.b16 %v90
  %v676 = vunpack.c.l.b16 %v91
  %v677 = vunpack.c.h.b16 %v91
  %v678 = vunpack.c.l.b16 %v92
  %v679 = vunpack.c.h.b16 %v92
  %v680 = vunpack.c.l.b16 %v93
  %v681 = vunpack.c.h.b16 %v93
  %v682 = vunpack.c.l.b16 %v94
  %v683 = vunpack.c.h.b16 %v94
  %v684 = vunpack.c.l.b16 %v95
  %v685 = vunpack.c.h.b16 %v95
  %v686 = vunpack.c.l.b16 %v96
  %v687 = vunpack.c.h.b16 %v96
  %v688 = vunpack.c.l.b16 %v97
  %v689 = vunpack.c.h.b16 %v97
  %v690 = vunpack.c.l.b16 %v98
  %v691 = vunpack.c.h.b16 %v98
  %v692 = vunpack.c.l.b16 %v99
  %v693 = vunpack.c.h.b16 %v99
  %v694 = vunpack.c.l.b16 %v100
  %v695 = vunpack.c.h.b16 %v100
  %v696 = vunpack.c.l.b16 %v101
  %v697 = vunpack.c.h.b16 %v101
  %v698 = vunpack.c.l.b16 %v102
  %v699 = vunpack.c.h.b16 %v102
  %v700 = vunpack.c.l.b16 %v103
  %v701 = vunpack.c.h.b16 %v103
  %v702 = vunpack.c.l.b16 %v104
  %v703 = vunpack.c.h.b16 %v104
  %v704 = vunpack.c.l.b16 %v105
  %v705 = vunpack.c.h.b16 %v105
  %v706 = vunpack.c.l.b16 %v106
  %v707 = vunpack.c.h.b16 %v106
  %v708 = vunpack.c.l.b16 %v107
  %v709 = vunpack.c.h.b16 %v107
  %v710 = vunpack.c.l.b16 %v108
  %v711 = vunpack.c.h.b16 %v108
  %v712 = vunpack.c.l.b16 %v109
  %v713 = vunpack.c.h.b16 %v109
  %v714 = vunpack.c.l.b16 %v110
  %v715 = vunpack.c.h.b16 %v110
  %v716 = vunpack.c.l.b16 %v111
  %v717 = vunpack.c.h.b16 %v111
  %v718 = vunpack.c.l.b16 %v112
  %v719 = vunpack.c.h.b16 %v112
  %v720 = vunpack.c.l.b16 %v113
  %v721 = vunpack.c.h.b16 %v113
  %v722 = vunpack.c.l.b16 %v114
  %v723 = vunpack.c.h.b16 %v114
  %v724 = vunpack.c.l.b16 %v115
  %v725 = vunpack.c.h.b16 %v115
  %v726 = vunpack.c.l.b16 %v116
  %v727 = vunpack.c.h.b16 %v116
  %v728 = vunpack.c.l.b16 %v117
  %v729 = vunpack.c.h.b16 %v117
  %v730 = vunpack.c.l.b16 %v118
  %v731 = vunpack.c.h.b16 %v118
  %v732 = vunpack.c.l.b16 %v119
  %v733 = vunpack.c.h.b16 %v119
  %v734 = vunpack.c.l.b16 %v120
  %v735 = vunpack.c.h.b16 %v120
  %v736 = vunpack.c.l.b16 %v121
  %v737 = vunpack.c.h.b16 %v121
  %v738 = vunpack.c.l.b16 %v122
  %v739 = vunpack.c.h.b16 %v122
  %v740 = vunpack.c.l.b16 %v123
  %v741 = vunpack.c.h.b16 %v123
  %v742 = vunpack.c.l.b16 %v124
  %v743 = vunpack.c.h.b16 %v124
  %v744 = vunpack.c.l.b16 %v125
  %v745 = vunpack.c.h.b16 %v125
  %v746 = vunpack.c.l.b16 %v126
  %v747 = vunpack.c.h.b16 %v126
  %v748 = vunpack.c.l.b16 %v127
  %v749 = vunpack.c.h.b16 %v127
  %v750 = vunpack.c.l.b16 %v128
  %v751 = vunpack.c.h.b16 %v128
  %v752 = vunpack.c.l.b16 %v129
  %v753 = vunpack.c.h.b16 %v129
  %v754 = vunpack.c.l.b16 %v130
  %v755 = vunpack.c.h.b16 %v130
  %v756 = vunpack.c.l.b16 %v131
  %v757 = vunpack.c.h.b16 %v131
  %v758 = vunpack.c.l.b16 %v132
  %v759 = vunpack.c.h.b16 %v132
  %v760 = vunpack.c.l.b16 %v133
  %v761 = vunpack.c.h.b16 %v133
  %v762 = vunpack.c.l.b16 %v134
  %v763 = vunpack.c.h.b16 %v134
  %v764 = vunpack.c.l.b16 %v135
  %v765 = vunpack.c.h.b16 %v135
  %v766 = vunpack.c.l.b16 %v136
  %v767 = vunpack.c.h.b16 %v136
  %v768 = vunpack.c.l.b16 %v137
  %v769 = vunpack.c.h.b16 %v137
  %v770 = vunpack.c.l.b16 %v138
  %v771 = vunpack.c.h.b16 %v138
  %v772 = vunpack.c.l.b16 %v139
  %v773 = vunpack.c.h.b16 %v139
  %v774 = vunpack.c.l.b16 %v140
  %v775 = vunpack.c.h.b16 %v140
  %v776 = vunpack.c.l.b16 %v141
  %v777 = vunpack.c.h.b16 %v141
  %v778 = vunpack.c.l.b16 %v142
  %v779 = vunpack.c.h.b16 %v142
  %v780 = vunpack.c.l.b16 %v143
  %v781 = vunpack.c.h.b16 %v143
  %v782 = vunpack.c.l.b16 %v144
  %v783 = vunpack.c.h.b16 %v144
  %v784 = vunpack.c.l.b16 %v145
  %v785 = vunpack.c.h.b16 %v145
  %v786 = vunpack.c.l.b16 %v146
  %v787 = vunpack.c.h.b16 %v146
  %v788 = vunpack.c.l.b16 %v147
  %v789 = vunpack.c.h.b16 %v147
  %v790 = vunpack.c.l.b16 %v148
  %v791 = vunpack.c.h.b16 %v148
  %v792 = vunpack.c.l.b16 %v149
  %v793 = vunpack.c.h.b16 %v149
  %v794 = vunpack.c.l.b16 %v150
  %v795 = vunpack.c.h.b16 %v150
  %v796 = vunpack.c.l.b16 %v151
  %v797 = vunpack.c.h.b16 %v151
  %v798 = vunpack.c.l.b16 %v152
  %v799 = vunpack.c.h.b16 %v152
  %v800 = vunpack.c.l.b16 %v153
  %v801 = vunpack.c.h.b16 %v153
  %v802 = vunpack.c.l.b16 %v154
  %v803 = vunpack.c.h.b16 %v154
  %v804 = vunpack.c.l.b16 %v155
  %v805 = vunpack.c.h.b16 %v155
  %v806 = vunpack.c.l.b16 %v156
  %v807 = vunpack.c.h.b16 %v156
  %v808 = vunpack.c.l.b16 %v157
  %v809 = vunpack.c.h.b16 %v157
  %v810 = vunpack.c.l.b16 %v158
  %v811 = vunpack.c.h.b16 %v158
  %v812 = vunpack.c.l.b16 %v159
  %v813 = vunpack.c.h.b16 %v159
  %v814 = vunpack.c.l.b16 %v160
  %v815 = vunpack.c.h.b16 %v160
  %v816 = vunpack.c.l.b16 %v161
  %v817 = vunpack.c.h.b16 %v161
  %v818 = vpack.c.b16 %v532, %v530
  %v819 = vpack.c.b16 %v533, %v531
  %v820 = vpack.c.b16 %v536, %v534
  %v821 = vpack.c.b16 %v537, %v535
  %v822 = vpack.c.b16 %v540, %v538
  %v823 = vpack.c.b16 %v541, %v539
  %v824 = vpack.c.b16 %v544, %v542
  %v825 = vpack.c.b16 %v545, %v543
  %v826 = vpack.c.b16 %v548, %v546
  %v827 = vpack.c.b16 %v549, %v547
  %v828 = vpack.c.b16 %v552, %v550
  %v829 = vpack.c.b16 %v553, %v551
  %v830 = vpack.c.b16 %v556, %v554
  %v831 = vpack.c.b16 %v557, %v555
  %v832 = vpack.c.b16 %v560, %v558
  %v833 = vpack.c.b16 %v561, %v559
  %v834 = vpack.c.b16 %v564, %v562
  %v835 = vpack.c.b16 %v565, %v563
  %v836 = vpack.c.b16 %v568, %v566
  %v837 = vpack.c.b16 %v569, %v567
  %v838 = vpack.c.b16 %v572, %v570
  %v839 = vpack.c.b16 %v573, %v571
  %v840 = vpack.c.b16 %v576, %v574
  %v841 = vpack.c.b16 %v577, %v575
  %v842 = vpack.c.b16 %v580, %v578
  %v843 = vpack.c.b16 %v581, %v579
  %v844 = vpack.c.b16 %v584, %v582
  %v845 = vpack.c.b16 %v585, %v583
  %v846 = vpack.c.b16 %v588, %v586
  %v847 = vpack.c.b16 %v589, %v587
  %v848 = vpack.c.b16 %v592, %v590
  %v849 = vpack.c.b16 %v593, %v591
  %v850 = vpack.c.b16 %v596, %v594
  %v851 = vpack.c.b16 %v597, %v595
  %v852 = vpack.c.b16 %v600, %v598
  %v853 = vpack.c.b16 %v601, %v599
  %v854 = vpack.c.b16 %v604, %v602
  %v855 = vpack.c.b16 %v605, %v603
  %v856 = vpack.c.b16 %v608, %v606
  %v857 = vpack.c.b16 %v609, %v607
  %v858 = vpack.c.b16 %v612, %v610
  %v859 = vpack.c.b16 %v613, %v611
  %v860 = vpack.c.b16 %v616, %v614
  %v861 = vpack.c.b16 %v617, %v615
  %v862 = vpack.c.b16 %v620, %v618
  %v863 = vpack.c.b16 %v621, %v619
  %v864 = vpack.c.b16 %v624, %v622
  %v865 = vpack.c.b16 %v625, %v623
  %v866 = vpack.c.b16 %v628, %v626
  %v867 = vpack.c.b16 %v629, %v627
  %v868 = vpack.c.b16 %v632, %v630
  %v869 = vpack.c.b16 %v633, %v631
  %v870 = vpack.c.b16 %v636, %v634
  %v871 = vpack.c.b16 %v637, %v635
  %v872 = vpack.c.b16 %v640, %v638
  %v873 = vpack.c.b16 %v641, %v639
  %v874 = vpack.c.b16 %v644, %v642
  %v875 = vpack.c.b16 %v645, %v643
  %v876 = vpack.c.b16 %v648, %v646
  %v877 = vpack.c.b16 %v649, %v647
  %v878 = vpack.c.b16 %v652, %v650
  %v879 = vpack.c.b16 %v653, %v651
  %v880 = vpack.c.b16 %v656, %v654
  %v881 = vpack.c.b16 %v657, %v655
  %v882 = vpack.c.b16 %v660, %v658
  %v883 = vpack.c.b16 %v661, %v659
  %v884 = vpack.c.b16 %v664, %v662
  %v885 = vpack.c.b16 %v665, %v663
  %v886 = vpack.c.b16 %v668, %v666
  %v887 = vpack.c.b16 %v669, %v667
  %v888 = vpack.c.b16 %v672, %v670
  %v889 = vpack.c.b16 %v673, %v671
  %v890 = vpack.c.b16 %v676, %v674
  %v891 = vpack.c.b16 %v677, %v675
  %v892 = vpack.c.b16 %v680, %v678
  %v893 = vpack.c.b16 %v681, %v679
  %v894 = vpack.c.b16 %v684, %v682
  %v895 = vpack.c.b16 %v685, %v683
  %v896 = vpack.c.b16 %v688, %v686
  %v897 = vpack.c.b16 %v689, %v687
  %v898 = vpack.c.b16 %v692, %v690
  %v899 = vpack.c.b16 %v693, %v691
  %v900 = vpack.c.b16 %v696, %v694
  %v901 = vpack.c.b16 %v697, %v695
  %v902 = vpack.c.b16 %v700, %v698
  %v903 = vpack.c.b16 %v701, %v699
  %v904 = vpack.c.b16 %v704, %v702
  %v905 = vpack.c.b16 %v705, %v703
  %v906 = vpack.c.b16 %v708, %v706
  %v907 = vpack.c.b16 %v709, %v707
  %v908 = vpack.c.b16 %v712, %v710
  %v909 = vpack.c.b16 %v713, %v711
  %v910 = vpack.c.b16 %v716, %v714
  %v911 = vpack.c.b16 %v717, %v715
  %v912 = vpack.c.b16 %v720, %v718
  %v913 = vpack.c.b16 %v721, %v719
  %v914 = vpack.c.b16 %v724, %v722
  %v915 = vpack.c.b16 %v725, %v723
  %v916 = vpack.c.b16 %v728, %v726
  %v917 = vpack.c.b16 %v729, %v727
  %v918 = vpack.c.b16 %v732, %v730
  %v919 = vpack.c.b16 %v733, %v731
  %v920 = vpack.c.b16 %v736, %v734
  %v921 = vpack.c.b16 %v737, %v735
  %v922 = vpack.c.b16 %v740, %v738
  %v923 = vpack.c.b16 %v741, %v739
  %v924 = vpack.c.b16 %v744, %v742
  %v925 = vpack.c.b16 %v745, %v743
  %v926 = vpack.c.b16 %v748, %v746
  %v927 = vpack.c.b16 %v749, %v747
  %v928 = vpack.c.b16 %v752, %v750
  %v929 = vpack.c.b16 %v753, %v751
  %v930 = vpack.c.b16 %v756, %v754
  %v931 = vpack.c.b16 %v757, %v755
  %v932 = vpack.c.b16 %v760, %v758
  %v933 = vpack.c.b16 %v761, %v759
  %v934 = vpack.c.b16 %v764, %v762
  %v935 = vpack.c.b16 %v765, %v763
  %v936 = vpack.c.b16 %v768, %v766
  %v937 = vpack.c.b16 %v769, %v767
  %v938 = vpack.c.b16 %v772, %v770
  %v939 = vpack.c.b16 %v773, %v771
  %v940 = vpack.c.b16 %v776, %v774
  %v941 = vpack.c.b16 %v777, %v775
  %v942 = vpack.c.b16 %v780, %v778
  %v943 = vpack.c.b16 %v781, %v779
  %v944 = vpack.c.b16 %v784, %v782
  %v945 = vpack.c.b16 %v785, %v783
  %v946 = vpack.c.b16 %v788, %v786
  %v947 = vpack.c.b16 %v789, %v787
  %v948 = vpack.c.b16 %v792, %v790
  %v949 = vpack.c.b16 %v793, %v791
  %v950 = vpack.c.b16 %v796, %v794
  %v951 = vpack.c.b16 %v797, %v795
  %v952 = vpack.c.b16 %v800, %v798
  %v953 = vpack.c.b16 %v801, %v799
  %v954 = vpack.c.b16 %v804, %v802
  %v955 = vpack.c.b16 %v805, %v803
  %v956 = vpack.c.b16 %v808, %v806
  %v957 = vpack.c.b16 %v809, %v807
  %v958 = vpack.c.b16 %v812, %v810
  %v959 = vpack.c.b16 %v813, %v811
  %v960 = vpack.c.b16 %v816, %v814
  %v961 = vpack.c.b16 %v817, %v815
  %1106 = vmatprep.subr.bf16.mxu0 %v819
  %1107 = vmatpush1.bf16.msra.mxu0 %v818
  %1108 = vmatprep.subr.bf16.mxu0 %v821
  %1109 = vmatpush1.bf16.msra.mxu0 %v820
  %1110 = vmatprep.subr.bf16.mxu0 %v823
  %1111 = vmatpush1.bf16.msra.mxu0 %v822
  %1112 = vmatprep.subr.bf16.mxu0 %v825
  %1113 = vmatpush1.bf16.msra.mxu0 %v824
  %1114 = vmatprep.subr.bf16.mxu0 %v827
  %1115 = vmatpush1.bf16.msra.mxu0 %v826
  %1116 = vmatprep.subr.bf16.mxu0 %v829
  %1117 = vmatpush1.bf16.msra.mxu0 %v828
  %1118 = vmatprep.subr.bf16.mxu0 %v831
  %1119 = vmatpush1.bf16.msra.mxu0 %v830
  %1120 = vmatprep.subr.bf16.mxu0 %v833
  %1121 = vmatpush1.bf16.msra.mxu0 %v832
  %1122 = vmatprep.subr.bf16.mxu0 %v835
  %1123 = vmatpush1.bf16.msra.mxu0 %v834
  %1124 = vmatprep.subr.bf16.mxu0 %v837
  %1125 = vmatpush1.bf16.msra.mxu0 %v836
  %1126 = vmatprep.subr.bf16.mxu0 %v839
  %1127 = vmatpush1.bf16.msra.mxu0 %v838
  %1128 = vmatprep.subr.bf16.mxu0 %v841
  %1129 = vmatpush1.bf16.msra.mxu0 %v840
  %1130 = vmatprep.subr.bf16.mxu0 %v843
  %1131 = vmatpush1.bf16.msra.mxu0 %v842
  %1132 = vmatprep.subr.bf16.mxu0 %v845
  %1133 = vmatpush1.bf16.msra.mxu0 %v844
  %1134 = vmatprep.subr.bf16.mxu0 %v847
  %1135 = vmatpush1.bf16.msra.mxu0 %v846
  %1136 = vmatprep.subr.bf16.mxu0 %v849
  %1137 = vmatpush1.bf16.msra.mxu0 %v848
  %1138 = vmatprep.mubr.bf16.mxu0 %v315
  %1139 = vmatmul.mubr.bf16.gmra.mrb[0].mxu0 %v314
  %v1140 = vpop.f32.mrb[0].mxu0
  %v1141 = vadd.f32 0.0, %v1140
  %v1142 = vpop.f32.mrb[0].mxu0
  %v1143 = vadd.f32 0.0, %v1142
  %v1144 = vpop.f32.mrb[0].mxu0
  %v1145 = vadd.f32 0.0, %v1144
  %v1146 = vpop.f32.mrb[0].mxu0
  %v1147 = vadd.f32 0.0, %v1146
  %1148 = vmatprep.mubr.bf16.mxu0 %v324
  %1149 = vmatmul.mubr.bf16.gmra.mrb[0].mxu0 %v323
  %v1150 = vpop.f32.mrb[0].mxu0
  %v1151 = vadd.f32 0.0, %v1150
  %v1152 = vpop.f32.mrb[0].mxu0
  %v1153 = vadd.f32 0.0, %v1152
  %v1154 = vpop.f32.mrb[0].mxu0
  %v1155 = vadd.f32 0.0, %v1154
  %v1156 = vpop.f32.mrb[0].mxu0
  %v1157 = vadd.f32 0.0, %v1156
  %1158 = vmatprep.mubr.bf16.mxu0 %v333
  %1159 = vmatmul.mubr.bf16.gmra.mrb[0].mxu0 %v332
  %v1160 = vpop.f32.mrb[0].mxu0
  %v1161 = vadd.f32 0.0, %v1160
  %v1162 = vpop.f32.mrb[0].mxu0
  %v1163 = vadd.f32 0.0, %v1162
  %v1164 = vpop.f32.mrb[0].mxu0
  %v1165 = vadd.f32 0.0, %v1164
  %v1166 = vpop.f32.mrb[0].mxu0
  %v1167 = vadd.f32 0.0, %v1166
  %1168 = vmatprep.mubr.bf16.mxu0 %v342
  %1169 = vmatmul.mubr.bf16.gmra.mrb[0].mxu0 %v341
  %v1170 = vpop.f32.mrb[0].mxu0
  %v1171 = vadd.f32 0.0, %v1170
  %v1172 = vpop.f32.mrb[0].mxu0
  %v1173 = vadd.f32 0.0, %v1172
  %v1174 = vpop.f32.mrb[0].mxu0
  %v1175 = vadd.f32 0.0, %v1174
  %v1176 = vpop.f32.mrb[0].mxu0
  %v1177 = vadd.f32 0.0, %v1176
  %1178 = vdwg.mxu0
  %1179 = vmatprep.subr.bf16.mxu0 %v851
  %1180 = vmatpush1.bf16.msra.mxu0 %v850
  %1181 = vmatprep.subr.bf16.mxu0 %v853
  %1182 = vmatpush1.bf16.msra.mxu0 %v852
  %1183 = vmatprep.subr.bf16.mxu0 %v855
  %1184 = vmatpush1.bf16.msra.mxu0 %v854
  %1185 = vmatprep.subr.bf16.mxu0 %v857
  %1186 = vmatpush1.bf16.msra.mxu0 %v856
  %1187 = vmatprep.subr.bf16.mxu0 %v859
  %1188 = vmatpush1.bf16.msra.mxu0 %v858
  %1189 = vmatprep.subr.bf16.mxu0 %v861
  %1190 = vmatpush1.bf16.msra.mxu0 %v860
  %1191 = vmatprep.subr.bf16.mxu0 %v863
  %1192 = vmatpush1.bf16.msra.mxu0 %v862
  %1193 = vmatprep.subr.bf16.mxu0 %v865
  %1194 = vmatpush1.bf16.msra.mxu0 %v864
  %1195 = vmatprep.subr.bf16.mxu0 %v867
  %1196 = vmatpush1.bf16.msra.mxu0 %v866
  %1197 = vmatprep.subr.bf16.mxu0 %v869
  %1198 = vmatpush1.bf16.msra.mxu0 %v868
  %1199 = vmatprep.subr.bf16.mxu0 %v871
  %1200 = vmatpush1.bf16.msra.mxu0 %v870
  %1201 = vmatprep.subr.bf16.mxu0 %v873
  %1202 = vmatpush1.bf16.msra.mxu0 %v872
  %1203 = vmatprep.subr.bf16.mxu0 %v875
  %1204 = vmatpush1.bf16.msra.mxu0 %v874
  %1205 = vmatprep.subr.bf16.mxu0 %v877
  %1206 = vmatpush1.bf16.msra.mxu0 %v876
  %1207 = vmatprep.subr.bf16.mxu0 %v879
  %1208 = vmatpush1.bf16.msra.mxu0 %v878
  %1209 = vmatprep.subr.bf16.mxu0 %v881
  %1210 = vmatpush1.bf16.msra.mxu0 %v880
  %1211 = vmatprep.mubr.bf16.mxu0 %v317
  %1212 = vmatmul.mubr.bf16.gmra.mrb[0].mxu0 %v316
  %v1213 = vpop.f32.mrb[0].mxu0
  %v1214 = vadd.f32 %v1141, %v1213
  %v1215 = vpop.f32.mrb[0].mxu0
  %v1216 = vadd.f32 %v1143, %v1215
  %v1217 = vpop.f32.mrb[0].mxu0
  %v1218 = vadd.f32 %v1145, %v1217
  %v1219 = vpop.f32.mrb[0].mxu0
  %v1220 = vadd.f32 %v1147, %v1219
  %1221 = vmatprep.mubr.bf16.mxu0 %v326
  %1222 = vmatmul.mubr.bf16.gmra.mrb[0].mxu0 %v325
  %v1223 = vpop.f32.mrb[0].mxu0
  %v1224 = vadd.f32 %v1151, %v1223
  %v1225 = vpop.f32.mrb[0].mxu0
  %v1226 = vadd.f32 %v1153, %v1225
  %v1227 = vpop.f32.mrb[0].mxu0
  %v1228 = vadd.f32 %v1155, %v1227
  %v1229 = vpop.f32.mrb[0].mxu0
  %v1230 = vadd.f32 %v1157, %v1229
  %1231 = vmatprep.mubr.bf16.mxu0 %v335
  %1232 = vmatmul.mubr.bf16.gmra.mrb[0].mxu0 %v334
  %v1233 = vpop.f32.mrb[0].mxu0
  %v1234 = vadd.f32 %v1161, %v1233
  %v1235 = vpop.f32.mrb[0].mxu0
  %v1236 = vadd.f32 %v1163, %v1235
  %v1237 = vpop.f32.mrb[0].mxu0
  %v1238 = vadd.f32 %v1165, %v1237
  %v1239 = vpop.f32.mrb[0].mxu0
  %v1240 = vadd.f32 %v1167, %v1239
  %1241 = vmatprep.mubr.bf16.mxu0 %v344
  %1242 = vmatmul.mubr.bf16.gmra.mrb[0].mxu0 %v343
  %v1243 = vpop.f32.mrb[0].mxu0
  %v1244 = vadd.f32 %v1171, %v1243
  %v1245 = vpop.f32.mrb[0].mxu0
  %v1246 = vadd.f32 %v1173, %v1245
  %v1247 = vpop.f32.mrb[0].mxu0
  %v1248 = vadd.f32 %v1175, %v1247
  %v1249 = vpop.f32.mrb[0].mxu0
  %v1250 = vadd.f32 %v1177, %v1249
  %1251 = vdwg.mxu0
  %1252 = vmatprep.subr.bf16.mxu0 %v883
  %1253 = vmatpush1.bf16.msra.mxu0 %v882
  %1254 = vmatprep.subr.bf16.mxu0 %v885
  %1255 = vmatpush1.bf16.msra.mxu0 %v884
  %1256 = vmatprep.subr.bf16.mxu0 %v887
  %1257 = vmatpush1.bf16.msra.mxu0 %v886
  %1258 = vmatprep.subr.bf16.mxu0 %v889
  %1259 = vmatpush1.bf16.msra.mxu0 %v888
  %1260 = vmatprep.subr.bf16.mxu0 %v891
  %1261 = vmatpush1.bf16.msra.mxu0 %v890
  %1262 = vmatprep.subr.bf16.mxu0 %v893
  %1263 = vmatpush1.bf16.msra.mxu0 %v892
  %1264 = vmatprep.subr.bf16.mxu0 %v895
  %1265 = vmatpush1.bf16.msra.mxu0 %v894
  %1266 = vmatprep.subr.bf16.mxu0 %v897
  %1267 = vmatpush1.bf16.msra.mxu0 %v896
  %1268 = vmatprep.subr.bf16.mxu0 %v899
  %1269 = vmatpush1.bf16.msra.mxu0 %v898
  %1270 = vmatprep.subr.bf16.mxu0 %v901
  %1271 = vmatpush1.bf16.msra.mxu0 %v900
  %1272 = vmatprep.subr.bf16.mxu0 %v903
  %1273 = vmatpush1.bf16.msra.mxu0 %v902
  %1274 = vmatprep.subr.bf16.mxu0 %v905
  %1275 = vmatpush1.bf16.msra.mxu0 %v904
  %1276 = vmatprep.subr.bf16.mxu0 %v907
  %1277 = vmatpush1.bf16.msra.mxu0 %v906
  %1278 = vmatprep.subr.bf16.mxu0 %v909
  %1279 = vmatpush1.bf16.msra.mxu0 %v908
  %1280 = vmatprep.subr.bf16.mxu0 %v911
  %1281 = vmatpush1.bf16.msra.mxu0 %v910
  %1282 = vmatprep.subr.bf16.mxu0 %v913
  %1283 = vmatpush1.bf16.msra.mxu0 %v912
  %1284 = vmatprep.mubr.bf16.mxu0 %v319
  %1285 = vmatmul.mubr.bf16.gmra.mrb[0].mxu0 %v318
  %v1286 = vpop.f32.mrb[0].mxu0
  %v1287 = vadd.f32 %v1214, %v1286
  %v1288 = vpop.f32.mrb[0].mxu0
  %v1289 = vadd.f32 %v1216, %v1288
  %v1290 = vpop.f32.mrb[0].mxu0
  %v1291 = vadd.f32 %v1218, %v1290
  %v1292 = vpop.f32.mrb[0].mxu0
  %v1293 = vadd.f32 %v1220, %v1292
  %1294 = vmatprep.mubr.bf16.mxu0 %v328
  %1295 = vmatmul.mubr.bf16.gmra.mrb[0].mxu0 %v327
  %v1296 = vpop.f32.mrb[0].mxu0
  %v1297 = vadd.f32 %v1224, %v1296
  %v1298 = vpop.f32.mrb[0].mxu0
  %v1299 = vadd.f32 %v1226, %v1298
  %v1300 = vpop.f32.mrb[0].mxu0
  %v1301 = vadd.f32 %v1228, %v1300
  %v1302 = vpop.f32.mrb[0].mxu0
  %v1303 = vadd.f32 %v1230, %v1302
  %1304 = vmatprep.mubr.bf16.mxu0 %v337
  %1305 = vmatmul.mubr.bf16.gmra.mrb[0].mxu0 %v336
  %v1306 = vpop.f32.mrb[0].mxu0
  %v1307 = vadd.f32 %v1234, %v1306
  %v1308 = vpop.f32.mrb[0].mxu0
  %v1309 = vadd.f32 %v1236, %v1308
  %v1310 = vpop.f32.mrb[0].mxu0
  %v1311 = vadd.f32 %v1238, %v1310
  %v1312 = vpop.f32.mrb[0].mxu0
  %v1313 = vadd.f32 %v1240, %v1312
  %1314 = vmatprep.mubr.bf16.mxu0 %v346
  %1315 = vmatmul.mubr.bf16.gmra.mrb[0].mxu0 %v345
  %v1316 = vpop.f32.mrb[0].mxu0
  %v1317 = vadd.f32 %v1244, %v1316
  %v1318 = vpop.f32.mrb[0].mxu0
  %v1319 = vadd.f32 %v1246, %v1318
  %v1320 = vpop.f32.mrb[0].mxu0
  %v1321 = vadd.f32 %v1248, %v1320
  %v1322 = vpop.f32.mrb[0].mxu0
  %v1323 = vadd.f32 %v1250, %v1322
  %1324 = vdwg.mxu0
  %1325 = vmatprep.subr.bf16.mxu0 %v915
  %1326 = vmatpush1.bf16.msra.mxu0 %v914
  %1327 = vmatprep.subr.bf16.mxu0 %v917
  %1328 = vmatpush1.bf16.msra.mxu0 %v916
  %1329 = vmatprep.subr.bf16.mxu0 %v919
  %1330 = vmatpush1.bf16.msra.mxu0 %v918
  %1331 = vmatprep.subr.bf16.mxu0 %v921
  %1332 = vmatpush1.bf16.msra.mxu0 %v920
  %1333 = vmatprep.subr.bf16.mxu0 %v923
  %1334 = vmatpush1.bf16.msra.mxu0 %v922
  %1335 = vmatprep.subr.bf16.mxu0 %v925
  %1336 = vmatpush1.bf16.msra.mxu0 %v924
  %1337 = vmatprep.subr.bf16.mxu0 %v927
  %1338 = vmatpush1.bf16.msra.mxu0 %v926
  %1339 = vmatprep.subr.bf16.mxu0 %v929
  %1340 = vmatpush1.bf16.msra.mxu0 %v928
  %1341 = vmatprep.subr.bf16.mxu0 %v931
  %1342 = vmatpush1.bf16.msra.mxu0 %v930
  %1343 = vmatprep.subr.bf16.mxu0 %v933
  %1344 = vmatpush1.bf16.msra.mxu0 %v932
  %1345 = vmatprep.subr.bf16.mxu0 %v935
  %1346 = vmatpush1.bf16.msra.mxu0 %v934
  %1347 = vmatprep.subr.bf16.mxu0 %v937
  %1348 = vmatpush1.bf16.msra.mxu0 %v936
  %1349 = vmatprep.subr.bf16.mxu0 %v939
  %1350 = vmatpush1.bf16.msra.mxu0 %v938
  %1351 = vmatprep.subr.bf16.mxu0 %v941
  %1352 = vmatpush1.bf16.msra.mxu0 %v940
  %1353 = vmatprep.subr.bf16.mxu0 %v943
  %1354 = vmatpush1.bf16.msra.mxu0 %v942
  %1355 = vmatprep.subr.bf16.mxu0 %v945
  %1356 = vmatpush1.bf16.msra.mxu0 %v944
  %1357 = vmatprep.mubr.bf16.mxu0 %v321
  %1358 = vmatmul.mubr.bf16.gmra.mrb[0].mxu0 %v320
  %v1359 = vpop.f32.mrb[0].mxu0
  %v1360 = vadd.f32 %v1287, %v1359
  %v1361 = vpop.f32.mrb[0].mxu0
  %v1362 = vadd.f32 %v1289, %v1361
  %v1363 = vpop.f32.mrb[0].mxu0
  %v1364 = vadd.f32 %v1291, %v1363
  %v1365 = vpop.f32.mrb[0].mxu0
  %v1366 = vadd.f32 %v1293, %v1365
  %1367 = vmatprep.mubr.bf16.mxu0 %v330
  %1368 = vmatmul.mubr.bf16.gmra.mrb[0].mxu0 %v329
  %v1369 = vpop.f32.mrb[0].mxu0
  %v1370 = vadd.f32 %v1297, %v1369
  %v1371 = vpop.f32.mrb[0].mxu0
  %v1372 = vadd.f32 %v1299, %v1371
  %v1373 = vpop.f32.mrb[0].mxu0
  %v1374 = vadd.f32 %v1301, %v1373
  %v1375 = vpop.f32.mrb[0].mxu0
  %v1376 = vadd.f32 %v1303, %v1375
  %1377 = vmatprep.mubr.bf16.mxu0 %v339
  %1378 = vmatmul.mubr.bf16.gmra.mrb[0].mxu0 %v338
  %v1379 = vpop.f32.mrb[0].mxu0
  %v1380 = vadd.f32 %v1307, %v1379
  %v1381 = vpop.f32.mrb[0].mxu0
  %v1382 = vadd.f32 %v1309, %v1381
  %v1383 = vpop.f32.mrb[0].mxu0
  %v1384 = vadd.f32 %v1311, %v1383
  %v1385 = vpop.f32.mrb[0].mxu0
  %v1386 = vadd.f32 %v1313, %v1385
  %1387 = vmatprep.mubr.bf16.mxu0 %v348
  %1388 = vmatmul.mubr.bf16.gmra.mrb[0].mxu0 %v347
  %v1389 = vpop.f32.mrb[0].mxu0
  %v1390 = vadd.f32 %v1317, %v1389
  %v1391 = vpop.f32.mrb[0].mxu0
  %v1392 = vadd.f32 %v1319, %v1391
  %v1393 = vpop.f32.mrb[0].mxu0
  %v1394 = vadd.f32 %v1321, %v1393
  %v1395 = vpop.f32.mrb[0].mxu0
  %v1396 = vadd.f32 %v1323, %v1395
  %1397 = vdwg.mxu0
  %1398 = vmatprep.subr.bf16.mxu0 %v947
  %1399 = vmatpush1.bf16.msra.mxu0 %v946
  %1400 = vmatprep.subr.bf16.mxu0 %v949
  %1401 = vmatpush1.bf16.msra.mxu0 %v948
  %1402 = vmatprep.subr.bf16.mxu0 %v951
  %1403 = vmatpush1.bf16.msra.mxu0 %v950
  %1404 = vmatprep.subr.bf16.mxu0 %v953
  %1405 = vmatpush1.bf16.msra.mxu0 %v952
  %1406 = vmatprep.subr.bf16.mxu0 %v955
  %1407 = vmatpush1.bf16.msra.mxu0 %v954
  %1408 = vmatprep.subr.bf16.mxu0 %v957
  %1409 = vmatpush1.bf16.msra.mxu0 %v956
  %1410 = vmatprep.subr.bf16.mxu0 %v959
  %1411 = vmatpush1.bf16.msra.mxu0 %v958
  %1412 = vmatprep.subr.bf16.mxu0 %v961
  %1413 = vmatpush1.bf16.msra.mxu0 %v960
  %1414 = vmatprep.subr.bf16.mxu0 0
  %1415 = vmatpush1.bf16.msra.mxu0 0
  %1416 = vmatprep.subr.bf16.mxu0 0
  %1417 = vmatpush1.bf16.msra.mxu0 0
  %1418 = vmatprep.subr.bf16.mxu0 0
  %1419 = vmatpush1.bf16.msra.mxu0 0
  %1420 = vmatprep.subr.bf16.mxu0 0
  %1421 = vmatpush1.bf16.msra.mxu0 0
  %1422 = vmatprep.subr.bf16.mxu0 0
  %1423 = vmatpush1.bf16.msra.mxu0 0
  %1424 = vmatprep.subr.bf16.mxu0 0
  %1425 = vmatpush1.bf16.msra.mxu0 0
  %1426 = vmatprep.subr.bf16.mxu0 0
  %1427 = vmatpush1.bf16.msra.mxu0 0
  %1428 = vmatprep.subr.bf16.mxu0 0
  %1429 = vmatpush1.bf16.msra.mxu0 0
  %1430 = vmatprep.mubr.bf16.mxu0 0
  %1431 = vmatmul.mubr.bf16.gmra.mrb[0].mxu0 %v322
  %v1432 = vpop.f32.mrb[0].mxu0
  %v1433 = vadd.f32 %v1360, %v1432
  %v1434 = vpop.f32.mrb[0].mxu0
  %v1435 = vadd.f32 %v1362, %v1434
  %v1436 = vpop.f32.mrb[0].mxu0
  %v1437 = vadd.f32 %v1364, %v1436
  %v1438 = vpop.f32.mrb[0].mxu0
  %v1439 = vadd.f32 %v1366, %v1438
  %1440 = vmatprep.mubr.bf16.mxu0 0
  %1441 = vmatmul.mubr.bf16.gmra.mrb[0].mxu0 %v331
  %v1442 = vpop.f32.mrb[0].mxu0
  %v1443 = vadd.f32 %v1370, %v1442
  %v1444 = vpop.f32.mrb[0].mxu0
  %v1445 = vadd.f32 %v1372, %v1444
  %v1446 = vpop.f32.mrb[0].mxu0
  %v1447 = vadd.f32 %v1374, %v1446
  %v1448 = vpop.f32.mrb[0].mxu0
  %v1449 = vadd.f32 %v1376, %v1448
  %1450 = vmatprep.mubr.bf16.mxu0 0
  %1451 = vmatmul.mubr.bf16.gmra.mrb[0].mxu0 %v340
  %v1452 = vpop.f32.mrb[0].mxu0
  %v1453 = vadd.f32 %v1380, %v1452
  %v1454 = vpop.f32.mrb[0].mxu0
  %v1455 = vadd.f32 %v1382, %v1454
  %v1456 = vpop.f32.mrb[0].mxu0
  %v1457 = vadd.f32 %v1384, %v1456
  %v1458 = vpop.f32.mrb[0].mxu0
  %v1459 = vadd.f32 %v1386, %v1458
  %1460 = vmatprep.mubr.bf16.mxu0 0
  %1461 = vmatmul.mubr.bf16.gmra.mrb[0].mxu0 %v349
  %v1462 = vpop.f32.mrb[0].mxu0
  %v1463 = vadd.f32 %v1390, %v1462
  %v1464 = vpop.f32.mrb[0].mxu0
  %v1465 = vadd.f32 %v1392, %v1464
  %v1466 = vpop.f32.mrb[0].mxu0
  %v1467 = vadd.f32 %v1394, %v1466
  %v1468 = vpop.f32.mrb[0].mxu0
  %v1469 = vadd.f32 %v1396, %v1468
  %1470 = vdwg.mxu0
  %v1471 = vld [vmem:[%s2] sm:$0x3]
  %v1473 = vlaneseq
  %v1474 = vshrl.u32 %v1473, 7
  %v1475 = vsub.s32 0, %v1474
  %v1476 = vrot.slane %v1471, %v1475
  %v1477 = vlaneseq
  %v1478 = vshrl.u32 %v1477, 7
  %v1479 = vsub.s32 1, %v1478
  %v1480 = vrot.slane %v1471, %v1479
  %v1483 = vmul.f32 %v1433, %v1476
  %v1484 = vmul.f32 %v1435, %v1480
  %v1485 = vmul.f32 %v1437, %v1476
  %v1486 = vmul.f32 %v1439, %v1480
  %v1487 = vmul.f32 %v1443, %v1476
  %v1488 = vmul.f32 %v1445, %v1480
  %v1489 = vmul.f32 %v1447, %v1476
  %v1490 = vmul.f32 %v1449, %v1480
  %v1491 = vmul.f32 %v1453, %v1476
  %v1492 = vmul.f32 %v1455, %v1480
  %v1493 = vmul.f32 %v1457, %v1476
  %v1494 = vmul.f32 %v1459, %v1480
  %v1495 = vmul.f32 %v1463, %v1476
  %v1496 = vmul.f32 %v1465, %v1480
  %v1497 = vmul.f32 %v1467, %v1476
  %v1498 = vmul.f32 %v1469, %v1480
  %v1499 = vld [vmem:[%s3] sm:$0x3]
  %v1501 = vlaneseq
  %v1502 = vshrl.u32 %v1501, 7
  %v1503 = vsub.s32 0, %v1502
  %v1504 = vrot.slane %v1499, %v1503
  %v1505 = vlaneseq
  %v1506 = vshrl.u32 %v1505, 7
  %v1507 = vsub.s32 1, %v1506
  %v1508 = vrot.slane %v1499, %v1507
  %v1511 = vadd.f32 %v1483, %v1504
  %v1512 = vadd.f32 %v1484, %v1508
  %v1513 = vadd.f32 %v1485, %v1504
  %v1514 = vadd.f32 %v1486, %v1508
  %v1515 = vadd.f32 %v1487, %v1504
  %v1516 = vadd.f32 %v1488, %v1508
  %v1517 = vadd.f32 %v1489, %v1504
  %v1518 = vadd.f32 %v1490, %v1508
  %v1519 = vadd.f32 %v1491, %v1504
  %v1520 = vadd.f32 %v1492, %v1508
  %v1521 = vadd.f32 %v1493, %v1504
  %v1522 = vadd.f32 %v1494, %v1508
  %v1523 = vadd.f32 %v1495, %v1504
  %v1524 = vadd.f32 %v1496, %v1508
  %v1525 = vadd.f32 %v1497, %v1504
  %v1526 = vadd.f32 %v1498, %v1508
  %v1527 = vmax.f32 %v1511, 0.0
  %v1528 = vmax.f32 %v1512, 0.0
  %v1529 = vmax.f32 %v1513, 0.0
  %v1530 = vmax.f32 %v1514, 0.0
  %v1531 = vmax.f32 %v1515, 0.0
  %v1532 = vmax.f32 %v1516, 0.0
  %v1533 = vmax.f32 %v1517, 0.0
  %v1534 = vmax.f32 %v1518, 0.0
  %v1535 = vmax.f32 %v1519, 0.0
  %v1536 = vmax.f32 %v1520, 0.0
  %v1537 = vmax.f32 %v1521, 0.0
  %v1538 = vmax.f32 %v1522, 0.0
  %v1539 = vmax.f32 %v1523, 0.0
  %v1540 = vmax.f32 %v1524, 0.0
  %v1541 = vmax.f32 %v1525, 0.0
  %v1542 = vmax.f32 %v1526, 0.0
  %1543 = vst [vmem:[%s4] sm:$0xff] %v1527
  %1544 = vst [vmem:[%s4 + $0x8] sm:$0xff] %v1528
  %1545 = vst [vmem:[%s4 + $0x10] sm:$0xff] %v1529
  %1546 = vst [vmem:[%s4 + $0x18] sm:$0xff] %v1530
  %1547 = vst [vmem:[%s4 + $0x20] sm:$0xff] %v1531
  %1548 = vst [vmem:[%s4 + $0x28] sm:$0xff] %v1532
  %1549 = vst [vmem:[%s4 + $0x30] sm:$0xff] %v1533
  %1550 = vst [vmem:[%s4 + $0x38] sm:$0xff] %v1534
  %1551 = vst [vmem:[%s4 + $0x40] sm:$0xff] %v1535
  %1552 = vst [vmem:[%s4 + $0x48] sm:$0xff] %v1536
  %1553 = vst [vmem:[%s4 + $0x50] sm:$0xff] %v1537
  %1554 = vst [vmem:[%s4 + $0x58] sm:$0xff] %v1538
  %1555 = vst [vmem:[%s4 + $0x60] sm:$0xff] %v1539
  %1556 = vst [vmem:[%s4 + $0x68] sm:$0xff] %v1540
  %1557 = vst [vmem:[%s4 + $0x70] sm:$0xff] %v1541
  %1558 = vst [vmem:[%s4 + $0x78] sm:$0xff] %v1542
  // Predicated region
  $region18: #{recognizer_forward.10} parent=0 // pred_check
    _
  $region19: #{recognizer_forward.10} parent=0 // pred_check_branch
    %1560 = sbr.rel (0) target = $region21
  $region20: #{recognizer_forward.10} parent=0 // pred_region
    _
  $region21: #{recognizer_forward.10} parent=0 // pred_fallthru
    _
  // Predicated region
  $region22: #{recognizer_forward.10} parent=0 // pred_check
    _
  $region23: #{recognizer_forward.10} parent=0 // pred_check_branch
    %1562 = sbr.rel (0) target = $region25
  $region24: #{recognizer_forward.10} parent=0 // pred_region
    _
  $region25: #{recognizer_forward.10} parent=0 // pred_fallthru
    _

// kernel: recognizer_forward.11
$region0: #{recognizer_forward.11}
  #allocation0 [shape = 'u32[]', space=smem, size = 0x4, offset = 0x4, fixed_abs, tag = 'smem constant byte address 0x4 - core index']
  #allocation1 [shape = 'u32[144,128]{1,0:T(1,128)}', space=vmem, size = 0x12000, scoped, tag = 'internal scratch']
  %s0 = inlined_call_operand.vmem [shape: bf16[16,6400], index: 0, kind: input, shape index: {}]
  %s1 = inlined_call_operand.vmem [shape: s8[6400,3072], index: 1, kind: input, shape index: {}]
  %s2 = inlined_call_operand.vmem [shape: f32[1,3072], index: 2, kind: input, shape index: {}]
  %s3 = inlined_call_operand.vmem [shape: f32[1,3072], index: 3, kind: input, shape index: {}]
  %s4 = inlined_call_operand.vmem [shape: f32[16,3072], index: 4, kind: output, shape index: {}]
  %s5 = sld [smem:[#allocation0]]
  $region91: #{recognizer_forward.11} parent=0
    _
  %s7 = ssub.s32 1, %s5
  %s8 = scalar_select 0, %s7, %s5
  $region1: #{recognizer_forward.11} parent=0
    #allocation2 [shape = 'u8[4915200]{0}', space=vmem, size = 0x4b0000, scoped, tag = 'input window, operand 1']
    #allocation3 [shape = 'u8[49152]{0}', space=vmem, size = 0xc000, scoped, tag = 'output window, operand 0']
    loop: start=0, step=1, limit=10
    $region2: #{recognizer_forward.11} parent=1 // loop_pre_header
      _
    $region3: #{recognizer_forward.11} parent=1 // loop_header
      %s10 = sphi 0, %s14
      %p11 = scmp.ge.s32.totalorder %s10, 10
      %s17 = sphi 0, %s29
      %s18 = sphi 0, %s25
      %s19 = sphi 0, %s17
      %s20 = sphi 0, %s18
      %s21 = sphi 0, %s19
      %s22 = sphi 0, %s20
      %s32 = sphi 0, %s34
      %s35 = sphi 0, %s32
      %s36 = sphi 0, %s35
      %s52 = sphi 0, %s36
      %s58 = sphi 0, %s60
      %s61 = sphi 0, %s58
      %s62 = sphi 0, %s61
      %s78 = sphi 0, %s62
      %s84 = sphi 0, %s86
      %s87 = sphi 0, %s84
      %s88 = sphi 0, %s87
      %s104 = sphi 0, %s88
      %s110 = sphi 0, %s112
      %s113 = sphi 0, %s110
      %s114 = sphi 0, %s113
      %s130 = sphi 0, %s114
      %s138 = sphi 0, %s140
      %s141 = sphi 0, %s138
      %s142 = sphi 0, %s141
      %s158 = sphi 0, %s142
    $region4: #{recognizer_forward.11} parent=1 // loop_header_branch
      %13 = sbr.rel (%p11) target = $region8
    $region5: #{recognizer_forward.11} parent=1 // loop_body
      %s15 = ssub.s32 %s10, 1
      %s16 = ssub.s32 %s10, 2
      %s23 = sadd.s32 1, %s18
      %p24 = scmp.ge.s32.totalorder %s23, 8
      %s25 = scalar_select %p24, 0, %s23
      %s26 = sadd.s32 1, %s17
      %s27 = scalar_select %p24, %s26, %s17
      %p28 = scmp.ge.s32.totalorder %s27, 1
      %s29 = scalar_select %p28, 0, %s27
      %s30 = ssub.s32 %s17, %s29
      %p31 = scmp.eq.s32.totalorder %s30, 0
      %s33 = sadd.s32 %s32, 1
      %s34 = scalar_select %p31, %s32, %s33
      %p37 = pneg %p31
      %p38 = scmp.eq.s32.totalorder %s10, 7
      %p39 = por %p37, %p38
      %p40 = scmp.ne.s32.totalorder %s32, %s35
      %p41 = scmp.eq.s32.totalorder %s10, 0
      %p42 = por %p40, %p41
      %p43 = scmp.ne.s32.totalorder %s32, %s35
      %p44 = scmp.eq.s32.totalorder %s15, 7
      %p45 = por %p43, %p44
      %p46 = scmp.ne.s32.totalorder %s35, %s36
      %p47 = scmp.eq.s32.totalorder %s15, 0
      %p48 = por %p46, %p47
      %p49 = scmp.ne.s32.totalorder %s35, %s36
      %p50 = scmp.eq.s32.totalorder %s16, 7
      %p51 = por %p49, %p50
      %p53 = scmp.ne.s32.totalorder %s36, %s52
      %p54 = scmp.eq.s32.totalorder %s16, 0
      %p55 = por %p53, %p54
      %s56 = ssub.s32 %s18, %s25
      %p57 = scmp.eq.s32.totalorder %s56, 0
      %s59 = sadd.s32 %s58, 1
      %s60 = scalar_select %p57, %s58, %s59
      %p63 = pneg %p57
      %p64 = scmp.eq.s32.totalorder %s10, 7
      %p65 = por %p63, %p64
      %p66 = scmp.ne.s32.totalorder %s58, %s61
      %p67 = scmp.eq.s32.totalorder %s10, 0
      %p68 = por %p66, %p67
      %p69 = scmp.ne.s32.totalorder %s58, %s61
      %p70 = scmp.eq.s32.totalorder %s15, 7
      %p71 = por %p69, %p70
      %p72 = scmp.ne.s32.totalorder %s61, %s62
      %p73 = scmp.eq.s32.totalorder %s15, 0
      %p74 = por %p72, %p73
      %p75 = scmp.ne.s32.totalorder %s61, %s62
      %p76 = scmp.eq.s32.totalorder %s16, 7
      %p77 = por %p75, %p76
      %p79 = scmp.ne.s32.totalorder %s62, %s78
      %p80 = scmp.eq.s32.totalorder %s16, 0
      %p81 = por %p79, %p80
      %s82 = ssub.s32 %s18, %s25
      %p83 = scmp.eq.s32.totalorder %s82, 0
      %s85 = sadd.s32 %s84, 1
      %s86 = scalar_select %p83, %s84, %s85
      %p89 = pneg %p83
      %p90 = scmp.eq.s32.totalorder %s10, 7
      %p91 = por %p89, %p90
      %p92 = scmp.ne.s32.totalorder %s84, %s87
      %p93 = scmp.eq.s32.totalorder %s10, 0
      %p94 = por %p92, %p93
      %p95 = scmp.ne.s32.totalorder %s84, %s87
      %p96 = scmp.eq.s32.totalorder %s15, 7
      %p97 = por %p95, %p96
      %p98 = scmp.ne.s32.totalorder %s87, %s88
      %p99 = scmp.eq.s32.totalorder %s15, 0
      %p100 = por %p98, %p99
      %p101 = scmp.ne.s32.totalorder %s87, %s88
      %p102 = scmp.eq.s32.totalorder %s16, 7
      %p103 = por %p101, %p102
      %p105 = scmp.ne.s32.totalorder %s88, %s104
      %p106 = scmp.eq.s32.totalorder %s16, 0
      %p107 = por %p105, %p106
      %s108 = ssub.s32 %s18, %s25
      %p109 = scmp.eq.s32.totalorder %s108, 0
      %s111 = sadd.s32 %s110, 1
      %s112 = scalar_select %p109, %s110, %s111
      %p115 = pneg %p109
      %p116 = scmp.eq.s32.totalorder %s10, 7
      %p117 = por %p115, %p116
      %p118 = scmp.ne.s32.totalorder %s110, %s113
      %p119 = scmp.eq.s32.totalorder %s10, 0
      %p120 = por %p118, %p119
      %p121 = scmp.ne.s32.totalorder %s110, %s113
      %p122 = scmp.eq.s32.totalorder %s15, 7
      %p123 = por %p121, %p122
      %p124 = scmp.ne.s32.totalorder %s113, %s114
      %p125 = scmp.eq.s32.totalorder %s15, 0
      %p126 = por %p124, %p125
      %p127 = scmp.ne.s32.totalorder %s113, %s114
      %p128 = scmp.eq.s32.totalorder %s16, 7
      %p129 = por %p127, %p128
      %p131 = scmp.ne.s32.totalorder %s114, %s130
      %p132 = scmp.eq.s32.totalorder %s16, 0
      %p133 = por %p131, %p132
      %s134 = ssub.s32 %s17, %s29
      %s135 = ssub.s32 %s18, %s25
      %s136 = sor.u32 %s134, %s135
      %p137 = scmp.eq.s32.totalorder %s136, 0
      %s139 = sadd.s32 %s138, 1
      %s140 = scalar_select %p137, %s138, %s139
      %p143 = pneg %p137
      %p144 = scmp.eq.s32.totalorder %s10, 7
      %p145 = por %p143, %p144
      %p146 = scmp.ne.s32.totalorder %s138, %s141
      %p147 = scmp.eq.s32.totalorder %s10, 0
      %p148 = por %p146, %p147
      %p149 = scmp.ne.s32.totalorder %s138, %s141
      %p150 = scmp.eq.s32.totalorder %s15, 7
      %p151 = por %p149, %p150
      %p152 = scmp.ne.s32.totalorder %s141, %s142
      %p153 = scmp.eq.s32.totalorder %s15, 0
      %p154 = por %p152, %p153
      %p155 = scmp.ne.s32.totalorder %s141, %s142
      %p156 = scmp.eq.s32.totalorder %s16, 7
      %p157 = por %p155, %p156
      %p159 = scmp.ne.s32.totalorder %s142, %s158
      %p160 = scmp.eq.s32.totalorder %s16, 0
      %p161 = por %p159, %p160
      %p162 = scmp.le.s32.totalorder 1, %s10
      %p163 = scmp.lt.s32.totalorder %s10, 9
      %p164 = pnand %p162, %p163
      %p165 = pneg %p164
      // Predicated region
      $region9: #{recognizer_forward.11} parent=5 // pred_check
        _
      $region10: #{recognizer_forward.11} parent=5 // pred_check_branch
        %167 = sbr.rel (%p164) target = $region12
      $region11: #{recognizer_forward.11} parent=5 // pred_region
        %s168 = ssub.s32 %s10, 1
        // Predicated region
        $region13: #{recognizer_forward.11} parent=11 // pred_check
          %p169 = pneg %p48
        $region14: #{recognizer_forward.11} parent=11 // pred_check_branch
          %171 = sbr.rel (%p169) target = $region16
        $region15: #{recognizer_forward.11} parent=11 // pred_region
          %s172 = smul.u32 2, %s19
          %p173 = scmp.lt.s32.totalorder %s172, 1
          %s174 = scalar_select %p173, %s172, 1
          %s175 = smul.addr %s174, 50
          %s176 = smul.addr %s175, 4
          %s177 = scalar_lea.vmem %s0, %s176
          %s178 = smul.u32 2, %s19
        $region16: #{recognizer_forward.11} parent=11 // pred_fallthru
          _
      $region12: #{recognizer_forward.11} parent=5 // pred_fallthru
        _
      %p179 = scmp.lt.s32.totalorder %s10, 8
      // Predicated region
      $region17: #{recognizer_forward.11} parent=5 // pred_check
        %p180 = pneg %p179
      $region18: #{recognizer_forward.11} parent=5 // pred_check_branch
        %182 = sbr.rel (%p180) target = $region20
      $region19: #{recognizer_forward.11} parent=5 // pred_region
        // Predicated region
        $region21: #{recognizer_forward.11} parent=19 // pred_check
          %p183 = pneg %p68
        $region22: #{recognizer_forward.11} parent=19 // pred_check_branch
          %185 = sbr.rel (%p183) target = $region24
        $region23: #{recognizer_forward.11} parent=19 // pred_region
          %s186 = sand.u32 %s58, 1
          %s187 = sand.u32 %s58, 1
          %s188 = smul.addr %s187, 4800
          %s189 = scalar_lea.vmem [#allocation2], %s188
          %s190 = smul.u32 3, %s18
          %s191 = smul.addr %s190, 8
          %s192 = scalar_lea.vmem %s1, %s191
          // Predicated region
          $region25: #{recognizer_forward.11} parent=23 // pred_check
            _
          $region26: #{recognizer_forward.11} parent=23 // pred_check_branch
            %194 = sbr.rel (0) target = $region28
          $region27: #{recognizer_forward.11} parent=23 // pred_region
            // Predicated region
            $region29: #{recognizer_forward.11} parent=27 // pred_check
              _
            $region30: #{recognizer_forward.11} parent=27 // pred_check_branch
              %196 = sbr.rel (0) target = $region32
            $region31: #{recognizer_forward.11} parent=27 // pred_region
              loop: start=0, step=1, limit=1
              $region33: #{recognizer_forward.11} parent=31 // loop_pre_header
                _
              $region34: #{recognizer_forward.11} parent=31 // loop_header
                %s198 = sphi 0, %s202
                %p199 = scmp.ge.s32.totalorder %s198, 1
                %s203 = sphi %s192, %s192
                %s204 = sphi %s189, %s189
              $region35: #{recognizer_forward.11} parent=31 // loop_header_branch
                %201 = sbr.rel (%p199) target = $region39
              $region36: #{recognizer_forward.11} parent=31 // loop_body
                %v205 = vld [vmem:[%s203] sm:$0xff]
                %206 = vst [vmem:[%s204] sm:$0xff] %v205
                %v207 = vld [vmem:[%s203 + $0x8] sm:$0xff]
                %208 = vst [vmem:[%s204 + $0x8] sm:$0xff] %v207
                %v209 = vld [vmem:[%s203 + $0x10] sm:$0xff]
                %210 = vst [vmem:[%s204 + $0x10] sm:$0xff] %v209
                %v211 = vld [vmem:[%s203 + $0xc0] sm:$0xff]
                %212 = vst [vmem:[%s204 + $0x18] sm:$0xff] %v211
                %v213 = vld [vmem:[%s203 + $0xc8] sm:$0xff]
                %214 = vst [vmem:[%s204 + $0x20] sm:$0xff] %v213
                %v215 = vld [vmem:[%s203 + $0xd0] sm:$0xff]
                %216 = vst [vmem:[%s204 + $0x28] sm:$0xff] %v215
                %v217 = vld [vmem:[%s203 + $0x180] sm:$0xff]
                %218 = vst [vmem:[%s204 + $0x30] sm:$0xff] %v217
                %v219 = vld [vmem:[%s203 + $0x188] sm:$0xff]
                %220 = vst [vmem:[%s204 + $0x38] sm:$0xff] %v219
                %v221 = vld [vmem:[%s203 + $0x190] sm:$0xff]
                %222 = vst [vmem:[%s204 + $0x40] sm:$0xff] %v221
                %v223 = vld [vmem:[%s203 + $0x240] sm:$0xff]
                %224 = vst [vmem:[%s204 + $0x48] sm:$0xff] %v223
                %v225 = vld [vmem:[%s203 + $0x248] sm:$0xff]
                %226 = vst [vmem:[%s204 + $0x50] sm:$0xff] %v225
                %v227 = vld [vmem:[%s203 + $0x250] sm:$0xff]
                %228 = vst [vmem:[%s204 + $0x58] sm:$0xff] %v227
                %v229 = vld [vmem:[%s203 + $0x300] sm:$0xff]
                %230 = vst [vmem:[%s204 + $0x60] sm:$0xff] %v229
                %v231 = vld [vmem:[%s203 + $0x308] sm:$0xff]
                %232 = vst [vmem:[%s204 + $0x68] sm:$0xff] %v231
                %v233 = vld [vmem:[%s203 + $0x310] sm:$0xff]
                %234 = vst [vmem:[%s204 + $0x70] sm:$0xff] %v233
                %v235 = vld [vmem:[%s203 + $0x3c0] sm:$0xff]
                %236 = vst [vmem:[%s204 + $0x78] sm:$0xff] %v235
                %v237 = vld [vmem:[%s203 + $0x3c8] sm:$0xff]
                %238 = vst [vmem:[%s204 + $0x80] sm:$0xff] %v237
                %v239 = vld [vmem:[%s203 + $0x3d0] sm:$0xff]
                %240 = vst [vmem:[%s204 + $0x88] sm:$0xff] %v239
                %v241 = vld [vmem:[%s203 + $0x480] sm:$0xff]
                %242 = vst [vmem:[%s204 + $0x90] sm:$0xff] %v241
                %v243 = vld [vmem:[%s203 + $0x488] sm:$0xff]
                %244 = vst [vmem:[%s204 + $0x98] sm:$0xff] %v243
                %v245 = vld [vmem:[%s203 + $0x490] sm:$0xff]
                %246 = vst [vmem:[%s204 + $0xa0] sm:$0xff] %v245
                %v247 = vld [vmem:[%s203 + $0x540] sm:$0xff]
                %248 = vst [vmem:[%s204 + $0xa8] sm:$0xff] %v247
                %v249 = vld [vmem:[%s203 + $0x548] sm:$0xff]
                %250 = vst [vmem:[%s204 + $0xb0] sm:$0xff] %v249
                %v251 = vld [vmem:[%s203 + $0x550] sm:$0xff]
                %252 = vst [vmem:[%s204 + $0xb8] sm:$0xff] %v251
                %v253 = vld [vmem:[%s203 + $0x600] sm:$0xff]
                %254 = vst [vmem:[%s204 + $0xc0] sm:$0xff] %v253
                %v255 = vld [vmem:[%s203 + $0x608] sm:$0xff]
                %256 = vst [vmem:[%s204 + $0xc8] sm:$0xff] %v255
                %v257 = vld [vmem:[%s203 + $0x610] sm:$0xff]
                %258 = vst [vmem:[%s204 + $0xd0] sm:$0xff] %v257
                %v259 = vld [vmem:[%s203 + $0x6c0] sm:$0xff]
                %260 = vst [vmem:[%s204 + $0xd8] sm:$0xff] %v259
                %v261 = vld [vmem:[%s203 + $0x6c8] sm:$0xff]
                %262 = vst [vmem:[%s204 + $0xe0] sm:$0xff] %v261
                %v263 = vld [vmem:[%s203 + $0x6d0] sm:$0xff]
                %264 = vst [vmem:[%s204 + $0xe8] sm:$0xff] %v263
                %v265 = vld [vmem:[%s203 + $0x780] sm:$0xff]
                %266 = vst [vmem:[%s204 + $0xf0] sm:$0xff] %v265
                %v267 = vld [vmem:[%s203 + $0x788] sm:$0xff]
                %268 = vst [vmem:[%s204 + $0xf8] sm:$0xff] %v267
                %v269 = vld [vmem:[%s203 + $0x790] sm:$0xff]
                %270 = vst [vmem:[%s204 + $0x100] sm:$0xff] %v269
                %v271 = vld [vmem:[%s203 + $0x840] sm:$0xff]
                %272 = vst [vmem:[%s204 + $0x108] sm:$0xff] %v271
                %v273 = vld [vmem:[%s203 + $0x848] sm:$0xff]
                %274 = vst [vmem:[%s204 + $0x110] sm:$0xff] %v273
                %v275 = vld [vmem:[%s203 + $0x850] sm:$0xff]
                %276 = vst [vmem:[%s204 + $0x118] sm:$0xff] %v275
                %v277 = vld [vmem:[%s203 + $0x900] sm:$0xff]
                %278 = vst [vmem:[%s204 + $0x120] sm:$0xff] %v277
                %v279 = vld [vmem:[%s203 + $0x908] sm:$0xff]
                %280 = vst [vmem:[%s204 + $0x128] sm:$0xff] %v279
                %v281 = vld [vmem:[%s203 + $0x910] sm:$0xff]
                %282 = vst [vmem:[%s204 + $0x130] sm:$0xff] %v281
                %v283 = vld [vmem:[%s203 + $0x9c0] sm:$0xff]
                %284 = vst [vmem:[%s204 + $0x138] sm:$0xff] %v283
                %v285 = vld [vmem:[%s203 + $0x9c8] sm:$0xff]
                %286 = vst [vmem:[%s204 + $0x140] sm:$0xff] %v285
                %v287 = vld [vmem:[%s203 + $0x9d0] sm:$0xff]
                %288 = vst [vmem:[%s204 + $0x148] sm:$0xff] %v287
                %v289 = vld [vmem:[%s203 + $0xa80] sm:$0xff]
                %290 = vst [vmem:[%s204 + $0x150] sm:$0xff] %v289
                %v291 = vld [vmem:[%s203 + $0xa88] sm:$0xff]
                %292 = vst [vmem:[%s204 + $0x158] sm:$0xff] %v291
                %v293 = vld [vmem:[%s203 + $0xa90] sm:$0xff]
                %294 = vst [vmem:[%s204 + $0x160] sm:$0xff] %v293
                %v295 = vld [vmem:[%s203 + $0xb40] sm:$0xff]
                %296 = vst [vmem:[%s204 + $0x168] sm:$0xff] %v295
                %v297 = vld [vmem:[%s203 + $0xb48] sm:$0xff]
                %298 = vst [vmem:[%s204 + $0x170] sm:$0xff] %v297
                %v299 = vld [vmem:[%s203 + $0xb50] sm:$0xff]
                %300 = vst [vmem:[%s204 + $0x178] sm:$0xff] %v299
                %v301 = vld [vmem:[%s203 + $0xc00] sm:$0xff]
                %302 = vst [vmem:[%s204 + $0x180] sm:$0xff] %v301
                %v303 = vld [vmem:[%s203 + $0xc08] sm:$0xff]
                %304 = vst [vmem:[%s204 + $0x188] sm:$0xff] %v303
                %v305 = vld [vmem:[%s203 + $0xc10] sm:$0xff]
                %306 = vst [vmem:[%s204 + $0x190] sm:$0xff] %v305
                %v307 = vld [vmem:[%s203 + $0xcc0] sm:$0xff]
                %308 = vst [vmem:[%s204 + $0x198] sm:$0xff] %v307
                %v309 = vld [vmem:[%s203 + $0xcc8] sm:$0xff]
                %310 = vst [vmem:[%s204 + $0x1a0] sm:$0xff] %v309
                %v311 = vld [vmem:[%s203 + $0xcd0] sm:$0xff]
                %312 = vst [vmem:[%s204 + $0x1a8] sm:$0xff] %v311
                %v313 = vld [vmem:[%s203 + $0xd80] sm:$0xff]
                %314 = vst [vmem:[%s204 + $0x1b0] sm:$0xff] %v313
                %v315 = vld [vmem:[%s203 + $0xd88] sm:$0xff]
                %316 = vst [vmem:[%s204 + $0x1b8] sm:$0xff] %v315
                %v317 = vld [vmem:[%s203 + $0xd90] sm:$0xff]
                %318 = vst [vmem:[%s204 + $0x1c0] sm:$0xff] %v317
                %v319 = vld [vmem:[%s203 + $0xe40] sm:$0xff]
                %320 = vst [vmem:[%s204 + $0x1c8] sm:$0xff] %v319
                %v321 = vld [vmem:[%s203 + $0xe48] sm:$0xff]
                %322 = vst [vmem:[%s204 + $0x1d0] sm:$0xff] %v321
                %v323 = vld [vmem:[%s203 + $0xe50] sm:$0xff]
                %324 = vst [vmem:[%s204 + $0x1d8] sm:$0xff] %v323
                %v325 = vld [vmem:[%s203 + $0xf00] sm:$0xff]
                %326 = vst [vmem:[%s204 + $0x1e0] sm:$0xff] %v325
                %v327 = vld [vmem:[%s203 + $0xf08] sm:$0xff]
                %328 = vst [vmem:[%s204 + $0x1e8] sm:$0xff] %v327
                %v329 = vld [vmem:[%s203 + $0xf10] sm:$0xff]
                %330 = vst [vmem:[%s204 + $0x1f0] sm:$0xff] %v329
                %v331 = vld [vmem:[%s203 + $0xfc0] sm:$0xff]
                %332 = vst [vmem:[%s204 + $0x1f8] sm:$0xff] %v331
                %v333 = vld [vmem:[%s203 + $0xfc8] sm:$0xff]
                %334 = vst [vmem:[%s204 + $0x200] sm:$0xff] %v333
                %v335 = vld [vmem:[%s203 + $0xfd0] sm:$0xff]
                %336 = vst [vmem:[%s204 + $0x208] sm:$0xff] %v335
                %v337 = vld [vmem:[%s203 + $0x1080] sm:$0xff]
                %338 = vst [vmem:[%s204 + $0x210] sm:$0xff] %v337
                %v339 = vld [vmem:[%s203 + $0x1088] sm:$0xff]
                %340 = vst [vmem:[%s204 + $0x218] sm:$0xff] %v339
                %v341 = vld [vmem:[%s203 + $0x1090] sm:$0xff]
                %342 = vst [vmem:[%s204 + $0x220] sm:$0xff] %v341
                %v343 = vld [vmem:[%s203 + $0x1140] sm:$0xff]
                %344 = vst [vmem:[%s204 + $0x228] sm:$0xff] %v343
                %v345 = vld [vmem:[%s203 + $0x1148] sm:$0xff]
                %346 = vst [vmem:[%s204 + $0x230] sm:$0xff] %v345
                %v347 = vld [vmem:[%s203 + $0x1150] sm:$0xff]
                %348 = vst [vmem:[%s204 + $0x238] sm:$0xff] %v347
                %v349 = vld [vmem:[%s203 + $0x1200] sm:$0xff]
                %350 = vst [vmem:[%s204 + $0x240] sm:$0xff] %v349
                %v351 = vld [vmem:[%s203 + $0x1208] sm:$0xff]
                %352 = vst [vmem:[%s204 + $0x248] sm:$0xff] %v351
                %v353 = vld [vmem:[%s203 + $0x1210] sm:$0xff]
                %354 = vst [vmem:[%s204 + $0x250] sm:$0xff] %v353
                %v355 = vld [vmem:[%s203 + $0x12c0] sm:$0xff]
                %356 = vst [vmem:[%s204 + $0x258] sm:$0xff] %v355
                %v357 = vld [vmem:[%s203 + $0x12c8] sm:$0xff]
                %358 = vst [vmem:[%s204 + $0x260] sm:$0xff] %v357
                %v359 = vld [vmem:[%s203 + $0x12d0] sm:$0xff]
                %360 = vst [vmem:[%s204 + $0x268] sm:$0xff] %v359
                %v361 = vld [vmem:[%s203 + $0x1380] sm:$0xff]
                %362 = vst [vmem:[%s204 + $0x270] sm:$0xff] %v361
                %v363 = vld [vmem:[%s203 + $0x1388] sm:$0xff]
                %364 = vst [vmem:[%s204 + $0x278] sm:$0xff] %v363
                %v365 = vld [vmem:[%s203 + $0x1390] sm:$0xff]
                %366 = vst [vmem:[%s204 + $0x280] sm:$0xff] %v365
                %v367 = vld [vmem:[%s203 + $0x1440] sm:$0xff]
                %368 = vst [vmem:[%s204 + $0x288] sm:$0xff] %v367
                %v369 = vld [vmem:[%s203 + $0x1448] sm:$0xff]
                %370 = vst [vmem:[%s204 + $0x290] sm:$0xff] %v369
                %v371 = vld [vmem:[%s203 + $0x1450] sm:$0xff]
                %372 = vst [vmem:[%s204 + $0x298] sm:$0xff] %v371
                %v373 = vld [vmem:[%s203 + $0x1500] sm:$0xff]
                %374 = vst [vmem:[%s204 + $0x2a0] sm:$0xff] %v373
                %v375 = vld [vmem:[%s203 + $0x1508] sm:$0xff]
                %376 = vst [vmem:[%s204 + $0x2a8] sm:$0xff] %v375
                %v377 = vld [vmem:[%s203 + $0x1510] sm:$0xff]
                %378 = vst [vmem:[%s204 + $0x2b0] sm:$0xff] %v377
                %v379 = vld [vmem:[%s203 + $0x15c0] sm:$0xff]
                %380 = vst [vmem:[%s204 + $0x2b8] sm:$0xff] %v379
                %v381 = vld [vmem:[%s203 + $0x15c8] sm:$0xff]
                %382 = vst [vmem:[%s204 + $0x2c0] sm:$0xff] %v381
                %v383 = vld [vmem:[%s203 + $0x15d0] sm:$0xff]
                %384 = vst [vmem:[%s204 + $0x2c8] sm:$0xff] %v383
                %v385 = vld [vmem:[%s203 + $0x1680] sm:$0xff]
                %386 = vst [vmem:[%s204 + $0x2d0] sm:$0xff] %v385
                %v387 = vld [vmem:[%s203 + $0x1688] sm:$0xff]
                %388 = vst [vmem:[%s204 + $0x2d8] sm:$0xff] %v387
                %v389 = vld [vmem:[%s203 + $0x1690] sm:$0xff]
                %390 = vst [vmem:[%s204 + $0x2e0] sm:$0xff] %v389
                %v391 = vld [vmem:[%s203 + $0x1740] sm:$0xff]
                %392 = vst [vmem:[%s204 + $0x2e8] sm:$0xff] %v391
                %v393 = vld [vmem:[%s203 + $0x1748] sm:$0xff]
                %394 = vst [vmem:[%s204 + $0x2f0] sm:$0xff] %v393
                %v395 = vld [vmem:[%s203 + $0x1750] sm:$0xff]
                %396 = vst [vmem:[%s204 + $0x2f8] sm:$0xff] %v395
                %v397 = vld [vmem:[%s203 + $0x1800] sm:$0xff]
                %398 = vst [vmem:[%s204 + $0x300] sm:$0xff] %v397
                %v399 = vld [vmem:[%s203 + $0x1808] sm:$0xff]
                %400 = vst [vmem:[%s204 + $0x308] sm:$0xff] %v399
                %v401 = vld [vmem:[%s203 + $0x1810] sm:$0xff]
                %402 = vst [vmem:[%s204 + $0x310] sm:$0xff] %v401
                %v403 = vld [vmem:[%s203 + $0x18c0] sm:$0xff]
                %404 = vst [vmem:[%s204 + $0x318] sm:$0xff] %v403
                %v405 = vld [vmem:[%s203 + $0x18c8] sm:$0xff]
                %406 = vst [vmem:[%s204 + $0x320] sm:$0xff] %v405
                %v407 = vld [vmem:[%s203 + $0x18d0] sm:$0xff]
                %408 = vst [vmem:[%s204 + $0x328] sm:$0xff] %v407
                %v409 = vld [vmem:[%s203 + $0x1980] sm:$0xff]
                %410 = vst [vmem:[%s204 + $0x330] sm:$0xff] %v409
                %v411 = vld [vmem:[%s203 + $0x1988] sm:$0xff]
                %412 = vst [vmem:[%s204 + $0x338] sm:$0xff] %v411
                %v413 = vld [vmem:[%s203 + $0x1990] sm:$0xff]
                %414 = vst [vmem:[%s204 + $0x340] sm:$0xff] %v413
                %v415 = vld [vmem:[%s203 + $0x1a40] sm:$0xff]
                %416 = vst [vmem:[%s204 + $0x348] sm:$0xff] %v415
                %v417 = vld [vmem:[%s203 + $0x1a48] sm:$0xff]
                %418 = vst [vmem:[%s204 + $0x350] sm:$0xff] %v417
                %v419 = vld [vmem:[%s203 + $0x1a50] sm:$0xff]
                %420 = vst [vmem:[%s204 + $0x358] sm:$0xff] %v419
                %v421 = vld [vmem:[%s203 + $0x1b00] sm:$0xff]
                %422 = vst [vmem:[%s204 + $0x360] sm:$0xff] %v421
                %v423 = vld [vmem:[%s203 + $0x1b08] sm:$0xff]
                %424 = vst [vmem:[%s204 + $0x368] sm:$0xff] %v423
                %v425 = vld [vmem:[%s203 + $0x1b10] sm:$0xff]
                %426 = vst [vmem:[%s204 + $0x370] sm:$0xff] %v425
                %v427 = vld [vmem:[%s203 + $0x1bc0] sm:$0xff]
                %428 = vst [vmem:[%s204 + $0x378] sm:$0xff] %v427
                %v429 = vld [vmem:[%s203 + $0x1bc8] sm:$0xff]
                %430 = vst [vmem:[%s204 + $0x380] sm:$0xff] %v429
                %v431 = vld [vmem:[%s203 + $0x1bd0] sm:$0xff]
                %432 = vst [vmem:[%s204 + $0x388] sm:$0xff] %v431
                %v433 = vld [vmem:[%s203 + $0x1c80] sm:$0xff]
                %434 = vst [vmem:[%s204 + $0x390] sm:$0xff] %v433
                %v435 = vld [vmem:[%s203 + $0x1c88] sm:$0xff]
                %436 = vst [vmem:[%s204 + $0x398] sm:$0xff] %v435
                %v437 = vld [vmem:[%s203 + $0x1c90] sm:$0xff]
                %438 = vst [vmem:[%s204 + $0x3a0] sm:$0xff] %v437
                %v439 = vld [vmem:[%s203 + $0x1d40] sm:$0xff]
                %440 = vst [vmem:[%s204 + $0x3a8] sm:$0xff] %v439
                %v441 = vld [vmem:[%s203 + $0x1d48] sm:$0xff]
                %442 = vst [vmem:[%s204 + $0x3b0] sm:$0xff] %v441
                %v443 = vld [vmem:[%s203 + $0x1d50] sm:$0xff]
                %444 = vst [vmem:[%s204 + $0x3b8] sm:$0xff] %v443
                %v445 = vld [vmem:[%s203 + $0x1e00] sm:$0xff]
                %446 = vst [vmem:[%s204 + $0x3c0] sm:$0xff] %v445
                %v447 = vld [vmem:[%s203 + $0x1e08] sm:$0xff]
                %448 = vst [vmem:[%s204 + $0x3c8] sm:$0xff] %v447
                %v449 = vld [vmem:[%s203 + $0x1e10] sm:$0xff]
                %450 = vst [vmem:[%s204 + $0x3d0] sm:$0xff] %v449
                %v451 = vld [vmem:[%s203 + $0x1ec0] sm:$0xff]
                %452 = vst [vmem:[%s204 + $0x3d8] sm:$0xff] %v451
                %v453 = vld [vmem:[%s203 + $0x1ec8] sm:$0xff]
                %454 = vst [vmem:[%s204 + $0x3e0] sm:$0xff] %v453
                %v455 = vld [vmem:[%s203 + $0x1ed0] sm:$0xff]
                %456 = vst [vmem:[%s204 + $0x3e8] sm:$0xff] %v455
                %v457 = vld [vmem:[%s203 + $0x1f80] sm:$0xff]
                %458 = vst [vmem:[%s204 + $0x3f0] sm:$0xff] %v457
                %v459 = vld [vmem:[%s203 + $0x1f88] sm:$0xff]
                %460 = vst [vmem:[%s204 + $0x3f8] sm:$0xff] %v459
                %v461 = vld [vmem:[%s203 + $0x1f90] sm:$0xff]
                %462 = vst [vmem:[%s204 + $0x400] sm:$0xff] %v461
                %v463 = vld [vmem:[%s203 + $0x2040] sm:$0xff]
                %464 = vst [vmem:[%s204 + $0x408] sm:$0xff] %v463
                %v465 = vld [vmem:[%s203 + $0x2048] sm:$0xff]
                %466 = vst [vmem:[%s204 + $0x410] sm:$0xff] %v465
                %v467 = vld [vmem:[%s203 + $0x2050] sm:$0xff]
                %468 = vst [vmem:[%s204 + $0x418] sm:$0xff] %v467
                %v469 = vld [vmem:[%s203 + $0x2100] sm:$0xff]
                %470 = vst [vmem:[%s204 + $0x420] sm:$0xff] %v469
                %v471 = vld [vmem:[%s203 + $0x2108] sm:$0xff]
                %472 = vst [vmem:[%s204 + $0x428] sm:$0xff] %v471
                %v473 = vld [vmem:[%s203 + $0x2110] sm:$0xff]
                %474 = vst [vmem:[%s204 + $0x430] sm:$0xff] %v473
                %v475 = vld [vmem:[%s203 + $0x21c0] sm:$0xff]
                %476 = vst [vmem:[%s204 + $0x438] sm:$0xff] %v475
                %v477 = vld [vmem:[%s203 + $0x21c8] sm:$0xff]
                %478 = vst [vmem:[%s204 + $0x440] sm:$0xff] %v477
                %v479 = vld [vmem:[%s203 + $0x21d0] sm:$0xff]
                %480 = vst [vmem:[%s204 + $0x448] sm:$0xff] %v479
                %v481 = vld [vmem:[%s203 + $0x2280] sm:$0xff]
                %482 = vst [vmem:[%s204 + $0x450] sm:$0xff] %v481
                %v483 = vld [vmem:[%s203 + $0x2288] sm:$0xff]
                %484 = vst [vmem:[%s204 + $0x458] sm:$0xff] %v483
                %v485 = vld [vmem:[%s203 + $0x2290] sm:$0xff]
                %486 = vst [vmem:[%s204 + $0x460] sm:$0xff] %v485
                %v487 = vld [vmem:[%s203 + $0x2340] sm:$0xff]
                %488 = vst [vmem:[%s204 + $0x468] sm:$0xff] %v487
                %v489 = vld [vmem:[%s203 + $0x2348] sm:$0xff]
                %490 = vst [vmem:[%s204 + $0x470] sm:$0xff] %v489
                %v491 = vld [vmem:[%s203 + $0x2350] sm:$0xff]
                %492 = vst [vmem:[%s204 + $0x478] sm:$0xff] %v491
                %v493 = vld [vmem:[%s203 + $0x2400] sm:$0xff]
                %494 = vst [vmem:[%s204 + $0x480] sm:$0xff] %v493
                %v495 = vld [vmem:[%s203 + $0x2408] sm:$0xff]
                %496 = vst [vmem:[%s204 + $0x488] sm:$0xff] %v495
                %v497 = vld [vmem:[%s203 + $0x2410] sm:$0xff]
                %498 = vst [vmem:[%s204 + $0x490] sm:$0xff] %v497
                %v499 = vld [vmem:[%s203 + $0x24c0] sm:$0xff]
                %500 = vst [vmem:[%s204 + $0x498] sm:$0xff] %v499
                %v501 = vld [vmem:[%s203 + $0x24c8] sm:$0xff]
                %502 = vst [vmem:[%s204 + $0x4a0] sm:$0xff] %v501
                %v503 = vld [vmem:[%s203 + $0x24d0] sm:$0xff]
                %504 = vst [vmem:[%s204 + $0x4a8] sm:$0xff] %v503
                %v505 = vld [vmem:[%s203 + $0x2580] sm:$0xff]
                %506 = vst [vmem:[%s204 + $0x4b0] sm:$0xff] %v505
                %v507 = vld [vmem:[%s203 + $0x2588] sm:$0xff]
                %508 = vst [vmem:[%s204 + $0x4b8] sm:$0xff] %v507
                %v509 = vld [vmem:[%s203 + $0x2590] sm:$0xff]
                %510 = vst [vmem:[%s204 + $0x4c0] sm:$0xff] %v509
                %v511 = vld [vmem:[%s203 + $0x2640] sm:$0xff]
                %512 = vst [vmem:[%s204 + $0x4c8] sm:$0xff] %v511
                %v513 = vld [vmem:[%s203 + $0x2648] sm:$0xff]
                %514 = vst [vmem:[%s204 + $0x4d0] sm:$0xff] %v513
                %v515 = vld [vmem:[%s203 + $0x2650] sm:$0xff]
                %516 = vst [vmem:[%s204 + $0x4d8] sm:$0xff] %v515
                %v517 = vld [vmem:[%s203 + $0x2700] sm:$0xff]
                %518 = vst [vmem:[%s204 + $0x4e0] sm:$0xff] %v517
                %v519 = vld [vmem:[%s203 + $0x2708] sm:$0xff]
                %520 = vst [vmem:[%s204 + $0x4e8] sm:$0xff] %v519
                %v521 = vld [vmem:[%s203 + $0x2710] sm:$0xff]
                %522 = vst [vmem:[%s204 + $0x4f0] sm:$0xff] %v521
                %v523 = vld [vmem:[%s203 + $0x27c0] sm:$0xff]
                %524 = vst [vmem:[%s204 + $0x4f8] sm:$0xff] %v523
                %v525 = vld [vmem:[%s203 + $0x27c8] sm:$0xff]
                %526 = vst [vmem:[%s204 + $0x500] sm:$0xff] %v525
                %v527 = vld [vmem:[%s203 + $0x27d0] sm:$0xff]
                %528 = vst [vmem:[%s204 + $0x508] sm:$0xff] %v527
                %v529 = vld [vmem:[%s203 + $0x2880] sm:$0xff]
                %530 = vst [vmem:[%s204 + $0x510] sm:$0xff] %v529
                %v531 = vld [vmem:[%s203 + $0x2888] sm:$0xff]
                %532 = vst [vmem:[%s204 + $0x518] sm:$0xff] %v531
                %v533 = vld [vmem:[%s203 + $0x2890] sm:$0xff]
                %534 = vst [vmem:[%s204 + $0x520] sm:$0xff] %v533
                %v535 = vld [vmem:[%s203 + $0x2940] sm:$0xff]
                %536 = vst [vmem:[%s204 + $0x528] sm:$0xff] %v535
                %v537 = vld [vmem:[%s203 + $0x2948] sm:$0xff]
                %538 = vst [vmem:[%s204 + $0x530] sm:$0xff] %v537
                %v539 = vld [vmem:[%s203 + $0x2950] sm:$0xff]
                %540 = vst [vmem:[%s204 + $0x538] sm:$0xff] %v539
                %v541 = vld [vmem:[%s203 + $0x2a00] sm:$0xff]
                %542 = vst [vmem:[%s204 + $0x540] sm:$0xff] %v541
                %v543 = vld [vmem:[%s203 + $0x2a08] sm:$0xff]
                %544 = vst [vmem:[%s204 + $0x548] sm:$0xff] %v543
                %v545 = vld [vmem:[%s203 + $0x2a10] sm:$0xff]
                %546 = vst [vmem:[%s204 + $0x550] sm:$0xff] %v545
                %v547 = vld [vmem:[%s203 + $0x2ac0] sm:$0xff]
                %548 = vst [vmem:[%s204 + $0x558] sm:$0xff] %v547
                %v549 = vld [vmem:[%s203 + $0x2ac8] sm:$0xff]
                %550 = vst [vmem:[%s204 + $0x560] sm:$0xff] %v549
                %v551 = vld [vmem:[%s203 + $0x2ad0] sm:$0xff]
                %552 = vst [vmem:[%s204 + $0x568] sm:$0xff] %v551
                %v553 = vld [vmem:[%s203 + $0x2b80] sm:$0xff]
                %554 = vst [vmem:[%s204 + $0x570] sm:$0xff] %v553
                %v555 = vld [vmem:[%s203 + $0x2b88] sm:$0xff]
                %556 = vst [vmem:[%s204 + $0x578] sm:$0xff] %v555
                %v557 = vld [vmem:[%s203 + $0x2b90] sm:$0xff]
                %558 = vst [vmem:[%s204 + $0x580] sm:$0xff] %v557
                %v559 = vld [vmem:[%s203 + $0x2c40] sm:$0xff]
                %560 = vst [vmem:[%s204 + $0x588] sm:$0xff] %v559
                %v561 = vld [vmem:[%s203 + $0x2c48] sm:$0xff]
                %562 = vst [vmem:[%s204 + $0x590] sm:$0xff] %v561
                %v563 = vld [vmem:[%s203 + $0x2c50] sm:$0xff]
                %564 = vst [vmem:[%s204 + $0x598] sm:$0xff] %v563
                %v565 = vld [vmem:[%s203 + $0x2d00] sm:$0xff]
                %566 = vst [vmem:[%s204 + $0x5a0] sm:$0xff] %v565
                %v567 = vld [vmem:[%s203 + $0x2d08] sm:$0xff]
                %568 = vst [vmem:[%s204 + $0x5a8] sm:$0xff] %v567
                %v569 = vld [vmem:[%s203 + $0x2d10] sm:$0xff]
                %570 = vst [vmem:[%s204 + $0x5b0] sm:$0xff] %v569
                %v571 = vld [vmem:[%s203 + $0x2dc0] sm:$0xff]
                %572 = vst [vmem:[%s204 + $0x5b8] sm:$0xff] %v571
                %v573 = vld [vmem:[%s203 + $0x2dc8] sm:$0xff]
                %574 = vst [vmem:[%s204 + $0x5c0] sm:$0xff] %v573
                %v575 = vld [vmem:[%s203 + $0x2dd0] sm:$0xff]
                %576 = vst [vmem:[%s204 + $0x5c8] sm:$0xff] %v575
                %v577 = vld [vmem:[%s203 + $0x2e80] sm:$0xff]
                %578 = vst [vmem:[%s204 + $0x5d0] sm:$0xff] %v577
                %v579 = vld [vmem:[%s203 + $0x2e88] sm:$0xff]
                %580 = vst [vmem:[%s204 + $0x5d8] sm:$0xff] %v579
                %v581 = vld [vmem:[%s203 + $0x2e90] sm:$0xff]
                %582 = vst [vmem:[%s204 + $0x5e0] sm:$0xff] %v581
                %v583 = vld [vmem:[%s203 + $0x2f40] sm:$0xff]
                %584 = vst [vmem:[%s204 + $0x5e8] sm:$0xff] %v583
                %v585 = vld [vmem:[%s203 + $0x2f48] sm:$0xff]
                %586 = vst [vmem:[%s204 + $0x5f0] sm:$0xff] %v585
                %v587 = vld [vmem:[%s203 + $0x2f50] sm:$0xff]
                %588 = vst [vmem:[%s204 + $0x5f8] sm:$0xff] %v587
                %v589 = vld [vmem:[%s203 + $0x3000] sm:$0xff]
                %590 = vst [vmem:[%s204 + $0x600] sm:$0xff] %v589
                %v591 = vld [vmem:[%s203 + $0x3008] sm:$0xff]
                %592 = vst [vmem:[%s204 + $0x608] sm:$0xff] %v591
                %v593 = vld [vmem:[%s203 + $0x3010] sm:$0xff]
                %594 = vst [vmem:[%s204 + $0x610] sm:$0xff] %v593
                %v595 = vld [vmem:[%s203 + $0x30c0] sm:$0xff]
                %596 = vst [vmem:[%s204 + $0x618] sm:$0xff] %v595
                %v597 = vld [vmem:[%s203 + $0x30c8] sm:$0xff]
                %598 = vst [vmem:[%s204 + $0x620] sm:$0xff] %v597
                %v599 = vld [vmem:[%s203 + $0x30d0] sm:$0xff]
                %600 = vst [vmem:[%s204 + $0x628] sm:$0xff] %v599
                %v601 = vld [vmem:[%s203 + $0x3180] sm:$0xff]
                %602 = vst [vmem:[%s204 + $0x630] sm:$0xff] %v601
                %v603 = vld [vmem:[%s203 + $0x3188] sm:$0xff]
                %604 = vst [vmem:[%s204 + $0x638] sm:$0xff] %v603
                %v605 = vld [vmem:[%s203 + $0x3190] sm:$0xff]
                %606 = vst [vmem:[%s204 + $0x640] sm:$0xff] %v605
                %v607 = vld [vmem:[%s203 + $0x3240] sm:$0xff]
                %608 = vst [vmem:[%s204 + $0x648] sm:$0xff] %v607
                %v609 = vld [vmem:[%s203 + $0x3248] sm:$0xff]
                %610 = vst [vmem:[%s204 + $0x650] sm:$0xff] %v609
                %v611 = vld [vmem:[%s203 + $0x3250] sm:$0xff]
                %612 = vst [vmem:[%s204 + $0x658] sm:$0xff] %v611
                %v613 = vld [vmem:[%s203 + $0x3300] sm:$0xff]
                %614 = vst [vmem:[%s204 + $0x660] sm:$0xff] %v613
                %v615 = vld [vmem:[%s203 + $0x3308] sm:$0xff]
                %616 = vst [vmem:[%s204 + $0x668] sm:$0xff] %v615
                %v617 = vld [vmem:[%s203 + $0x3310] sm:$0xff]
                %618 = vst [vmem:[%s204 + $0x670] sm:$0xff] %v617
                %v619 = vld [vmem:[%s203 + $0x33c0] sm:$0xff]
                %620 = vst [vmem:[%s204 + $0x678] sm:$0xff] %v619
                %v621 = vld [vmem:[%s203 + $0x33c8] sm:$0xff]
                %622 = vst [vmem:[%s204 + $0x680] sm:$0xff] %v621
                %v623 = vld [vmem:[%s203 + $0x33d0] sm:$0xff]
                %624 = vst [vmem:[%s204 + $0x688] sm:$0xff] %v623
                %v625 = vld [vmem:[%s203 + $0x3480] sm:$0xff]
                %626 = vst [vmem:[%s204 + $0x690] sm:$0xff] %v625
                %v627 = vld [vmem:[%s203 + $0x3488] sm:$0xff]
                %628 = vst [vmem:[%s204 + $0x698] sm:$0xff] %v627
                %v629 = vld [vmem:[%s203 + $0x3490] sm:$0xff]
                %630 = vst [vmem:[%s204 + $0x6a0] sm:$0xff] %v629
                %v631 = vld [vmem:[%s203 + $0x3540] sm:$0xff]
                %632 = vst [vmem:[%s204 + $0x6a8] sm:$0xff] %v631
                %v633 = vld [vmem:[%s203 + $0x3548] sm:$0xff]
                %634 = vst [vmem:[%s204 + $0x6b0] sm:$0xff] %v633
                %v635 = vld [vmem:[%s203 + $0x3550] sm:$0xff]
                %636 = vst [vmem:[%s204 + $0x6b8] sm:$0xff] %v635
                %v637 = vld [vmem:[%s203 + $0x3600] sm:$0xff]
                %638 = vst [vmem:[%s204 + $0x6c0] sm:$0xff] %v637
                %v639 = vld [vmem:[%s203 + $0x3608] sm:$0xff]
                %640 = vst [vmem:[%s204 + $0x6c8] sm:$0xff] %v639
                %v641 = vld [vmem:[%s203 + $0x3610] sm:$0xff]
                %642 = vst [vmem:[%s204 + $0x6d0] sm:$0xff] %v641
                %v643 = vld [vmem:[%s203 + $0x36c0] sm:$0xff]
                %644 = vst [vmem:[%s204 + $0x6d8] sm:$0xff] %v643
                %v645 = vld [vmem:[%s203 + $0x36c8] sm:$0xff]
                %646 = vst [vmem:[%s204 + $0x6e0] sm:$0xff] %v645
                %v647 = vld [vmem:[%s203 + $0x36d0] sm:$0xff]
                %648 = vst [vmem:[%s204 + $0x6e8] sm:$0xff] %v647
                %v649 = vld [vmem:[%s203 + $0x3780] sm:$0xff]
                %650 = vst [vmem:[%s204 + $0x6f0] sm:$0xff] %v649
                %v651 = vld [vmem:[%s203 + $0x3788] sm:$0xff]
                %652 = vst [vmem:[%s204 + $0x6f8] sm:$0xff] %v651
                %v653 = vld [vmem:[%s203 + $0x3790] sm:$0xff]
                %654 = vst [vmem:[%s204 + $0x700] sm:$0xff] %v653
                %v655 = vld [vmem:[%s203 + $0x3840] sm:$0xff]
                %656 = vst [vmem:[%s204 + $0x708] sm:$0xff] %v655
                %v657 = vld [vmem:[%s203 + $0x3848] sm:$0xff]
                %658 = vst [vmem:[%s204 + $0x710] sm:$0xff] %v657
                %v659 = vld [vmem:[%s203 + $0x3850] sm:$0xff]
                %660 = vst [vmem:[%s204 + $0x718] sm:$0xff] %v659
                %v661 = vld [vmem:[%s203 + $0x3900] sm:$0xff]
                %662 = vst [vmem:[%s204 + $0x720] sm:$0xff] %v661
                %v663 = vld [vmem:[%s203 + $0x3908] sm:$0xff]
                %664 = vst [vmem:[%s204 + $0x728] sm:$0xff] %v663
                %v665 = vld [vmem:[%s203 + $0x3910] sm:$0xff]
                %666 = vst [vmem:[%s204 + $0x730] sm:$0xff] %v665
                %v667 = vld [vmem:[%s203 + $0x39c0] sm:$0xff]
                %668 = vst [vmem:[%s204 + $0x738] sm:$0xff] %v667
                %v669 = vld [vmem:[%s203 + $0x39c8] sm:$0xff]
                %670 = vst [vmem:[%s204 + $0x740] sm:$0xff] %v669
                %v671 = vld [vmem:[%s203 + $0x39d0] sm:$0xff]
                %672 = vst [vmem:[%s204 + $0x748] sm:$0xff] %v671
                %v673 = vld [vmem:[%s203 + $0x3a80] sm:$0xff]
                %674 = vst [vmem:[%s204 + $0x750] sm:$0xff] %v673
                %v675 = vld [vmem:[%s203 + $0x3a88] sm:$0xff]
                %676 = vst [vmem:[%s204 + $0x758] sm:$0xff] %v675
                %v677 = vld [vmem:[%s203 + $0x3a90] sm:$0xff]
                %678 = vst [vmem:[%s204 + $0x760] sm:$0xff] %v677
                %v679 = vld [vmem:[%s203 + $0x3b40] sm:$0xff]
                %680 = vst [vmem:[%s204 + $0x768] sm:$0xff] %v679
                %v681 = vld [vmem:[%s203 + $0x3b48] sm:$0xff]
                %682 = vst [vmem:[%s204 + $0x770] sm:$0xff] %v681
                %v683 = vld [vmem:[%s203 + $0x3b50] sm:$0xff]
                %684 = vst [vmem:[%s204 + $0x778] sm:$0xff] %v683
                %v685 = vld [vmem:[%s203 + $0x3c00] sm:$0xff]
                %686 = vst [vmem:[%s204 + $0x780] sm:$0xff] %v685
                %v687 = vld [vmem:[%s203 + $0x3c08] sm:$0xff]
                %688 = vst [vmem:[%s204 + $0x788] sm:$0xff] %v687
                %v689 = vld [vmem:[%s203 + $0x3c10] sm:$0xff]
                %690 = vst [vmem:[%s204 + $0x790] sm:$0xff] %v689
                %v691 = vld [vmem:[%s203 + $0x3cc0] sm:$0xff]
                %692 = vst [vmem:[%s204 + $0x798] sm:$0xff] %v691
                %v693 = vld [vmem:[%s203 + $0x3cc8] sm:$0xff]
                %694 = vst [vmem:[%s204 + $0x7a0] sm:$0xff] %v693
                %v695 = vld [vmem:[%s203 + $0x3cd0] sm:$0xff]
                %696 = vst [vmem:[%s204 + $0x7a8] sm:$0xff] %v695
                %v697 = vld [vmem:[%s203 + $0x3d80] sm:$0xff]
                %698 = vst [vmem:[%s204 + $0x7b0] sm:$0xff] %v697
                %v699 = vld [vmem:[%s203 + $0x3d88] sm:$0xff]
                %700 = vst [vmem:[%s204 + $0x7b8] sm:$0xff] %v699
                %v701 = vld [vmem:[%s203 + $0x3d90] sm:$0xff]
                %702 = vst [vmem:[%s204 + $0x7c0] sm:$0xff] %v701
                %v703 = vld [vmem:[%s203 + $0x3e40] sm:$0xff]
                %704 = vst [vmem:[%s204 + $0x7c8] sm:$0xff] %v703
                %v705 = vld [vmem:[%s203 + $0x3e48] sm:$0xff]
                %706 = vst [vmem:[%s204 + $0x7d0] sm:$0xff] %v705
                %v707 = vld [vmem:[%s203 + $0x3e50] sm:$0xff]
                %708 = vst [vmem:[%s204 + $0x7d8] sm:$0xff] %v707
                %v709 = vld [vmem:[%s203 + $0x3f00] sm:$0xff]
                %710 = vst [vmem:[%s204 + $0x7e0] sm:$0xff] %v709
                %v711 = vld [vmem:[%s203 + $0x3f08] sm:$0xff]
                %712 = vst [vmem:[%s204 + $0x7e8] sm:$0xff] %v711
                %v713 = vld [vmem:[%s203 + $0x3f10] sm:$0xff]
                %714 = vst [vmem:[%s204 + $0x7f0] sm:$0xff] %v713
                %v715 = vld [vmem:[%s203 + $0x3fc0] sm:$0xff]
                %716 = vst [vmem:[%s204 + $0x7f8] sm:$0xff] %v715
                %v717 = vld [vmem:[%s203 + $0x3fc8] sm:$0xff]
                %718 = vst [vmem:[%s204 + $0x800] sm:$0xff] %v717
                %v719 = vld [vmem:[%s203 + $0x3fd0] sm:$0xff]
                %720 = vst [vmem:[%s204 + $0x808] sm:$0xff] %v719
                %v721 = vld [vmem:[%s203 + $0x4080] sm:$0xff]
                %722 = vst [vmem:[%s204 + $0x810] sm:$0xff] %v721
                %v723 = vld [vmem:[%s203 + $0x4088] sm:$0xff]
                %724 = vst [vmem:[%s204 + $0x818] sm:$0xff] %v723
                %v725 = vld [vmem:[%s203 + $0x4090] sm:$0xff]
                %726 = vst [vmem:[%s204 + $0x820] sm:$0xff] %v725
                %v727 = vld [vmem:[%s203 + $0x4140] sm:$0xff]
                %728 = vst [vmem:[%s204 + $0x828] sm:$0xff] %v727
                %v729 = vld [vmem:[%s203 + $0x4148] sm:$0xff]
                %730 = vst [vmem:[%s204 + $0x830] sm:$0xff] %v729
                %v731 = vld [vmem:[%s203 + $0x4150] sm:$0xff]
                %732 = vst [vmem:[%s204 + $0x838] sm:$0xff] %v731
                %v733 = vld [vmem:[%s203 + $0x4200] sm:$0xff]
                %734 = vst [vmem:[%s204 + $0x840] sm:$0xff] %v733
                %v735 = vld [vmem:[%s203 + $0x4208] sm:$0xff]
                %736 = vst [vmem:[%s204 + $0x848] sm:$0xff] %v735
                %v737 = vld [vmem:[%s203 + $0x4210] sm:$0xff]
                %738 = vst [vmem:[%s204 + $0x850] sm:$0xff] %v737
                %v739 = vld [vmem:[%s203 + $0x42c0] sm:$0xff]
                %740 = vst [vmem:[%s204 + $0x858] sm:$0xff] %v739
                %v741 = vld [vmem:[%s203 + $0x42c8] sm:$0xff]
                %742 = vst [vmem:[%s204 + $0x860] sm:$0xff] %v741
                %v743 = vld [vmem:[%s203 + $0x42d0] sm:$0xff]
                %744 = vst [vmem:[%s204 + $0x868] sm:$0xff] %v743
                %v745 = vld [vmem:[%s203 + $0x4380] sm:$0xff]
                %746 = vst [vmem:[%s204 + $0x870] sm:$0xff] %v745
                %v747 = vld [vmem:[%s203 + $0x4388] sm:$0xff]
                %748 = vst [vmem:[%s204 + $0x878] sm:$0xff] %v747
                %v749 = vld [vmem:[%s203 + $0x4390] sm:$0xff]
                %750 = vst [vmem:[%s204 + $0x880] sm:$0xff] %v749
                %v751 = vld [vmem:[%s203 + $0x4440] sm:$0xff]
                %752 = vst [vmem:[%s204 + $0x888] sm:$0xff] %v751
                %v753 = vld [vmem:[%s203 + $0x4448] sm:$0xff]
                %754 = vst [vmem:[%s204 + $0x890] sm:$0xff] %v753
                %v755 = vld [vmem:[%s203 + $0x4450] sm:$0xff]
                %756 = vst [vmem:[%s204 + $0x898] sm:$0xff] %v755
                %v757 = vld [vmem:[%s203 + $0x4500] sm:$0xff]
                %758 = vst [vmem:[%s204 + $0x8a0] sm:$0xff] %v757
                %v759 = vld [vmem:[%s203 + $0x4508] sm:$0xff]
                %760 = vst [vmem:[%s204 + $0x8a8] sm:$0xff] %v759
                %v761 = vld [vmem:[%s203 + $0x4510] sm:$0xff]
                %762 = vst [vmem:[%s204 + $0x8b0] sm:$0xff] %v761
                %v763 = vld [vmem:[%s203 + $0x45c0] sm:$0xff]
                %764 = vst [vmem:[%s204 + $0x8b8] sm:$0xff] %v763
                %v765 = vld [vmem:[%s203 + $0x45c8] sm:$0xff]
                %766 = vst [vmem:[%s204 + $0x8c0] sm:$0xff] %v765
                %v767 = vld [vmem:[%s203 + $0x45d0] sm:$0xff]
                %768 = vst [vmem:[%s204 + $0x8c8] sm:$0xff] %v767
                %v769 = vld [vmem:[%s203 + $0x4680] sm:$0xff]
                %770 = vst [vmem:[%s204 + $0x8d0] sm:$0xff] %v769
                %v771 = vld [vmem:[%s203 + $0x4688] sm:$0xff]
                %772 = vst [vmem:[%s204 + $0x8d8] sm:$0xff] %v771
                %v773 = vld [vmem:[%s203 + $0x4690] sm:$0xff]
                %774 = vst [vmem:[%s204 + $0x8e0] sm:$0xff] %v773
                %v775 = vld [vmem:[%s203 + $0x4740] sm:$0xff]
                %776 = vst [vmem:[%s204 + $0x8e8] sm:$0xff] %v775
                %v777 = vld [vmem:[%s203 + $0x4748] sm:$0xff]
                %778 = vst [vmem:[%s204 + $0x8f0] sm:$0xff] %v777
                %v779 = vld [vmem:[%s203 + $0x4750] sm:$0xff]
                %780 = vst [vmem:[%s204 + $0x8f8] sm:$0xff] %v779
                %v781 = vld [vmem:[%s203 + $0x4800] sm:$0xff]
                %782 = vst [vmem:[%s204 + $0x900] sm:$0xff] %v781
                %v783 = vld [vmem:[%s203 + $0x4808] sm:$0xff]
                %784 = vst [vmem:[%s204 + $0x908] sm:$0xff] %v783
                %v785 = vld [vmem:[%s203 + $0x4810] sm:$0xff]
                %786 = vst [vmem:[%s204 + $0x910] sm:$0xff] %v785
                %v787 = vld [vmem:[%s203 + $0x48c0] sm:$0xff]
                %788 = vst [vmem:[%s204 + $0x918] sm:$0xff] %v787
                %v789 = vld [vmem:[%s203 + $0x48c8] sm:$0xff]
                %790 = vst [vmem:[%s204 + $0x920] sm:$0xff] %v789
                %v791 = vld [vmem:[%s203 + $0x48d0] sm:$0xff]
                %792 = vst [vmem:[%s204 + $0x928] sm:$0xff] %v791
                %v793 = vld [vmem:[%s203 + $0x4980] sm:$0xff]
                %794 = vst [vmem:[%s204 + $0x930] sm:$0xff] %v793
                %v795 = vld [vmem:[%s203 + $0x4988] sm:$0xff]
                %796 = vst [vmem:[%s204 + $0x938] sm:$0xff] %v795
                %v797 = vld [vmem:[%s203 + $0x4990] sm:$0xff]
                %798 = vst [vmem:[%s204 + $0x940] sm:$0xff] %v797
                %v799 = vld [vmem:[%s203 + $0x4a40] sm:$0xff]
                %800 = vst [vmem:[%s204 + $0x948] sm:$0xff] %v799
                %v801 = vld [vmem:[%s203 + $0x4a48] sm:$0xff]
                %802 = vst [vmem:[%s204 + $0x950] sm:$0xff] %v801
                %v803 = vld [vmem:[%s203 + $0x4a50] sm:$0xff]
                %804 = vst [vmem:[%s204 + $0x958] sm:$0xff] %v803
                %v805 = vld [vmem:[%s203 + $0x4b00] sm:$0xff]
                %806 = vst [vmem:[%s204 + $0x960] sm:$0xff] %v805
                %v807 = vld [vmem:[%s203 + $0x4b08] sm:$0xff]
                %808 = vst [vmem:[%s204 + $0x968] sm:$0xff] %v807
                %v809 = vld [vmem:[%s203 + $0x4b10] sm:$0xff]
                %810 = vst [vmem:[%s204 + $0x970] sm:$0xff] %v809
                %v811 = vld [vmem:[%s203 + $0x4bc0] sm:$0xff]
                %812 = vst [vmem:[%s204 + $0x978] sm:$0xff] %v811
                %v813 = vld [vmem:[%s203 + $0x4bc8] sm:$0xff]
                %814 = vst [vmem:[%s204 + $0x980] sm:$0xff] %v813
                %v815 = vld [vmem:[%s203 + $0x4bd0] sm:$0xff]
                %816 = vst [vmem:[%s204 + $0x988] sm:$0xff] %v815
                %v817 = vld [vmem:[%s203 + $0x4c80] sm:$0xff]
                %818 = vst [vmem:[%s204 + $0x990] sm:$0xff] %v817
                %v819 = vld [vmem:[%s203 + $0x4c88] sm:$0xff]
                %820 = vst [vmem:[%s204 + $0x998] sm:$0xff] %v819
                %v821 = vld [vmem:[%s203 + $0x4c90] sm:$0xff]
                %822 = vst [vmem:[%s204 + $0x9a0] sm:$0xff] %v821
                %v823 = vld [vmem:[%s203 + $0x4d40] sm:$0xff]
                %824 = vst [vmem:[%s204 + $0x9a8] sm:$0xff] %v823
                %v825 = vld [vmem:[%s203 + $0x4d48] sm:$0xff]
                %826 = vst [vmem:[%s204 + $0x9b0] sm:$0xff] %v825
                %v827 = vld [vmem:[%s203 + $0x4d50] sm:$0xff]
                %828 = vst [vmem:[%s204 + $0x9b8] sm:$0xff] %v827
                %v829 = vld [vmem:[%s203 + $0x4e00] sm:$0xff]
                %830 = vst [vmem:[%s204 + $0x9c0] sm:$0xff] %v829
                %v831 = vld [vmem:[%s203 + $0x4e08] sm:$0xff]
                %832 = vst [vmem:[%s204 + $0x9c8] sm:$0xff] %v831
                %v833 = vld [vmem:[%s203 + $0x4e10] sm:$0xff]
                %834 = vst [vmem:[%s204 + $0x9d0] sm:$0xff] %v833
                %v835 = vld [vmem:[%s203 + $0x4ec0] sm:$0xff]
                %836 = vst [vmem:[%s204 + $0x9d8] sm:$0xff] %v835
                %v837 = vld [vmem:[%s203 + $0x4ec8] sm:$0xff]
                %838 = vst [vmem:[%s204 + $0x9e0] sm:$0xff] %v837
                %v839 = vld [vmem:[%s203 + $0x4ed0] sm:$0xff]
                %840 = vst [vmem:[%s204 + $0x9e8] sm:$0xff] %v839
                %v841 = vld [vmem:[%s203 + $0x4f80] sm:$0xff]
                %842 = vst [vmem:[%s204 + $0x9f0] sm:$0xff] %v841
                %v843 = vld [vmem:[%s203 + $0x4f88] sm:$0xff]
                %844 = vst [vmem:[%s204 + $0x9f8] sm:$0xff] %v843
                %v845 = vld [vmem:[%s203 + $0x4f90] sm:$0xff]
                %846 = vst [vmem:[%s204 + $0xa00] sm:$0xff] %v845
                %v847 = vld [vmem:[%s203 + $0x5040] sm:$0xff]
                %848 = vst [vmem:[%s204 + $0xa08] sm:$0xff] %v847
                %v849 = vld [vmem:[%s203 + $0x5048] sm:$0xff]
                %850 = vst [vmem:[%s204 + $0xa10] sm:$0xff] %v849
                %v851 = vld [vmem:[%s203 + $0x5050] sm:$0xff]
                %852 = vst [vmem:[%s204 + $0xa18] sm:$0xff] %v851
                %v853 = vld [vmem:[%s203 + $0x5100] sm:$0xff]
                %854 = vst [vmem:[%s204 + $0xa20] sm:$0xff] %v853
                %v855 = vld [vmem:[%s203 + $0x5108] sm:$0xff]
                %856 = vst [vmem:[%s204 + $0xa28] sm:$0xff] %v855
                %v857 = vld [vmem:[%s203 + $0x5110] sm:$0xff]
                %858 = vst [vmem:[%s204 + $0xa30] sm:$0xff] %v857
                %v859 = vld [vmem:[%s203 + $0x51c0] sm:$0xff]
                %860 = vst [vmem:[%s204 + $0xa38] sm:$0xff] %v859
                %v861 = vld [vmem:[%s203 + $0x51c8] sm:$0xff]
                %862 = vst [vmem:[%s204 + $0xa40] sm:$0xff] %v861
                %v863 = vld [vmem:[%s203 + $0x51d0] sm:$0xff]
                %864 = vst [vmem:[%s204 + $0xa48] sm:$0xff] %v863
                %v865 = vld [vmem:[%s203 + $0x5280] sm:$0xff]
                %866 = vst [vmem:[%s204 + $0xa50] sm:$0xff] %v865
                %v867 = vld [vmem:[%s203 + $0x5288] sm:$0xff]
                %868 = vst [vmem:[%s204 + $0xa58] sm:$0xff] %v867
                %v869 = vld [vmem:[%s203 + $0x5290] sm:$0xff]
                %870 = vst [vmem:[%s204 + $0xa60] sm:$0xff] %v869
                %v871 = vld [vmem:[%s203 + $0x5340] sm:$0xff]
                %872 = vst [vmem:[%s204 + $0xa68] sm:$0xff] %v871
                %v873 = vld [vmem:[%s203 + $0x5348] sm:$0xff]
                %874 = vst [vmem:[%s204 + $0xa70] sm:$0xff] %v873
                %v875 = vld [vmem:[%s203 + $0x5350] sm:$0xff]
                %876 = vst [vmem:[%s204 + $0xa78] sm:$0xff] %v875
                %v877 = vld [vmem:[%s203 + $0x5400] sm:$0xff]
                %878 = vst [vmem:[%s204 + $0xa80] sm:$0xff] %v877
                %v879 = vld [vmem:[%s203 + $0x5408] sm:$0xff]
                %880 = vst [vmem:[%s204 + $0xa88] sm:$0xff] %v879
                %v881 = vld [vmem:[%s203 + $0x5410] sm:$0xff]
                %882 = vst [vmem:[%s204 + $0xa90] sm:$0xff] %v881
                %v883 = vld [vmem:[%s203 + $0x54c0] sm:$0xff]
                %884 = vst [vmem:[%s204 + $0xa98] sm:$0xff] %v883
                %v885 = vld [vmem:[%s203 + $0x54c8] sm:$0xff]
                %886 = vst [vmem:[%s204 + $0xaa0] sm:$0xff] %v885
                %v887 = vld [vmem:[%s203 + $0x54d0] sm:$0xff]
                %888 = vst [vmem:[%s204 + $0xaa8] sm:$0xff] %v887
                %v889 = vld [vmem:[%s203 + $0x5580] sm:$0xff]
                %890 = vst [vmem:[%s204 + $0xab0] sm:$0xff] %v889
                %v891 = vld [vmem:[%s203 + $0x5588] sm:$0xff]
                %892 = vst [vmem:[%s204 + $0xab8] sm:$0xff] %v891
                %v893 = vld [vmem:[%s203 + $0x5590] sm:$0xff]
                %894 = vst [vmem:[%s204 + $0xac0] sm:$0xff] %v893
                %v895 = vld [vmem:[%s203 + $0x5640] sm:$0xff]
                %896 = vst [vmem:[%s204 + $0xac8] sm:$0xff] %v895
                %v897 = vld [vmem:[%s203 + $0x5648] sm:$0xff]
                %898 = vst [vmem:[%s204 + $0xad0] sm:$0xff] %v897
                %v899 = vld [vmem:[%s203 + $0x5650] sm:$0xff]
                %900 = vst [vmem:[%s204 + $0xad8] sm:$0xff] %v899
                %v901 = vld [vmem:[%s203 + $0x5700] sm:$0xff]
                %902 = vst [vmem:[%s204 + $0xae0] sm:$0xff] %v901
                %v903 = vld [vmem:[%s203 + $0x5708] sm:$0xff]
                %904 = vst [vmem:[%s204 + $0xae8] sm:$0xff] %v903
                %v905 = vld [vmem:[%s203 + $0x5710] sm:$0xff]
                %906 = vst [vmem:[%s204 + $0xaf0] sm:$0xff] %v905
                %v907 = vld [vmem:[%s203 + $0x57c0] sm:$0xff]
                %908 = vst [vmem:[%s204 + $0xaf8] sm:$0xff] %v907
                %v909 = vld [vmem:[%s203 + $0x57c8] sm:$0xff]
                %910 = vst [vmem:[%s204 + $0xb00] sm:$0xff] %v909
                %v911 = vld [vmem:[%s203 + $0x57d0] sm:$0xff]
                %912 = vst [vmem:[%s204 + $0xb08] sm:$0xff] %v911
                %v913 = vld [vmem:[%s203 + $0x5880] sm:$0xff]
                %914 = vst [vmem:[%s204 + $0xb10] sm:$0xff] %v913
                %v915 = vld [vmem:[%s203 + $0x5888] sm:$0xff]
                %916 = vst [vmem:[%s204 + $0xb18] sm:$0xff] %v915
                %v917 = vld [vmem:[%s203 + $0x5890] sm:$0xff]
                %918 = vst [vmem:[%s204 + $0xb20] sm:$0xff] %v917
                %v919 = vld [vmem:[%s203 + $0x5940] sm:$0xff]
                %920 = vst [vmem:[%s204 + $0xb28] sm:$0xff] %v919
                %v921 = vld [vmem:[%s203 + $0x5948] sm:$0xff]
                %922 = vst [vmem:[%s204 + $0xb30] sm:$0xff] %v921
                %v923 = vld [vmem:[%s203 + $0x5950] sm:$0xff]
                %924 = vst [vmem:[%s204 + $0xb38] sm:$0xff] %v923
                %v925 = vld [vmem:[%s203 + $0x5a00] sm:$0xff]
                %926 = vst [vmem:[%s204 + $0xb40] sm:$0xff] %v925
                %v927 = vld [vmem:[%s203 + $0x5a08] sm:$0xff]
                %928 = vst [vmem:[%s204 + $0xb48] sm:$0xff] %v927
                %v929 = vld [vmem:[%s203 + $0x5a10] sm:$0xff]
                %930 = vst [vmem:[%s204 + $0xb50] sm:$0xff] %v929
                %v931 = vld [vmem:[%s203 + $0x5ac0] sm:$0xff]
                %932 = vst [vmem:[%s204 + $0xb58] sm:$0xff] %v931
                %v933 = vld [vmem:[%s203 + $0x5ac8] sm:$0xff]
                %934 = vst [vmem:[%s204 + $0xb60] sm:$0xff] %v933
                %v935 = vld [vmem:[%s203 + $0x5ad0] sm:$0xff]
                %936 = vst [vmem:[%s204 + $0xb68] sm:$0xff] %v935
                %v937 = vld [vmem:[%s203 + $0x5b80] sm:$0xff]
                %938 = vst [vmem:[%s204 + $0xb70] sm:$0xff] %v937
                %v939 = vld [vmem:[%s203 + $0x5b88] sm:$0xff]
                %940 = vst [vmem:[%s204 + $0xb78] sm:$0xff] %v939
                %v941 = vld [vmem:[%s203 + $0x5b90] sm:$0xff]
                %942 = vst [vmem:[%s204 + $0xb80] sm:$0xff] %v941
                %v943 = vld [vmem:[%s203 + $0x5c40] sm:$0xff]
                %944 = vst [vmem:[%s204 + $0xb88] sm:$0xff] %v943
                %v945 = vld [vmem:[%s203 + $0x5c48] sm:$0xff]
                %946 = vst [vmem:[%s204 + $0xb90] sm:$0xff] %v945
                %v947 = vld [vmem:[%s203 + $0x5c50] sm:$0xff]
                %948 = vst [vmem:[%s204 + $0xb98] sm:$0xff] %v947
                %v949 = vld [vmem:[%s203 + $0x5d00] sm:$0xff]
                %950 = vst [vmem:[%s204 + $0xba0] sm:$0xff] %v949
                %v951 = vld [vmem:[%s203 + $0x5d08] sm:$0xff]
                %952 = vst [vmem:[%s204 + $0xba8] sm:$0xff] %v951
                %v953 = vld [vmem:[%s203 + $0x5d10] sm:$0xff]
                %954 = vst [vmem:[%s204 + $0xbb0] sm:$0xff] %v953
                %v955 = vld [vmem:[%s203 + $0x5dc0] sm:$0xff]
                %956 = vst [vmem:[%s204 + $0xbb8] sm:$0xff] %v955
                %v957 = vld [vmem:[%s203 + $0x5dc8] sm:$0xff]
                %958 = vst [vmem:[%s204 + $0xbc0] sm:$0xff] %v957
                %v959 = vld [vmem:[%s203 + $0x5dd0] sm:$0xff]
                %960 = vst [vmem:[%s204 + $0xbc8] sm:$0xff] %v959
                %v961 = vld [vmem:[%s203 + $0x5e80] sm:$0xff]
                %962 = vst [vmem:[%s204 + $0xbd0] sm:$0xff] %v961
                %v963 = vld [vmem:[%s203 + $0x5e88] sm:$0xff]
                %964 = vst [vmem:[%s204 + $0xbd8] sm:$0xff] %v963
                %v965 = vld [vmem:[%s203 + $0x5e90] sm:$0xff]
                %966 = vst [vmem:[%s204 + $0xbe0] sm:$0xff] %v965
                %v967 = vld [vmem:[%s203 + $0x5f40] sm:$0xff]
                %968 = vst [vmem:[%s204 + $0xbe8] sm:$0xff] %v967
                %v969 = vld [vmem:[%s203 + $0x5f48] sm:$0xff]
                %970 = vst [vmem:[%s204 + $0xbf0] sm:$0xff] %v969
                %v971 = vld [vmem:[%s203 + $0x5f50] sm:$0xff]
                %972 = vst [vmem:[%s204 + $0xbf8] sm:$0xff] %v971
                %v973 = vld [vmem:[%s203 + $0x6000] sm:$0xff]
                %974 = vst [vmem:[%s204 + $0xc00] sm:$0xff] %v973
                %v975 = vld [vmem:[%s203 + $0x6008] sm:$0xff]
                %976 = vst [vmem:[%s204 + $0xc08] sm:$0xff] %v975
                %v977 = vld [vmem:[%s203 + $0x6010] sm:$0xff]
                %978 = vst [vmem:[%s204 + $0xc10] sm:$0xff] %v977
                %v979 = vld [vmem:[%s203 + $0x60c0] sm:$0xff]
                %980 = vst [vmem:[%s204 + $0xc18] sm:$0xff] %v979
                %v981 = vld [vmem:[%s203 + $0x60c8] sm:$0xff]
                %982 = vst [vmem:[%s204 + $0xc20] sm:$0xff] %v981
                %v983 = vld [vmem:[%s203 + $0x60d0] sm:$0xff]
                %984 = vst [vmem:[%s204 + $0xc28] sm:$0xff] %v983
                %v985 = vld [vmem:[%s203 + $0x6180] sm:$0xff]
                %986 = vst [vmem:[%s204 + $0xc30] sm:$0xff] %v985
                %v987 = vld [vmem:[%s203 + $0x6188] sm:$0xff]
                %988 = vst [vmem:[%s204 + $0xc38] sm:$0xff] %v987
                %v989 = vld [vmem:[%s203 + $0x6190] sm:$0xff]
                %990 = vst [vmem:[%s204 + $0xc40] sm:$0xff] %v989
                %v991 = vld [vmem:[%s203 + $0x6240] sm:$0xff]
                %992 = vst [vmem:[%s204 + $0xc48] sm:$0xff] %v991
                %v993 = vld [vmem:[%s203 + $0x6248] sm:$0xff]
                %994 = vst [vmem:[%s204 + $0xc50] sm:$0xff] %v993
                %v995 = vld [vmem:[%s203 + $0x6250] sm:$0xff]
                %996 = vst [vmem:[%s204 + $0xc58] sm:$0xff] %v995
                %v997 = vld [vmem:[%s203 + $0x6300] sm:$0xff]
                %998 = vst [vmem:[%s204 + $0xc60] sm:$0xff] %v997
                %v999 = vld [vmem:[%s203 + $0x6308] sm:$0xff]
                %1000 = vst [vmem:[%s204 + $0xc68] sm:$0xff] %v999
                %v1001 = vld [vmem:[%s203 + $0x6310] sm:$0xff]
                %1002 = vst [vmem:[%s204 + $0xc70] sm:$0xff] %v1001
                %v1003 = vld [vmem:[%s203 + $0x63c0] sm:$0xff]
                %1004 = vst [vmem:[%s204 + $0xc78] sm:$0xff] %v1003
                %v1005 = vld [vmem:[%s203 + $0x63c8] sm:$0xff]
                %1006 = vst [vmem:[%s204 + $0xc80] sm:$0xff] %v1005
                %v1007 = vld [vmem:[%s203 + $0x63d0] sm:$0xff]
                %1008 = vst [vmem:[%s204 + $0xc88] sm:$0xff] %v1007
                %v1009 = vld [vmem:[%s203 + $0x6480] sm:$0xff]
                %1010 = vst [vmem:[%s204 + $0xc90] sm:$0xff] %v1009
                %v1011 = vld [vmem:[%s203 + $0x6488] sm:$0xff]
                %1012 = vst [vmem:[%s204 + $0xc98] sm:$0xff] %v1011
                %v1013 = vld [vmem:[%s203 + $0x6490] sm:$0xff]
                %1014 = vst [vmem:[%s204 + $0xca0] sm:$0xff] %v1013
                %v1015 = vld [vmem:[%s203 + $0x6540] sm:$0xff]
                %1016 = vst [vmem:[%s204 + $0xca8] sm:$0xff] %v1015
                %v1017 = vld [vmem:[%s203 + $0x6548] sm:$0xff]
                %1018 = vst [vmem:[%s204 + $0xcb0] sm:$0xff] %v1017
                %v1019 = vld [vmem:[%s203 + $0x6550] sm:$0xff]
                %1020 = vst [vmem:[%s204 + $0xcb8] sm:$0xff] %v1019
                %v1021 = vld [vmem:[%s203 + $0x6600] sm:$0xff]
                %1022 = vst [vmem:[%s204 + $0xcc0] sm:$0xff] %v1021
                %v1023 = vld [vmem:[%s203 + $0x6608] sm:$0xff]
                %1024 = vst [vmem:[%s204 + $0xcc8] sm:$0xff] %v1023
                %v1025 = vld [vmem:[%s203 + $0x6610] sm:$0xff]
                %1026 = vst [vmem:[%s204 + $0xcd0] sm:$0xff] %v1025
                %v1027 = vld [vmem:[%s203 + $0x66c0] sm:$0xff]
                %1028 = vst [vmem:[%s204 + $0xcd8] sm:$0xff] %v1027
                %v1029 = vld [vmem:[%s203 + $0x66c8] sm:$0xff]
                %1030 = vst [vmem:[%s204 + $0xce0] sm:$0xff] %v1029
                %v1031 = vld [vmem:[%s203 + $0x66d0] sm:$0xff]
                %1032 = vst [vmem:[%s204 + $0xce8] sm:$0xff] %v1031
                %v1033 = vld [vmem:[%s203 + $0x6780] sm:$0xff]
                %1034 = vst [vmem:[%s204 + $0xcf0] sm:$0xff] %v1033
                %v1035 = vld [vmem:[%s203 + $0x6788] sm:$0xff]
                %1036 = vst [vmem:[%s204 + $0xcf8] sm:$0xff] %v1035
                %v1037 = vld [vmem:[%s203 + $0x6790] sm:$0xff]
                %1038 = vst [vmem:[%s204 + $0xd00] sm:$0xff] %v1037
                %v1039 = vld [vmem:[%s203 + $0x6840] sm:$0xff]
                %1040 = vst [vmem:[%s204 + $0xd08] sm:$0xff] %v1039
                %v1041 = vld [vmem:[%s203 + $0x6848] sm:$0xff]
                %1042 = vst [vmem:[%s204 + $0xd10] sm:$0xff] %v1041
                %v1043 = vld [vmem:[%s203 + $0x6850] sm:$0xff]
                %1044 = vst [vmem:[%s204 + $0xd18] sm:$0xff] %v1043
                %v1045 = vld [vmem:[%s203 + $0x6900] sm:$0xff]
                %1046 = vst [vmem:[%s204 + $0xd20] sm:$0xff] %v1045
                %v1047 = vld [vmem:[%s203 + $0x6908] sm:$0xff]
                %1048 = vst [vmem:[%s204 + $0xd28] sm:$0xff] %v1047
                %v1049 = vld [vmem:[%s203 + $0x6910] sm:$0xff]
                %1050 = vst [vmem:[%s204 + $0xd30] sm:$0xff] %v1049
                %v1051 = vld [vmem:[%s203 + $0x69c0] sm:$0xff]
                %1052 = vst [vmem:[%s204 + $0xd38] sm:$0xff] %v1051
                %v1053 = vld [vmem:[%s203 + $0x69c8] sm:$0xff]
                %1054 = vst [vmem:[%s204 + $0xd40] sm:$0xff] %v1053
                %v1055 = vld [vmem:[%s203 + $0x69d0] sm:$0xff]
                %1056 = vst [vmem:[%s204 + $0xd48] sm:$0xff] %v1055
                %v1057 = vld [vmem:[%s203 + $0x6a80] sm:$0xff]
                %1058 = vst [vmem:[%s204 + $0xd50] sm:$0xff] %v1057
                %v1059 = vld [vmem:[%s203 + $0x6a88] sm:$0xff]
                %1060 = vst [vmem:[%s204 + $0xd58] sm:$0xff] %v1059
                %v1061 = vld [vmem:[%s203 + $0x6a90] sm:$0xff]
                %1062 = vst [vmem:[%s204 + $0xd60] sm:$0xff] %v1061
                %v1063 = vld [vmem:[%s203 + $0x6b40] sm:$0xff]
                %1064 = vst [vmem:[%s204 + $0xd68] sm:$0xff] %v1063
                %v1065 = vld [vmem:[%s203 + $0x6b48] sm:$0xff]
                %1066 = vst [vmem:[%s204 + $0xd70] sm:$0xff] %v1065
                %v1067 = vld [vmem:[%s203 + $0x6b50] sm:$0xff]
                %1068 = vst [vmem:[%s204 + $0xd78] sm:$0xff] %v1067
                %v1069 = vld [vmem:[%s203 + $0x6c00] sm:$0xff]
                %1070 = vst [vmem:[%s204 + $0xd80] sm:$0xff] %v1069
                %v1071 = vld [vmem:[%s203 + $0x6c08] sm:$0xff]
                %1072 = vst [vmem:[%s204 + $0xd88] sm:$0xff] %v1071
                %v1073 = vld [vmem:[%s203 + $0x6c10] sm:$0xff]
                %1074 = vst [vmem:[%s204 + $0xd90] sm:$0xff] %v1073
                %v1075 = vld [vmem:[%s203 + $0x6cc0] sm:$0xff]
                %1076 = vst [vmem:[%s204 + $0xd98] sm:$0xff] %v1075
                %v1077 = vld [vmem:[%s203 + $0x6cc8] sm:$0xff]
                %1078 = vst [vmem:[%s204 + $0xda0] sm:$0xff] %v1077
                %v1079 = vld [vmem:[%s203 + $0x6cd0] sm:$0xff]
                %1080 = vst [vmem:[%s204 + $0xda8] sm:$0xff] %v1079
                %v1081 = vld [vmem:[%s203 + $0x6d80] sm:$0xff]
                %1082 = vst [vmem:[%s204 + $0xdb0] sm:$0xff] %v1081
                %v1083 = vld [vmem:[%s203 + $0x6d88] sm:$0xff]
                %1084 = vst [vmem:[%s204 + $0xdb8] sm:$0xff] %v1083
                %v1085 = vld [vmem:[%s203 + $0x6d90] sm:$0xff]
                %1086 = vst [vmem:[%s204 + $0xdc0] sm:$0xff] %v1085
                %v1087 = vld [vmem:[%s203 + $0x6e40] sm:$0xff]
                %1088 = vst [vmem:[%s204 + $0xdc8] sm:$0xff] %v1087
                %v1089 = vld [vmem:[%s203 + $0x6e48] sm:$0xff]
                %1090 = vst [vmem:[%s204 + $0xdd0] sm:$0xff] %v1089
                %v1091 = vld [vmem:[%s203 + $0x6e50] sm:$0xff]
                %1092 = vst [vmem:[%s204 + $0xdd8] sm:$0xff] %v1091
                %v1093 = vld [vmem:[%s203 + $0x6f00] sm:$0xff]
                %1094 = vst [vmem:[%s204 + $0xde0] sm:$0xff] %v1093
                %v1095 = vld [vmem:[%s203 + $0x6f08] sm:$0xff]
                %1096 = vst [vmem:[%s204 + $0xde8] sm:$0xff] %v1095
                %v1097 = vld [vmem:[%s203 + $0x6f10] sm:$0xff]
                %1098 = vst [vmem:[%s204 + $0xdf0] sm:$0xff] %v1097
                %v1099 = vld [vmem:[%s203 + $0x6fc0] sm:$0xff]
                %1100 = vst [vmem:[%s204 + $0xdf8] sm:$0xff] %v1099
                %v1101 = vld [vmem:[%s203 + $0x6fc8] sm:$0xff]
                %1102 = vst [vmem:[%s204 + $0xe00] sm:$0xff] %v1101
                %v1103 = vld [vmem:[%s203 + $0x6fd0] sm:$0xff]
                %1104 = vst [vmem:[%s204 + $0xe08] sm:$0xff] %v1103
                %v1105 = vld [vmem:[%s203 + $0x7080] sm:$0xff]
                %1106 = vst [vmem:[%s204 + $0xe10] sm:$0xff] %v1105
                %v1107 = vld [vmem:[%s203 + $0x7088] sm:$0xff]
                %1108 = vst [vmem:[%s204 + $0xe18] sm:$0xff] %v1107
                %v1109 = vld [vmem:[%s203 + $0x7090] sm:$0xff]
                %1110 = vst [vmem:[%s204 + $0xe20] sm:$0xff] %v1109
                %v1111 = vld [vmem:[%s203 + $0x7140] sm:$0xff]
                %1112 = vst [vmem:[%s204 + $0xe28] sm:$0xff] %v1111
                %v1113 = vld [vmem:[%s203 + $0x7148] sm:$0xff]
                %1114 = vst [vmem:[%s204 + $0xe30] sm:$0xff] %v1113
                %v1115 = vld [vmem:[%s203 + $0x7150] sm:$0xff]
                %1116 = vst [vmem:[%s204 + $0xe38] sm:$0xff] %v1115
                %v1117 = vld [vmem:[%s203 + $0x7200] sm:$0xff]
                %1118 = vst [vmem:[%s204 + $0xe40] sm:$0xff] %v1117
                %v1119 = vld [vmem:[%s203 + $0x7208] sm:$0xff]
                %1120 = vst [vmem:[%s204 + $0xe48] sm:$0xff] %v1119
                %v1121 = vld [vmem:[%s203 + $0x7210] sm:$0xff]
                %1122 = vst [vmem:[%s204 + $0xe50] sm:$0xff] %v1121
                %v1123 = vld [vmem:[%s203 + $0x72c0] sm:$0xff]
                %1124 = vst [vmem:[%s204 + $0xe58] sm:$0xff] %v1123
                %v1125 = vld [vmem:[%s203 + $0x72c8] sm:$0xff]
                %1126 = vst [vmem:[%s204 + $0xe60] sm:$0xff] %v1125
                %v1127 = vld [vmem:[%s203 + $0x72d0] sm:$0xff]
                %1128 = vst [vmem:[%s204 + $0xe68] sm:$0xff] %v1127
                %v1129 = vld [vmem:[%s203 + $0x7380] sm:$0xff]
                %1130 = vst [vmem:[%s204 + $0xe70] sm:$0xff] %v1129
                %v1131 = vld [vmem:[%s203 + $0x7388] sm:$0xff]
                %1132 = vst [vmem:[%s204 + $0xe78] sm:$0xff] %v1131
                %v1133 = vld [vmem:[%s203 + $0x7390] sm:$0xff]
                %1134 = vst [vmem:[%s204 + $0xe80] sm:$0xff] %v1133
                %v1135 = vld [vmem:[%s203 + $0x7440] sm:$0xff]
                %1136 = vst [vmem:[%s204 + $0xe88] sm:$0xff] %v1135
                %v1137 = vld [vmem:[%s203 + $0x7448] sm:$0xff]
                %1138 = vst [vmem:[%s204 + $0xe90] sm:$0xff] %v1137
                %v1139 = vld [vmem:[%s203 + $0x7450] sm:$0xff]
                %1140 = vst [vmem:[%s204 + $0xe98] sm:$0xff] %v1139
                %v1141 = vld [vmem:[%s203 + $0x7500] sm:$0xff]
                %1142 = vst [vmem:[%s204 + $0xea0] sm:$0xff] %v1141
                %v1143 = vld [vmem:[%s203 + $0x7508] sm:$0xff]
                %1144 = vst [vmem:[%s204 + $0xea8] sm:$0xff] %v1143
                %v1145 = vld [vmem:[%s203 + $0x7510] sm:$0xff]
                %1146 = vst [vmem:[%s204 + $0xeb0] sm:$0xff] %v1145
                %v1147 = vld [vmem:[%s203 + $0x75c0] sm:$0xff]
                %1148 = vst [vmem:[%s204 + $0xeb8] sm:$0xff] %v1147
                %v1149 = vld [vmem:[%s203 + $0x75c8] sm:$0xff]
                %1150 = vst [vmem:[%s204 + $0xec0] sm:$0xff] %v1149
                %v1151 = vld [vmem:[%s203 + $0x75d0] sm:$0xff]
                %1152 = vst [vmem:[%s204 + $0xec8] sm:$0xff] %v1151
                %v1153 = vld [vmem:[%s203 + $0x7680] sm:$0xff]
                %1154 = vst [vmem:[%s204 + $0xed0] sm:$0xff] %v1153
                %v1155 = vld [vmem:[%s203 + $0x7688] sm:$0xff]
                %1156 = vst [vmem:[%s204 + $0xed8] sm:$0xff] %v1155
                %v1157 = vld [vmem:[%s203 + $0x7690] sm:$0xff]
                %1158 = vst [vmem:[%s204 + $0xee0] sm:$0xff] %v1157
                %v1159 = vld [vmem:[%s203 + $0x7740] sm:$0xff]
                %1160 = vst [vmem:[%s204 + $0xee8] sm:$0xff] %v1159
                %v1161 = vld [vmem:[%s203 + $0x7748] sm:$0xff]
                %1162 = vst [vmem:[%s204 + $0xef0] sm:$0xff] %v1161
                %v1163 = vld [vmem:[%s203 + $0x7750] sm:$0xff]
                %1164 = vst [vmem:[%s204 + $0xef8] sm:$0xff] %v1163
                %v1165 = vld [vmem:[%s203 + $0x7800] sm:$0xff]
                %1166 = vst [vmem:[%s204 + $0xf00] sm:$0xff] %v1165
                %v1167 = vld [vmem:[%s203 + $0x7808] sm:$0xff]
                %1168 = vst [vmem:[%s204 + $0xf08] sm:$0xff] %v1167
                %v1169 = vld [vmem:[%s203 + $0x7810] sm:$0xff]
                %1170 = vst [vmem:[%s204 + $0xf10] sm:$0xff] %v1169
                %v1171 = vld [vmem:[%s203 + $0x78c0] sm:$0xff]
                %1172 = vst [vmem:[%s204 + $0xf18] sm:$0xff] %v1171
                %v1173 = vld [vmem:[%s203 + $0x78c8] sm:$0xff]
                %1174 = vst [vmem:[%s204 + $0xf20] sm:$0xff] %v1173
                %v1175 = vld [vmem:[%s203 + $0x78d0] sm:$0xff]
                %1176 = vst [vmem:[%s204 + $0xf28] sm:$0xff] %v1175
                %v1177 = vld [vmem:[%s203 + $0x7980] sm:$0xff]
                %1178 = vst [vmem:[%s204 + $0xf30] sm:$0xff] %v1177
                %v1179 = vld [vmem:[%s203 + $0x7988] sm:$0xff]
                %1180 = vst [vmem:[%s204 + $0xf38] sm:$0xff] %v1179
                %v1181 = vld [vmem:[%s203 + $0x7990] sm:$0xff]
                %1182 = vst [vmem:[%s204 + $0xf40] sm:$0xff] %v1181
                %v1183 = vld [vmem:[%s203 + $0x7a40] sm:$0xff]
                %1184 = vst [vmem:[%s204 + $0xf48] sm:$0xff] %v1183
                %v1185 = vld [vmem:[%s203 + $0x7a48] sm:$0xff]
                %1186 = vst [vmem:[%s204 + $0xf50] sm:$0xff] %v1185
                %v1187 = vld [vmem:[%s203 + $0x7a50] sm:$0xff]
                %1188 = vst [vmem:[%s204 + $0xf58] sm:$0xff] %v1187
                %v1189 = vld [vmem:[%s203 + $0x7b00] sm:$0xff]
                %1190 = vst [vmem:[%s204 + $0xf60] sm:$0xff] %v1189
                %v1191 = vld [vmem:[%s203 + $0x7b08] sm:$0xff]
                %1192 = vst [vmem:[%s204 + $0xf68] sm:$0xff] %v1191
                %v1193 = vld [vmem:[%s203 + $0x7b10] sm:$0xff]
                %1194 = vst [vmem:[%s204 + $0xf70] sm:$0xff] %v1193
                %v1195 = vld [vmem:[%s203 + $0x7bc0] sm:$0xff]
                %1196 = vst [vmem:[%s204 + $0xf78] sm:$0xff] %v1195
                %v1197 = vld [vmem:[%s203 + $0x7bc8] sm:$0xff]
                %1198 = vst [vmem:[%s204 + $0xf80] sm:$0xff] %v1197
                %v1199 = vld [vmem:[%s203 + $0x7bd0] sm:$0xff]
                %1200 = vst [vmem:[%s204 + $0xf88] sm:$0xff] %v1199
                %v1201 = vld [vmem:[%s203 + $0x7c80] sm:$0xff]
                %1202 = vst [vmem:[%s204 + $0xf90] sm:$0xff] %v1201
                %v1203 = vld [vmem:[%s203 + $0x7c88] sm:$0xff]
                %1204 = vst [vmem:[%s204 + $0xf98] sm:$0xff] %v1203
                %v1205 = vld [vmem:[%s203 + $0x7c90] sm:$0xff]
                %1206 = vst [vmem:[%s204 + $0xfa0] sm:$0xff] %v1205
                %v1207 = vld [vmem:[%s203 + $0x7d40] sm:$0xff]
                %1208 = vst [vmem:[%s204 + $0xfa8] sm:$0xff] %v1207
                %v1209 = vld [vmem:[%s203 + $0x7d48] sm:$0xff]
                %1210 = vst [vmem:[%s204 + $0xfb0] sm:$0xff] %v1209
                %v1211 = vld [vmem:[%s203 + $0x7d50] sm:$0xff]
                %1212 = vst [vmem:[%s204 + $0xfb8] sm:$0xff] %v1211
                %v1213 = vld [vmem:[%s203 + $0x7e00] sm:$0xff]
                %1214 = vst [vmem:[%s204 + $0xfc0] sm:$0xff] %v1213
                %v1215 = vld [vmem:[%s203 + $0x7e08] sm:$0xff]
                %1216 = vst [vmem:[%s204 + $0xfc8] sm:$0xff] %v1215
                %v1217 = vld [vmem:[%s203 + $0x7e10] sm:$0xff]
                %1218 = vst [vmem:[%s204 + $0xfd0] sm:$0xff] %v1217
                %v1219 = vld [vmem:[%s203 + $0x7ec0] sm:$0xff]
                %1220 = vst [vmem:[%s204 + $0xfd8] sm:$0xff] %v1219
                %v1221 = vld [vmem:[%s203 + $0x7ec8] sm:$0xff]
                %1222 = vst [vmem:[%s204 + $0xfe0] sm:$0xff] %v1221
                %v1223 = vld [vmem:[%s203 + $0x7ed0] sm:$0xff]
                %1224 = vst [vmem:[%s204 + $0xfe8] sm:$0xff] %v1223
                %v1225 = vld [vmem:[%s203 + $0x7f80] sm:$0xff]
                %1226 = vst [vmem:[%s204 + $0xff0] sm:$0xff] %v1225
                %v1227 = vld [vmem:[%s203 + $0x7f88] sm:$0xff]
                %1228 = vst [vmem:[%s204 + $0xff8] sm:$0xff] %v1227
                %v1229 = vld [vmem:[%s203 + $0x7f90] sm:$0xff]
                %1230 = vst [vmem:[%s204 + $0x1000] sm:$0xff] %v1229
                %v1231 = vld [vmem:[%s203 + $0x8040] sm:$0xff]
                %1232 = vst [vmem:[%s204 + $0x1008] sm:$0xff] %v1231
                %v1233 = vld [vmem:[%s203 + $0x8048] sm:$0xff]
                %1234 = vst [vmem:[%s204 + $0x1010] sm:$0xff] %v1233
                %v1235 = vld [vmem:[%s203 + $0x8050] sm:$0xff]
                %1236 = vst [vmem:[%s204 + $0x1018] sm:$0xff] %v1235
                %v1237 = vld [vmem:[%s203 + $0x8100] sm:$0xff]
                %1238 = vst [vmem:[%s204 + $0x1020] sm:$0xff] %v1237
                %v1239 = vld [vmem:[%s203 + $0x8108] sm:$0xff]
                %1240 = vst [vmem:[%s204 + $0x1028] sm:$0xff] %v1239
                %v1241 = vld [vmem:[%s203 + $0x8110] sm:$0xff]
                %1242 = vst [vmem:[%s204 + $0x1030] sm:$0xff] %v1241
                %v1243 = vld [vmem:[%s203 + $0x81c0] sm:$0xff]
                %1244 = vst [vmem:[%s204 + $0x1038] sm:$0xff] %v1243
                %v1245 = vld [vmem:[%s203 + $0x81c8] sm:$0xff]
                %1246 = vst [vmem:[%s204 + $0x1040] sm:$0xff] %v1245
                %v1247 = vld [vmem:[%s203 + $0x81d0] sm:$0xff]
                %1248 = vst [vmem:[%s204 + $0x1048] sm:$0xff] %v1247
                %v1249 = vld [vmem:[%s203 + $0x8280] sm:$0xff]
                %1250 = vst [vmem:[%s204 + $0x1050] sm:$0xff] %v1249
                %v1251 = vld [vmem:[%s203 + $0x8288] sm:$0xff]
                %1252 = vst [vmem:[%s204 + $0x1058] sm:$0xff] %v1251
                %v1253 = vld [vmem:[%s203 + $0x8290] sm:$0xff]
                %1254 = vst [vmem:[%s204 + $0x1060] sm:$0xff] %v1253
                %v1255 = vld [vmem:[%s203 + $0x8340] sm:$0xff]
                %1256 = vst [vmem:[%s204 + $0x1068] sm:$0xff] %v1255
                %v1257 = vld [vmem:[%s203 + $0x8348] sm:$0xff]
                %1258 = vst [vmem:[%s204 + $0x1070] sm:$0xff] %v1257
                %v1259 = vld [vmem:[%s203 + $0x8350] sm:$0xff]
                %1260 = vst [vmem:[%s204 + $0x1078] sm:$0xff] %v1259
                %v1261 = vld [vmem:[%s203 + $0x8400] sm:$0xff]
                %1262 = vst [vmem:[%s204 + $0x1080] sm:$0xff] %v1261
                %v1263 = vld [vmem:[%s203 + $0x8408] sm:$0xff]
                %1264 = vst [vmem:[%s204 + $0x1088] sm:$0xff] %v1263
                %v1265 = vld [vmem:[%s203 + $0x8410] sm:$0xff]
                %1266 = vst [vmem:[%s204 + $0x1090] sm:$0xff] %v1265
                %v1267 = vld [vmem:[%s203 + $0x84c0] sm:$0xff]
                %1268 = vst [vmem:[%s204 + $0x1098] sm:$0xff] %v1267
                %v1269 = vld [vmem:[%s203 + $0x84c8] sm:$0xff]
                %1270 = vst [vmem:[%s204 + $0x10a0] sm:$0xff] %v1269
                %v1271 = vld [vmem:[%s203 + $0x84d0] sm:$0xff]
                %1272 = vst [vmem:[%s204 + $0x10a8] sm:$0xff] %v1271
                %v1273 = vld [vmem:[%s203 + $0x8580] sm:$0xff]
                %1274 = vst [vmem:[%s204 + $0x10b0] sm:$0xff] %v1273
                %v1275 = vld [vmem:[%s203 + $0x8588] sm:$0xff]
                %1276 = vst [vmem:[%s204 + $0x10b8] sm:$0xff] %v1275
                %v1277 = vld [vmem:[%s203 + $0x8590] sm:$0xff]
                %1278 = vst [vmem:[%s204 + $0x10c0] sm:$0xff] %v1277
                %v1279 = vld [vmem:[%s203 + $0x8640] sm:$0xff]
                %1280 = vst [vmem:[%s204 + $0x10c8] sm:$0xff] %v1279
                %v1281 = vld [vmem:[%s203 + $0x8648] sm:$0xff]
                %1282 = vst [vmem:[%s204 + $0x10d0] sm:$0xff] %v1281
                %v1283 = vld [vmem:[%s203 + $0x8650] sm:$0xff]
                %1284 = vst [vmem:[%s204 + $0x10d8] sm:$0xff] %v1283
                %v1285 = vld [vmem:[%s203 + $0x8700] sm:$0xff]
                %1286 = vst [vmem:[%s204 + $0x10e0] sm:$0xff] %v1285
                %v1287 = vld [vmem:[%s203 + $0x8708] sm:$0xff]
                %1288 = vst [vmem:[%s204 + $0x10e8] sm:$0xff] %v1287
                %v1289 = vld [vmem:[%s203 + $0x8710] sm:$0xff]
                %1290 = vst [vmem:[%s204 + $0x10f0] sm:$0xff] %v1289
                %v1291 = vld [vmem:[%s203 + $0x87c0] sm:$0xff]
                %1292 = vst [vmem:[%s204 + $0x10f8] sm:$0xff] %v1291
                %v1293 = vld [vmem:[%s203 + $0x87c8] sm:$0xff]
                %1294 = vst [vmem:[%s204 + $0x1100] sm:$0xff] %v1293
                %v1295 = vld [vmem:[%s203 + $0x87d0] sm:$0xff]
                %1296 = vst [vmem:[%s204 + $0x1108] sm:$0xff] %v1295
                %v1297 = vld [vmem:[%s203 + $0x8880] sm:$0xff]
                %1298 = vst [vmem:[%s204 + $0x1110] sm:$0xff] %v1297
                %v1299 = vld [vmem:[%s203 + $0x8888] sm:$0xff]
                %1300 = vst [vmem:[%s204 + $0x1118] sm:$0xff] %v1299
                %v1301 = vld [vmem:[%s203 + $0x8890] sm:$0xff]
                %1302 = vst [vmem:[%s204 + $0x1120] sm:$0xff] %v1301
                %v1303 = vld [vmem:[%s203 + $0x8940] sm:$0xff]
                %1304 = vst [vmem:[%s204 + $0x1128] sm:$0xff] %v1303
                %v1305 = vld [vmem:[%s203 + $0x8948] sm:$0xff]
                %1306 = vst [vmem:[%s204 + $0x1130] sm:$0xff] %v1305
                %v1307 = vld [vmem:[%s203 + $0x8950] sm:$0xff]
                %1308 = vst [vmem:[%s204 + $0x1138] sm:$0xff] %v1307
                %v1309 = vld [vmem:[%s203 + $0x8a00] sm:$0xff]
                %1310 = vst [vmem:[%s204 + $0x1140] sm:$0xff] %v1309
                %v1311 = vld [vmem:[%s203 + $0x8a08] sm:$0xff]
                %1312 = vst [vmem:[%s204 + $0x1148] sm:$0xff] %v1311
                %v1313 = vld [vmem:[%s203 + $0x8a10] sm:$0xff]
                %1314 = vst [vmem:[%s204 + $0x1150] sm:$0xff] %v1313
                %v1315 = vld [vmem:[%s203 + $0x8ac0] sm:$0xff]
                %1316 = vst [vmem:[%s204 + $0x1158] sm:$0xff] %v1315
                %v1317 = vld [vmem:[%s203 + $0x8ac8] sm:$0xff]
                %1318 = vst [vmem:[%s204 + $0x1160] sm:$0xff] %v1317
                %v1319 = vld [vmem:[%s203 + $0x8ad0] sm:$0xff]
                %1320 = vst [vmem:[%s204 + $0x1168] sm:$0xff] %v1319
                %v1321 = vld [vmem:[%s203 + $0x8b80] sm:$0xff]
                %1322 = vst [vmem:[%s204 + $0x1170] sm:$0xff] %v1321
                %v1323 = vld [vmem:[%s203 + $0x8b88] sm:$0xff]
                %1324 = vst [vmem:[%s204 + $0x1178] sm:$0xff] %v1323
                %v1325 = vld [vmem:[%s203 + $0x8b90] sm:$0xff]
                %1326 = vst [vmem:[%s204 + $0x1180] sm:$0xff] %v1325
                %v1327 = vld [vmem:[%s203 + $0x8c40] sm:$0xff]
                %1328 = vst [vmem:[%s204 + $0x1188] sm:$0xff] %v1327
                %v1329 = vld [vmem:[%s203 + $0x8c48] sm:$0xff]
                %1330 = vst [vmem:[%s204 + $0x1190] sm:$0xff] %v1329
                %v1331 = vld [vmem:[%s203 + $0x8c50] sm:$0xff]
                %1332 = vst [vmem:[%s204 + $0x1198] sm:$0xff] %v1331
                %v1333 = vld [vmem:[%s203 + $0x8d00] sm:$0xff]
                %1334 = vst [vmem:[%s204 + $0x11a0] sm:$0xff] %v1333
                %v1335 = vld [vmem:[%s203 + $0x8d08] sm:$0xff]
                %1336 = vst [vmem:[%s204 + $0x11a8] sm:$0xff] %v1335
                %v1337 = vld [vmem:[%s203 + $0x8d10] sm:$0xff]
                %1338 = vst [vmem:[%s204 + $0x11b0] sm:$0xff] %v1337
                %v1339 = vld [vmem:[%s203 + $0x8dc0] sm:$0xff]
                %1340 = vst [vmem:[%s204 + $0x11b8] sm:$0xff] %v1339
                %v1341 = vld [vmem:[%s203 + $0x8dc8] sm:$0xff]
                %1342 = vst [vmem:[%s204 + $0x11c0] sm:$0xff] %v1341
                %v1343 = vld [vmem:[%s203 + $0x8dd0] sm:$0xff]
                %1344 = vst [vmem:[%s204 + $0x11c8] sm:$0xff] %v1343
                %v1345 = vld [vmem:[%s203 + $0x8e80] sm:$0xff]
                %1346 = vst [vmem:[%s204 + $0x11d0] sm:$0xff] %v1345
                %v1347 = vld [vmem:[%s203 + $0x8e88] sm:$0xff]
                %1348 = vst [vmem:[%s204 + $0x11d8] sm:$0xff] %v1347
                %v1349 = vld [vmem:[%s203 + $0x8e90] sm:$0xff]
                %1350 = vst [vmem:[%s204 + $0x11e0] sm:$0xff] %v1349
                %v1351 = vld [vmem:[%s203 + $0x8f40] sm:$0xff]
                %1352 = vst [vmem:[%s204 + $0x11e8] sm:$0xff] %v1351
                %v1353 = vld [vmem:[%s203 + $0x8f48] sm:$0xff]
                %1354 = vst [vmem:[%s204 + $0x11f0] sm:$0xff] %v1353
                %v1355 = vld [vmem:[%s203 + $0x8f50] sm:$0xff]
                %1356 = vst [vmem:[%s204 + $0x11f8] sm:$0xff] %v1355
                %v1357 = vld [vmem:[%s203 + $0x9000] sm:$0xff]
                %1358 = vst [vmem:[%s204 + $0x1200] sm:$0xff] %v1357
                %v1359 = vld [vmem:[%s203 + $0x9008] sm:$0xff]
                %1360 = vst [vmem:[%s204 + $0x1208] sm:$0xff] %v1359
                %v1361 = vld [vmem:[%s203 + $0x9010] sm:$0xff]
                %1362 = vst [vmem:[%s204 + $0x1210] sm:$0xff] %v1361
                %v1363 = vld [vmem:[%s203 + $0x90c0] sm:$0xff]
                %1364 = vst [vmem:[%s204 + $0x1218] sm:$0xff] %v1363
                %v1365 = vld [vmem:[%s203 + $0x90c8] sm:$0xff]
                %1366 = vst [vmem:[%s204 + $0x1220] sm:$0xff] %v1365
                %v1367 = vld [vmem:[%s203 + $0x90d0] sm:$0xff]
                %1368 = vst [vmem:[%s204 + $0x1228] sm:$0xff] %v1367
                %v1369 = vld [vmem:[%s203 + $0x9180] sm:$0xff]
                %1370 = vst [vmem:[%s204 + $0x1230] sm:$0xff] %v1369
                %v1371 = vld [vmem:[%s203 + $0x9188] sm:$0xff]
                %1372 = vst [vmem:[%s204 + $0x1238] sm:$0xff] %v1371
                %v1373 = vld [vmem:[%s203 + $0x9190] sm:$0xff]
                %1374 = vst [vmem:[%s204 + $0x1240] sm:$0xff] %v1373
                %v1375 = vld [vmem:[%s203 + $0x9240] sm:$0xff]
                %1376 = vst [vmem:[%s204 + $0x1248] sm:$0xff] %v1375
                %v1377 = vld [vmem:[%s203 + $0x9248] sm:$0xff]
                %1378 = vst [vmem:[%s204 + $0x1250] sm:$0xff] %v1377
                %v1379 = vld [vmem:[%s203 + $0x9250] sm:$0xff]
                %1380 = vst [vmem:[%s204 + $0x1258] sm:$0xff] %v1379
                %v1381 = vld [vmem:[%s203 + $0x9300] sm:$0xff]
                %1382 = vst [vmem:[%s204 + $0x1260] sm:$0xff] %v1381
                %v1383 = vld [vmem:[%s203 + $0x9308] sm:$0xff]
                %1384 = vst [vmem:[%s204 + $0x1268] sm:$0xff] %v1383
                %v1385 = vld [vmem:[%s203 + $0x9310] sm:$0xff]
                %1386 = vst [vmem:[%s204 + $0x1270] sm:$0xff] %v1385
                %v1387 = vld [vmem:[%s203 + $0x93c0] sm:$0xff]
                %1388 = vst [vmem:[%s204 + $0x1278] sm:$0xff] %v1387
                %v1389 = vld [vmem:[%s203 + $0x93c8] sm:$0xff]
                %1390 = vst [vmem:[%s204 + $0x1280] sm:$0xff] %v1389
                %v1391 = vld [vmem:[%s203 + $0x93d0] sm:$0xff]
                %1392 = vst [vmem:[%s204 + $0x1288] sm:$0xff] %v1391
                %v1393 = vld [vmem:[%s203 + $0x9480] sm:$0xff]
                %1394 = vst [vmem:[%s204 + $0x1290] sm:$0xff] %v1393
                %v1395 = vld [vmem:[%s203 + $0x9488] sm:$0xff]
                %1396 = vst [vmem:[%s204 + $0x1298] sm:$0xff] %v1395
                %v1397 = vld [vmem:[%s203 + $0x9490] sm:$0xff]
                %1398 = vst [vmem:[%s204 + $0x12a0] sm:$0xff] %v1397
                %v1399 = vld [vmem:[%s203 + $0x9540] sm:$0xff]
                %1400 = vst [vmem:[%s204 + $0x12a8] sm:$0xff] %v1399
                %v1401 = vld [vmem:[%s203 + $0x9548] sm:$0xff]
                %1402 = vst [vmem:[%s204 + $0x12b0] sm:$0xff] %v1401
                %v1403 = vld [vmem:[%s203 + $0x9550] sm:$0xff]
                %1404 = vst [vmem:[%s204 + $0x12b8] sm:$0xff] %v1403
              $region37: #{recognizer_forward.11} parent=31 // loop_footer
                %s202 = sadd.s32 1, %s198
              $region38: #{recognizer_forward.11} parent=31 // loop_footer_branch
                %197 = sbr.rel target = $region34
              $region39: #{recognizer_forward.11} parent=31 // loop_exit
                _
            $region32: #{recognizer_forward.11} parent=27 // pred_fallthru
              _
            // Predicated region
            $region40: #{recognizer_forward.11} parent=27 // pred_check
              _
            $region41: #{recognizer_forward.11} parent=27 // pred_check_branch
              %1406 = sbr.rel target = $region43
            $region42: #{recognizer_forward.11} parent=27 // pred_region
              _
            $region43: #{recognizer_forward.11} parent=27 // pred_fallthru
              _
          $region28: #{recognizer_forward.11} parent=23 // pred_fallthru
            _
          %1407 = vnop
        $region24: #{recognizer_forward.11} parent=19 // pred_fallthru
          _
        // Predicated region
        $region44: #{recognizer_forward.11} parent=19 // pred_check
          %p1408 = pneg %p94
        $region45: #{recognizer_forward.11} parent=19 // pred_check_branch
          %1410 = sbr.rel (%p1408) target = $region47
        $region46: #{recognizer_forward.11} parent=19 // pred_region
          %s1411 = smul.u32 3, %s18
          %p1412 = scmp.lt.s32.totalorder %s1411, 23
          %s1413 = scalar_select %p1412, %s1411, 23
          %s1414 = scalar_lea.vmem %s2, %s1413
          %s1415 = smul.u32 3, %s18
        $region47: #{recognizer_forward.11} parent=19 // pred_fallthru
          _
        // Predicated region
        $region48: #{recognizer_forward.11} parent=19 // pred_check
          %p1416 = pneg %p120
        $region49: #{recognizer_forward.11} parent=19 // pred_check_branch
          %1418 = sbr.rel (%p1416) target = $region51
        $region50: #{recognizer_forward.11} parent=19 // pred_region
          %s1419 = smul.u32 3, %s18
          %p1420 = scmp.lt.s32.totalorder %s1419, 23
          %s1421 = scalar_select %p1420, %s1419, 23
          %s1422 = scalar_lea.vmem %s3, %s1421
          %s1423 = smul.u32 3, %s18
        $region51: #{recognizer_forward.11} parent=19 // pred_fallthru
          _
      $region20: #{recognizer_forward.11} parent=5 // pred_fallthru
        _
      %p1424 = scmp.le.s32.totalorder 1, %s10
      %p1425 = scmp.lt.s32.totalorder %s10, 9
      %p1426 = pnand %p1424, %p1425
      %p1427 = pneg %p1426
      // Predicated region
      $region52: #{recognizer_forward.11} parent=5 // pred_check
        _
      $region53: #{recognizer_forward.11} parent=5 // pred_check_branch
        %1429 = sbr.rel (%p1426) target = $region55
      $region54: #{recognizer_forward.11} parent=5 // pred_region
        %s1430 = ssub.s32 %s10, 1
        %s1431 = sand.u32 %s61, 1
        %s1432 = sand.u32 %s61, 1
        %s1433 = smul.addr %s1432, 4800
        %s1434 = scalar_lea.vmem [#allocation2], %s1433
        // Predicated region
        $region56: #{recognizer_forward.11} parent=54 // pred_check
          %p1435 = pneg %p74
        $region57: #{recognizer_forward.11} parent=54 // pred_check_branch
          %1437 = sbr.rel (%p1435) target = $region59
        $region58: #{recognizer_forward.11} parent=54 // pred_region
          _
        $region59: #{recognizer_forward.11} parent=54 // pred_fallthru
          _
        %s1438 = smul.u32 2, %s19
        %p1439 = scmp.lt.s32.totalorder %s1438, 1
        %s1440 = scalar_select %p1439, %s1438, 1
        %s1441 = smul.addr %s1440, 50
        %s1442 = smul.addr %s1441, 4
        %s1443 = scalar_lea.vmem %s0, %s1442
        %p1444 = pneg %p48
        %p1445 = pneg %p45
        %s1446 = sand.u32 %s61, 1
        %s1447 = sand.u32 %s61, 1
        %s1448 = smul.addr %s1447, 4800
        %s1449 = scalar_lea.vmem [#allocation2], %s1448
        %p1450 = pneg %p74
        %p1451 = pneg %p71
        %s1452 = smul.u32 3, %s20
        %p1453 = scmp.lt.s32.totalorder %s1452, 23
        %s1454 = scalar_select %p1453, %s1452, 23
        %s1455 = scalar_lea.vmem %s2, %s1454
        %p1456 = pneg %p100
        %p1457 = pneg %p97
        %s1458 = smul.u32 3, %s20
        %p1459 = scmp.lt.s32.totalorder %s1458, 23
        %s1460 = scalar_select %p1459, %s1458, 23
        %s1461 = scalar_lea.vmem %s3, %s1460
        %p1462 = pneg %p126
        %p1463 = pneg %p123
        %p1464 = pneg %p154
        %p1465 = pneg %p151
        %s1466 = sand.u32 %s141, 1
        %s1467 = sand.u32 %s141, 1
        %s1468 = smul.addr %s1467, 48
        %s1469 = scalar_lea.vmem [#allocation3], %s1468
        %s1470 = smul.u32 2, %s19
        %p1471 = scmp.lt.s32.totalorder %s1470, 1
        %s1472 = scalar_select %p1471, %s1470, 1
        %s1473 = smul.addr %s1472, 50
        %s1474 = smul.addr %s1473, 4
        %s1475 = scalar_lea.vmem %s0, %s1474
        %s1476 = smul.u32 2, %s19
        %s1477 = smul.u32 3, %s20
        %s1478 = smul.u32 3, %s20
        %p1479 = scmp.lt.s32.totalorder %s1478, 23
        %s1480 = scalar_select %p1479, %s1478, 23
        %s1481 = scalar_lea.vmem %s2, %s1480
        %s1482 = smul.u32 3, %s20
        %s1483 = smul.u32 3, %s20
        %p1484 = scmp.lt.s32.totalorder %s1483, 23
        %s1485 = scalar_select %p1484, %s1483, 23
        %s1486 = scalar_lea.vmem %s3, %s1485
        %s1487 = smul.u32 3, %s20
        %s1488 = smul.u32 2, %s19
        %s1489 = smul.u32 3, %s20
        %v1491 = vld [vmem:[%s1434] sm:$0xff]
        %v1492 = vld [vmem:[%s1434 + $0x8] sm:$0xff]
        %v1493 = vld [vmem:[%s1434 + $0x10] sm:$0xff]
        %v1494 = vld [vmem:[%s1434 + $0x18] sm:$0xff]
        %v1495 = vld [vmem:[%s1434 + $0x20] sm:$0xff]
        %v1496 = vld [vmem:[%s1434 + $0x28] sm:$0xff]
        %v1497 = vld [vmem:[%s1434 + $0x30] sm:$0xff]
        %v1498 = vld [vmem:[%s1434 + $0x38] sm:$0xff]
        %v1499 = vld [vmem:[%s1434 + $0x40] sm:$0xff]
        %v1500 = vld [vmem:[%s1434 + $0x48] sm:$0xff]
        %v1501 = vld [vmem:[%s1434 + $0x50] sm:$0xff]
        %v1502 = vld [vmem:[%s1434 + $0x58] sm:$0xff]
        %v1503 = vld [vmem:[%s1434 + $0x60] sm:$0xff]
        %v1504 = vld [vmem:[%s1434 + $0x68] sm:$0xff]
        %v1505 = vld [vmem:[%s1434 + $0x70] sm:$0xff]
        %v1506 = vld [vmem:[%s1434 + $0x78] sm:$0xff]
        %v1507 = vld [vmem:[%s1434 + $0x80] sm:$0xff]
        %v1508 = vld [vmem:[%s1434 + $0x88] sm:$0xff]
        %v1509 = vld [vmem:[%s1434 + $0x90] sm:$0xff]
        %v1510 = vld [vmem:[%s1434 + $0x98] sm:$0xff]
        %v1511 = vld [vmem:[%s1434 + $0xa0] sm:$0xff]
        %v1512 = vld [vmem:[%s1434 + $0xa8] sm:$0xff]
        %v1513 = vld [vmem:[%s1434 + $0xb0] sm:$0xff]
        %v1514 = vld [vmem:[%s1434 + $0xb8] sm:$0xff]
        %v1515 = vld [vmem:[%s1434 + $0xc0] sm:$0xff]
        %v1516 = vld [vmem:[%s1434 + $0xc8] sm:$0xff]
        %v1517 = vld [vmem:[%s1434 + $0xd0] sm:$0xff]
        %v1518 = vld [vmem:[%s1434 + $0xd8] sm:$0xff]
        %v1519 = vld [vmem:[%s1434 + $0xe0] sm:$0xff]
        %v1520 = vld [vmem:[%s1434 + $0xe8] sm:$0xff]
        %v1521 = vld [vmem:[%s1434 + $0xf0] sm:$0xff]
        %v1522 = vld [vmem:[%s1434 + $0xf8] sm:$0xff]
        %v1523 = vld [vmem:[%s1434 + $0x100] sm:$0xff]
        %v1524 = vld [vmem:[%s1434 + $0x108] sm:$0xff]
        %v1525 = vld [vmem:[%s1434 + $0x110] sm:$0xff]
        %v1526 = vld [vmem:[%s1434 + $0x118] sm:$0xff]
        %v1527 = vld [vmem:[%s1434 + $0x120] sm:$0xff]
        %v1528 = vld [vmem:[%s1434 + $0x128] sm:$0xff]
        %v1529 = vld [vmem:[%s1434 + $0x130] sm:$0xff]
        %v1530 = vld [vmem:[%s1434 + $0x138] sm:$0xff]
        %v1531 = vld [vmem:[%s1434 + $0x140] sm:$0xff]
        %v1532 = vld [vmem:[%s1434 + $0x148] sm:$0xff]
        %v1533 = vld [vmem:[%s1434 + $0x150] sm:$0xff]
        %v1534 = vld [vmem:[%s1434 + $0x158] sm:$0xff]
        %v1535 = vld [vmem:[%s1434 + $0x160] sm:$0xff]
        %v1536 = vld [vmem:[%s1434 + $0x168] sm:$0xff]
        %v1537 = vld [vmem:[%s1434 + $0x170] sm:$0xff]
        %v1538 = vld [vmem:[%s1434 + $0x178] sm:$0xff]
        %v1539 = vld [vmem:[%s1434 + $0x180] sm:$0xff]
        %v1540 = vld [vmem:[%s1434 + $0x188] sm:$0xff]
        %v1541 = vld [vmem:[%s1434 + $0x190] sm:$0xff]
        %v1542 = vld [vmem:[%s1434 + $0x198] sm:$0xff]
        %v1543 = vld [vmem:[%s1434 + $0x1a0] sm:$0xff]
        %v1544 = vld [vmem:[%s1434 + $0x1a8] sm:$0xff]
        %v1545 = vld [vmem:[%s1434 + $0x1b0] sm:$0xff]
        %v1546 = vld [vmem:[%s1434 + $0x1b8] sm:$0xff]
        %v1547 = vld [vmem:[%s1434 + $0x1c0] sm:$0xff]
        %v1548 = vld [vmem:[%s1434 + $0x1c8] sm:$0xff]
        %v1549 = vld [vmem:[%s1434 + $0x1d0] sm:$0xff]
        %v1550 = vld [vmem:[%s1434 + $0x1d8] sm:$0xff]
        %v1551 = vld [vmem:[%s1434 + $0x1e0] sm:$0xff]
        %v1552 = vld [vmem:[%s1434 + $0x1e8] sm:$0xff]
        %v1553 = vld [vmem:[%s1434 + $0x1f0] sm:$0xff]
        %v1554 = vld [vmem:[%s1434 + $0x1f8] sm:$0xff]
        %v1555 = vld [vmem:[%s1434 + $0x200] sm:$0xff]
        %v1556 = vld [vmem:[%s1434 + $0x208] sm:$0xff]
        %v1557 = vld [vmem:[%s1434 + $0x210] sm:$0xff]
        %v1558 = vld [vmem:[%s1434 + $0x218] sm:$0xff]
        %v1559 = vld [vmem:[%s1434 + $0x220] sm:$0xff]
        %v1560 = vld [vmem:[%s1434 + $0x228] sm:$0xff]
        %v1561 = vld [vmem:[%s1434 + $0x230] sm:$0xff]
        %v1562 = vld [vmem:[%s1434 + $0x238] sm:$0xff]
        %v1563 = vld [vmem:[%s1434 + $0x240] sm:$0xff]
        %v1564 = vld [vmem:[%s1434 + $0x248] sm:$0xff]
        %v1565 = vld [vmem:[%s1434 + $0x250] sm:$0xff]
        %v1566 = vld [vmem:[%s1434 + $0x258] sm:$0xff]
        %v1567 = vld [vmem:[%s1434 + $0x260] sm:$0xff]
        %v1568 = vld [vmem:[%s1434 + $0x268] sm:$0xff]
        %v1569 = vld [vmem:[%s1434 + $0x270] sm:$0xff]
        %v1570 = vld [vmem:[%s1434 + $0x278] sm:$0xff]
        %v1571 = vld [vmem:[%s1434 + $0x280] sm:$0xff]
        %v1572 = vld [vmem:[%s1434 + $0x288] sm:$0xff]
        %v1573 = vld [vmem:[%s1434 + $0x290] sm:$0xff]
        %v1574 = vld [vmem:[%s1434 + $0x298] sm:$0xff]
        %v1575 = vld [vmem:[%s1434 + $0x2a0] sm:$0xff]
        %v1576 = vld [vmem:[%s1434 + $0x2a8] sm:$0xff]
        %v1577 = vld [vmem:[%s1434 + $0x2b0] sm:$0xff]
        %v1578 = vld [vmem:[%s1434 + $0x2b8] sm:$0xff]
        %v1579 = vld [vmem:[%s1434 + $0x2c0] sm:$0xff]
        %v1580 = vld [vmem:[%s1434 + $0x2c8] sm:$0xff]
        %v1581 = vld [vmem:[%s1434 + $0x2d0] sm:$0xff]
        %v1582 = vld [vmem:[%s1434 + $0x2d8] sm:$0xff]
        %v1583 = vld [vmem:[%s1434 + $0x2e0] sm:$0xff]
        %v1584 = vld [vmem:[%s1434 + $0x2e8] sm:$0xff]
        %v1585 = vld [vmem:[%s1434 + $0x2f0] sm:$0xff]
        %v1586 = vld [vmem:[%s1434 + $0x2f8] sm:$0xff]
        %v1587 = vld [vmem:[%s1434 + $0x300] sm:$0xff]
        %v1588 = vld [vmem:[%s1434 + $0x308] sm:$0xff]
        %v1589 = vld [vmem:[%s1434 + $0x310] sm:$0xff]
        %v1590 = vld [vmem:[%s1434 + $0x318] sm:$0xff]
        %v1591 = vld [vmem:[%s1434 + $0x320] sm:$0xff]
        %v1592 = vld [vmem:[%s1434 + $0x328] sm:$0xff]
        %v1593 = vld [vmem:[%s1434 + $0x330] sm:$0xff]
        %v1594 = vld [vmem:[%s1434 + $0x338] sm:$0xff]
        %v1595 = vld [vmem:[%s1434 + $0x340] sm:$0xff]
        %v1596 = vld [vmem:[%s1434 + $0x348] sm:$0xff]
        %v1597 = vld [vmem:[%s1434 + $0x350] sm:$0xff]
        %v1598 = vld [vmem:[%s1434 + $0x358] sm:$0xff]
        %v1599 = vld [vmem:[%s1434 + $0x360] sm:$0xff]
        %v1600 = vld [vmem:[%s1434 + $0x368] sm:$0xff]
        %v1601 = vld [vmem:[%s1434 + $0x370] sm:$0xff]
        %v1602 = vld [vmem:[%s1434 + $0x378] sm:$0xff]
        %v1603 = vld [vmem:[%s1434 + $0x380] sm:$0xff]
        %v1604 = vld [vmem:[%s1434 + $0x388] sm:$0xff]
        %v1605 = vld [vmem:[%s1434 + $0x390] sm:$0xff]
        %v1606 = vld [vmem:[%s1434 + $0x398] sm:$0xff]
        %v1607 = vld [vmem:[%s1434 + $0x3a0] sm:$0xff]
        %v1608 = vld [vmem:[%s1434 + $0x3a8] sm:$0xff]
        %v1609 = vld [vmem:[%s1434 + $0x3b0] sm:$0xff]
        %v1610 = vld [vmem:[%s1434 + $0x3b8] sm:$0xff]
        %v1611 = vld [vmem:[%s1434 + $0x3c0] sm:$0xff]
        %v1612 = vld [vmem:[%s1434 + $0x3c8] sm:$0xff]
        %v1613 = vld [vmem:[%s1434 + $0x3d0] sm:$0xff]
        %v1614 = vld [vmem:[%s1434 + $0x3d8] sm:$0xff]
        %v1615 = vld [vmem:[%s1434 + $0x3e0] sm:$0xff]
        %v1616 = vld [vmem:[%s1434 + $0x3e8] sm:$0xff]
        %v1617 = vld [vmem:[%s1434 + $0x3f0] sm:$0xff]
        %v1618 = vld [vmem:[%s1434 + $0x3f8] sm:$0xff]
        %v1619 = vld [vmem:[%s1434 + $0x400] sm:$0xff]
        %v1620 = vld [vmem:[%s1434 + $0x408] sm:$0xff]
        %v1621 = vld [vmem:[%s1434 + $0x410] sm:$0xff]
        %v1622 = vld [vmem:[%s1434 + $0x418] sm:$0xff]
        %v1623 = vld [vmem:[%s1434 + $0x420] sm:$0xff]
        %v1624 = vld [vmem:[%s1434 + $0x428] sm:$0xff]
        %v1625 = vld [vmem:[%s1434 + $0x430] sm:$0xff]
        %v1626 = vld [vmem:[%s1434 + $0x438] sm:$0xff]
        %v1627 = vld [vmem:[%s1434 + $0x440] sm:$0xff]
        %v1628 = vld [vmem:[%s1434 + $0x448] sm:$0xff]
        %v1629 = vld [vmem:[%s1434 + $0x450] sm:$0xff]
        %v1630 = vld [vmem:[%s1434 + $0x458] sm:$0xff]
        %v1631 = vld [vmem:[%s1434 + $0x460] sm:$0xff]
        %v1632 = vld [vmem:[%s1434 + $0x468] sm:$0xff]
        %v1633 = vld [vmem:[%s1434 + $0x470] sm:$0xff]
        %v1634 = vld [vmem:[%s1434 + $0x478] sm:$0xff]
        %v1635 = vld [vmem:[%s1434 + $0x480] sm:$0xff]
        %v1636 = vld [vmem:[%s1434 + $0x488] sm:$0xff]
        %v1637 = vld [vmem:[%s1434 + $0x490] sm:$0xff]
        %v1638 = vld [vmem:[%s1434 + $0x498] sm:$0xff]
        %v1639 = vld [vmem:[%s1434 + $0x4a0] sm:$0xff]
        %v1640 = vld [vmem:[%s1434 + $0x4a8] sm:$0xff]
        %v1641 = vld [vmem:[%s1434 + $0x4b0] sm:$0xff]
        %v1642 = vld [vmem:[%s1434 + $0x4b8] sm:$0xff]
        %v1643 = vld [vmem:[%s1434 + $0x4c0] sm:$0xff]
        %v1644 = vld [vmem:[%s1434 + $0x4c8] sm:$0xff]
        %v1645 = vld [vmem:[%s1434 + $0x4d0] sm:$0xff]
        %v1646 = vld [vmem:[%s1434 + $0x4d8] sm:$0xff]
        %v1647 = vld [vmem:[%s1434 + $0x4e0] sm:$0xff]
        %v1648 = vld [vmem:[%s1434 + $0x4e8] sm:$0xff]
        %v1649 = vld [vmem:[%s1434 + $0x4f0] sm:$0xff]
        %v1650 = vld [vmem:[%s1434 + $0x4f8] sm:$0xff]
        %v1651 = vld [vmem:[%s1434 + $0x500] sm:$0xff]
        %v1652 = vld [vmem:[%s1434 + $0x508] sm:$0xff]
        %v1653 = vld [vmem:[%s1434 + $0x510] sm:$0xff]
        %v1654 = vld [vmem:[%s1434 + $0x518] sm:$0xff]
        %v1655 = vld [vmem:[%s1434 + $0x520] sm:$0xff]
        %v1656 = vld [vmem:[%s1434 + $0x528] sm:$0xff]
        %v1657 = vld [vmem:[%s1434 + $0x530] sm:$0xff]
        %v1658 = vld [vmem:[%s1434 + $0x538] sm:$0xff]
        %v1659 = vld [vmem:[%s1434 + $0x540] sm:$0xff]
        %v1660 = vld [vmem:[%s1434 + $0x548] sm:$0xff]
        %v1661 = vld [vmem:[%s1434 + $0x550] sm:$0xff]
        %v1662 = vld [vmem:[%s1434 + $0x558] sm:$0xff]
        %v1663 = vld [vmem:[%s1434 + $0x560] sm:$0xff]
        %v1664 = vld [vmem:[%s1434 + $0x568] sm:$0xff]
        %v1665 = vld [vmem:[%s1434 + $0x570] sm:$0xff]
        %v1666 = vld [vmem:[%s1434 + $0x578] sm:$0xff]
        %v1667 = vld [vmem:[%s1434 + $0x580] sm:$0xff]
        %v1668 = vld [vmem:[%s1434 + $0x588] sm:$0xff]
        %v1669 = vld [vmem:[%s1434 + $0x590] sm:$0xff]
        %v1670 = vld [vmem:[%s1434 + $0x598] sm:$0xff]
        %v1671 = vld [vmem:[%s1434 + $0x5a0] sm:$0xff]
        %v1672 = vld [vmem:[%s1434 + $0x5a8] sm:$0xff]
        %v1673 = vld [vmem:[%s1434 + $0x5b0] sm:$0xff]
        %v1674 = vld [vmem:[%s1434 + $0x5b8] sm:$0xff]
        %v1675 = vld [vmem:[%s1434 + $0x5c0] sm:$0xff]
        %v1676 = vld [vmem:[%s1434 + $0x5c8] sm:$0xff]
        %v1677 = vld [vmem:[%s1434 + $0x5d0] sm:$0xff]
        %v1678 = vld [vmem:[%s1434 + $0x5d8] sm:$0xff]
        %v1679 = vld [vmem:[%s1434 + $0x5e0] sm:$0xff]
        %v1680 = vld [vmem:[%s1434 + $0x5e8] sm:$0xff]
        %v1681 = vld [vmem:[%s1434 + $0x5f0] sm:$0xff]
        %v1682 = vld [vmem:[%s1434 + $0x5f8] sm:$0xff]
        %v1683 = vld [vmem:[%s1434 + $0x600] sm:$0xff]
        %v1684 = vld [vmem:[%s1434 + $0x608] sm:$0xff]
        %v1685 = vld [vmem:[%s1434 + $0x610] sm:$0xff]
        %v1686 = vld [vmem:[%s1434 + $0x618] sm:$0xff]
        %v1687 = vld [vmem:[%s1434 + $0x620] sm:$0xff]
        %v1688 = vld [vmem:[%s1434 + $0x628] sm:$0xff]
        %v1689 = vld [vmem:[%s1434 + $0x630] sm:$0xff]
        %v1690 = vld [vmem:[%s1434 + $0x638] sm:$0xff]
        %v1691 = vld [vmem:[%s1434 + $0x640] sm:$0xff]
        %v1692 = vld [vmem:[%s1434 + $0x648] sm:$0xff]
        %v1693 = vld [vmem:[%s1434 + $0x650] sm:$0xff]
        %v1694 = vld [vmem:[%s1434 + $0x658] sm:$0xff]
        %v1695 = vld [vmem:[%s1434 + $0x660] sm:$0xff]
        %v1696 = vld [vmem:[%s1434 + $0x668] sm:$0xff]
        %v1697 = vld [vmem:[%s1434 + $0x670] sm:$0xff]
        %v1698 = vld [vmem:[%s1434 + $0x678] sm:$0xff]
        %v1699 = vld [vmem:[%s1434 + $0x680] sm:$0xff]
        %v1700 = vld [vmem:[%s1434 + $0x688] sm:$0xff]
        %v1701 = vld [vmem:[%s1434 + $0x690] sm:$0xff]
        %v1702 = vld [vmem:[%s1434 + $0x698] sm:$0xff]
        %v1703 = vld [vmem:[%s1434 + $0x6a0] sm:$0xff]
        %v1704 = vld [vmem:[%s1434 + $0x6a8] sm:$0xff]
        %v1705 = vld [vmem:[%s1434 + $0x6b0] sm:$0xff]
        %v1706 = vld [vmem:[%s1434 + $0x6b8] sm:$0xff]
        %v1707 = vld [vmem:[%s1434 + $0x6c0] sm:$0xff]
        %v1708 = vld [vmem:[%s1434 + $0x6c8] sm:$0xff]
        %v1709 = vld [vmem:[%s1434 + $0x6d0] sm:$0xff]
        %v1710 = vld [vmem:[%s1434 + $0x6d8] sm:$0xff]
        %v1711 = vld [vmem:[%s1434 + $0x6e0] sm:$0xff]
        %v1712 = vld [vmem:[%s1434 + $0x6e8] sm:$0xff]
        %v1713 = vld [vmem:[%s1434 + $0x6f0] sm:$0xff]
        %v1714 = vld [vmem:[%s1434 + $0x6f8] sm:$0xff]
        %v1715 = vld [vmem:[%s1434 + $0x700] sm:$0xff]
        %v1716 = vld [vmem:[%s1434 + $0x708] sm:$0xff]
        %v1717 = vld [vmem:[%s1434 + $0x710] sm:$0xff]
        %v1718 = vld [vmem:[%s1434 + $0x718] sm:$0xff]
        %v1719 = vld [vmem:[%s1434 + $0x720] sm:$0xff]
        %v1720 = vld [vmem:[%s1434 + $0x728] sm:$0xff]
        %v1721 = vld [vmem:[%s1434 + $0x730] sm:$0xff]
        %v1722 = vld [vmem:[%s1434 + $0x738] sm:$0xff]
        %v1723 = vld [vmem:[%s1434 + $0x740] sm:$0xff]
        %v1724 = vld [vmem:[%s1434 + $0x748] sm:$0xff]
        %v1725 = vld [vmem:[%s1434 + $0x750] sm:$0xff]
        %v1726 = vld [vmem:[%s1434 + $0x758] sm:$0xff]
        %v1727 = vld [vmem:[%s1434 + $0x760] sm:$0xff]
        %v1728 = vld [vmem:[%s1434 + $0x768] sm:$0xff]
        %v1729 = vld [vmem:[%s1434 + $0x770] sm:$0xff]
        %v1730 = vld [vmem:[%s1434 + $0x778] sm:$0xff]
        %v1731 = vld [vmem:[%s1434 + $0x780] sm:$0xff]
        %v1732 = vld [vmem:[%s1434 + $0x788] sm:$0xff]
        %v1733 = vld [vmem:[%s1434 + $0x790] sm:$0xff]
        %v1734 = vld [vmem:[%s1434 + $0x798] sm:$0xff]
        %v1735 = vld [vmem:[%s1434 + $0x7a0] sm:$0xff]
        %v1736 = vld [vmem:[%s1434 + $0x7a8] sm:$0xff]
        %v1737 = vld [vmem:[%s1434 + $0x7b0] sm:$0xff]
        %v1738 = vld [vmem:[%s1434 + $0x7b8] sm:$0xff]
        %v1739 = vld [vmem:[%s1434 + $0x7c0] sm:$0xff]
        %v1740 = vld [vmem:[%s1434 + $0x7c8] sm:$0xff]
        %v1741 = vld [vmem:[%s1434 + $0x7d0] sm:$0xff]
        %v1742 = vld [vmem:[%s1434 + $0x7d8] sm:$0xff]
        %v1743 = vld [vmem:[%s1434 + $0x7e0] sm:$0xff]
        %v1744 = vld [vmem:[%s1434 + $0x7e8] sm:$0xff]
        %v1745 = vld [vmem:[%s1434 + $0x7f0] sm:$0xff]
        %v1746 = vld [vmem:[%s1434 + $0x7f8] sm:$0xff]
        %v1747 = vld [vmem:[%s1434 + $0x800] sm:$0xff]
        %v1748 = vld [vmem:[%s1434 + $0x808] sm:$0xff]
        %v1749 = vld [vmem:[%s1434 + $0x810] sm:$0xff]
        %v1750 = vld [vmem:[%s1434 + $0x818] sm:$0xff]
        %v1751 = vld [vmem:[%s1434 + $0x820] sm:$0xff]
        %v1752 = vld [vmem:[%s1434 + $0x828] sm:$0xff]
        %v1753 = vld [vmem:[%s1434 + $0x830] sm:$0xff]
        %v1754 = vld [vmem:[%s1434 + $0x838] sm:$0xff]
        %v1755 = vld [vmem:[%s1434 + $0x840] sm:$0xff]
        %v1756 = vld [vmem:[%s1434 + $0x848] sm:$0xff]
        %v1757 = vld [vmem:[%s1434 + $0x850] sm:$0xff]
        %v1758 = vld [vmem:[%s1434 + $0x858] sm:$0xff]
        %v1759 = vld [vmem:[%s1434 + $0x860] sm:$0xff]
        %v1760 = vld [vmem:[%s1434 + $0x868] sm:$0xff]
        %v1761 = vld [vmem:[%s1434 + $0x870] sm:$0xff]
        %v1762 = vld [vmem:[%s1434 + $0x878] sm:$0xff]
        %v1763 = vld [vmem:[%s1434 + $0x880] sm:$0xff]
        %v1764 = vld [vmem:[%s1434 + $0x888] sm:$0xff]
        %v1765 = vld [vmem:[%s1434 + $0x890] sm:$0xff]
        %v1766 = vld [vmem:[%s1434 + $0x898] sm:$0xff]
        %v1767 = vld [vmem:[%s1434 + $0x8a0] sm:$0xff]
        %v1768 = vld [vmem:[%s1434 + $0x8a8] sm:$0xff]
        %v1769 = vld [vmem:[%s1434 + $0x8b0] sm:$0xff]
        %v1770 = vld [vmem:[%s1434 + $0x8b8] sm:$0xff]
        %v1771 = vld [vmem:[%s1434 + $0x8c0] sm:$0xff]
        %v1772 = vld [vmem:[%s1434 + $0x8c8] sm:$0xff]
        %v1773 = vld [vmem:[%s1434 + $0x8d0] sm:$0xff]
        %v1774 = vld [vmem:[%s1434 + $0x8d8] sm:$0xff]
        %v1775 = vld [vmem:[%s1434 + $0x8e0] sm:$0xff]
        %v1776 = vld [vmem:[%s1434 + $0x8e8] sm:$0xff]
        %v1777 = vld [vmem:[%s1434 + $0x8f0] sm:$0xff]
        %v1778 = vld [vmem:[%s1434 + $0x8f8] sm:$0xff]
        %v1779 = vld [vmem:[%s1434 + $0x900] sm:$0xff]
        %v1780 = vld [vmem:[%s1434 + $0x908] sm:$0xff]
        %v1781 = vld [vmem:[%s1434 + $0x910] sm:$0xff]
        %v1782 = vld [vmem:[%s1434 + $0x918] sm:$0xff]
        %v1783 = vld [vmem:[%s1434 + $0x920] sm:$0xff]
        %v1784 = vld [vmem:[%s1434 + $0x928] sm:$0xff]
        %v1785 = vld [vmem:[%s1434 + $0x930] sm:$0xff]
        %v1786 = vld [vmem:[%s1434 + $0x938] sm:$0xff]
        %v1787 = vld [vmem:[%s1434 + $0x940] sm:$0xff]
        %v1788 = vld [vmem:[%s1434 + $0x948] sm:$0xff]
        %v1789 = vld [vmem:[%s1434 + $0x950] sm:$0xff]
        %v1790 = vld [vmem:[%s1434 + $0x958] sm:$0xff]
        %v1791 = vld [vmem:[%s1434 + $0x960] sm:$0xff]
        %v1792 = vld [vmem:[%s1434 + $0x968] sm:$0xff]
        %v1793 = vld [vmem:[%s1434 + $0x970] sm:$0xff]
        %v1794 = vld [vmem:[%s1434 + $0x978] sm:$0xff]
        %v1795 = vld [vmem:[%s1434 + $0x980] sm:$0xff]
        %v1796 = vld [vmem:[%s1434 + $0x988] sm:$0xff]
        %v1797 = vld [vmem:[%s1434 + $0x990] sm:$0xff]
        %v1798 = vld [vmem:[%s1434 + $0x998] sm:$0xff]
        %v1799 = vld [vmem:[%s1434 + $0x9a0] sm:$0xff]
        %v1800 = vld [vmem:[%s1434 + $0x9a8] sm:$0xff]
        %v1801 = vld [vmem:[%s1434 + $0x9b0] sm:$0xff]
        %v1802 = vld [vmem:[%s1434 + $0x9b8] sm:$0xff]
        %v1803 = vld [vmem:[%s1434 + $0x9c0] sm:$0xff]
        %v1804 = vld [vmem:[%s1434 + $0x9c8] sm:$0xff]
        %v1805 = vld [vmem:[%s1434 + $0x9d0] sm:$0xff]
        %v1806 = vld [vmem:[%s1434 + $0x9d8] sm:$0xff]
        %v1807 = vld [vmem:[%s1434 + $0x9e0] sm:$0xff]
        %v1808 = vld [vmem:[%s1434 + $0x9e8] sm:$0xff]
        %v1809 = vld [vmem:[%s1434 + $0x9f0] sm:$0xff]
        %v1810 = vld [vmem:[%s1434 + $0x9f8] sm:$0xff]
        %v1811 = vld [vmem:[%s1434 + $0xa00] sm:$0xff]
        %v1812 = vld [vmem:[%s1434 + $0xa08] sm:$0xff]
        %v1813 = vld [vmem:[%s1434 + $0xa10] sm:$0xff]
        %v1814 = vld [vmem:[%s1434 + $0xa18] sm:$0xff]
        %v1815 = vld [vmem:[%s1434 + $0xa20] sm:$0xff]
        %v1816 = vld [vmem:[%s1434 + $0xa28] sm:$0xff]
        %v1817 = vld [vmem:[%s1434 + $0xa30] sm:$0xff]
        %v1818 = vld [vmem:[%s1434 + $0xa38] sm:$0xff]
        %v1819 = vld [vmem:[%s1434 + $0xa40] sm:$0xff]
        %v1820 = vld [vmem:[%s1434 + $0xa48] sm:$0xff]
        %v1821 = vld [vmem:[%s1434 + $0xa50] sm:$0xff]
        %v1822 = vld [vmem:[%s1434 + $0xa58] sm:$0xff]
        %v1823 = vld [vmem:[%s1434 + $0xa60] sm:$0xff]
        %v1824 = vld [vmem:[%s1434 + $0xa68] sm:$0xff]
        %v1825 = vld [vmem:[%s1434 + $0xa70] sm:$0xff]
        %v1826 = vld [vmem:[%s1434 + $0xa78] sm:$0xff]
        %v1827 = vld [vmem:[%s1434 + $0xa80] sm:$0xff]
        %v1828 = vld [vmem:[%s1434 + $0xa88] sm:$0xff]
        %v1829 = vld [vmem:[%s1434 + $0xa90] sm:$0xff]
        %v1830 = vld [vmem:[%s1434 + $0xa98] sm:$0xff]
        %v1831 = vld [vmem:[%s1434 + $0xaa0] sm:$0xff]
        %v1832 = vld [vmem:[%s1434 + $0xaa8] sm:$0xff]
        %v1833 = vld [vmem:[%s1434 + $0xab0] sm:$0xff]
        %v1834 = vld [vmem:[%s1434 + $0xab8] sm:$0xff]
        %v1835 = vld [vmem:[%s1434 + $0xac0] sm:$0xff]
        %v1836 = vld [vmem:[%s1434 + $0xac8] sm:$0xff]
        %v1837 = vld [vmem:[%s1434 + $0xad0] sm:$0xff]
        %v1838 = vld [vmem:[%s1434 + $0xad8] sm:$0xff]
        %v1839 = vld [vmem:[%s1434 + $0xae0] sm:$0xff]
        %v1840 = vld [vmem:[%s1434 + $0xae8] sm:$0xff]
        %v1841 = vld [vmem:[%s1434 + $0xaf0] sm:$0xff]
        %v1842 = vld [vmem:[%s1434 + $0xaf8] sm:$0xff]
        %v1843 = vld [vmem:[%s1434 + $0xb00] sm:$0xff]
        %v1844 = vld [vmem:[%s1434 + $0xb08] sm:$0xff]
        %v1845 = vld [vmem:[%s1434 + $0xb10] sm:$0xff]
        %v1846 = vld [vmem:[%s1434 + $0xb18] sm:$0xff]
        %v1847 = vld [vmem:[%s1434 + $0xb20] sm:$0xff]
        %v1848 = vld [vmem:[%s1434 + $0xb28] sm:$0xff]
        %v1849 = vld [vmem:[%s1434 + $0xb30] sm:$0xff]
        %v1850 = vld [vmem:[%s1434 + $0xb38] sm:$0xff]
        %v1851 = vld [vmem:[%s1434 + $0xb40] sm:$0xff]
        %v1852 = vld [vmem:[%s1434 + $0xb48] sm:$0xff]
        %v1853 = vld [vmem:[%s1434 + $0xb50] sm:$0xff]
        %v1854 = vld [vmem:[%s1434 + $0xb58] sm:$0xff]
        %v1855 = vld [vmem:[%s1434 + $0xb60] sm:$0xff]
        %v1856 = vld [vmem:[%s1434 + $0xb68] sm:$0xff]
        %v1857 = vld [vmem:[%s1434 + $0xb70] sm:$0xff]
        %v1858 = vld [vmem:[%s1434 + $0xb78] sm:$0xff]
        %v1859 = vld [vmem:[%s1434 + $0xb80] sm:$0xff]
        %v1860 = vld [vmem:[%s1434 + $0xb88] sm:$0xff]
        %v1861 = vld [vmem:[%s1434 + $0xb90] sm:$0xff]
        %v1862 = vld [vmem:[%s1434 + $0xb98] sm:$0xff]
        %v1863 = vld [vmem:[%s1434 + $0xba0] sm:$0xff]
        %v1864 = vld [vmem:[%s1434 + $0xba8] sm:$0xff]
        %v1865 = vld [vmem:[%s1434 + $0xbb0] sm:$0xff]
        %v1866 = vld [vmem:[%s1434 + $0xbb8] sm:$0xff]
        %v1867 = vld [vmem:[%s1434 + $0xbc0] sm:$0xff]
        %v1868 = vld [vmem:[%s1434 + $0xbc8] sm:$0xff]
        %v1869 = vld [vmem:[%s1434 + $0xbd0] sm:$0xff]
        %v1870 = vld [vmem:[%s1434 + $0xbd8] sm:$0xff]
        %v1871 = vld [vmem:[%s1434 + $0xbe0] sm:$0xff]
        %v1872 = vld [vmem:[%s1434 + $0xbe8] sm:$0xff]
        %v1873 = vld [vmem:[%s1434 + $0xbf0] sm:$0xff]
        %v1874 = vld [vmem:[%s1434 + $0xbf8] sm:$0xff]
        %v1875 = vld [vmem:[%s1434 + $0xc00] sm:$0xff]
        %v1876 = vld [vmem:[%s1434 + $0xc08] sm:$0xff]
        %v1877 = vld [vmem:[%s1434 + $0xc10] sm:$0xff]
        %v1878 = vld [vmem:[%s1434 + $0xc18] sm:$0xff]
        %v1879 = vld [vmem:[%s1434 + $0xc20] sm:$0xff]
        %v1880 = vld [vmem:[%s1434 + $0xc28] sm:$0xff]
        %v1881 = vld [vmem:[%s1434 + $0xc30] sm:$0xff]
        %v1882 = vld [vmem:[%s1434 + $0xc38] sm:$0xff]
        %v1883 = vld [vmem:[%s1434 + $0xc40] sm:$0xff]
        %v1884 = vld [vmem:[%s1434 + $0xc48] sm:$0xff]
        %v1885 = vld [vmem:[%s1434 + $0xc50] sm:$0xff]
        %v1886 = vld [vmem:[%s1434 + $0xc58] sm:$0xff]
        %v1887 = vld [vmem:[%s1434 + $0xc60] sm:$0xff]
        %v1888 = vld [vmem:[%s1434 + $0xc68] sm:$0xff]
        %v1889 = vld [vmem:[%s1434 + $0xc70] sm:$0xff]
        %v1890 = vld [vmem:[%s1434 + $0xc78] sm:$0xff]
        %v1891 = vld [vmem:[%s1434 + $0xc80] sm:$0xff]
        %v1892 = vld [vmem:[%s1434 + $0xc88] sm:$0xff]
        %v1893 = vld [vmem:[%s1434 + $0xc90] sm:$0xff]
        %v1894 = vld [vmem:[%s1434 + $0xc98] sm:$0xff]
        %v1895 = vld [vmem:[%s1434 + $0xca0] sm:$0xff]
        %v1896 = vld [vmem:[%s1434 + $0xca8] sm:$0xff]
        %v1897 = vld [vmem:[%s1434 + $0xcb0] sm:$0xff]
        %v1898 = vld [vmem:[%s1434 + $0xcb8] sm:$0xff]
        %v1899 = vld [vmem:[%s1434 + $0xcc0] sm:$0xff]
        %v1900 = vld [vmem:[%s1434 + $0xcc8] sm:$0xff]
        %v1901 = vld [vmem:[%s1434 + $0xcd0] sm:$0xff]
        %v1902 = vld [vmem:[%s1434 + $0xcd8] sm:$0xff]
        %v1903 = vld [vmem:[%s1434 + $0xce0] sm:$0xff]
        %v1904 = vld [vmem:[%s1434 + $0xce8] sm:$0xff]
        %v1905 = vld [vmem:[%s1434 + $0xcf0] sm:$0xff]
        %v1906 = vld [vmem:[%s1434 + $0xcf8] sm:$0xff]
        %v1907 = vld [vmem:[%s1434 + $0xd00] sm:$0xff]
        %v1908 = vld [vmem:[%s1434 + $0xd08] sm:$0xff]
        %v1909 = vld [vmem:[%s1434 + $0xd10] sm:$0xff]
        %v1910 = vld [vmem:[%s1434 + $0xd18] sm:$0xff]
        %v1911 = vld [vmem:[%s1434 + $0xd20] sm:$0xff]
        %v1912 = vld [vmem:[%s1434 + $0xd28] sm:$0xff]
        %v1913 = vld [vmem:[%s1434 + $0xd30] sm:$0xff]
        %v1914 = vld [vmem:[%s1434 + $0xd38] sm:$0xff]
        %v1915 = vld [vmem:[%s1434 + $0xd40] sm:$0xff]
        %v1916 = vld [vmem:[%s1434 + $0xd48] sm:$0xff]
        %v1917 = vld [vmem:[%s1434 + $0xd50] sm:$0xff]
        %v1918 = vld [vmem:[%s1434 + $0xd58] sm:$0xff]
        %v1919 = vld [vmem:[%s1434 + $0xd60] sm:$0xff]
        %v1920 = vld [vmem:[%s1434 + $0xd68] sm:$0xff]
        %v1921 = vld [vmem:[%s1434 + $0xd70] sm:$0xff]
        %v1922 = vld [vmem:[%s1434 + $0xd78] sm:$0xff]
        %v1923 = vld [vmem:[%s1434 + $0xd80] sm:$0xff]
        %v1924 = vld [vmem:[%s1434 + $0xd88] sm:$0xff]
        %v1925 = vld [vmem:[%s1434 + $0xd90] sm:$0xff]
        %v1926 = vld [vmem:[%s1434 + $0xd98] sm:$0xff]
        %v1927 = vld [vmem:[%s1434 + $0xda0] sm:$0xff]
        %v1928 = vld [vmem:[%s1434 + $0xda8] sm:$0xff]
        %v1929 = vld [vmem:[%s1434 + $0xdb0] sm:$0xff]
        %v1930 = vld [vmem:[%s1434 + $0xdb8] sm:$0xff]
        %v1931 = vld [vmem:[%s1434 + $0xdc0] sm:$0xff]
        %v1932 = vld [vmem:[%s1434 + $0xdc8] sm:$0xff]
        %v1933 = vld [vmem:[%s1434 + $0xdd0] sm:$0xff]
        %v1934 = vld [vmem:[%s1434 + $0xdd8] sm:$0xff]
        %v1935 = vld [vmem:[%s1434 + $0xde0] sm:$0xff]
        %v1936 = vld [vmem:[%s1434 + $0xde8] sm:$0xff]
        %v1937 = vld [vmem:[%s1434 + $0xdf0] sm:$0xff]
        %v1938 = vld [vmem:[%s1434 + $0xdf8] sm:$0xff]
        %v1939 = vld [vmem:[%s1434 + $0xe00] sm:$0xff]
        %v1940 = vld [vmem:[%s1434 + $0xe08] sm:$0xff]
        %v1941 = vld [vmem:[%s1434 + $0xe10] sm:$0xff]
        %v1942 = vld [vmem:[%s1434 + $0xe18] sm:$0xff]
        %v1943 = vld [vmem:[%s1434 + $0xe20] sm:$0xff]
        %v1944 = vld [vmem:[%s1434 + $0xe28] sm:$0xff]
        %v1945 = vld [vmem:[%s1434 + $0xe30] sm:$0xff]
        %v1946 = vld [vmem:[%s1434 + $0xe38] sm:$0xff]
        %v1947 = vld [vmem:[%s1434 + $0xe40] sm:$0xff]
        %v1948 = vld [vmem:[%s1434 + $0xe48] sm:$0xff]
        %v1949 = vld [vmem:[%s1434 + $0xe50] sm:$0xff]
        %v1950 = vld [vmem:[%s1434 + $0xe58] sm:$0xff]
        %v1951 = vld [vmem:[%s1434 + $0xe60] sm:$0xff]
        %v1952 = vld [vmem:[%s1434 + $0xe68] sm:$0xff]
        %v1953 = vld [vmem:[%s1434 + $0xe70] sm:$0xff]
        %v1954 = vld [vmem:[%s1434 + $0xe78] sm:$0xff]
        %v1955 = vld [vmem:[%s1434 + $0xe80] sm:$0xff]
        %v1956 = vld [vmem:[%s1434 + $0xe88] sm:$0xff]
        %v1957 = vld [vmem:[%s1434 + $0xe90] sm:$0xff]
        %v1958 = vld [vmem:[%s1434 + $0xe98] sm:$0xff]
        %v1959 = vld [vmem:[%s1434 + $0xea0] sm:$0xff]
        %v1960 = vld [vmem:[%s1434 + $0xea8] sm:$0xff]
        %v1961 = vld [vmem:[%s1434 + $0xeb0] sm:$0xff]
        %v1962 = vld [vmem:[%s1434 + $0xeb8] sm:$0xff]
        %v1963 = vld [vmem:[%s1434 + $0xec0] sm:$0xff]
        %v1964 = vld [vmem:[%s1434 + $0xec8] sm:$0xff]
        %v1965 = vld [vmem:[%s1434 + $0xed0] sm:$0xff]
        %v1966 = vld [vmem:[%s1434 + $0xed8] sm:$0xff]
        %v1967 = vld [vmem:[%s1434 + $0xee0] sm:$0xff]
        %v1968 = vld [vmem:[%s1434 + $0xee8] sm:$0xff]
        %v1969 = vld [vmem:[%s1434 + $0xef0] sm:$0xff]
        %v1970 = vld [vmem:[%s1434 + $0xef8] sm:$0xff]
        %v1971 = vld [vmem:[%s1434 + $0xf00] sm:$0xff]
        %v1972 = vld [vmem:[%s1434 + $0xf08] sm:$0xff]
        %v1973 = vld [vmem:[%s1434 + $0xf10] sm:$0xff]
        %v1974 = vld [vmem:[%s1434 + $0xf18] sm:$0xff]
        %v1975 = vld [vmem:[%s1434 + $0xf20] sm:$0xff]
        %v1976 = vld [vmem:[%s1434 + $0xf28] sm:$0xff]
        %v1977 = vld [vmem:[%s1434 + $0xf30] sm:$0xff]
        %v1978 = vld [vmem:[%s1434 + $0xf38] sm:$0xff]
        %v1979 = vld [vmem:[%s1434 + $0xf40] sm:$0xff]
        %v1980 = vld [vmem:[%s1434 + $0xf48] sm:$0xff]
        %v1981 = vld [vmem:[%s1434 + $0xf50] sm:$0xff]
        %v1982 = vld [vmem:[%s1434 + $0xf58] sm:$0xff]
        %v1983 = vld [vmem:[%s1434 + $0xf60] sm:$0xff]
        %v1984 = vld [vmem:[%s1434 + $0xf68] sm:$0xff]
        %v1985 = vld [vmem:[%s1434 + $0xf70] sm:$0xff]
        %v1986 = vld [vmem:[%s1434 + $0xf78] sm:$0xff]
        %v1987 = vld [vmem:[%s1434 + $0xf80] sm:$0xff]
        %v1988 = vld [vmem:[%s1434 + $0xf88] sm:$0xff]
        %v1989 = vld [vmem:[%s1434 + $0xf90] sm:$0xff]
        %v1990 = vld [vmem:[%s1434 + $0xf98] sm:$0xff]
        %v1991 = vld [vmem:[%s1434 + $0xfa0] sm:$0xff]
        %v1992 = vld [vmem:[%s1434 + $0xfa8] sm:$0xff]
        %v1993 = vld [vmem:[%s1434 + $0xfb0] sm:$0xff]
        %v1994 = vld [vmem:[%s1434 + $0xfb8] sm:$0xff]
        %v1995 = vld [vmem:[%s1434 + $0xfc0] sm:$0xff]
        %v1996 = vld [vmem:[%s1434 + $0xfc8] sm:$0xff]
        %v1997 = vld [vmem:[%s1434 + $0xfd0] sm:$0xff]
        %v1998 = vld [vmem:[%s1434 + $0xfd8] sm:$0xff]
        %v1999 = vld [vmem:[%s1434 + $0xfe0] sm:$0xff]
        %v2000 = vld [vmem:[%s1434 + $0xfe8] sm:$0xff]
        %v2001 = vld [vmem:[%s1434 + $0xff0] sm:$0xff]
        %v2002 = vld [vmem:[%s1434 + $0xff8] sm:$0xff]
        %v2003 = vld [vmem:[%s1434 + $0x1000] sm:$0xff]
        %v2004 = vld [vmem:[%s1434 + $0x1008] sm:$0xff]
        %v2005 = vld [vmem:[%s1434 + $0x1010] sm:$0xff]
        %v2006 = vld [vmem:[%s1434 + $0x1018] sm:$0xff]
        %v2007 = vld [vmem:[%s1434 + $0x1020] sm:$0xff]
        %v2008 = vld [vmem:[%s1434 + $0x1028] sm:$0xff]
        %v2009 = vld [vmem:[%s1434 + $0x1030] sm:$0xff]
        %v2010 = vld [vmem:[%s1434 + $0x1038] sm:$0xff]
        %v2011 = vld [vmem:[%s1434 + $0x1040] sm:$0xff]
        %v2012 = vld [vmem:[%s1434 + $0x1048] sm:$0xff]
        %v2013 = vld [vmem:[%s1434 + $0x1050] sm:$0xff]
        %v2014 = vld [vmem:[%s1434 + $0x1058] sm:$0xff]
        %v2015 = vld [vmem:[%s1434 + $0x1060] sm:$0xff]
        %v2016 = vld [vmem:[%s1434 + $0x1068] sm:$0xff]
        %v2017 = vld [vmem:[%s1434 + $0x1070] sm:$0xff]
        %v2018 = vld [vmem:[%s1434 + $0x1078] sm:$0xff]
        %v2019 = vld [vmem:[%s1434 + $0x1080] sm:$0xff]
        %v2020 = vld [vmem:[%s1434 + $0x1088] sm:$0xff]
        %v2021 = vld [vmem:[%s1434 + $0x1090] sm:$0xff]
        %v2022 = vld [vmem:[%s1434 + $0x1098] sm:$0xff]
        %v2023 = vld [vmem:[%s1434 + $0x10a0] sm:$0xff]
        %v2024 = vld [vmem:[%s1434 + $0x10a8] sm:$0xff]
        %v2025 = vld [vmem:[%s1434 + $0x10b0] sm:$0xff]
        %v2026 = vld [vmem:[%s1434 + $0x10b8] sm:$0xff]
        %v2027 = vld [vmem:[%s1434 + $0x10c0] sm:$0xff]
        %v2028 = vld [vmem:[%s1434 + $0x10c8] sm:$0xff]
        %v2029 = vld [vmem:[%s1434 + $0x10d0] sm:$0xff]
        %v2030 = vld [vmem:[%s1434 + $0x10d8] sm:$0xff]
        %v2031 = vld [vmem:[%s1434 + $0x10e0] sm:$0xff]
        %v2032 = vld [vmem:[%s1434 + $0x10e8] sm:$0xff]
        %v2033 = vld [vmem:[%s1434 + $0x10f0] sm:$0xff]
        %v2034 = vld [vmem:[%s1434 + $0x10f8] sm:$0xff]
        %v2035 = vld [vmem:[%s1434 + $0x1100] sm:$0xff]
        %v2036 = vld [vmem:[%s1434 + $0x1108] sm:$0xff]
        %v2037 = vld [vmem:[%s1434 + $0x1110] sm:$0xff]
        %v2038 = vld [vmem:[%s1434 + $0x1118] sm:$0xff]
        %v2039 = vld [vmem:[%s1434 + $0x1120] sm:$0xff]
        %v2040 = vld [vmem:[%s1434 + $0x1128] sm:$0xff]
        %v2041 = vld [vmem:[%s1434 + $0x1130] sm:$0xff]
        %v2042 = vld [vmem:[%s1434 + $0x1138] sm:$0xff]
        %v2043 = vld [vmem:[%s1434 + $0x1140] sm:$0xff]
        %v2044 = vld [vmem:[%s1434 + $0x1148] sm:$0xff]
        %v2045 = vld [vmem:[%s1434 + $0x1150] sm:$0xff]
        %v2046 = vld [vmem:[%s1434 + $0x1158] sm:$0xff]
        %v2047 = vld [vmem:[%s1434 + $0x1160] sm:$0xff]
        %v2048 = vld [vmem:[%s1434 + $0x1168] sm:$0xff]
        %v2049 = vld [vmem:[%s1434 + $0x1170] sm:$0xff]
        %v2050 = vld [vmem:[%s1434 + $0x1178] sm:$0xff]
        %v2051 = vld [vmem:[%s1434 + $0x1180] sm:$0xff]
        %v2052 = vld [vmem:[%s1434 + $0x1188] sm:$0xff]
        %v2053 = vld [vmem:[%s1434 + $0x1190] sm:$0xff]
        %v2054 = vld [vmem:[%s1434 + $0x1198] sm:$0xff]
        %v2055 = vld [vmem:[%s1434 + $0x11a0] sm:$0xff]
        %v2056 = vld [vmem:[%s1434 + $0x11a8] sm:$0xff]
        %v2057 = vld [vmem:[%s1434 + $0x11b0] sm:$0xff]
        %v2058 = vld [vmem:[%s1434 + $0x11b8] sm:$0xff]
        %v2059 = vld [vmem:[%s1434 + $0x11c0] sm:$0xff]
        %v2060 = vld [vmem:[%s1434 + $0x11c8] sm:$0xff]
        %v2061 = vld [vmem:[%s1434 + $0x11d0] sm:$0xff]
        %v2062 = vld [vmem:[%s1434 + $0x11d8] sm:$0xff]
        %v2063 = vld [vmem:[%s1434 + $0x11e0] sm:$0xff]
        %v2064 = vld [vmem:[%s1434 + $0x11e8] sm:$0xff]
        %v2065 = vld [vmem:[%s1434 + $0x11f0] sm:$0xff]
        %v2066 = vld [vmem:[%s1434 + $0x11f8] sm:$0xff]
        %v2067 = vld [vmem:[%s1434 + $0x1200] sm:$0xff]
        %v2068 = vld [vmem:[%s1434 + $0x1208] sm:$0xff]
        %v2069 = vld [vmem:[%s1434 + $0x1210] sm:$0xff]
        %v2070 = vld [vmem:[%s1434 + $0x1218] sm:$0xff]
        %v2071 = vld [vmem:[%s1434 + $0x1220] sm:$0xff]
        %v2072 = vld [vmem:[%s1434 + $0x1228] sm:$0xff]
        %v2073 = vld [vmem:[%s1434 + $0x1230] sm:$0xff]
        %v2074 = vld [vmem:[%s1434 + $0x1238] sm:$0xff]
        %v2075 = vld [vmem:[%s1434 + $0x1240] sm:$0xff]
        %v2076 = vld [vmem:[%s1434 + $0x1248] sm:$0xff]
        %v2077 = vld [vmem:[%s1434 + $0x1250] sm:$0xff]
        %v2078 = vld [vmem:[%s1434 + $0x1258] sm:$0xff]
        %v2079 = vld [vmem:[%s1434 + $0x1260] sm:$0xff]
        %v2080 = vld [vmem:[%s1434 + $0x1268] sm:$0xff]
        %v2081 = vld [vmem:[%s1434 + $0x1270] sm:$0xff]
        %v2082 = vld [vmem:[%s1434 + $0x1278] sm:$0xff]
        %v2083 = vld [vmem:[%s1434 + $0x1280] sm:$0xff]
        %v2084 = vld [vmem:[%s1434 + $0x1288] sm:$0xff]
        %v2085 = vld [vmem:[%s1434 + $0x1290] sm:$0xff]
        %v2086 = vld [vmem:[%s1434 + $0x1298] sm:$0xff]
        %v2087 = vld [vmem:[%s1434 + $0x12a0] sm:$0xff]
        %v2088 = vld [vmem:[%s1434 + $0x12a8] sm:$0xff]
        %v2089 = vld [vmem:[%s1434 + $0x12b0] sm:$0xff]
        %v2090 = vld [vmem:[%s1434 + $0x12b8] sm:$0xff]
        %v2091 = vunpack.c.l.s8.bf16 %v1491
        %v2092 = vunpack.c.l.s8.bf16 %v1492
        %v2093 = vunpack.c.l.s8.bf16 %v1493
        %v2094 = vunpack.c.h.s8.bf16 %v1491
        %v2095 = vunpack.c.h.s8.bf16 %v1492
        %v2096 = vunpack.c.h.s8.bf16 %v1493
        %v2097 = vunpack.c.l.s8.bf16 %v1494
        %v2098 = vunpack.c.l.s8.bf16 %v1495
        %v2099 = vunpack.c.l.s8.bf16 %v1496
        %v2100 = vunpack.c.h.s8.bf16 %v1494
        %v2101 = vunpack.c.h.s8.bf16 %v1495
        %v2102 = vunpack.c.h.s8.bf16 %v1496
        %v2103 = vunpack.c.l.s8.bf16 %v1497
        %v2104 = vunpack.c.l.s8.bf16 %v1498
        %v2105 = vunpack.c.l.s8.bf16 %v1499
        %v2106 = vunpack.c.h.s8.bf16 %v1497
        %v2107 = vunpack.c.h.s8.bf16 %v1498
        %v2108 = vunpack.c.h.s8.bf16 %v1499
        %v2109 = vunpack.c.l.s8.bf16 %v1500
        %v2110 = vunpack.c.l.s8.bf16 %v1501
        %v2111 = vunpack.c.l.s8.bf16 %v1502
        %v2112 = vunpack.c.h.s8.bf16 %v1500
        %v2113 = vunpack.c.h.s8.bf16 %v1501
        %v2114 = vunpack.c.h.s8.bf16 %v1502
        %v2115 = vunpack.c.l.s8.bf16 %v1503
        %v2116 = vunpack.c.l.s8.bf16 %v1504
        %v2117 = vunpack.c.l.s8.bf16 %v1505
        %v2118 = vunpack.c.h.s8.bf16 %v1503
        %v2119 = vunpack.c.h.s8.bf16 %v1504
        %v2120 = vunpack.c.h.s8.bf16 %v1505
        %v2121 = vunpack.c.l.s8.bf16 %v1506
        %v2122 = vunpack.c.l.s8.bf16 %v1507
        %v2123 = vunpack.c.l.s8.bf16 %v1508
        %v2124 = vunpack.c.h.s8.bf16 %v1506
        %v2125 = vunpack.c.h.s8.bf16 %v1507
        %v2126 = vunpack.c.h.s8.bf16 %v1508
        %v2127 = vunpack.c.l.s8.bf16 %v1509
        %v2128 = vunpack.c.l.s8.bf16 %v1510
        %v2129 = vunpack.c.l.s8.bf16 %v1511
        %v2130 = vunpack.c.h.s8.bf16 %v1509
        %v2131 = vunpack.c.h.s8.bf16 %v1510
        %v2132 = vunpack.c.h.s8.bf16 %v1511
        %v2133 = vunpack.c.l.s8.bf16 %v1512
        %v2134 = vunpack.c.l.s8.bf16 %v1513
        %v2135 = vunpack.c.l.s8.bf16 %v1514
        %v2136 = vunpack.c.h.s8.bf16 %v1512
        %v2137 = vunpack.c.h.s8.bf16 %v1513
        %v2138 = vunpack.c.h.s8.bf16 %v1514
        %v2139 = vunpack.c.l.s8.bf16 %v1515
        %v2140 = vunpack.c.l.s8.bf16 %v1516
        %v2141 = vunpack.c.l.s8.bf16 %v1517
        %v2142 = vunpack.c.h.s8.bf16 %v1515
        %v2143 = vunpack.c.h.s8.bf16 %v1516
        %v2144 = vunpack.c.h.s8.bf16 %v1517
        %v2145 = vunpack.c.l.s8.bf16 %v1518
        %v2146 = vunpack.c.l.s8.bf16 %v1519
        %v2147 = vunpack.c.l.s8.bf16 %v1520
        %v2148 = vunpack.c.h.s8.bf16 %v1518
        %v2149 = vunpack.c.h.s8.bf16 %v1519
        %v2150 = vunpack.c.h.s8.bf16 %v1520
        %v2151 = vunpack.c.l.s8.bf16 %v1521
        %v2152 = vunpack.c.l.s8.bf16 %v1522
        %v2153 = vunpack.c.l.s8.bf16 %v1523
        %v2154 = vunpack.c.h.s8.bf16 %v1521
        %v2155 = vunpack.c.h.s8.bf16 %v1522
        %v2156 = vunpack.c.h.s8.bf16 %v1523
        %v2157 = vunpack.c.l.s8.bf16 %v1524
        %v2158 = vunpack.c.l.s8.bf16 %v1525
        %v2159 = vunpack.c.l.s8.bf16 %v1526
        %v2160 = vunpack.c.h.s8.bf16 %v1524
        %v2161 = vunpack.c.h.s8.bf16 %v1525
        %v2162 = vunpack.c.h.s8.bf16 %v1526
        %v2163 = vunpack.c.l.s8.bf16 %v1527
        %v2164 = vunpack.c.l.s8.bf16 %v1528
        %v2165 = vunpack.c.l.s8.bf16 %v1529
        %v2166 = vunpack.c.h.s8.bf16 %v1527
        %v2167 = vunpack.c.h.s8.bf16 %v1528
        %v2168 = vunpack.c.h.s8.bf16 %v1529
        %v2169 = vunpack.c.l.s8.bf16 %v1530
        %v2170 = vunpack.c.l.s8.bf16 %v1531
        %v2171 = vunpack.c.l.s8.bf16 %v1532
        %v2172 = vunpack.c.h.s8.bf16 %v1530
        %v2173 = vunpack.c.h.s8.bf16 %v1531
        %v2174 = vunpack.c.h.s8.bf16 %v1532
        %v2175 = vunpack.c.l.s8.bf16 %v1533
        %v2176 = vunpack.c.l.s8.bf16 %v1534
        %v2177 = vunpack.c.l.s8.bf16 %v1535
        %v2178 = vunpack.c.h.s8.bf16 %v1533
        %v2179 = vunpack.c.h.s8.bf16 %v1534
        %v2180 = vunpack.c.h.s8.bf16 %v1535
        %v2181 = vunpack.c.l.s8.bf16 %v1536
        %v2182 = vunpack.c.l.s8.bf16 %v1537
        %v2183 = vunpack.c.l.s8.bf16 %v1538
        %v2184 = vunpack.c.h.s8.bf16 %v1536
        %v2185 = vunpack.c.h.s8.bf16 %v1537
        %v2186 = vunpack.c.h.s8.bf16 %v1538
        %v2187 = vunpack.c.l.s8.bf16 %v1539
        %v2188 = vunpack.c.l.s8.bf16 %v1540
        %v2189 = vunpack.c.l.s8.bf16 %v1541
        %v2190 = vunpack.c.h.s8.bf16 %v1539
        %v2191 = vunpack.c.h.s8.bf16 %v1540
        %v2192 = vunpack.c.h.s8.bf16 %v1541
        %v2193 = vunpack.c.l.s8.bf16 %v1542
        %v2194 = vunpack.c.l.s8.bf16 %v1543
        %v2195 = vunpack.c.l.s8.bf16 %v1544
        %v2196 = vunpack.c.h.s8.bf16 %v1542
        %v2197 = vunpack.c.h.s8.bf16 %v1543
        %v2198 = vunpack.c.h.s8.bf16 %v1544
        %v2199 = vunpack.c.l.s8.bf16 %v1545
        %v2200 = vunpack.c.l.s8.bf16 %v1546
        %v2201 = vunpack.c.l.s8.bf16 %v1547
        %v2202 = vunpack.c.h.s8.bf16 %v1545
        %v2203 = vunpack.c.h.s8.bf16 %v1546
        %v2204 = vunpack.c.h.s8.bf16 %v1547
        %v2205 = vunpack.c.l.s8.bf16 %v1548
        %v2206 = vunpack.c.l.s8.bf16 %v1549
        %v2207 = vunpack.c.l.s8.bf16 %v1550
        %v2208 = vunpack.c.h.s8.bf16 %v1548
        %v2209 = vunpack.c.h.s8.bf16 %v1549
        %v2210 = vunpack.c.h.s8.bf16 %v1550
        %v2211 = vunpack.c.l.s8.bf16 %v1551
        %v2212 = vunpack.c.l.s8.bf16 %v1552
        %v2213 = vunpack.c.l.s8.bf16 %v1553
        %v2214 = vunpack.c.h.s8.bf16 %v1551
        %v2215 = vunpack.c.h.s8.bf16 %v1552
        %v2216 = vunpack.c.h.s8.bf16 %v1553
        %v2217 = vunpack.c.l.s8.bf16 %v1554
        %v2218 = vunpack.c.l.s8.bf16 %v1555
        %v2219 = vunpack.c.l.s8.bf16 %v1556
        %v2220 = vunpack.c.h.s8.bf16 %v1554
        %v2221 = vunpack.c.h.s8.bf16 %v1555
        %v2222 = vunpack.c.h.s8.bf16 %v1556
        %v2223 = vunpack.c.l.s8.bf16 %v1557
        %v2224 = vunpack.c.l.s8.bf16 %v1558
        %v2225 = vunpack.c.l.s8.bf16 %v1559
        %v2226 = vunpack.c.h.s8.bf16 %v1557
        %v2227 = vunpack.c.h.s8.bf16 %v1558
        %v2228 = vunpack.c.h.s8.bf16 %v1559
        %v2229 = vunpack.c.l.s8.bf16 %v1560
        %v2230 = vunpack.c.l.s8.bf16 %v1561
        %v2231 = vunpack.c.l.s8.bf16 %v1562
        %v2232 = vunpack.c.h.s8.bf16 %v1560
        %v2233 = vunpack.c.h.s8.bf16 %v1561
        %v2234 = vunpack.c.h.s8.bf16 %v1562
        %v2235 = vunpack.c.l.s8.bf16 %v1563
        %v2236 = vunpack.c.l.s8.bf16 %v1564
        %v2237 = vunpack.c.l.s8.bf16 %v1565
        %v2238 = vunpack.c.h.s8.bf16 %v1563
        %v2239 = vunpack.c.h.s8.bf16 %v1564
        %v2240 = vunpack.c.h.s8.bf16 %v1565
        %v2241 = vunpack.c.l.s8.bf16 %v1566
        %v2242 = vunpack.c.l.s8.bf16 %v1567
        %v2243 = vunpack.c.l.s8.bf16 %v1568
        %v2244 = vunpack.c.h.s8.bf16 %v1566
        %v2245 = vunpack.c.h.s8.bf16 %v1567
        %v2246 = vunpack.c.h.s8.bf16 %v1568
        %v2247 = vunpack.c.l.s8.bf16 %v1569
        %v2248 = vunpack.c.l.s8.bf16 %v1570
        %v2249 = vunpack.c.l.s8.bf16 %v1571
        %v2250 = vunpack.c.h.s8.bf16 %v1569
        %v2251 = vunpack.c.h.s8.bf16 %v1570
        %v2252 = vunpack.c.h.s8.bf16 %v1571
        %v2253 = vunpack.c.l.s8.bf16 %v1572
        %v2254 = vunpack.c.l.s8.bf16 %v1573
        %v2255 = vunpack.c.l.s8.bf16 %v1574
        %v2256 = vunpack.c.h.s8.bf16 %v1572
        %v2257 = vunpack.c.h.s8.bf16 %v1573
        %v2258 = vunpack.c.h.s8.bf16 %v1574
        %v2259 = vunpack.c.l.s8.bf16 %v1575
        %v2260 = vunpack.c.l.s8.bf16 %v1576
        %v2261 = vunpack.c.l.s8.bf16 %v1577
        %v2262 = vunpack.c.h.s8.bf16 %v1575
        %v2263 = vunpack.c.h.s8.bf16 %v1576
        %v2264 = vunpack.c.h.s8.bf16 %v1577
        %v2265 = vunpack.c.l.s8.bf16 %v1578
        %v2266 = vunpack.c.l.s8.bf16 %v1579
        %v2267 = vunpack.c.l.s8.bf16 %v1580
        %v2268 = vunpack.c.h.s8.bf16 %v1578
        %v2269 = vunpack.c.h.s8.bf16 %v1579
        %v2270 = vunpack.c.h.s8.bf16 %v1580
        %v2271 = vunpack.c.l.s8.bf16 %v1581
        %v2272 = vunpack.c.l.s8.bf16 %v1582
        %v2273 = vunpack.c.l.s8.bf16 %v1583
        %v2274 = vunpack.c.h.s8.bf16 %v1581
        %v2275 = vunpack.c.h.s8.bf16 %v1582
        %v2276 = vunpack.c.h.s8.bf16 %v1583
        %v2277 = vunpack.c.l.s8.bf16 %v1584
        %v2278 = vunpack.c.l.s8.bf16 %v1585
        %v2279 = vunpack.c.l.s8.bf16 %v1586
        %v2280 = vunpack.c.h.s8.bf16 %v1584
        %v2281 = vunpack.c.h.s8.bf16 %v1585
        %v2282 = vunpack.c.h.s8.bf16 %v1586
        %v2283 = vunpack.c.l.s8.bf16 %v1587
        %v2284 = vunpack.c.l.s8.bf16 %v1588
        %v2285 = vunpack.c.l.s8.bf16 %v1589
        %v2286 = vunpack.c.h.s8.bf16 %v1587
        %v2287 = vunpack.c.h.s8.bf16 %v1588
        %v2288 = vunpack.c.h.s8.bf16 %v1589
        %v2289 = vunpack.c.l.s8.bf16 %v1590
        %v2290 = vunpack.c.l.s8.bf16 %v1591
        %v2291 = vunpack.c.l.s8.bf16 %v1592
        %v2292 = vunpack.c.h.s8.bf16 %v1590
        %v2293 = vunpack.c.h.s8.bf16 %v1591
        %v2294 = vunpack.c.h.s8.bf16 %v1592
        %v2295 = vunpack.c.l.s8.bf16 %v1593
        %v2296 = vunpack.c.l.s8.bf16 %v1594
        %v2297 = vunpack.c.l.s8.bf16 %v1595
        %v2298 = vunpack.c.h.s8.bf16 %v1593
        %v2299 = vunpack.c.h.s8.bf16 %v1594
        %v2300 = vunpack.c.h.s8.bf16 %v1595
        %v2301 = vunpack.c.l.s8.bf16 %v1596
        %v2302 = vunpack.c.l.s8.bf16 %v1597
        %v2303 = vunpack.c.l.s8.bf16 %v1598
        %v2304 = vunpack.c.h.s8.bf16 %v1596
        %v2305 = vunpack.c.h.s8.bf16 %v1597
        %v2306 = vunpack.c.h.s8.bf16 %v1598
        %v2307 = vunpack.c.l.s8.bf16 %v1599
        %v2308 = vunpack.c.l.s8.bf16 %v1600
        %v2309 = vunpack.c.l.s8.bf16 %v1601
        %v2310 = vunpack.c.h.s8.bf16 %v1599
        %v2311 = vunpack.c.h.s8.bf16 %v1600
        %v2312 = vunpack.c.h.s8.bf16 %v1601
        %v2313 = vunpack.c.l.s8.bf16 %v1602
        %v2314 = vunpack.c.l.s8.bf16 %v1603
        %v2315 = vunpack.c.l.s8.bf16 %v1604
        %v2316 = vunpack.c.h.s8.bf16 %v1602
        %v2317 = vunpack.c.h.s8.bf16 %v1603
        %v2318 = vunpack.c.h.s8.bf16 %v1604
        %v2319 = vunpack.c.l.s8.bf16 %v1605
        %v2320 = vunpack.c.l.s8.bf16 %v1606
        %v2321 = vunpack.c.l.s8.bf16 %v1607
        %v2322 = vunpack.c.h.s8.bf16 %v1605
        %v2323 = vunpack.c.h.s8.bf16 %v1606
        %v2324 = vunpack.c.h.s8.bf16 %v1607
        %v2325 = vunpack.c.l.s8.bf16 %v1608
        %v2326 = vunpack.c.l.s8.bf16 %v1609
        %v2327 = vunpack.c.l.s8.bf16 %v1610
        %v2328 = vunpack.c.h.s8.bf16 %v1608
        %v2329 = vunpack.c.h.s8.bf16 %v1609
        %v2330 = vunpack.c.h.s8.bf16 %v1610
        %v2331 = vunpack.c.l.s8.bf16 %v1611
        %v2332 = vunpack.c.l.s8.bf16 %v1612
        %v2333 = vunpack.c.l.s8.bf16 %v1613
        %v2334 = vunpack.c.h.s8.bf16 %v1611
        %v2335 = vunpack.c.h.s8.bf16 %v1612
        %v2336 = vunpack.c.h.s8.bf16 %v1613
        %v2337 = vunpack.c.l.s8.bf16 %v1614
        %v2338 = vunpack.c.l.s8.bf16 %v1615
        %v2339 = vunpack.c.l.s8.bf16 %v1616
        %v2340 = vunpack.c.h.s8.bf16 %v1614
        %v2341 = vunpack.c.h.s8.bf16 %v1615
        %v2342 = vunpack.c.h.s8.bf16 %v1616
        %v2343 = vunpack.c.l.s8.bf16 %v1617
        %v2344 = vunpack.c.l.s8.bf16 %v1618
        %v2345 = vunpack.c.l.s8.bf16 %v1619
        %v2346 = vunpack.c.h.s8.bf16 %v1617
        %v2347 = vunpack.c.h.s8.bf16 %v1618
        %v2348 = vunpack.c.h.s8.bf16 %v1619
        %v2349 = vunpack.c.l.s8.bf16 %v1620
        %v2350 = vunpack.c.l.s8.bf16 %v1621
        %v2351 = vunpack.c.l.s8.bf16 %v1622
        %v2352 = vunpack.c.h.s8.bf16 %v1620
        %v2353 = vunpack.c.h.s8.bf16 %v1621
        %v2354 = vunpack.c.h.s8.bf16 %v1622
        %v2355 = vunpack.c.l.s8.bf16 %v1623
        %v2356 = vunpack.c.l.s8.bf16 %v1624
        %v2357 = vunpack.c.l.s8.bf16 %v1625
        %v2358 = vunpack.c.h.s8.bf16 %v1623
        %v2359 = vunpack.c.h.s8.bf16 %v1624
        %v2360 = vunpack.c.h.s8.bf16 %v1625
        %v2361 = vunpack.c.l.s8.bf16 %v1626
        %v2362 = vunpack.c.l.s8.bf16 %v1627
        %v2363 = vunpack.c.l.s8.bf16 %v1628
        %v2364 = vunpack.c.h.s8.bf16 %v1626
        %v2365 = vunpack.c.h.s8.bf16 %v1627
        %v2366 = vunpack.c.h.s8.bf16 %v1628
        %v2367 = vunpack.c.l.s8.bf16 %v1629
        %v2368 = vunpack.c.l.s8.bf16 %v1630
        %v2369 = vunpack.c.l.s8.bf16 %v1631
        %v2370 = vunpack.c.h.s8.bf16 %v1629
        %v2371 = vunpack.c.h.s8.bf16 %v1630
        %v2372 = vunpack.c.h.s8.bf16 %v1631
        %v2373 = vunpack.c.l.s8.bf16 %v1632
        %v2374 = vunpack.c.l.s8.bf16 %v1633
        %v2375 = vunpack.c.l.s8.bf16 %v1634
        %v2376 = vunpack.c.h.s8.bf16 %v1632
        %v2377 = vunpack.c.h.s8.bf16 %v1633
        %v2378 = vunpack.c.h.s8.bf16 %v1634
        %v2379 = vunpack.c.l.s8.bf16 %v1635
        %v2380 = vunpack.c.l.s8.bf16 %v1636
        %v2381 = vunpack.c.l.s8.bf16 %v1637
        %v2382 = vunpack.c.h.s8.bf16 %v1635
        %v2383 = vunpack.c.h.s8.bf16 %v1636
        %v2384 = vunpack.c.h.s8.bf16 %v1637
        %v2385 = vunpack.c.l.s8.bf16 %v1638
        %v2386 = vunpack.c.l.s8.bf16 %v1639
        %v2387 = vunpack.c.l.s8.bf16 %v1640
        %v2388 = vunpack.c.h.s8.bf16 %v1638
        %v2389 = vunpack.c.h.s8.bf16 %v1639
        %v2390 = vunpack.c.h.s8.bf16 %v1640
        %v2391 = vunpack.c.l.s8.bf16 %v1641
        %v2392 = vunpack.c.l.s8.bf16 %v1642
        %v2393 = vunpack.c.l.s8.bf16 %v1643
        %v2394 = vunpack.c.h.s8.bf16 %v1641
        %v2395 = vunpack.c.h.s8.bf16 %v1642
        %v2396 = vunpack.c.h.s8.bf16 %v1643
        %v2397 = vunpack.c.l.s8.bf16 %v1644
        %v2398 = vunpack.c.l.s8.bf16 %v1645
        %v2399 = vunpack.c.l.s8.bf16 %v1646
        %v2400 = vunpack.c.h.s8.bf16 %v1644
        %v2401 = vunpack.c.h.s8.bf16 %v1645
        %v2402 = vunpack.c.h.s8.bf16 %v1646
        %v2403 = vunpack.c.l.s8.bf16 %v1647
        %v2404 = vunpack.c.l.s8.bf16 %v1648
        %v2405 = vunpack.c.l.s8.bf16 %v1649
        %v2406 = vunpack.c.h.s8.bf16 %v1647
        %v2407 = vunpack.c.h.s8.bf16 %v1648
        %v2408 = vunpack.c.h.s8.bf16 %v1649
        %v2409 = vunpack.c.l.s8.bf16 %v1650
        %v2410 = vunpack.c.l.s8.bf16 %v1651
        %v2411 = vunpack.c.l.s8.bf16 %v1652
        %v2412 = vunpack.c.h.s8.bf16 %v1650
        %v2413 = vunpack.c.h.s8.bf16 %v1651
        %v2414 = vunpack.c.h.s8.bf16 %v1652
        %v2415 = vunpack.c.l.s8.bf16 %v1653
        %v2416 = vunpack.c.l.s8.bf16 %v1654
        %v2417 = vunpack.c.l.s8.bf16 %v1655
        %v2418 = vunpack.c.h.s8.bf16 %v1653
        %v2419 = vunpack.c.h.s8.bf16 %v1654
        %v2420 = vunpack.c.h.s8.bf16 %v1655
        %v2421 = vunpack.c.l.s8.bf16 %v1656
        %v2422 = vunpack.c.l.s8.bf16 %v1657
        %v2423 = vunpack.c.l.s8.bf16 %v1658
        %v2424 = vunpack.c.h.s8.bf16 %v1656
        %v2425 = vunpack.c.h.s8.bf16 %v1657
        %v2426 = vunpack.c.h.s8.bf16 %v1658
        %v2427 = vunpack.c.l.s8.bf16 %v1659
        %v2428 = vunpack.c.l.s8.bf16 %v1660
        %v2429 = vunpack.c.l.s8.bf16 %v1661
        %v2430 = vunpack.c.h.s8.bf16 %v1659
        %v2431 = vunpack.c.h.s8.bf16 %v1660
        %v2432 = vunpack.c.h.s8.bf16 %v1661
        %v2433 = vunpack.c.l.s8.bf16 %v1662
        %v2434 = vunpack.c.l.s8.bf16 %v1663
        %v2435 = vunpack.c.l.s8.bf16 %v1664
        %v2436 = vunpack.c.h.s8.bf16 %v1662
        %v2437 = vunpack.c.h.s8.bf16 %v1663
        %v2438 = vunpack.c.h.s8.bf16 %v1664
        %v2439 = vunpack.c.l.s8.bf16 %v1665
        %v2440 = vunpack.c.l.s8.bf16 %v1666
        %v2441 = vunpack.c.l.s8.bf16 %v1667
        %v2442 = vunpack.c.h.s8.bf16 %v1665
        %v2443 = vunpack.c.h.s8.bf16 %v1666
        %v2444 = vunpack.c.h.s8.bf16 %v1667
        %v2445 = vunpack.c.l.s8.bf16 %v1668
        %v2446 = vunpack.c.l.s8.bf16 %v1669
        %v2447 = vunpack.c.l.s8.bf16 %v1670
        %v2448 = vunpack.c.h.s8.bf16 %v1668
        %v2449 = vunpack.c.h.s8.bf16 %v1669
        %v2450 = vunpack.c.h.s8.bf16 %v1670
        %v2451 = vunpack.c.l.s8.bf16 %v1671
        %v2452 = vunpack.c.l.s8.bf16 %v1672
        %v2453 = vunpack.c.l.s8.bf16 %v1673
        %v2454 = vunpack.c.h.s8.bf16 %v1671
        %v2455 = vunpack.c.h.s8.bf16 %v1672
        %v2456 = vunpack.c.h.s8.bf16 %v1673
        %v2457 = vunpack.c.l.s8.bf16 %v1674
        %v2458 = vunpack.c.l.s8.bf16 %v1675
        %v2459 = vunpack.c.l.s8.bf16 %v1676
        %v2460 = vunpack.c.h.s8.bf16 %v1674
        %v2461 = vunpack.c.h.s8.bf16 %v1675
        %v2462 = vunpack.c.h.s8.bf16 %v1676
        %v2463 = vunpack.c.l.s8.bf16 %v1677
        %v2464 = vunpack.c.l.s8.bf16 %v1678
        %v2465 = vunpack.c.l.s8.bf16 %v1679
        %v2466 = vunpack.c.h.s8.bf16 %v1677
        %v2467 = vunpack.c.h.s8.bf16 %v1678
        %v2468 = vunpack.c.h.s8.bf16 %v1679
        %v2469 = vunpack.c.l.s8.bf16 %v1680
        %v2470 = vunpack.c.l.s8.bf16 %v1681
        %v2471 = vunpack.c.l.s8.bf16 %v1682
        %v2472 = vunpack.c.h.s8.bf16 %v1680
        %v2473 = vunpack.c.h.s8.bf16 %v1681
        %v2474 = vunpack.c.h.s8.bf16 %v1682
        %v2475 = vunpack.c.l.s8.bf16 %v1683
        %v2476 = vunpack.c.l.s8.bf16 %v1684
        %v2477 = vunpack.c.l.s8.bf16 %v1685
        %v2478 = vunpack.c.h.s8.bf16 %v1683
        %v2479 = vunpack.c.h.s8.bf16 %v1684
        %v2480 = vunpack.c.h.s8.bf16 %v1685
        %v2481 = vunpack.c.l.s8.bf16 %v1686
        %v2482 = vunpack.c.l.s8.bf16 %v1687
        %v2483 = vunpack.c.l.s8.bf16 %v1688
        %v2484 = vunpack.c.h.s8.bf16 %v1686
        %v2485 = vunpack.c.h.s8.bf16 %v1687
        %v2486 = vunpack.c.h.s8.bf16 %v1688
        %v2487 = vunpack.c.l.s8.bf16 %v1689
        %v2488 = vunpack.c.l.s8.bf16 %v1690
        %v2489 = vunpack.c.l.s8.bf16 %v1691
        %v2490 = vunpack.c.h.s8.bf16 %v1689
        %v2491 = vunpack.c.h.s8.bf16 %v1690
        %v2492 = vunpack.c.h.s8.bf16 %v1691
        %v2493 = vunpack.c.l.s8.bf16 %v1692
        %v2494 = vunpack.c.l.s8.bf16 %v1693
        %v2495 = vunpack.c.l.s8.bf16 %v1694
        %v2496 = vunpack.c.h.s8.bf16 %v1692
        %v2497 = vunpack.c.h.s8.bf16 %v1693
        %v2498 = vunpack.c.h.s8.bf16 %v1694
        %v2499 = vunpack.c.l.s8.bf16 %v1695
        %v2500 = vunpack.c.l.s8.bf16 %v1696
        %v2501 = vunpack.c.l.s8.bf16 %v1697
        %v2502 = vunpack.c.h.s8.bf16 %v1695
        %v2503 = vunpack.c.h.s8.bf16 %v1696
        %v2504 = vunpack.c.h.s8.bf16 %v1697
        %v2505 = vunpack.c.l.s8.bf16 %v1698
        %v2506 = vunpack.c.l.s8.bf16 %v1699
        %v2507 = vunpack.c.l.s8.bf16 %v1700
        %v2508 = vunpack.c.h.s8.bf16 %v1698
        %v2509 = vunpack.c.h.s8.bf16 %v1699
        %v2510 = vunpack.c.h.s8.bf16 %v1700
        %v2511 = vunpack.c.l.s8.bf16 %v1701
        %v2512 = vunpack.c.l.s8.bf16 %v1702
        %v2513 = vunpack.c.l.s8.bf16 %v1703
        %v2514 = vunpack.c.h.s8.bf16 %v1701
        %v2515 = vunpack.c.h.s8.bf16 %v1702
        %v2516 = vunpack.c.h.s8.bf16 %v1703
        %v2517 = vunpack.c.l.s8.bf16 %v1704
        %v2518 = vunpack.c.l.s8.bf16 %v1705
        %v2519 = vunpack.c.l.s8.bf16 %v1706
        %v2520 = vunpack.c.h.s8.bf16 %v1704
        %v2521 = vunpack.c.h.s8.bf16 %v1705
        %v2522 = vunpack.c.h.s8.bf16 %v1706
        %v2523 = vunpack.c.l.s8.bf16 %v1707
        %v2524 = vunpack.c.l.s8.bf16 %v1708
        %v2525 = vunpack.c.l.s8.bf16 %v1709
        %v2526 = vunpack.c.h.s8.bf16 %v1707
        %v2527 = vunpack.c.h.s8.bf16 %v1708
        %v2528 = vunpack.c.h.s8.bf16 %v1709
        %v2529 = vunpack.c.l.s8.bf16 %v1710
        %v2530 = vunpack.c.l.s8.bf16 %v1711
        %v2531 = vunpack.c.l.s8.bf16 %v1712
        %v2532 = vunpack.c.h.s8.bf16 %v1710
        %v2533 = vunpack.c.h.s8.bf16 %v1711
        %v2534 = vunpack.c.h.s8.bf16 %v1712
        %v2535 = vunpack.c.l.s8.bf16 %v1713
        %v2536 = vunpack.c.l.s8.bf16 %v1714
        %v2537 = vunpack.c.l.s8.bf16 %v1715
        %v2538 = vunpack.c.h.s8.bf16 %v1713
        %v2539 = vunpack.c.h.s8.bf16 %v1714
        %v2540 = vunpack.c.h.s8.bf16 %v1715
        %v2541 = vunpack.c.l.s8.bf16 %v1716
        %v2542 = vunpack.c.l.s8.bf16 %v1717
        %v2543 = vunpack.c.l.s8.bf16 %v1718
        %v2544 = vunpack.c.h.s8.bf16 %v1716
        %v2545 = vunpack.c.h.s8.bf16 %v1717
        %v2546 = vunpack.c.h.s8.bf16 %v1718
        %v2547 = vunpack.c.l.s8.bf16 %v1719
        %v2548 = vunpack.c.l.s8.bf16 %v1720
        %v2549 = vunpack.c.l.s8.bf16 %v1721
        %v2550 = vunpack.c.h.s8.bf16 %v1719
        %v2551 = vunpack.c.h.s8.bf16 %v1720
        %v2552 = vunpack.c.h.s8.bf16 %v1721
        %v2553 = vunpack.c.l.s8.bf16 %v1722
        %v2554 = vunpack.c.l.s8.bf16 %v1723
        %v2555 = vunpack.c.l.s8.bf16 %v1724
        %v2556 = vunpack.c.h.s8.bf16 %v1722
        %v2557 = vunpack.c.h.s8.bf16 %v1723
        %v2558 = vunpack.c.h.s8.bf16 %v1724
        %v2559 = vunpack.c.l.s8.bf16 %v1725
        %v2560 = vunpack.c.l.s8.bf16 %v1726
        %v2561 = vunpack.c.l.s8.bf16 %v1727
        %v2562 = vunpack.c.h.s8.bf16 %v1725
        %v2563 = vunpack.c.h.s8.bf16 %v1726
        %v2564 = vunpack.c.h.s8.bf16 %v1727
        %v2565 = vunpack.c.l.s8.bf16 %v1728
        %v2566 = vunpack.c.l.s8.bf16 %v1729
        %v2567 = vunpack.c.l.s8.bf16 %v1730
        %v2568 = vunpack.c.h.s8.bf16 %v1728
        %v2569 = vunpack.c.h.s8.bf16 %v1729
        %v2570 = vunpack.c.h.s8.bf16 %v1730
        %v2571 = vunpack.c.l.s8.bf16 %v1731
        %v2572 = vunpack.c.l.s8.bf16 %v1732
        %v2573 = vunpack.c.l.s8.bf16 %v1733
        %v2574 = vunpack.c.h.s8.bf16 %v1731
        %v2575 = vunpack.c.h.s8.bf16 %v1732
        %v2576 = vunpack.c.h.s8.bf16 %v1733
        %v2577 = vunpack.c.l.s8.bf16 %v1734
        %v2578 = vunpack.c.l.s8.bf16 %v1735
        %v2579 = vunpack.c.l.s8.bf16 %v1736
        %v2580 = vunpack.c.h.s8.bf16 %v1734
        %v2581 = vunpack.c.h.s8.bf16 %v1735
        %v2582 = vunpack.c.h.s8.bf16 %v1736
        %v2583 = vunpack.c.l.s8.bf16 %v1737
        %v2584 = vunpack.c.l.s8.bf16 %v1738
        %v2585 = vunpack.c.l.s8.bf16 %v1739
        %v2586 = vunpack.c.h.s8.bf16 %v1737
        %v2587 = vunpack.c.h.s8.bf16 %v1738
        %v2588 = vunpack.c.h.s8.bf16 %v1739
        %v2589 = vunpack.c.l.s8.bf16 %v1740
        %v2590 = vunpack.c.l.s8.bf16 %v1741
        %v2591 = vunpack.c.l.s8.bf16 %v1742
        %v2592 = vunpack.c.h.s8.bf16 %v1740
        %v2593 = vunpack.c.h.s8.bf16 %v1741
        %v2594 = vunpack.c.h.s8.bf16 %v1742
        %v2595 = vunpack.c.l.s8.bf16 %v1743
        %v2596 = vunpack.c.l.s8.bf16 %v1744
        %v2597 = vunpack.c.l.s8.bf16 %v1745
        %v2598 = vunpack.c.h.s8.bf16 %v1743
        %v2599 = vunpack.c.h.s8.bf16 %v1744
        %v2600 = vunpack.c.h.s8.bf16 %v1745
        %v2601 = vunpack.c.l.s8.bf16 %v1746
        %v2602 = vunpack.c.l.s8.bf16 %v1747
        %v2603 = vunpack.c.l.s8.bf16 %v1748
        %v2604 = vunpack.c.h.s8.bf16 %v1746
        %v2605 = vunpack.c.h.s8.bf16 %v1747
        %v2606 = vunpack.c.h.s8.bf16 %v1748
        %v2607 = vunpack.c.l.s8.bf16 %v1749
        %v2608 = vunpack.c.l.s8.bf16 %v1750
        %v2609 = vunpack.c.l.s8.bf16 %v1751
        %v2610 = vunpack.c.h.s8.bf16 %v1749
        %v2611 = vunpack.c.h.s8.bf16 %v1750
        %v2612 = vunpack.c.h.s8.bf16 %v1751
        %v2613 = vunpack.c.l.s8.bf16 %v1752
        %v2614 = vunpack.c.l.s8.bf16 %v1753
        %v2615 = vunpack.c.l.s8.bf16 %v1754
        %v2616 = vunpack.c.h.s8.bf16 %v1752
        %v2617 = vunpack.c.h.s8.bf16 %v1753
        %v2618 = vunpack.c.h.s8.bf16 %v1754
        %v2619 = vunpack.c.l.s8.bf16 %v1755
        %v2620 = vunpack.c.l.s8.bf16 %v1756
        %v2621 = vunpack.c.l.s8.bf16 %v1757
        %v2622 = vunpack.c.h.s8.bf16 %v1755
        %v2623 = vunpack.c.h.s8.bf16 %v1756
        %v2624 = vunpack.c.h.s8.bf16 %v1757
        %v2625 = vunpack.c.l.s8.bf16 %v1758
        %v2626 = vunpack.c.l.s8.bf16 %v1759
        %v2627 = vunpack.c.l.s8.bf16 %v1760
        %v2628 = vunpack.c.h.s8.bf16 %v1758
        %v2629 = vunpack.c.h.s8.bf16 %v1759
        %v2630 = vunpack.c.h.s8.bf16 %v1760
        %v2631 = vunpack.c.l.s8.bf16 %v1761
        %v2632 = vunpack.c.l.s8.bf16 %v1762
        %v2633 = vunpack.c.l.s8.bf16 %v1763
        %v2634 = vunpack.c.h.s8.bf16 %v1761
        %v2635 = vunpack.c.h.s8.bf16 %v1762
        %v2636 = vunpack.c.h.s8.bf16 %v1763
        %v2637 = vunpack.c.l.s8.bf16 %v1764
        %v2638 = vunpack.c.l.s8.bf16 %v1765
        %v2639 = vunpack.c.l.s8.bf16 %v1766
        %v2640 = vunpack.c.h.s8.bf16 %v1764
        %v2641 = vunpack.c.h.s8.bf16 %v1765
        %v2642 = vunpack.c.h.s8.bf16 %v1766
        %v2643 = vunpack.c.l.s8.bf16 %v1767
        %v2644 = vunpack.c.l.s8.bf16 %v1768
        %v2645 = vunpack.c.l.s8.bf16 %v1769
        %v2646 = vunpack.c.h.s8.bf16 %v1767
        %v2647 = vunpack.c.h.s8.bf16 %v1768
        %v2648 = vunpack.c.h.s8.bf16 %v1769
        %v2649 = vunpack.c.l.s8.bf16 %v1770
        %v2650 = vunpack.c.l.s8.bf16 %v1771
        %v2651 = vunpack.c.l.s8.bf16 %v1772
        %v2652 = vunpack.c.h.s8.bf16 %v1770
        %v2653 = vunpack.c.h.s8.bf16 %v1771
        %v2654 = vunpack.c.h.s8.bf16 %v1772
        %v2655 = vunpack.c.l.s8.bf16 %v1773
        %v2656 = vunpack.c.l.s8.bf16 %v1774
        %v2657 = vunpack.c.l.s8.bf16 %v1775
        %v2658 = vunpack.c.h.s8.bf16 %v1773
        %v2659 = vunpack.c.h.s8.bf16 %v1774
        %v2660 = vunpack.c.h.s8.bf16 %v1775
        %v2661 = vunpack.c.l.s8.bf16 %v1776
        %v2662 = vunpack.c.l.s8.bf16 %v1777
        %v2663 = vunpack.c.l.s8.bf16 %v1778
        %v2664 = vunpack.c.h.s8.bf16 %v1776
        %v2665 = vunpack.c.h.s8.bf16 %v1777
        %v2666 = vunpack.c.h.s8.bf16 %v1778
        %v2667 = vunpack.c.l.s8.bf16 %v1779
        %v2668 = vunpack.c.l.s8.bf16 %v1780
        %v2669 = vunpack.c.l.s8.bf16 %v1781
        %v2670 = vunpack.c.h.s8.bf16 %v1779
        %v2671 = vunpack.c.h.s8.bf16 %v1780
        %v2672 = vunpack.c.h.s8.bf16 %v1781
        %v2673 = vunpack.c.l.s8.bf16 %v1782
        %v2674 = vunpack.c.l.s8.bf16 %v1783
        %v2675 = vunpack.c.l.s8.bf16 %v1784
        %v2676 = vunpack.c.h.s8.bf16 %v1782
        %v2677 = vunpack.c.h.s8.bf16 %v1783
        %v2678 = vunpack.c.h.s8.bf16 %v1784
        %v2679 = vunpack.c.l.s8.bf16 %v1785
        %v2680 = vunpack.c.l.s8.bf16 %v1786
        %v2681 = vunpack.c.l.s8.bf16 %v1787
        %v2682 = vunpack.c.h.s8.bf16 %v1785
        %v2683 = vunpack.c.h.s8.bf16 %v1786
        %v2684 = vunpack.c.h.s8.bf16 %v1787
        %v2685 = vunpack.c.l.s8.bf16 %v1788
        %v2686 = vunpack.c.l.s8.bf16 %v1789
        %v2687 = vunpack.c.l.s8.bf16 %v1790
        %v2688 = vunpack.c.h.s8.bf16 %v1788
        %v2689 = vunpack.c.h.s8.bf16 %v1789
        %v2690 = vunpack.c.h.s8.bf16 %v1790
        %v2691 = vunpack.c.l.s8.bf16 %v1791
        %v2692 = vunpack.c.l.s8.bf16 %v1792
        %v2693 = vunpack.c.l.s8.bf16 %v1793
        %v2694 = vunpack.c.h.s8.bf16 %v1791
        %v2695 = vunpack.c.h.s8.bf16 %v1792
        %v2696 = vunpack.c.h.s8.bf16 %v1793
        %v2697 = vunpack.c.l.s8.bf16 %v1794
        %v2698 = vunpack.c.l.s8.bf16 %v1795
        %v2699 = vunpack.c.l.s8.bf16 %v1796
        %v2700 = vunpack.c.h.s8.bf16 %v1794
        %v2701 = vunpack.c.h.s8.bf16 %v1795
        %v2702 = vunpack.c.h.s8.bf16 %v1796
        %v2703 = vunpack.c.l.s8.bf16 %v1797
        %v2704 = vunpack.c.l.s8.bf16 %v1798
        %v2705 = vunpack.c.l.s8.bf16 %v1799
        %v2706 = vunpack.c.h.s8.bf16 %v1797
        %v2707 = vunpack.c.h.s8.bf16 %v1798
        %v2708 = vunpack.c.h.s8.bf16 %v1799
        %v2709 = vunpack.c.l.s8.bf16 %v1800
        %v2710 = vunpack.c.l.s8.bf16 %v1801
        %v2711 = vunpack.c.l.s8.bf16 %v1802
        %v2712 = vunpack.c.h.s8.bf16 %v1800
        %v2713 = vunpack.c.h.s8.bf16 %v1801
        %v2714 = vunpack.c.h.s8.bf16 %v1802
        %v2715 = vunpack.c.l.s8.bf16 %v1803
        %v2716 = vunpack.c.l.s8.bf16 %v1804
        %v2717 = vunpack.c.l.s8.bf16 %v1805
        %v2718 = vunpack.c.h.s8.bf16 %v1803
        %v2719 = vunpack.c.h.s8.bf16 %v1804
        %v2720 = vunpack.c.h.s8.bf16 %v1805
        %v2721 = vunpack.c.l.s8.bf16 %v1806
        %v2722 = vunpack.c.l.s8.bf16 %v1807
        %v2723 = vunpack.c.l.s8.bf16 %v1808
        %v2724 = vunpack.c.h.s8.bf16 %v1806
        %v2725 = vunpack.c.h.s8.bf16 %v1807
        %v2726 = vunpack.c.h.s8.bf16 %v1808
        %v2727 = vunpack.c.l.s8.bf16 %v1809
        %v2728 = vunpack.c.l.s8.bf16 %v1810
        %v2729 = vunpack.c.l.s8.bf16 %v1811
        %v2730 = vunpack.c.h.s8.bf16 %v1809
        %v2731 = vunpack.c.h.s8.bf16 %v1810
        %v2732 = vunpack.c.h.s8.bf16 %v1811
        %v2733 = vunpack.c.l.s8.bf16 %v1812
        %v2734 = vunpack.c.l.s8.bf16 %v1813
        %v2735 = vunpack.c.l.s8.bf16 %v1814
        %v2736 = vunpack.c.h.s8.bf16 %v1812
        %v2737 = vunpack.c.h.s8.bf16 %v1813
        %v2738 = vunpack.c.h.s8.bf16 %v1814
        %v2739 = vunpack.c.l.s8.bf16 %v1815
        %v2740 = vunpack.c.l.s8.bf16 %v1816
        %v2741 = vunpack.c.l.s8.bf16 %v1817
        %v2742 = vunpack.c.h.s8.bf16 %v1815
        %v2743 = vunpack.c.h.s8.bf16 %v1816
        %v2744 = vunpack.c.h.s8.bf16 %v1817
        %v2745 = vunpack.c.l.s8.bf16 %v1818
        %v2746 = vunpack.c.l.s8.bf16 %v1819
        %v2747 = vunpack.c.l.s8.bf16 %v1820
        %v2748 = vunpack.c.h.s8.bf16 %v1818
        %v2749 = vunpack.c.h.s8.bf16 %v1819
        %v2750 = vunpack.c.h.s8.bf16 %v1820
        %v2751 = vunpack.c.l.s8.bf16 %v1821
        %v2752 = vunpack.c.l.s8.bf16 %v1822
        %v2753 = vunpack.c.l.s8.bf16 %v1823
        %v2754 = vunpack.c.h.s8.bf16 %v1821
        %v2755 = vunpack.c.h.s8.bf16 %v1822
        %v2756 = vunpack.c.h.s8.bf16 %v1823
        %v2757 = vunpack.c.l.s8.bf16 %v1824
        %v2758 = vunpack.c.l.s8.bf16 %v1825
        %v2759 = vunpack.c.l.s8.bf16 %v1826
        %v2760 = vunpack.c.h.s8.bf16 %v1824
        %v2761 = vunpack.c.h.s8.bf16 %v1825
        %v2762 = vunpack.c.h.s8.bf16 %v1826
        %v2763 = vunpack.c.l.s8.bf16 %v1827
        %v2764 = vunpack.c.l.s8.bf16 %v1828
        %v2765 = vunpack.c.l.s8.bf16 %v1829
        %v2766 = vunpack.c.h.s8.bf16 %v1827
        %v2767 = vunpack.c.h.s8.bf16 %v1828
        %v2768 = vunpack.c.h.s8.bf16 %v1829
        %v2769 = vunpack.c.l.s8.bf16 %v1830
        %v2770 = vunpack.c.l.s8.bf16 %v1831
        %v2771 = vunpack.c.l.s8.bf16 %v1832
        %v2772 = vunpack.c.h.s8.bf16 %v1830
        %v2773 = vunpack.c.h.s8.bf16 %v1831
        %v2774 = vunpack.c.h.s8.bf16 %v1832
        %v2775 = vunpack.c.l.s8.bf16 %v1833
        %v2776 = vunpack.c.l.s8.bf16 %v1834
        %v2777 = vunpack.c.l.s8.bf16 %v1835
        %v2778 = vunpack.c.h.s8.bf16 %v1833
        %v2779 = vunpack.c.h.s8.bf16 %v1834
        %v2780 = vunpack.c.h.s8.bf16 %v1835
        %v2781 = vunpack.c.l.s8.bf16 %v1836
        %v2782 = vunpack.c.l.s8.bf16 %v1837
        %v2783 = vunpack.c.l.s8.bf16 %v1838
        %v2784 = vunpack.c.h.s8.bf16 %v1836
        %v2785 = vunpack.c.h.s8.bf16 %v1837
        %v2786 = vunpack.c.h.s8.bf16 %v1838
        %v2787 = vunpack.c.l.s8.bf16 %v1839
        %v2788 = vunpack.c.l.s8.bf16 %v1840
        %v2789 = vunpack.c.l.s8.bf16 %v1841
        %v2790 = vunpack.c.h.s8.bf16 %v1839
        %v2791 = vunpack.c.h.s8.bf16 %v1840
        %v2792 = vunpack.c.h.s8.bf16 %v1841
        %v2793 = vunpack.c.l.s8.bf16 %v1842
        %v2794 = vunpack.c.l.s8.bf16 %v1843
        %v2795 = vunpack.c.l.s8.bf16 %v1844
        %v2796 = vunpack.c.h.s8.bf16 %v1842
        %v2797 = vunpack.c.h.s8.bf16 %v1843
        %v2798 = vunpack.c.h.s8.bf16 %v1844
        %v2799 = vunpack.c.l.s8.bf16 %v1845
        %v2800 = vunpack.c.l.s8.bf16 %v1846
        %v2801 = vunpack.c.l.s8.bf16 %v1847
        %v2802 = vunpack.c.h.s8.bf16 %v1845
        %v2803 = vunpack.c.h.s8.bf16 %v1846
        %v2804 = vunpack.c.h.s8.bf16 %v1847
        %v2805 = vunpack.c.l.s8.bf16 %v1848
        %v2806 = vunpack.c.l.s8.bf16 %v1849
        %v2807 = vunpack.c.l.s8.bf16 %v1850
        %v2808 = vunpack.c.h.s8.bf16 %v1848
        %v2809 = vunpack.c.h.s8.bf16 %v1849
        %v2810 = vunpack.c.h.s8.bf16 %v1850
        %v2811 = vunpack.c.l.s8.bf16 %v1851
        %v2812 = vunpack.c.l.s8.bf16 %v1852
        %v2813 = vunpack.c.l.s8.bf16 %v1853
        %v2814 = vunpack.c.h.s8.bf16 %v1851
        %v2815 = vunpack.c.h.s8.bf16 %v1852
        %v2816 = vunpack.c.h.s8.bf16 %v1853
        %v2817 = vunpack.c.l.s8.bf16 %v1854
        %v2818 = vunpack.c.l.s8.bf16 %v1855
        %v2819 = vunpack.c.l.s8.bf16 %v1856
        %v2820 = vunpack.c.h.s8.bf16 %v1854
        %v2821 = vunpack.c.h.s8.bf16 %v1855
        %v2822 = vunpack.c.h.s8.bf16 %v1856
        %v2823 = vunpack.c.l.s8.bf16 %v1857
        %v2824 = vunpack.c.l.s8.bf16 %v1858
        %v2825 = vunpack.c.l.s8.bf16 %v1859
        %v2826 = vunpack.c.h.s8.bf16 %v1857
        %v2827 = vunpack.c.h.s8.bf16 %v1858
        %v2828 = vunpack.c.h.s8.bf16 %v1859
        %v2829 = vunpack.c.l.s8.bf16 %v1860
        %v2830 = vunpack.c.l.s8.bf16 %v1861
        %v2831 = vunpack.c.l.s8.bf16 %v1862
        %v2832 = vunpack.c.h.s8.bf16 %v1860
        %v2833 = vunpack.c.h.s8.bf16 %v1861
        %v2834 = vunpack.c.h.s8.bf16 %v1862
        %v2835 = vunpack.c.l.s8.bf16 %v1863
        %v2836 = vunpack.c.l.s8.bf16 %v1864
        %v2837 = vunpack.c.l.s8.bf16 %v1865
        %v2838 = vunpack.c.h.s8.bf16 %v1863
        %v2839 = vunpack.c.h.s8.bf16 %v1864
        %v2840 = vunpack.c.h.s8.bf16 %v1865
        %v2841 = vunpack.c.l.s8.bf16 %v1866
        %v2842 = vunpack.c.l.s8.bf16 %v1867
        %v2843 = vunpack.c.l.s8.bf16 %v1868
        %v2844 = vunpack.c.h.s8.bf16 %v1866
        %v2845 = vunpack.c.h.s8.bf16 %v1867
        %v2846 = vunpack.c.h.s8.bf16 %v1868
        %v2847 = vunpack.c.l.s8.bf16 %v1869
        %v2848 = vunpack.c.l.s8.bf16 %v1870
        %v2849 = vunpack.c.l.s8.bf16 %v1871
        %v2850 = vunpack.c.h.s8.bf16 %v1869
        %v2851 = vunpack.c.h.s8.bf16 %v1870
        %v2852 = vunpack.c.h.s8.bf16 %v1871
        %v2853 = vunpack.c.l.s8.bf16 %v1872
        %v2854 = vunpack.c.l.s8.bf16 %v1873
        %v2855 = vunpack.c.l.s8.bf16 %v1874
        %v2856 = vunpack.c.h.s8.bf16 %v1872
        %v2857 = vunpack.c.h.s8.bf16 %v1873
        %v2858 = vunpack.c.h.s8.bf16 %v1874
        %v2859 = vunpack.c.l.s8.bf16 %v1875
        %v2860 = vunpack.c.l.s8.bf16 %v1876
        %v2861 = vunpack.c.l.s8.bf16 %v1877
        %v2862 = vunpack.c.h.s8.bf16 %v1875
        %v2863 = vunpack.c.h.s8.bf16 %v1876
        %v2864 = vunpack.c.h.s8.bf16 %v1877
        %v2865 = vunpack.c.l.s8.bf16 %v1878
        %v2866 = vunpack.c.l.s8.bf16 %v1879
        %v2867 = vunpack.c.l.s8.bf16 %v1880
        %v2868 = vunpack.c.h.s8.bf16 %v1878
        %v2869 = vunpack.c.h.s8.bf16 %v1879
        %v2870 = vunpack.c.h.s8.bf16 %v1880
        %v2871 = vunpack.c.l.s8.bf16 %v1881
        %v2872 = vunpack.c.l.s8.bf16 %v1882
        %v2873 = vunpack.c.l.s8.bf16 %v1883
        %v2874 = vunpack.c.h.s8.bf16 %v1881
        %v2875 = vunpack.c.h.s8.bf16 %v1882
        %v2876 = vunpack.c.h.s8.bf16 %v1883
        %v2877 = vunpack.c.l.s8.bf16 %v1884
        %v2878 = vunpack.c.l.s8.bf16 %v1885
        %v2879 = vunpack.c.l.s8.bf16 %v1886
        %v2880 = vunpack.c.h.s8.bf16 %v1884
        %v2881 = vunpack.c.h.s8.bf16 %v1885
        %v2882 = vunpack.c.h.s8.bf16 %v1886
        %v2883 = vunpack.c.l.s8.bf16 %v1887
        %v2884 = vunpack.c.l.s8.bf16 %v1888
        %v2885 = vunpack.c.l.s8.bf16 %v1889
        %v2886 = vunpack.c.h.s8.bf16 %v1887
        %v2887 = vunpack.c.h.s8.bf16 %v1888
        %v2888 = vunpack.c.h.s8.bf16 %v1889
        %v2889 = vunpack.c.l.s8.bf16 %v1890
        %v2890 = vunpack.c.l.s8.bf16 %v1891
        %v2891 = vunpack.c.l.s8.bf16 %v1892
        %v2892 = vunpack.c.h.s8.bf16 %v1890
        %v2893 = vunpack.c.h.s8.bf16 %v1891
        %v2894 = vunpack.c.h.s8.bf16 %v1892
        %v2895 = vunpack.c.l.s8.bf16 %v1893
        %v2896 = vunpack.c.l.s8.bf16 %v1894
        %v2897 = vunpack.c.l.s8.bf16 %v1895
        %v2898 = vunpack.c.h.s8.bf16 %v1893
        %v2899 = vunpack.c.h.s8.bf16 %v1894
        %v2900 = vunpack.c.h.s8.bf16 %v1895
        %v2901 = vunpack.c.l.s8.bf16 %v1896
        %v2902 = vunpack.c.l.s8.bf16 %v1897
        %v2903 = vunpack.c.l.s8.bf16 %v1898
        %v2904 = vunpack.c.h.s8.bf16 %v1896
        %v2905 = vunpack.c.h.s8.bf16 %v1897
        %v2906 = vunpack.c.h.s8.bf16 %v1898
        %v2907 = vunpack.c.l.s8.bf16 %v1899
        %v2908 = vunpack.c.l.s8.bf16 %v1900
        %v2909 = vunpack.c.l.s8.bf16 %v1901
        %v2910 = vunpack.c.h.s8.bf16 %v1899
        %v2911 = vunpack.c.h.s8.bf16 %v1900
        %v2912 = vunpack.c.h.s8.bf16 %v1901
        %v2913 = vunpack.c.l.s8.bf16 %v1902
        %v2914 = vunpack.c.l.s8.bf16 %v1903
        %v2915 = vunpack.c.l.s8.bf16 %v1904
        %v2916 = vunpack.c.h.s8.bf16 %v1902
        %v2917 = vunpack.c.h.s8.bf16 %v1903
        %v2918 = vunpack.c.h.s8.bf16 %v1904
        %v2919 = vunpack.c.l.s8.bf16 %v1905
        %v2920 = vunpack.c.l.s8.bf16 %v1906
        %v2921 = vunpack.c.l.s8.bf16 %v1907
        %v2922 = vunpack.c.h.s8.bf16 %v1905
        %v2923 = vunpack.c.h.s8.bf16 %v1906
        %v2924 = vunpack.c.h.s8.bf16 %v1907
        %v2925 = vunpack.c.l.s8.bf16 %v1908
        %v2926 = vunpack.c.l.s8.bf16 %v1909
        %v2927 = vunpack.c.l.s8.bf16 %v1910
        %v2928 = vunpack.c.h.s8.bf16 %v1908
        %v2929 = vunpack.c.h.s8.bf16 %v1909
        %v2930 = vunpack.c.h.s8.bf16 %v1910
        %v2931 = vunpack.c.l.s8.bf16 %v1911
        %v2932 = vunpack.c.l.s8.bf16 %v1912
        %v2933 = vunpack.c.l.s8.bf16 %v1913
        %v2934 = vunpack.c.h.s8.bf16 %v1911
        %v2935 = vunpack.c.h.s8.bf16 %v1912
        %v2936 = vunpack.c.h.s8.bf16 %v1913
        %v2937 = vunpack.c.l.s8.bf16 %v1914
        %v2938 = vunpack.c.l.s8.bf16 %v1915
        %v2939 = vunpack.c.l.s8.bf16 %v1916
        %v2940 = vunpack.c.h.s8.bf16 %v1914
        %v2941 = vunpack.c.h.s8.bf16 %v1915
        %v2942 = vunpack.c.h.s8.bf16 %v1916
        %v2943 = vunpack.c.l.s8.bf16 %v1917
        %v2944 = vunpack.c.l.s8.bf16 %v1918
        %v2945 = vunpack.c.l.s8.bf16 %v1919
        %v2946 = vunpack.c.h.s8.bf16 %v1917
        %v2947 = vunpack.c.h.s8.bf16 %v1918
        %v2948 = vunpack.c.h.s8.bf16 %v1919
        %v2949 = vunpack.c.l.s8.bf16 %v1920
        %v2950 = vunpack.c.l.s8.bf16 %v1921
        %v2951 = vunpack.c.l.s8.bf16 %v1922
        %v2952 = vunpack.c.h.s8.bf16 %v1920
        %v2953 = vunpack.c.h.s8.bf16 %v1921
        %v2954 = vunpack.c.h.s8.bf16 %v1922
        %v2955 = vunpack.c.l.s8.bf16 %v1923
        %v2956 = vunpack.c.l.s8.bf16 %v1924
        %v2957 = vunpack.c.l.s8.bf16 %v1925
        %v2958 = vunpack.c.h.s8.bf16 %v1923
        %v2959 = vunpack.c.h.s8.bf16 %v1924
        %v2960 = vunpack.c.h.s8.bf16 %v1925
        %v2961 = vunpack.c.l.s8.bf16 %v1926
        %v2962 = vunpack.c.l.s8.bf16 %v1927
        %v2963 = vunpack.c.l.s8.bf16 %v1928
        %v2964 = vunpack.c.h.s8.bf16 %v1926
        %v2965 = vunpack.c.h.s8.bf16 %v1927
        %v2966 = vunpack.c.h.s8.bf16 %v1928
        %v2967 = vunpack.c.l.s8.bf16 %v1929
        %v2968 = vunpack.c.l.s8.bf16 %v1930
        %v2969 = vunpack.c.l.s8.bf16 %v1931
        %v2970 = vunpack.c.h.s8.bf16 %v1929
        %v2971 = vunpack.c.h.s8.bf16 %v1930
        %v2972 = vunpack.c.h.s8.bf16 %v1931
        %v2973 = vunpack.c.l.s8.bf16 %v1932
        %v2974 = vunpack.c.l.s8.bf16 %v1933
        %v2975 = vunpack.c.l.s8.bf16 %v1934
        %v2976 = vunpack.c.h.s8.bf16 %v1932
        %v2977 = vunpack.c.h.s8.bf16 %v1933
        %v2978 = vunpack.c.h.s8.bf16 %v1934
        %v2979 = vunpack.c.l.s8.bf16 %v1935
        %v2980 = vunpack.c.l.s8.bf16 %v1936
        %v2981 = vunpack.c.l.s8.bf16 %v1937
        %v2982 = vunpack.c.h.s8.bf16 %v1935
        %v2983 = vunpack.c.h.s8.bf16 %v1936
        %v2984 = vunpack.c.h.s8.bf16 %v1937
        %v2985 = vunpack.c.l.s8.bf16 %v1938
        %v2986 = vunpack.c.l.s8.bf16 %v1939
        %v2987 = vunpack.c.l.s8.bf16 %v1940
        %v2988 = vunpack.c.h.s8.bf16 %v1938
        %v2989 = vunpack.c.h.s8.bf16 %v1939
        %v2990 = vunpack.c.h.s8.bf16 %v1940
        %v2991 = vunpack.c.l.s8.bf16 %v1941
        %v2992 = vunpack.c.l.s8.bf16 %v1942
        %v2993 = vunpack.c.l.s8.bf16 %v1943
        %v2994 = vunpack.c.h.s8.bf16 %v1941
        %v2995 = vunpack.c.h.s8.bf16 %v1942
        %v2996 = vunpack.c.h.s8.bf16 %v1943
        %v2997 = vunpack.c.l.s8.bf16 %v1944
        %v2998 = vunpack.c.l.s8.bf16 %v1945
        %v2999 = vunpack.c.l.s8.bf16 %v1946
        %v3000 = vunpack.c.h.s8.bf16 %v1944
        %v3001 = vunpack.c.h.s8.bf16 %v1945
        %v3002 = vunpack.c.h.s8.bf16 %v1946
        %v3003 = vunpack.c.l.s8.bf16 %v1947
        %v3004 = vunpack.c.l.s8.bf16 %v1948
        %v3005 = vunpack.c.l.s8.bf16 %v1949
        %v3006 = vunpack.c.h.s8.bf16 %v1947
        %v3007 = vunpack.c.h.s8.bf16 %v1948
        %v3008 = vunpack.c.h.s8.bf16 %v1949
        %v3009 = vunpack.c.l.s8.bf16 %v1950
        %v3010 = vunpack.c.l.s8.bf16 %v1951
        %v3011 = vunpack.c.l.s8.bf16 %v1952
        %v3012 = vunpack.c.h.s8.bf16 %v1950
        %v3013 = vunpack.c.h.s8.bf16 %v1951
        %v3014 = vunpack.c.h.s8.bf16 %v1952
        %v3015 = vunpack.c.l.s8.bf16 %v1953
        %v3016 = vunpack.c.l.s8.bf16 %v1954
        %v3017 = vunpack.c.l.s8.bf16 %v1955
        %v3018 = vunpack.c.h.s8.bf16 %v1953
        %v3019 = vunpack.c.h.s8.bf16 %v1954
        %v3020 = vunpack.c.h.s8.bf16 %v1955
        %v3021 = vunpack.c.l.s8.bf16 %v1956
        %v3022 = vunpack.c.l.s8.bf16 %v1957
        %v3023 = vunpack.c.l.s8.bf16 %v1958
        %v3024 = vunpack.c.h.s8.bf16 %v1956
        %v3025 = vunpack.c.h.s8.bf16 %v1957
        %v3026 = vunpack.c.h.s8.bf16 %v1958
        %v3027 = vunpack.c.l.s8.bf16 %v1959
        %v3028 = vunpack.c.l.s8.bf16 %v1960
        %v3029 = vunpack.c.l.s8.bf16 %v1961
        %v3030 = vunpack.c.h.s8.bf16 %v1959
        %v3031 = vunpack.c.h.s8.bf16 %v1960
        %v3032 = vunpack.c.h.s8.bf16 %v1961
        %v3033 = vunpack.c.l.s8.bf16 %v1962
        %v3034 = vunpack.c.l.s8.bf16 %v1963
        %v3035 = vunpack.c.l.s8.bf16 %v1964
        %v3036 = vunpack.c.h.s8.bf16 %v1962
        %v3037 = vunpack.c.h.s8.bf16 %v1963
        %v3038 = vunpack.c.h.s8.bf16 %v1964
        %v3039 = vunpack.c.l.s8.bf16 %v1965
        %v3040 = vunpack.c.l.s8.bf16 %v1966
        %v3041 = vunpack.c.l.s8.bf16 %v1967
        %v3042 = vunpack.c.h.s8.bf16 %v1965
        %v3043 = vunpack.c.h.s8.bf16 %v1966
        %v3044 = vunpack.c.h.s8.bf16 %v1967
        %v3045 = vunpack.c.l.s8.bf16 %v1968
        %v3046 = vunpack.c.l.s8.bf16 %v1969
        %v3047 = vunpack.c.l.s8.bf16 %v1970
        %v3048 = vunpack.c.h.s8.bf16 %v1968
        %v3049 = vunpack.c.h.s8.bf16 %v1969
        %v3050 = vunpack.c.h.s8.bf16 %v1970
        %v3051 = vunpack.c.l.s8.bf16 %v1971
        %v3052 = vunpack.c.l.s8.bf16 %v1972
        %v3053 = vunpack.c.l.s8.bf16 %v1973
        %v3054 = vunpack.c.h.s8.bf16 %v1971
        %v3055 = vunpack.c.h.s8.bf16 %v1972
        %v3056 = vunpack.c.h.s8.bf16 %v1973
        %v3057 = vunpack.c.l.s8.bf16 %v1974
        %v3058 = vunpack.c.l.s8.bf16 %v1975
        %v3059 = vunpack.c.l.s8.bf16 %v1976
        %v3060 = vunpack.c.h.s8.bf16 %v1974
        %v3061 = vunpack.c.h.s8.bf16 %v1975
        %v3062 = vunpack.c.h.s8.bf16 %v1976
        %v3063 = vunpack.c.l.s8.bf16 %v1977
        %v3064 = vunpack.c.l.s8.bf16 %v1978
        %v3065 = vunpack.c.l.s8.bf16 %v1979
        %v3066 = vunpack.c.h.s8.bf16 %v1977
        %v3067 = vunpack.c.h.s8.bf16 %v1978
        %v3068 = vunpack.c.h.s8.bf16 %v1979
        %v3069 = vunpack.c.l.s8.bf16 %v1980
        %v3070 = vunpack.c.l.s8.bf16 %v1981
        %v3071 = vunpack.c.l.s8.bf16 %v1982
        %v3072 = vunpack.c.h.s8.bf16 %v1980
        %v3073 = vunpack.c.h.s8.bf16 %v1981
        %v3074 = vunpack.c.h.s8.bf16 %v1982
        %v3075 = vunpack.c.l.s8.bf16 %v1983
        %v3076 = vunpack.c.l.s8.bf16 %v1984
        %v3077 = vunpack.c.l.s8.bf16 %v1985
        %v3078 = vunpack.c.h.s8.bf16 %v1983
        %v3079 = vunpack.c.h.s8.bf16 %v1984
        %v3080 = vunpack.c.h.s8.bf16 %v1985
        %v3081 = vunpack.c.l.s8.bf16 %v1986
        %v3082 = vunpack.c.l.s8.bf16 %v1987
        %v3083 = vunpack.c.l.s8.bf16 %v1988
        %v3084 = vunpack.c.h.s8.bf16 %v1986
        %v3085 = vunpack.c.h.s8.bf16 %v1987
        %v3086 = vunpack.c.h.s8.bf16 %v1988
        %v3087 = vunpack.c.l.s8.bf16 %v1989
        %v3088 = vunpack.c.l.s8.bf16 %v1990
        %v3089 = vunpack.c.l.s8.bf16 %v1991
        %v3090 = vunpack.c.h.s8.bf16 %v1989
        %v3091 = vunpack.c.h.s8.bf16 %v1990
        %v3092 = vunpack.c.h.s8.bf16 %v1991
        %v3093 = vunpack.c.l.s8.bf16 %v1992
        %v3094 = vunpack.c.l.s8.bf16 %v1993
        %v3095 = vunpack.c.l.s8.bf16 %v1994
        %v3096 = vunpack.c.h.s8.bf16 %v1992
        %v3097 = vunpack.c.h.s8.bf16 %v1993
        %v3098 = vunpack.c.h.s8.bf16 %v1994
        %v3099 = vunpack.c.l.s8.bf16 %v1995
        %v3100 = vunpack.c.l.s8.bf16 %v1996
        %v3101 = vunpack.c.l.s8.bf16 %v1997
        %v3102 = vunpack.c.h.s8.bf16 %v1995
        %v3103 = vunpack.c.h.s8.bf16 %v1996
        %v3104 = vunpack.c.h.s8.bf16 %v1997
        %v3105 = vunpack.c.l.s8.bf16 %v1998
        %v3106 = vunpack.c.l.s8.bf16 %v1999
        %v3107 = vunpack.c.l.s8.bf16 %v2000
        %v3108 = vunpack.c.h.s8.bf16 %v1998
        %v3109 = vunpack.c.h.s8.bf16 %v1999
        %v3110 = vunpack.c.h.s8.bf16 %v2000
        %v3111 = vunpack.c.l.s8.bf16 %v2001
        %v3112 = vunpack.c.l.s8.bf16 %v2002
        %v3113 = vunpack.c.l.s8.bf16 %v2003
        %v3114 = vunpack.c.h.s8.bf16 %v2001
        %v3115 = vunpack.c.h.s8.bf16 %v2002
        %v3116 = vunpack.c.h.s8.bf16 %v2003
        %v3117 = vunpack.c.l.s8.bf16 %v2004
        %v3118 = vunpack.c.l.s8.bf16 %v2005
        %v3119 = vunpack.c.l.s8.bf16 %v2006
        %v3120 = vunpack.c.h.s8.bf16 %v2004
        %v3121 = vunpack.c.h.s8.bf16 %v2005
        %v3122 = vunpack.c.h.s8.bf16 %v2006
        %v3123 = vunpack.c.l.s8.bf16 %v2007
        %v3124 = vunpack.c.l.s8.bf16 %v2008
        %v3125 = vunpack.c.l.s8.bf16 %v2009
        %v3126 = vunpack.c.h.s8.bf16 %v2007
        %v3127 = vunpack.c.h.s8.bf16 %v2008
        %v3128 = vunpack.c.h.s8.bf16 %v2009
        %v3129 = vunpack.c.l.s8.bf16 %v2010
        %v3130 = vunpack.c.l.s8.bf16 %v2011
        %v3131 = vunpack.c.l.s8.bf16 %v2012
        %v3132 = vunpack.c.h.s8.bf16 %v2010
        %v3133 = vunpack.c.h.s8.bf16 %v2011
        %v3134 = vunpack.c.h.s8.bf16 %v2012
        %v3135 = vunpack.c.l.s8.bf16 %v2013
        %v3136 = vunpack.c.l.s8.bf16 %v2014
        %v3137 = vunpack.c.l.s8.bf16 %v2015
        %v3138 = vunpack.c.h.s8.bf16 %v2013
        %v3139 = vunpack.c.h.s8.bf16 %v2014
        %v3140 = vunpack.c.h.s8.bf16 %v2015
        %v3141 = vunpack.c.l.s8.bf16 %v2016
        %v3142 = vunpack.c.l.s8.bf16 %v2017
        %v3143 = vunpack.c.l.s8.bf16 %v2018
        %v3144 = vunpack.c.h.s8.bf16 %v2016
        %v3145 = vunpack.c.h.s8.bf16 %v2017
        %v3146 = vunpack.c.h.s8.bf16 %v2018
        %v3147 = vunpack.c.l.s8.bf16 %v2019
        %v3148 = vunpack.c.l.s8.bf16 %v2020
        %v3149 = vunpack.c.l.s8.bf16 %v2021
        %v3150 = vunpack.c.h.s8.bf16 %v2019
        %v3151 = vunpack.c.h.s8.bf16 %v2020
        %v3152 = vunpack.c.h.s8.bf16 %v2021
        %v3153 = vunpack.c.l.s8.bf16 %v2022
        %v3154 = vunpack.c.l.s8.bf16 %v2023
        %v3155 = vunpack.c.l.s8.bf16 %v2024
        %v3156 = vunpack.c.h.s8.bf16 %v2022
        %v3157 = vunpack.c.h.s8.bf16 %v2023
        %v3158 = vunpack.c.h.s8.bf16 %v2024
        %v3159 = vunpack.c.l.s8.bf16 %v2025
        %v3160 = vunpack.c.l.s8.bf16 %v2026
        %v3161 = vunpack.c.l.s8.bf16 %v2027
        %v3162 = vunpack.c.h.s8.bf16 %v2025
        %v3163 = vunpack.c.h.s8.bf16 %v2026
        %v3164 = vunpack.c.h.s8.bf16 %v2027
        %v3165 = vunpack.c.l.s8.bf16 %v2028
        %v3166 = vunpack.c.l.s8.bf16 %v2029
        %v3167 = vunpack.c.l.s8.bf16 %v2030
        %v3168 = vunpack.c.h.s8.bf16 %v2028
        %v3169 = vunpack.c.h.s8.bf16 %v2029
        %v3170 = vunpack.c.h.s8.bf16 %v2030
        %v3171 = vunpack.c.l.s8.bf16 %v2031
        %v3172 = vunpack.c.l.s8.bf16 %v2032
        %v3173 = vunpack.c.l.s8.bf16 %v2033
        %v3174 = vunpack.c.h.s8.bf16 %v2031
        %v3175 = vunpack.c.h.s8.bf16 %v2032
        %v3176 = vunpack.c.h.s8.bf16 %v2033
        %v3177 = vunpack.c.l.s8.bf16 %v2034
        %v3178 = vunpack.c.l.s8.bf16 %v2035
        %v3179 = vunpack.c.l.s8.bf16 %v2036
        %v3180 = vunpack.c.h.s8.bf16 %v2034
        %v3181 = vunpack.c.h.s8.bf16 %v2035
        %v3182 = vunpack.c.h.s8.bf16 %v2036
        %v3183 = vunpack.c.l.s8.bf16 %v2037
        %v3184 = vunpack.c.l.s8.bf16 %v2038
        %v3185 = vunpack.c.l.s8.bf16 %v2039
        %v3186 = vunpack.c.h.s8.bf16 %v2037
        %v3187 = vunpack.c.h.s8.bf16 %v2038
        %v3188 = vunpack.c.h.s8.bf16 %v2039
        %v3189 = vunpack.c.l.s8.bf16 %v2040
        %v3190 = vunpack.c.l.s8.bf16 %v2041
        %v3191 = vunpack.c.l.s8.bf16 %v2042
        %v3192 = vunpack.c.h.s8.bf16 %v2040
        %v3193 = vunpack.c.h.s8.bf16 %v2041
        %v3194 = vunpack.c.h.s8.bf16 %v2042
        %v3195 = vunpack.c.l.s8.bf16 %v2043
        %v3196 = vunpack.c.l.s8.bf16 %v2044
        %v3197 = vunpack.c.l.s8.bf16 %v2045
        %v3198 = vunpack.c.h.s8.bf16 %v2043
        %v3199 = vunpack.c.h.s8.bf16 %v2044
        %v3200 = vunpack.c.h.s8.bf16 %v2045
        %v3201 = vunpack.c.l.s8.bf16 %v2046
        %v3202 = vunpack.c.l.s8.bf16 %v2047
        %v3203 = vunpack.c.l.s8.bf16 %v2048
        %v3204 = vunpack.c.h.s8.bf16 %v2046
        %v3205 = vunpack.c.h.s8.bf16 %v2047
        %v3206 = vunpack.c.h.s8.bf16 %v2048
        %v3207 = vunpack.c.l.s8.bf16 %v2049
        %v3208 = vunpack.c.l.s8.bf16 %v2050
        %v3209 = vunpack.c.l.s8.bf16 %v2051
        %v3210 = vunpack.c.h.s8.bf16 %v2049
        %v3211 = vunpack.c.h.s8.bf16 %v2050
        %v3212 = vunpack.c.h.s8.bf16 %v2051
        %v3213 = vunpack.c.l.s8.bf16 %v2052
        %v3214 = vunpack.c.l.s8.bf16 %v2053
        %v3215 = vunpack.c.l.s8.bf16 %v2054
        %v3216 = vunpack.c.h.s8.bf16 %v2052
        %v3217 = vunpack.c.h.s8.bf16 %v2053
        %v3218 = vunpack.c.h.s8.bf16 %v2054
        %v3219 = vunpack.c.l.s8.bf16 %v2055
        %v3220 = vunpack.c.l.s8.bf16 %v2056
        %v3221 = vunpack.c.l.s8.bf16 %v2057
        %v3222 = vunpack.c.h.s8.bf16 %v2055
        %v3223 = vunpack.c.h.s8.bf16 %v2056
        %v3224 = vunpack.c.h.s8.bf16 %v2057
        %v3225 = vunpack.c.l.s8.bf16 %v2058
        %v3226 = vunpack.c.l.s8.bf16 %v2059
        %v3227 = vunpack.c.l.s8.bf16 %v2060
        %v3228 = vunpack.c.h.s8.bf16 %v2058
        %v3229 = vunpack.c.h.s8.bf16 %v2059
        %v3230 = vunpack.c.h.s8.bf16 %v2060
        %v3231 = vunpack.c.l.s8.bf16 %v2061
        %v3232 = vunpack.c.l.s8.bf16 %v2062
        %v3233 = vunpack.c.l.s8.bf16 %v2063
        %v3234 = vunpack.c.h.s8.bf16 %v2061
        %v3235 = vunpack.c.h.s8.bf16 %v2062
        %v3236 = vunpack.c.h.s8.bf16 %v2063
        %v3237 = vunpack.c.l.s8.bf16 %v2064
        %v3238 = vunpack.c.l.s8.bf16 %v2065
        %v3239 = vunpack.c.l.s8.bf16 %v2066
        %v3240 = vunpack.c.h.s8.bf16 %v2064
        %v3241 = vunpack.c.h.s8.bf16 %v2065
        %v3242 = vunpack.c.h.s8.bf16 %v2066
        %v3243 = vunpack.c.l.s8.bf16 %v2067
        %v3244 = vunpack.c.l.s8.bf16 %v2068
        %v3245 = vunpack.c.l.s8.bf16 %v2069
        %v3246 = vunpack.c.h.s8.bf16 %v2067
        %v3247 = vunpack.c.h.s8.bf16 %v2068
        %v3248 = vunpack.c.h.s8.bf16 %v2069
        %v3249 = vunpack.c.l.s8.bf16 %v2070
        %v3250 = vunpack.c.l.s8.bf16 %v2071
        %v3251 = vunpack.c.l.s8.bf16 %v2072
        %v3252 = vunpack.c.h.s8.bf16 %v2070
        %v3253 = vunpack.c.h.s8.bf16 %v2071
        %v3254 = vunpack.c.h.s8.bf16 %v2072
        %v3255 = vunpack.c.l.s8.bf16 %v2073
        %v3256 = vunpack.c.l.s8.bf16 %v2074
        %v3257 = vunpack.c.l.s8.bf16 %v2075
        %v3258 = vunpack.c.h.s8.bf16 %v2073
        %v3259 = vunpack.c.h.s8.bf16 %v2074
        %v3260 = vunpack.c.h.s8.bf16 %v2075
        %v3261 = vunpack.c.l.s8.bf16 %v2076
        %v3262 = vunpack.c.l.s8.bf16 %v2077
        %v3263 = vunpack.c.l.s8.bf16 %v2078
        %v3264 = vunpack.c.h.s8.bf16 %v2076
        %v3265 = vunpack.c.h.s8.bf16 %v2077
        %v3266 = vunpack.c.h.s8.bf16 %v2078
        %v3267 = vunpack.c.l.s8.bf16 %v2079
        %v3268 = vunpack.c.l.s8.bf16 %v2080
        %v3269 = vunpack.c.l.s8.bf16 %v2081
        %v3270 = vunpack.c.h.s8.bf16 %v2079
        %v3271 = vunpack.c.h.s8.bf16 %v2080
        %v3272 = vunpack.c.h.s8.bf16 %v2081
        %v3273 = vunpack.c.l.s8.bf16 %v2082
        %v3274 = vunpack.c.l.s8.bf16 %v2083
        %v3275 = vunpack.c.l.s8.bf16 %v2084
        %v3276 = vunpack.c.h.s8.bf16 %v2082
        %v3277 = vunpack.c.h.s8.bf16 %v2083
        %v3278 = vunpack.c.h.s8.bf16 %v2084
        %v3279 = vunpack.c.l.s8.bf16 %v2085
        %v3280 = vunpack.c.l.s8.bf16 %v2086
        %v3281 = vunpack.c.l.s8.bf16 %v2087
        %v3282 = vunpack.c.h.s8.bf16 %v2085
        %v3283 = vunpack.c.h.s8.bf16 %v2086
        %v3284 = vunpack.c.h.s8.bf16 %v2087
        %v3285 = vunpack.c.l.s8.bf16 %v2088
        %v3286 = vunpack.c.l.s8.bf16 %v2089
        %v3287 = vunpack.c.l.s8.bf16 %v2090
        %v3288 = vunpack.c.h.s8.bf16 %v2088
        %v3289 = vunpack.c.h.s8.bf16 %v2089
        %v3290 = vunpack.c.h.s8.bf16 %v2090
        %v3291 = vld [vmem:[%s1475] sm:$0xff]
        %v3292 = vld [vmem:[%s1475 + $0x8] sm:$0xff]
        %v3293 = vld [vmem:[%s1475 + $0x10] sm:$0xff]
        %v3294 = vld [vmem:[%s1475 + $0x18] sm:$0xff]
        %v3295 = vld [vmem:[%s1475 + $0x20] sm:$0xff]
        %v3296 = vld [vmem:[%s1475 + $0x28] sm:$0xff]
        %v3297 = vld [vmem:[%s1475 + $0x30] sm:$0xff]
        %v3298 = vld [vmem:[%s1475 + $0x38] sm:$0xff]
        %v3299 = vld [vmem:[%s1475 + $0x40] sm:$0xff]
        %v3300 = vld [vmem:[%s1475 + $0x48] sm:$0xff]
        %v3301 = vld [vmem:[%s1475 + $0x50] sm:$0xff]
        %v3302 = vld [vmem:[%s1475 + $0x58] sm:$0xff]
        %v3303 = vld [vmem:[%s1475 + $0x60] sm:$0xff]
        %v3304 = vld [vmem:[%s1475 + $0x68] sm:$0xff]
        %v3305 = vld [vmem:[%s1475 + $0x70] sm:$0xff]
        %v3306 = vld [vmem:[%s1475 + $0x78] sm:$0xff]
        %v3307 = vld [vmem:[%s1475 + $0x80] sm:$0xff]
        %v3308 = vld [vmem:[%s1475 + $0x88] sm:$0xff]
        %v3309 = vld [vmem:[%s1475 + $0x90] sm:$0xff]
        %v3310 = vld [vmem:[%s1475 + $0x98] sm:$0xff]
        %v3311 = vld [vmem:[%s1475 + $0xa0] sm:$0xff]
        %v3312 = vld [vmem:[%s1475 + $0xa8] sm:$0xff]
        %v3313 = vld [vmem:[%s1475 + $0xb0] sm:$0xff]
        %v3314 = vld [vmem:[%s1475 + $0xb8] sm:$0xff]
        %v3315 = vld [vmem:[%s1475 + $0xc0] sm:$0xff]
        %v3316 = vld [vmem:[%s1475 + $0xc8] sm:$0xff]
        %v3317 = vld [vmem:[%s1475 + $0xd0] sm:$0xff]
        %v3318 = vld [vmem:[%s1475 + $0xd8] sm:$0xff]
        %v3319 = vld [vmem:[%s1475 + $0xe0] sm:$0xff]
        %v3320 = vld [vmem:[%s1475 + $0xe8] sm:$0xff]
        %v3321 = vld [vmem:[%s1475 + $0xf0] sm:$0xff]
        %v3322 = vld [vmem:[%s1475 + $0xf8] sm:$0xff]
        %v3323 = vld [vmem:[%s1475 + $0x100] sm:$0xff]
        %v3324 = vld [vmem:[%s1475 + $0x108] sm:$0xff]
        %v3325 = vld [vmem:[%s1475 + $0x110] sm:$0xff]
        %v3326 = vld [vmem:[%s1475 + $0x118] sm:$0xff]
        %v3327 = vld [vmem:[%s1475 + $0x120] sm:$0xff]
        %v3328 = vld [vmem:[%s1475 + $0x128] sm:$0xff]
        %v3329 = vld [vmem:[%s1475 + $0x130] sm:$0xff]
        %v3330 = vld [vmem:[%s1475 + $0x138] sm:$0xff]
        %v3331 = vld [vmem:[%s1475 + $0x140] sm:$0xff]
        %v3332 = vld [vmem:[%s1475 + $0x148] sm:$0xff]
        %v3333 = vld [vmem:[%s1475 + $0x150] sm:$0xff]
        %v3334 = vld [vmem:[%s1475 + $0x158] sm:$0xff]
        %v3335 = vld [vmem:[%s1475 + $0x160] sm:$0xff]
        %v3336 = vld [vmem:[%s1475 + $0x168] sm:$0xff]
        %v3337 = vld [vmem:[%s1475 + $0x170] sm:$0xff]
        %v3338 = vld [vmem:[%s1475 + $0x178] sm:$0xff]
        %v3339 = vld [vmem:[%s1475 + $0x180] sm:$0xff]
        %v3340 = vld [vmem:[%s1475 + $0x188] sm:$0xff]
        %v3391 = vunpack.c.l.b16 %v3291
        %v3392 = vunpack.c.h.b16 %v3291
        %v3393 = vunpack.c.l.b16 %v3292
        %v3394 = vunpack.c.h.b16 %v3292
        %v3395 = vunpack.c.l.b16 %v3293
        %v3396 = vunpack.c.h.b16 %v3293
        %v3397 = vunpack.c.l.b16 %v3294
        %v3398 = vunpack.c.h.b16 %v3294
        %v3399 = vunpack.c.l.b16 %v3295
        %v3400 = vunpack.c.h.b16 %v3295
        %v3401 = vunpack.c.l.b16 %v3296
        %v3402 = vunpack.c.h.b16 %v3296
        %v3403 = vunpack.c.l.b16 %v3297
        %v3404 = vunpack.c.h.b16 %v3297
        %v3405 = vunpack.c.l.b16 %v3298
        %v3406 = vunpack.c.h.b16 %v3298
        %v3407 = vunpack.c.l.b16 %v3299
        %v3408 = vunpack.c.h.b16 %v3299
        %v3409 = vunpack.c.l.b16 %v3300
        %v3410 = vunpack.c.h.b16 %v3300
        %v3411 = vunpack.c.l.b16 %v3301
        %v3412 = vunpack.c.h.b16 %v3301
        %v3413 = vunpack.c.l.b16 %v3302
        %v3414 = vunpack.c.h.b16 %v3302
        %v3415 = vunpack.c.l.b16 %v3303
        %v3416 = vunpack.c.h.b16 %v3303
        %v3417 = vunpack.c.l.b16 %v3304
        %v3418 = vunpack.c.h.b16 %v3304
        %v3419 = vunpack.c.l.b16 %v3305
        %v3420 = vunpack.c.h.b16 %v3305
        %v3421 = vunpack.c.l.b16 %v3306
        %v3422 = vunpack.c.h.b16 %v3306
        %v3423 = vunpack.c.l.b16 %v3307
        %v3424 = vunpack.c.h.b16 %v3307
        %v3425 = vunpack.c.l.b16 %v3308
        %v3426 = vunpack.c.h.b16 %v3308
        %v3427 = vunpack.c.l.b16 %v3309
        %v3428 = vunpack.c.h.b16 %v3309
        %v3429 = vunpack.c.l.b16 %v3310
        %v3430 = vunpack.c.h.b16 %v3310
        %v3431 = vunpack.c.l.b16 %v3311
        %v3432 = vunpack.c.h.b16 %v3311
        %v3433 = vunpack.c.l.b16 %v3312
        %v3434 = vunpack.c.h.b16 %v3312
        %v3435 = vunpack.c.l.b16 %v3313
        %v3436 = vunpack.c.h.b16 %v3313
        %v3437 = vunpack.c.l.b16 %v3314
        %v3438 = vunpack.c.h.b16 %v3314
        %v3439 = vunpack.c.l.b16 %v3315
        %v3440 = vunpack.c.h.b16 %v3315
        %v3441 = vunpack.c.l.b16 %v3316
        %v3442 = vunpack.c.h.b16 %v3316
        %v3443 = vunpack.c.l.b16 %v3317
        %v3444 = vunpack.c.h.b16 %v3317
        %v3445 = vunpack.c.l.b16 %v3318
        %v3446 = vunpack.c.h.b16 %v3318
        %v3447 = vunpack.c.l.b16 %v3319
        %v3448 = vunpack.c.h.b16 %v3319
        %v3449 = vunpack.c.l.b16 %v3320
        %v3450 = vunpack.c.h.b16 %v3320
        %v3451 = vunpack.c.l.b16 %v3321
        %v3452 = vunpack.c.h.b16 %v3321
        %v3453 = vunpack.c.l.b16 %v3322
        %v3454 = vunpack.c.h.b16 %v3322
        %v3455 = vunpack.c.l.b16 %v3323
        %v3456 = vunpack.c.h.b16 %v3323
        %v3457 = vunpack.c.l.b16 %v3324
        %v3458 = vunpack.c.h.b16 %v3324
        %v3459 = vunpack.c.l.b16 %v3325
        %v3460 = vunpack.c.h.b16 %v3325
        %v3461 = vunpack.c.l.b16 %v3326
        %v3462 = vunpack.c.h.b16 %v3326
        %v3463 = vunpack.c.l.b16 %v3327
        %v3464 = vunpack.c.h.b16 %v3327
        %v3465 = vunpack.c.l.b16 %v3328
        %v3466 = vunpack.c.h.b16 %v3328
        %v3467 = vunpack.c.l.b16 %v3329
        %v3468 = vunpack.c.h.b16 %v3329
        %v3469 = vunpack.c.l.b16 %v3330
        %v3470 = vunpack.c.h.b16 %v3330
        %v3471 = vunpack.c.l.b16 %v3331
        %v3472 = vunpack.c.h.b16 %v3331
        %v3473 = vunpack.c.l.b16 %v3332
        %v3474 = vunpack.c.h.b16 %v3332
        %v3475 = vunpack.c.l.b16 %v3333
        %v3476 = vunpack.c.h.b16 %v3333
        %v3477 = vunpack.c.l.b16 %v3334
        %v3478 = vunpack.c.h.b16 %v3334
        %v3479 = vunpack.c.l.b16 %v3335
        %v3480 = vunpack.c.h.b16 %v3335
        %v3481 = vunpack.c.l.b16 %v3336
        %v3482 = vunpack.c.h.b16 %v3336
        %v3483 = vunpack.c.l.b16 %v3337
        %v3484 = vunpack.c.h.b16 %v3337
        %v3485 = vunpack.c.l.b16 %v3338
        %v3486 = vunpack.c.h.b16 %v3338
        %v3487 = vunpack.c.l.b16 %v3339
        %v3488 = vunpack.c.h.b16 %v3339
        %v3489 = vunpack.c.l.b16 %v3340
        %v3490 = vunpack.c.h.b16 %v3340
        %v3491 = vpack.c.b16 %v3441, %v3391
        %v3492 = vpack.c.b16 %v3442, %v3392
        %v3493 = vpack.c.b16 %v3443, %v3393
        %v3494 = vpack.c.b16 %v3444, %v3394
        %v3495 = vpack.c.b16 %v3445, %v3395
        %v3496 = vpack.c.b16 %v3446, %v3396
        %v3497 = vpack.c.b16 %v3447, %v3397
        %v3498 = vpack.c.b16 %v3448, %v3398
        %v3499 = vpack.c.b16 %v3449, %v3399
        %v3500 = vpack.c.b16 %v3450, %v3400
        %v3501 = vpack.c.b16 %v3451, %v3401
        %v3502 = vpack.c.b16 %v3452, %v3402
        %v3503 = vpack.c.b16 %v3453, %v3403
        %v3504 = vpack.c.b16 %v3454, %v3404
        %v3505 = vpack.c.b16 %v3455, %v3405
        %v3506 = vpack.c.b16 %v3456, %v3406
        %v3507 = vpack.c.b16 %v3457, %v3407
        %v3508 = vpack.c.b16 %v3458, %v3408
        %v3509 = vpack.c.b16 %v3459, %v3409
        %v3510 = vpack.c.b16 %v3460, %v3410
        %v3511 = vpack.c.b16 %v3461, %v3411
        %v3512 = vpack.c.b16 %v3462, %v3412
        %v3513 = vpack.c.b16 %v3463, %v3413
        %v3514 = vpack.c.b16 %v3464, %v3414
        %v3515 = vpack.c.b16 %v3465, %v3415
        %v3516 = vpack.c.b16 %v3466, %v3416
        %v3517 = vpack.c.b16 %v3467, %v3417
        %v3518 = vpack.c.b16 %v3468, %v3418
        %v3519 = vpack.c.b16 %v3469, %v3419
        %v3520 = vpack.c.b16 %v3470, %v3420
        %v3521 = vpack.c.b16 %v3471, %v3421
        %v3522 = vpack.c.b16 %v3472, %v3422
        %v3523 = vpack.c.b16 %v3473, %v3423
        %v3524 = vpack.c.b16 %v3474, %v3424
        %v3525 = vpack.c.b16 %v3475, %v3425
        %v3526 = vpack.c.b16 %v3476, %v3426
        %v3527 = vpack.c.b16 %v3477, %v3427
        %v3528 = vpack.c.b16 %v3478, %v3428
        %v3529 = vpack.c.b16 %v3479, %v3429
        %v3530 = vpack.c.b16 %v3480, %v3430
        %v3531 = vpack.c.b16 %v3481, %v3431
        %v3532 = vpack.c.b16 %v3482, %v3432
        %v3533 = vpack.c.b16 %v3483, %v3433
        %v3534 = vpack.c.b16 %v3484, %v3434
        %v3535 = vpack.c.b16 %v3485, %v3435
        %v3536 = vpack.c.b16 %v3486, %v3436
        %v3537 = vpack.c.b16 %v3487, %v3437
        %v3538 = vpack.c.b16 %v3488, %v3438
        %v3539 = vpack.c.b16 %v3489, %v3439
        %v3540 = vpack.c.b16 %v3490, %v3440
        %3591 = vmatprep.subr.bf16.mxu0 %v2092
        %3592 = vmatpush1.bf16.msra.mxu0 %v2091
        %3593 = vmatprep.subr.bf16.mxu0 %v2095
        %3594 = vmatpush1.bf16.msra.mxu0 %v2094
        %3595 = vmatprep.subr.bf16.mxu0 %v2098
        %3596 = vmatpush1.bf16.msra.mxu0 %v2097
        %3597 = vmatprep.subr.bf16.mxu0 %v2101
        %3598 = vmatpush1.bf16.msra.mxu0 %v2100
        %3599 = vmatprep.subr.bf16.mxu0 %v2104
        %3600 = vmatpush1.bf16.msra.mxu0 %v2103
        %3601 = vmatprep.subr.bf16.mxu0 %v2107
        %3602 = vmatpush1.bf16.msra.mxu0 %v2106
        %3603 = vmatprep.subr.bf16.mxu0 %v2110
        %3604 = vmatpush1.bf16.msra.mxu0 %v2109
        %3605 = vmatprep.subr.bf16.mxu0 %v2113
        %3606 = vmatpush1.bf16.msra.mxu0 %v2112
        %3607 = vmatprep.subr.bf16.mxu0 %v2116
        %3608 = vmatpush1.bf16.msra.mxu0 %v2115
        %3609 = vmatprep.subr.bf16.mxu0 %v2119
        %3610 = vmatpush1.bf16.msra.mxu0 %v2118
        %3611 = vmatprep.subr.bf16.mxu0 %v2122
        %3612 = vmatpush1.bf16.msra.mxu0 %v2121
        %3613 = vmatprep.subr.bf16.mxu0 %v2125
        %3614 = vmatpush1.bf16.msra.mxu0 %v2124
        %3615 = vmatprep.subr.bf16.mxu0 %v2128
        %3616 = vmatpush1.bf16.msra.mxu0 %v2127
        %3617 = vmatprep.subr.bf16.mxu0 %v2131
        %3618 = vmatpush1.bf16.msra.mxu0 %v2130
        %3619 = vmatprep.subr.bf16.mxu0 %v2134
        %3620 = vmatpush1.bf16.msra.mxu0 %v2133
        %3621 = vmatprep.subr.bf16.mxu0 %v2137
        %3622 = vmatpush1.bf16.msra.mxu0 %v2136
        %3623 = vmatprep.mubr.bf16.mxu0 %v3492
        %3624 = vmatmul.mubr.bf16.gmra.mrb[0].mxu0 %v3491
        %v3625 = vpop.f32.mrb[0].mxu0
        %v3626 = vadd.f32 0.0, %v3625
        %v3627 = vpop.f32.mrb[0].mxu0
        %v3628 = vadd.f32 0.0, %v3627
        %v3629 = vpop.f32.mrb[0].mxu0
        %v3630 = vadd.f32 0.0, %v3629
        %v3631 = vpop.f32.mrb[0].mxu0
        %v3632 = vadd.f32 0.0, %v3631
        %3633 = vdwg.mxu0
        %3634 = vmatprep.subr.bf16.mxu0 %v2140
        %3635 = vmatpush1.bf16.msra.mxu0 %v2139
        %3636 = vmatprep.subr.bf16.mxu0 %v2143
        %3637 = vmatpush1.bf16.msra.mxu0 %v2142
        %3638 = vmatprep.subr.bf16.mxu0 %v2146
        %3639 = vmatpush1.bf16.msra.mxu0 %v2145
        %3640 = vmatprep.subr.bf16.mxu0 %v2149
        %3641 = vmatpush1.bf16.msra.mxu0 %v2148
        %3642 = vmatprep.subr.bf16.mxu0 %v2152
        %3643 = vmatpush1.bf16.msra.mxu0 %v2151
        %3644 = vmatprep.subr.bf16.mxu0 %v2155
        %3645 = vmatpush1.bf16.msra.mxu0 %v2154
        %3646 = vmatprep.subr.bf16.mxu0 %v2158
        %3647 = vmatpush1.bf16.msra.mxu0 %v2157
        %3648 = vmatprep.subr.bf16.mxu0 %v2161
        %3649 = vmatpush1.bf16.msra.mxu0 %v2160
        %3650 = vmatprep.subr.bf16.mxu0 %v2164
        %3651 = vmatpush1.bf16.msra.mxu0 %v2163
        %3652 = vmatprep.subr.bf16.mxu0 %v2167
        %3653 = vmatpush1.bf16.msra.mxu0 %v2166
        %3654 = vmatprep.subr.bf16.mxu0 %v2170
        %3655 = vmatpush1.bf16.msra.mxu0 %v2169
        %3656 = vmatprep.subr.bf16.mxu0 %v2173
        %3657 = vmatpush1.bf16.msra.mxu0 %v2172
        %3658 = vmatprep.subr.bf16.mxu0 %v2176
        %3659 = vmatpush1.bf16.msra.mxu0 %v2175
        %3660 = vmatprep.subr.bf16.mxu0 %v2179
        %3661 = vmatpush1.bf16.msra.mxu0 %v2178
        %3662 = vmatprep.subr.bf16.mxu0 %v2182
        %3663 = vmatpush1.bf16.msra.mxu0 %v2181
        %3664 = vmatprep.subr.bf16.mxu0 %v2185
        %3665 = vmatpush1.bf16.msra.mxu0 %v2184
        %3666 = vmatprep.mubr.bf16.mxu0 %v3494
        %3667 = vmatmul.mubr.bf16.gmra.mrb[0].mxu0 %v3493
        %v3668 = vpop.f32.mrb[0].mxu0
        %v3669 = vadd.f32 %v3626, %v3668
        %v3670 = vpop.f32.mrb[0].mxu0
        %v3671 = vadd.f32 %v3628, %v3670
        %v3672 = vpop.f32.mrb[0].mxu0
        %v3673 = vadd.f32 %v3630, %v3672
        %v3674 = vpop.f32.mrb[0].mxu0
        %v3675 = vadd.f32 %v3632, %v3674
        %3676 = vdwg.mxu0
        %3677 = vmatprep.subr.bf16.mxu0 %v2188
        %3678 = vmatpush1.bf16.msra.mxu0 %v2187
        %3679 = vmatprep.subr.bf16.mxu0 %v2191
        %3680 = vmatpush1.bf16.msra.mxu0 %v2190
        %3681 = vmatprep.subr.bf16.mxu0 %v2194
        %3682 = vmatpush1.bf16.msra.mxu0 %v2193
        %3683 = vmatprep.subr.bf16.mxu0 %v2197
        %3684 = vmatpush1.bf16.msra.mxu0 %v2196
        %3685 = vmatprep.subr.bf16.mxu0 %v2200
        %3686 = vmatpush1.bf16.msra.mxu0 %v2199
        %3687 = vmatprep.subr.bf16.mxu0 %v2203
        %3688 = vmatpush1.bf16.msra.mxu0 %v2202
        %3689 = vmatprep.subr.bf16.mxu0 %v2206
        %3690 = vmatpush1.bf16.msra.mxu0 %v2205
        %3691 = vmatprep.subr.bf16.mxu0 %v2209
        %3692 = vmatpush1.bf16.msra.mxu0 %v2208
        %3693 = vmatprep.subr.bf16.mxu0 %v2212
        %3694 = vmatpush1.bf16.msra.mxu0 %v2211
        %3695 = vmatprep.subr.bf16.mxu0 %v2215
        %3696 = vmatpush1.bf16.msra.mxu0 %v2214
        %3697 = vmatprep.subr.bf16.mxu0 %v2218
        %3698 = vmatpush1.bf16.msra.mxu0 %v2217
        %3699 = vmatprep.subr.bf16.mxu0 %v2221
        %3700 = vmatpush1.bf16.msra.mxu0 %v2220
        %3701 = vmatprep.subr.bf16.mxu0 %v2224
        %3702 = vmatpush1.bf16.msra.mxu0 %v2223
        %3703 = vmatprep.subr.bf16.mxu0 %v2227
        %3704 = vmatpush1.bf16.msra.mxu0 %v2226
        %3705 = vmatprep.subr.bf16.mxu0 %v2230
        %3706 = vmatpush1.bf16.msra.mxu0 %v2229
        %3707 = vmatprep.subr.bf16.mxu0 %v2233
        %3708 = vmatpush1.bf16.msra.mxu0 %v2232
        %3709 = vmatprep.mubr.bf16.mxu0 %v3496
        %3710 = vmatmul.mubr.bf16.gmra.mrb[0].mxu0 %v3495
        %v3711 = vpop.f32.mrb[0].mxu0
        %v3712 = vadd.f32 %v3669, %v3711
        %v3713 = vpop.f32.mrb[0].mxu0
        %v3714 = vadd.f32 %v3671, %v3713
        %v3715 = vpop.f32.mrb[0].mxu0
        %v3716 = vadd.f32 %v3673, %v3715
        %v3717 = vpop.f32.mrb[0].mxu0
        %v3718 = vadd.f32 %v3675, %v3717
        %3719 = vdwg.mxu0
        %3720 = vmatprep.subr.bf16.mxu0 %v2236
        %3721 = vmatpush1.bf16.msra.mxu0 %v2235
        %3722 = vmatprep.subr.bf16.mxu0 %v2239
        %3723 = vmatpush1.bf16.msra.mxu0 %v2238
        %3724 = vmatprep.subr.bf16.mxu0 %v2242
        %3725 = vmatpush1.bf16.msra.mxu0 %v2241
        %3726 = vmatprep.subr.bf16.mxu0 %v2245
        %3727 = vmatpush1.bf16.msra.mxu0 %v2244
        %3728 = vmatprep.subr.bf16.mxu0 %v2248
        %3729 = vmatpush1.bf16.msra.mxu0 %v2247
        %3730 = vmatprep.subr.bf16.mxu0 %v2251
        %3731 = vmatpush1.bf16.msra.mxu0 %v2250
        %3732 = vmatprep.subr.bf16.mxu0 %v2254
        %3733 = vmatpush1.bf16.msra.mxu0 %v2253
        %3734 = vmatprep.subr.bf16.mxu0 %v2257
        %3735 = vmatpush1.bf16.msra.mxu0 %v2256
        %3736 = vmatprep.subr.bf16.mxu0 %v2260
        %3737 = vmatpush1.bf16.msra.mxu0 %v2259
        %3738 = vmatprep.subr.bf16.mxu0 %v2263
        %3739 = vmatpush1.bf16.msra.mxu0 %v2262
        %3740 = vmatprep.subr.bf16.mxu0 %v2266
        %3741 = vmatpush1.bf16.msra.mxu0 %v2265
        %3742 = vmatprep.subr.bf16.mxu0 %v2269
        %3743 = vmatpush1.bf16.msra.mxu0 %v2268
        %3744 = vmatprep.subr.bf16.mxu0 %v2272
        %3745 = vmatpush1.bf16.msra.mxu0 %v2271
        %3746 = vmatprep.subr.bf16.mxu0 %v2275
        %3747 = vmatpush1.bf16.msra.mxu0 %v2274
        %3748 = vmatprep.subr.bf16.mxu0 %v2278
        %3749 = vmatpush1.bf16.msra.mxu0 %v2277
        %3750 = vmatprep.subr.bf16.mxu0 %v2281
        %3751 = vmatpush1.bf16.msra.mxu0 %v2280
        %3752 = vmatprep.mubr.bf16.mxu0 %v3498
        %3753 = vmatmul.mubr.bf16.gmra.mrb[0].mxu0 %v3497
        %v3754 = vpop.f32.mrb[0].mxu0
        %v3755 = vadd.f32 %v3712, %v3754
        %v3756 = vpop.f32.mrb[0].mxu0
        %v3757 = vadd.f32 %v3714, %v3756
        %v3758 = vpop.f32.mrb[0].mxu0
        %v3759 = vadd.f32 %v3716, %v3758
        %v3760 = vpop.f32.mrb[0].mxu0
        %v3761 = vadd.f32 %v3718, %v3760
        %3762 = vdwg.mxu0
        %3763 = vmatprep.subr.bf16.mxu0 %v2284
        %3764 = vmatpush1.bf16.msra.mxu0 %v2283
        %3765 = vmatprep.subr.bf16.mxu0 %v2287
        %3766 = vmatpush1.bf16.msra.mxu0 %v2286
        %3767 = vmatprep.subr.bf16.mxu0 %v2290
        %3768 = vmatpush1.bf16.msra.mxu0 %v2289
        %3769 = vmatprep.subr.bf16.mxu0 %v2293
        %3770 = vmatpush1.bf16.msra.mxu0 %v2292
        %3771 = vmatprep.subr.bf16.mxu0 %v2296
        %3772 = vmatpush1.bf16.msra.mxu0 %v2295
        %3773 = vmatprep.subr.bf16.mxu0 %v2299
        %3774 = vmatpush1.bf16.msra.mxu0 %v2298
        %3775 = vmatprep.subr.bf16.mxu0 %v2302
        %3776 = vmatpush1.bf16.msra.mxu0 %v2301
        %3777 = vmatprep.subr.bf16.mxu0 %v2305
        %3778 = vmatpush1.bf16.msra.mxu0 %v2304
        %3779 = vmatprep.subr.bf16.mxu0 %v2308
        %3780 = vmatpush1.bf16.msra.mxu0 %v2307
        %3781 = vmatprep.subr.bf16.mxu0 %v2311
        %3782 = vmatpush1.bf16.msra.mxu0 %v2310
        %3783 = vmatprep.subr.bf16.mxu0 %v2314
        %3784 = vmatpush1.bf16.msra.mxu0 %v2313
        %3785 = vmatprep.subr.bf16.mxu0 %v2317
        %3786 = vmatpush1.bf16.msra.mxu0 %v2316
        %3787 = vmatprep.subr.bf16.mxu0 %v2320
        %3788 = vmatpush1.bf16.msra.mxu0 %v2319
        %3789 = vmatprep.subr.bf16.mxu0 %v2323
        %3790 = vmatpush1.bf16.msra.mxu0 %v2322
        %3791 = vmatprep.subr.bf16.mxu0 %v2326
        %3792 = vmatpush1.bf16.msra.mxu0 %v2325
        %3793 = vmatprep.subr.bf16.mxu0 %v2329
        %3794 = vmatpush1.bf16.msra.mxu0 %v2328
        %3795 = vmatprep.mubr.bf16.mxu0 %v3500
        %3796 = vmatmul.mubr.bf16.gmra.mrb[0].mxu0 %v3499
        %v3797 = vpop.f32.mrb[0].mxu0
        %v3798 = vadd.f32 %v3755, %v3797
        %v3799 = vpop.f32.mrb[0].mxu0
        %v3800 = vadd.f32 %v3757, %v3799
        %v3801 = vpop.f32.mrb[0].mxu0
        %v3802 = vadd.f32 %v3759, %v3801
        %v3803 = vpop.f32.mrb[0].mxu0
        %v3804 = vadd.f32 %v3761, %v3803
        %3805 = vdwg.mxu0
        %3806 = vmatprep.subr.bf16.mxu0 %v2332
        %3807 = vmatpush1.bf16.msra.mxu0 %v2331
        %3808 = vmatprep.subr.bf16.mxu0 %v2335
        %3809 = vmatpush1.bf16.msra.mxu0 %v2334
        %3810 = vmatprep.subr.bf16.mxu0 %v2338
        %3811 = vmatpush1.bf16.msra.mxu0 %v2337
        %3812 = vmatprep.subr.bf16.mxu0 %v2341
        %3813 = vmatpush1.bf16.msra.mxu0 %v2340
        %3814 = vmatprep.subr.bf16.mxu0 %v2344
        %3815 = vmatpush1.bf16.msra.mxu0 %v2343
        %3816 = vmatprep.subr.bf16.mxu0 %v2347
        %3817 = vmatpush1.bf16.msra.mxu0 %v2346
        %3818 = vmatprep.subr.bf16.mxu0 %v2350
        %3819 = vmatpush1.bf16.msra.mxu0 %v2349
        %3820 = vmatprep.subr.bf16.mxu0 %v2353
        %3821 = vmatpush1.bf16.msra.mxu0 %v2352
        %3822 = vmatprep.subr.bf16.mxu0 %v2356
        %3823 = vmatpush1.bf16.msra.mxu0 %v2355
        %3824 = vmatprep.subr.bf16.mxu0 %v2359
        %3825 = vmatpush1.bf16.msra.mxu0 %v2358
        %3826 = vmatprep.subr.bf16.mxu0 %v2362
        %3827 = vmatpush1.bf16.msra.mxu0 %v2361
        %3828 = vmatprep.subr.bf16.mxu0 %v2365
        %3829 = vmatpush1.bf16.msra.mxu0 %v2364
        %3830 = vmatprep.subr.bf16.mxu0 %v2368
        %3831 = vmatpush1.bf16.msra.mxu0 %v2367
        %3832 = vmatprep.subr.bf16.mxu0 %v2371
        %3833 = vmatpush1.bf16.msra.mxu0 %v2370
        %3834 = vmatprep.subr.bf16.mxu0 %v2374
        %3835 = vmatpush1.bf16.msra.mxu0 %v2373
        %3836 = vmatprep.subr.bf16.mxu0 %v2377
        %3837 = vmatpush1.bf16.msra.mxu0 %v2376
        %3838 = vmatprep.mubr.bf16.mxu0 %v3502
        %3839 = vmatmul.mubr.bf16.gmra.mrb[0].mxu0 %v3501
        %v3840 = vpop.f32.mrb[0].mxu0
        %v3841 = vadd.f32 %v3798, %v3840
        %v3842 = vpop.f32.mrb[0].mxu0
        %v3843 = vadd.f32 %v3800, %v3842
        %v3844 = vpop.f32.mrb[0].mxu0
        %v3845 = vadd.f32 %v3802, %v3844
        %v3846 = vpop.f32.mrb[0].mxu0
        %v3847 = vadd.f32 %v3804, %v3846
        %3848 = vdwg.mxu0
        %3849 = vmatprep.subr.bf16.mxu0 %v2380
        %3850 = vmatpush1.bf16.msra.mxu0 %v2379
        %3851 = vmatprep.subr.bf16.mxu0 %v2383
        %3852 = vmatpush1.bf16.msra.mxu0 %v2382
        %3853 = vmatprep.subr.bf16.mxu0 %v2386
        %3854 = vmatpush1.bf16.msra.mxu0 %v2385
        %3855 = vmatprep.subr.bf16.mxu0 %v2389
        %3856 = vmatpush1.bf16.msra.mxu0 %v2388
        %3857 = vmatprep.subr.bf16.mxu0 %v2392
        %3858 = vmatpush1.bf16.msra.mxu0 %v2391
        %3859 = vmatprep.subr.bf16.mxu0 %v2395
        %3860 = vmatpush1.bf16.msra.mxu0 %v2394
        %3861 = vmatprep.subr.bf16.mxu0 %v2398
        %3862 = vmatpush1.bf16.msra.mxu0 %v2397
        %3863 = vmatprep.subr.bf16.mxu0 %v2401
        %3864 = vmatpush1.bf16.msra.mxu0 %v2400
        %3865 = vmatprep.subr.bf16.mxu0 %v2404
        %3866 = vmatpush1.bf16.msra.mxu0 %v2403
        %3867 = vmatprep.subr.bf16.mxu0 %v2407
        %3868 = vmatpush1.bf16.msra.mxu0 %v2406
        %3869 = vmatprep.subr.bf16.mxu0 %v2410
        %3870 = vmatpush1.bf16.msra.mxu0 %v2409
        %3871 = vmatprep.subr.bf16.mxu0 %v2413
        %3872 = vmatpush1.bf16.msra.mxu0 %v2412
        %3873 = vmatprep.subr.bf16.mxu0 %v2416
        %3874 = vmatpush1.bf16.msra.mxu0 %v2415
        %3875 = vmatprep.subr.bf16.mxu0 %v2419
        %3876 = vmatpush1.bf16.msra.mxu0 %v2418
        %3877 = vmatprep.subr.bf16.mxu0 %v2422
        %3878 = vmatpush1.bf16.msra.mxu0 %v2421
        %3879 = vmatprep.subr.bf16.mxu0 %v2425
        %3880 = vmatpush1.bf16.msra.mxu0 %v2424
        %3881 = vmatprep.mubr.bf16.mxu0 %v3504
        %3882 = vmatmul.mubr.bf16.gmra.mrb[0].mxu0 %v3503
        %v3883 = vpop.f32.mrb[0].mxu0
        %v3884 = vadd.f32 %v3841, %v3883
        %v3885 = vpop.f32.mrb[0].mxu0
        %v3886 = vadd.f32 %v3843, %v3885
        %v3887 = vpop.f32.mrb[0].mxu0
        %v3888 = vadd.f32 %v3845, %v3887
        %v3889 = vpop.f32.mrb[0].mxu0
        %v3890 = vadd.f32 %v3847, %v3889
        %3891 = vdwg.mxu0
        %3892 = vmatprep.subr.bf16.mxu0 %v2428
        %3893 = vmatpush1.bf16.msra.mxu0 %v2427
        %3894 = vmatprep.subr.bf16.mxu0 %v2431
        %3895 = vmatpush1.bf16.msra.mxu0 %v2430
        %3896 = vmatprep.subr.bf16.mxu0 %v2434
        %3897 = vmatpush1.bf16.msra.mxu0 %v2433
        %3898 = vmatprep.subr.bf16.mxu0 %v2437
        %3899 = vmatpush1.bf16.msra.mxu0 %v2436
        %3900 = vmatprep.subr.bf16.mxu0 %v2440
        %3901 = vmatpush1.bf16.msra.mxu0 %v2439
        %3902 = vmatprep.subr.bf16.mxu0 %v2443
        %3903 = vmatpush1.bf16.msra.mxu0 %v2442
        %3904 = vmatprep.subr.bf16.mxu0 %v2446
        %3905 = vmatpush1.bf16.msra.mxu0 %v2445
        %3906 = vmatprep.subr.bf16.mxu0 %v2449
        %3907 = vmatpush1.bf16.msra.mxu0 %v2448
        %3908 = vmatprep.subr.bf16.mxu0 %v2452
        %3909 = vmatpush1.bf16.msra.mxu0 %v2451
        %3910 = vmatprep.subr.bf16.mxu0 %v2455
        %3911 = vmatpush1.bf16.msra.mxu0 %v2454
        %3912 = vmatprep.subr.bf16.mxu0 %v2458
        %3913 = vmatpush1.bf16.msra.mxu0 %v2457
        %3914 = vmatprep.subr.bf16.mxu0 %v2461
        %3915 = vmatpush1.bf16.msra.mxu0 %v2460
        %3916 = vmatprep.subr.bf16.mxu0 %v2464
        %3917 = vmatpush1.bf16.msra.mxu0 %v2463
        %3918 = vmatprep.subr.bf16.mxu0 %v2467
        %3919 = vmatpush1.bf16.msra.mxu0 %v2466
        %3920 = vmatprep.subr.bf16.mxu0 %v2470
        %3921 = vmatpush1.bf16.msra.mxu0 %v2469
        %3922 = vmatprep.subr.bf16.mxu0 %v2473
        %3923 = vmatpush1.bf16.msra.mxu0 %v2472
        %3924 = vmatprep.mubr.bf16.mxu0 %v3506
        %3925 = vmatmul.mubr.bf16.gmra.mrb[0].mxu0 %v3505
        %v3926 = vpop.f32.mrb[0].mxu0
        %v3927 = vadd.f32 %v3884, %v3926
        %v3928 = vpop.f32.mrb[0].mxu0
        %v3929 = vadd.f32 %v3886, %v3928
        %v3930 = vpop.f32.mrb[0].mxu0
        %v3931 = vadd.f32 %v3888, %v3930
        %v3932 = vpop.f32.mrb[0].mxu0
        %v3933 = vadd.f32 %v3890, %v3932
        %3934 = vdwg.mxu0
        %3935 = vmatprep.subr.bf16.mxu0 %v2476
        %3936 = vmatpush1.bf16.msra.mxu0 %v2475
        %3937 = vmatprep.subr.bf16.mxu0 %v2479
        %3938 = vmatpush1.bf16.msra.mxu0 %v2478
        %3939 = vmatprep.subr.bf16.mxu0 %v2482
        %3940 = vmatpush1.bf16.msra.mxu0 %v2481
        %3941 = vmatprep.subr.bf16.mxu0 %v2485
        %3942 = vmatpush1.bf16.msra.mxu0 %v2484
        %3943 = vmatprep.subr.bf16.mxu0 %v2488
        %3944 = vmatpush1.bf16.msra.mxu0 %v2487
        %3945 = vmatprep.subr.bf16.mxu0 %v2491
        %3946 = vmatpush1.bf16.msra.mxu0 %v2490
        %3947 = vmatprep.subr.bf16.mxu0 %v2494
        %3948 = vmatpush1.bf16.msra.mxu0 %v2493
        %3949 = vmatprep.subr.bf16.mxu0 %v2497
        %3950 = vmatpush1.bf16.msra.mxu0 %v2496
        %3951 = vmatprep.subr.bf16.mxu0 %v2500
        %3952 = vmatpush1.bf16.msra.mxu0 %v2499
        %3953 = vmatprep.subr.bf16.mxu0 %v2503
        %3954 = vmatpush1.bf16.msra.mxu0 %v2502
        %3955 = vmatprep.subr.bf16.mxu0 %v2506
        %3956 = vmatpush1.bf16.msra.mxu0 %v2505
        %3957 = vmatprep.subr.bf16.mxu0 %v2509
        %3958 = vmatpush1.bf16.msra.mxu0 %v2508
        %3959 = vmatprep.subr.bf16.mxu0 %v2512
        %3960 = vmatpush1.bf16.msra.mxu0 %v2511
        %3961 = vmatprep.subr.bf16.mxu0 %v2515
        %3962 = vmatpush1.bf16.msra.mxu0 %v2514
        %3963 = vmatprep.subr.bf16.mxu0 %v2518
        %3964 = vmatpush1.bf16.msra.mxu0 %v2517
        %3965 = vmatprep.subr.bf16.mxu0 %v2521
        %3966 = vmatpush1.bf16.msra.mxu0 %v2520
        %3967 = vmatprep.mubr.bf16.mxu0 %v3508
        %3968 = vmatmul.mubr.bf16.gmra.mrb[0].mxu0 %v3507
        %v3969 = vpop.f32.mrb[0].mxu0
        %v3970 = vadd.f32 %v3927, %v3969
        %v3971 = vpop.f32.mrb[0].mxu0
        %v3972 = vadd.f32 %v3929, %v3971
        %v3973 = vpop.f32.mrb[0].mxu0
        %v3974 = vadd.f32 %v3931, %v3973
        %v3975 = vpop.f32.mrb[0].mxu0
        %v3976 = vadd.f32 %v3933, %v3975
        %3977 = vdwg.mxu0
        %3978 = vmatprep.subr.bf16.mxu0 %v2524
        %3979 = vmatpush1.bf16.msra.mxu0 %v2523
        %3980 = vmatprep.subr.bf16.mxu0 %v2527
        %3981 = vmatpush1.bf16.msra.mxu0 %v2526
        %3982 = vmatprep.subr.bf16.mxu0 %v2530
        %3983 = vmatpush1.bf16.msra.mxu0 %v2529
        %3984 = vmatprep.subr.bf16.mxu0 %v2533
        %3985 = vmatpush1.bf16.msra.mxu0 %v2532
        %3986 = vmatprep.subr.bf16.mxu0 %v2536
        %3987 = vmatpush1.bf16.msra.mxu0 %v2535
        %3988 = vmatprep.subr.bf16.mxu0 %v2539
        %3989 = vmatpush1.bf16.msra.mxu0 %v2538
        %3990 = vmatprep.subr.bf16.mxu0 %v2542
        %3991 = vmatpush1.bf16.msra.mxu0 %v2541
        %3992 = vmatprep.subr.bf16.mxu0 %v2545
        %3993 = vmatpush1.bf16.msra.mxu0 %v2544
        %3994 = vmatprep.subr.bf16.mxu0 %v2548
        %3995 = vmatpush1.bf16.msra.mxu0 %v2547
        %3996 = vmatprep.subr.bf16.mxu0 %v2551
        %3997 = vmatpush1.bf16.msra.mxu0 %v2550
        %3998 = vmatprep.subr.bf16.mxu0 %v2554
        %3999 = vmatpush1.bf16.msra.mxu0 %v2553
        %4000 = vmatprep.subr.bf16.mxu0 %v2557
        %4001 = vmatpush1.bf16.msra.mxu0 %v2556
        %4002 = vmatprep.subr.bf16.mxu0 %v2560
        %4003 = vmatpush1.bf16.msra.mxu0 %v2559
        %4004 = vmatprep.subr.bf16.mxu0 %v2563
        %4005 = vmatpush1.bf16.msra.mxu0 %v2562
        %4006 = vmatprep.subr.bf16.mxu0 %v2566
        %4007 = vmatpush1.bf16.msra.mxu0 %v2565
        %4008 = vmatprep.subr.bf16.mxu0 %v2569
        %4009 = vmatpush1.bf16.msra.mxu0 %v2568
        %4010 = vmatprep.mubr.bf16.mxu0 %v3510
        %4011 = vmatmul.mubr.bf16.gmra.mrb[0].mxu0 %v3509
        %v4012 = vpop.f32.mrb[0].mxu0
        %v4013 = vadd.f32 %v3970, %v4012
        %v4014 = vpop.f32.mrb[0].mxu0
        %v4015 = vadd.f32 %v3972, %v4014
        %v4016 = vpop.f32.mrb[0].mxu0
        %v4017 = vadd.f32 %v3974, %v4016
        %v4018 = vpop.f32.mrb[0].mxu0
        %v4019 = vadd.f32 %v3976, %v4018
        %4020 = vdwg.mxu0
        %4021 = vmatprep.subr.bf16.mxu0 %v2572
        %4022 = vmatpush1.bf16.msra.mxu0 %v2571
        %4023 = vmatprep.subr.bf16.mxu0 %v2575
        %4024 = vmatpush1.bf16.msra.mxu0 %v2574
        %4025 = vmatprep.subr.bf16.mxu0 %v2578
        %4026 = vmatpush1.bf16.msra.mxu0 %v2577
        %4027 = vmatprep.subr.bf16.mxu0 %v2581
        %4028 = vmatpush1.bf16.msra.mxu0 %v2580
        %4029 = vmatprep.subr.bf16.mxu0 %v2584
        %4030 = vmatpush1.bf16.msra.mxu0 %v2583
        %4031 = vmatprep.subr.bf16.mxu0 %v2587
        %4032 = vmatpush1.bf16.msra.mxu0 %v2586
        %4033 = vmatprep.subr.bf16.mxu0 %v2590
        %4034 = vmatpush1.bf16.msra.mxu0 %v2589
        %4035 = vmatprep.subr.bf16.mxu0 %v2593
        %4036 = vmatpush1.bf16.msra.mxu0 %v2592
        %4037 = vmatprep.subr.bf16.mxu0 %v2596
        %4038 = vmatpush1.bf16.msra.mxu0 %v2595
        %4039 = vmatprep.subr.bf16.mxu0 %v2599
        %4040 = vmatpush1.bf16.msra.mxu0 %v2598
        %4041 = vmatprep.subr.bf16.mxu0 %v2602
        %4042 = vmatpush1.bf16.msra.mxu0 %v2601
        %4043 = vmatprep.subr.bf16.mxu0 %v2605
        %4044 = vmatpush1.bf16.msra.mxu0 %v2604
        %4045 = vmatprep.subr.bf16.mxu0 %v2608
        %4046 = vmatpush1.bf16.msra.mxu0 %v2607
        %4047 = vmatprep.subr.bf16.mxu0 %v2611
        %4048 = vmatpush1.bf16.msra.mxu0 %v2610
        %4049 = vmatprep.subr.bf16.mxu0 %v2614
        %4050 = vmatpush1.bf16.msra.mxu0 %v2613
        %4051 = vmatprep.subr.bf16.mxu0 %v2617
        %4052 = vmatpush1.bf16.msra.mxu0 %v2616
        %4053 = vmatprep.mubr.bf16.mxu0 %v3512
        %4054 = vmatmul.mubr.bf16.gmra.mrb[0].mxu0 %v3511
        %v4055 = vpop.f32.mrb[0].mxu0
        %v4056 = vadd.f32 %v4013, %v4055
        %v4057 = vpop.f32.mrb[0].mxu0
        %v4058 = vadd.f32 %v4015, %v4057
        %v4059 = vpop.f32.mrb[0].mxu0
        %v4060 = vadd.f32 %v4017, %v4059
        %v4061 = vpop.f32.mrb[0].mxu0
        %v4062 = vadd.f32 %v4019, %v4061
        %4063 = vdwg.mxu0
        %4064 = vmatprep.subr.bf16.mxu0 %v2620
        %4065 = vmatpush1.bf16.msra.mxu0 %v2619
        %4066 = vmatprep.subr.bf16.mxu0 %v2623
        %4067 = vmatpush1.bf16.msra.mxu0 %v2622
        %4068 = vmatprep.subr.bf16.mxu0 %v2626
        %4069 = vmatpush1.bf16.msra.mxu0 %v2625
        %4070 = vmatprep.subr.bf16.mxu0 %v2629
        %4071 = vmatpush1.bf16.msra.mxu0 %v2628
        %4072 = vmatprep.subr.bf16.mxu0 %v2632
        %4073 = vmatpush1.bf16.msra.mxu0 %v2631
        %4074 = vmatprep.subr.bf16.mxu0 %v2635
        %4075 = vmatpush1.bf16.msra.mxu0 %v2634
        %4076 = vmatprep.subr.bf16.mxu0 %v2638
        %4077 = vmatpush1.bf16.msra.mxu0 %v2637
        %4078 = vmatprep.subr.bf16.mxu0 %v2641
        %4079 = vmatpush1.bf16.msra.mxu0 %v2640
        %4080 = vmatprep.subr.bf16.mxu0 %v2644
        %4081 = vmatpush1.bf16.msra.mxu0 %v2643
        %4082 = vmatprep.subr.bf16.mxu0 %v2647
        %4083 = vmatpush1.bf16.msra.mxu0 %v2646
        %4084 = vmatprep.subr.bf16.mxu0 %v2650
        %4085 = vmatpush1.bf16.msra.mxu0 %v2649
        %4086 = vmatprep.subr.bf16.mxu0 %v2653
        %4087 = vmatpush1.bf16.msra.mxu0 %v2652
        %4088 = vmatprep.subr.bf16.mxu0 %v2656
        %4089 = vmatpush1.bf16.msra.mxu0 %v2655
        %4090 = vmatprep.subr.bf16.mxu0 %v2659
        %4091 = vmatpush1.bf16.msra.mxu0 %v2658
        %4092 = vmatprep.subr.bf16.mxu0 %v2662
        %4093 = vmatpush1.bf16.msra.mxu0 %v2661
        %4094 = vmatprep.subr.bf16.mxu0 %v2665
        %4095 = vmatpush1.bf16.msra.mxu0 %v2664
        %4096 = vmatprep.mubr.bf16.mxu0 %v3514
        %4097 = vmatmul.mubr.bf16.gmra.mrb[0].mxu0 %v3513
        %v4098 = vpop.f32.mrb[0].mxu0
        %v4099 = vadd.f32 %v4056, %v4098
        %v4100 = vpop.f32.mrb[0].mxu0
        %v4101 = vadd.f32 %v4058, %v4100
        %v4102 = vpop.f32.mrb[0].mxu0
        %v4103 = vadd.f32 %v4060, %v4102
        %v4104 = vpop.f32.mrb[0].mxu0
        %v4105 = vadd.f32 %v4062, %v4104
        %4106 = vdwg.mxu0
        %4107 = vmatprep.subr.bf16.mxu0 %v2668
        %4108 = vmatpush1.bf16.msra.mxu0 %v2667
        %4109 = vmatprep.subr.bf16.mxu0 %v2671
        %4110 = vmatpush1.bf16.msra.mxu0 %v2670
        %4111 = vmatprep.subr.bf16.mxu0 %v2674
        %4112 = vmatpush1.bf16.msra.mxu0 %v2673
        %4113 = vmatprep.subr.bf16.mxu0 %v2677
        %4114 = vmatpush1.bf16.msra.mxu0 %v2676
        %4115 = vmatprep.subr.bf16.mxu0 %v2680
        %4116 = vmatpush1.bf16.msra.mxu0 %v2679
        %4117 = vmatprep.subr.bf16.mxu0 %v2683
        %4118 = vmatpush1.bf16.msra.mxu0 %v2682
        %4119 = vmatprep.subr.bf16.mxu0 %v2686
        %4120 = vmatpush1.bf16.msra.mxu0 %v2685
        %4121 = vmatprep.subr.bf16.mxu0 %v2689
        %4122 = vmatpush1.bf16.msra.mxu0 %v2688
        %4123 = vmatprep.subr.bf16.mxu0 %v2692
        %4124 = vmatpush1.bf16.msra.mxu0 %v2691
        %4125 = vmatprep.subr.bf16.mxu0 %v2695
        %4126 = vmatpush1.bf16.msra.mxu0 %v2694
        %4127 = vmatprep.subr.bf16.mxu0 %v2698
        %4128 = vmatpush1.bf16.msra.mxu0 %v2697
        %4129 = vmatprep.subr.bf16.mxu0 %v2701
        %4130 = vmatpush1.bf16.msra.mxu0 %v2700
        %4131 = vmatprep.subr.bf16.mxu0 %v2704
        %4132 = vmatpush1.bf16.msra.mxu0 %v2703
        %4133 = vmatprep.subr.bf16.mxu0 %v2707
        %4134 = vmatpush1.bf16.msra.mxu0 %v2706
        %4135 = vmatprep.subr.bf16.mxu0 %v2710
        %4136 = vmatpush1.bf16.msra.mxu0 %v2709
        %4137 = vmatprep.subr.bf16.mxu0 %v2713
        %4138 = vmatpush1.bf16.msra.mxu0 %v2712
        %4139 = vmatprep.mubr.bf16.mxu0 %v3516
        %4140 = vmatmul.mubr.bf16.gmra.mrb[0].mxu0 %v3515
        %v4141 = vpop.f32.mrb[0].mxu0
        %v4142 = vadd.f32 %v4099, %v4141
        %v4143 = vpop.f32.mrb[0].mxu0
        %v4144 = vadd.f32 %v4101, %v4143
        %v4145 = vpop.f32.mrb[0].mxu0
        %v4146 = vadd.f32 %v4103, %v4145
        %v4147 = vpop.f32.mrb[0].mxu0
        %v4148 = vadd.f32 %v4105, %v4147
        %4149 = vdwg.mxu0
        %4150 = vmatprep.subr.bf16.mxu0 %v2716
        %4151 = vmatpush1.bf16.msra.mxu0 %v2715
        %4152 = vmatprep.subr.bf16.mxu0 %v2719
        %4153 = vmatpush1.bf16.msra.mxu0 %v2718
        %4154 = vmatprep.subr.bf16.mxu0 %v2722
        %4155 = vmatpush1.bf16.msra.mxu0 %v2721
        %4156 = vmatprep.subr.bf16.mxu0 %v2725
        %4157 = vmatpush1.bf16.msra.mxu0 %v2724
        %4158 = vmatprep.subr.bf16.mxu0 %v2728
        %4159 = vmatpush1.bf16.msra.mxu0 %v2727
        %4160 = vmatprep.subr.bf16.mxu0 %v2731
        %4161 = vmatpush1.bf16.msra.mxu0 %v2730
        %4162 = vmatprep.subr.bf16.mxu0 %v2734
        %4163 = vmatpush1.bf16.msra.mxu0 %v2733
        %4164 = vmatprep.subr.bf16.mxu0 %v2737
        %4165 = vmatpush1.bf16.msra.mxu0 %v2736
        %4166 = vmatprep.subr.bf16.mxu0 %v2740
        %4167 = vmatpush1.bf16.msra.mxu0 %v2739
        %4168 = vmatprep.subr.bf16.mxu0 %v2743
        %4169 = vmatpush1.bf16.msra.mxu0 %v2742
        %4170 = vmatprep.subr.bf16.mxu0 %v2746
        %4171 = vmatpush1.bf16.msra.mxu0 %v2745
        %4172 = vmatprep.subr.bf16.mxu0 %v2749
        %4173 = vmatpush1.bf16.msra.mxu0 %v2748
        %4174 = vmatprep.subr.bf16.mxu0 %v2752
        %4175 = vmatpush1.bf16.msra.mxu0 %v2751
        %4176 = vmatprep.subr.bf16.mxu0 %v2755
        %4177 = vmatpush1.bf16.msra.mxu0 %v2754
        %4178 = vmatprep.subr.bf16.mxu0 %v2758
        %4179 = vmatpush1.bf16.msra.mxu0 %v2757
        %4180 = vmatprep.subr.bf16.mxu0 %v2761
        %4181 = vmatpush1.bf16.msra.mxu0 %v2760
        %4182 = vmatprep.mubr.bf16.mxu0 %v3518
        %4183 = vmatmul.mubr.bf16.gmra.mrb[0].mxu0 %v3517
        %v4184 = vpop.f32.mrb[0].mxu0
        %v4185 = vadd.f32 %v4142, %v4184
        %v4186 = vpop.f32.mrb[0].mxu0
        %v4187 = vadd.f32 %v4144, %v4186
        %v4188 = vpop.f32.mrb[0].mxu0
        %v4189 = vadd.f32 %v4146, %v4188
        %v4190 = vpop.f32.mrb[0].mxu0
        %v4191 = vadd.f32 %v4148, %v4190
        %4192 = vdwg.mxu0
        %4193 = vmatprep.subr.bf16.mxu0 %v2764
        %4194 = vmatpush1.bf16.msra.mxu0 %v2763
        %4195 = vmatprep.subr.bf16.mxu0 %v2767
        %4196 = vmatpush1.bf16.msra.mxu0 %v2766
        %4197 = vmatprep.subr.bf16.mxu0 %v2770
        %4198 = vmatpush1.bf16.msra.mxu0 %v2769
        %4199 = vmatprep.subr.bf16.mxu0 %v2773
        %4200 = vmatpush1.bf16.msra.mxu0 %v2772
        %4201 = vmatprep.subr.bf16.mxu0 %v2776
        %4202 = vmatpush1.bf16.msra.mxu0 %v2775
        %4203 = vmatprep.subr.bf16.mxu0 %v2779
        %4204 = vmatpush1.bf16.msra.mxu0 %v2778
        %4205 = vmatprep.subr.bf16.mxu0 %v2782
        %4206 = vmatpush1.bf16.msra.mxu0 %v2781
        %4207 = vmatprep.subr.bf16.mxu0 %v2785
        %4208 = vmatpush1.bf16.msra.mxu0 %v2784
        %4209 = vmatprep.subr.bf16.mxu0 %v2788
        %4210 = vmatpush1.bf16.msra.mxu0 %v2787
        %4211 = vmatprep.subr.bf16.mxu0 %v2791
        %4212 = vmatpush1.bf16.msra.mxu0 %v2790
        %4213 = vmatprep.subr.bf16.mxu0 %v2794
        %4214 = vmatpush1.bf16.msra.mxu0 %v2793
        %4215 = vmatprep.subr.bf16.mxu0 %v2797
        %4216 = vmatpush1.bf16.msra.mxu0 %v2796
        %4217 = vmatprep.subr.bf16.mxu0 %v2800
        %4218 = vmatpush1.bf16.msra.mxu0 %v2799
        %4219 = vmatprep.subr.bf16.mxu0 %v2803
        %4220 = vmatpush1.bf16.msra.mxu0 %v2802
        %4221 = vmatprep.subr.bf16.mxu0 %v2806
        %4222 = vmatpush1.bf16.msra.mxu0 %v2805
        %4223 = vmatprep.subr.bf16.mxu0 %v2809
        %4224 = vmatpush1.bf16.msra.mxu0 %v2808
        %4225 = vmatprep.mubr.bf16.mxu0 %v3520
        %4226 = vmatmul.mubr.bf16.gmra.mrb[0].mxu0 %v3519
        %v4227 = vpop.f32.mrb[0].mxu0
        %v4228 = vadd.f32 %v4185, %v4227
        %v4229 = vpop.f32.mrb[0].mxu0
        %v4230 = vadd.f32 %v4187, %v4229
        %v4231 = vpop.f32.mrb[0].mxu0
        %v4232 = vadd.f32 %v4189, %v4231
        %v4233 = vpop.f32.mrb[0].mxu0
        %v4234 = vadd.f32 %v4191, %v4233
        %4235 = vdwg.mxu0
        %4236 = vmatprep.subr.bf16.mxu0 %v2812
        %4237 = vmatpush1.bf16.msra.mxu0 %v2811
        %4238 = vmatprep.subr.bf16.mxu0 %v2815
        %4239 = vmatpush1.bf16.msra.mxu0 %v2814
        %4240 = vmatprep.subr.bf16.mxu0 %v2818
        %4241 = vmatpush1.bf16.msra.mxu0 %v2817
        %4242 = vmatprep.subr.bf16.mxu0 %v2821
        %4243 = vmatpush1.bf16.msra.mxu0 %v2820
        %4244 = vmatprep.subr.bf16.mxu0 %v2824
        %4245 = vmatpush1.bf16.msra.mxu0 %v2823
        %4246 = vmatprep.subr.bf16.mxu0 %v2827
        %4247 = vmatpush1.bf16.msra.mxu0 %v2826
        %4248 = vmatprep.subr.bf16.mxu0 %v2830
        %4249 = vmatpush1.bf16.msra.mxu0 %v2829
        %4250 = vmatprep.subr.bf16.mxu0 %v2833
        %4251 = vmatpush1.bf16.msra.mxu0 %v2832
        %4252 = vmatprep.subr.bf16.mxu0 %v2836
        %4253 = vmatpush1.bf16.msra.mxu0 %v2835
        %4254 = vmatprep.subr.bf16.mxu0 %v2839
        %4255 = vmatpush1.bf16.msra.mxu0 %v2838
        %4256 = vmatprep.subr.bf16.mxu0 %v2842
        %4257 = vmatpush1.bf16.msra.mxu0 %v2841
        %4258 = vmatprep.subr.bf16.mxu0 %v2845
        %4259 = vmatpush1.bf16.msra.mxu0 %v2844
        %4260 = vmatprep.subr.bf16.mxu0 %v2848
        %4261 = vmatpush1.bf16.msra.mxu0 %v2847
        %4262 = vmatprep.subr.bf16.mxu0 %v2851
        %4263 = vmatpush1.bf16.msra.mxu0 %v2850
        %4264 = vmatprep.subr.bf16.mxu0 %v2854
        %4265 = vmatpush1.bf16.msra.mxu0 %v2853
        %4266 = vmatprep.subr.bf16.mxu0 %v2857
        %4267 = vmatpush1.bf16.msra.mxu0 %v2856
        %4268 = vmatprep.mubr.bf16.mxu0 %v3522
        %4269 = vmatmul.mubr.bf16.gmra.mrb[0].mxu0 %v3521
        %v4270 = vpop.f32.mrb[0].mxu0
        %v4271 = vadd.f32 %v4228, %v4270
        %v4272 = vpop.f32.mrb[0].mxu0
        %v4273 = vadd.f32 %v4230, %v4272
        %v4274 = vpop.f32.mrb[0].mxu0
        %v4275 = vadd.f32 %v4232, %v4274
        %v4276 = vpop.f32.mrb[0].mxu0
        %v4277 = vadd.f32 %v4234, %v4276
        %4278 = vdwg.mxu0
        %4279 = vmatprep.subr.bf16.mxu0 %v2860
        %4280 = vmatpush1.bf16.msra.mxu0 %v2859
        %4281 = vmatprep.subr.bf16.mxu0 %v2863
        %4282 = vmatpush1.bf16.msra.mxu0 %v2862
        %4283 = vmatprep.subr.bf16.mxu0 %v2866
        %4284 = vmatpush1.bf16.msra.mxu0 %v2865
        %4285 = vmatprep.subr.bf16.mxu0 %v2869
        %4286 = vmatpush1.bf16.msra.mxu0 %v2868
        %4287 = vmatprep.subr.bf16.mxu0 %v2872
        %4288 = vmatpush1.bf16.msra.mxu0 %v2871
        %4289 = vmatprep.subr.bf16.mxu0 %v2875
        %4290 = vmatpush1.bf16.msra.mxu0 %v2874
        %4291 = vmatprep.subr.bf16.mxu0 %v2878
        %4292 = vmatpush1.bf16.msra.mxu0 %v2877
        %4293 = vmatprep.subr.bf16.mxu0 %v2881
        %4294 = vmatpush1.bf16.msra.mxu0 %v2880
        %4295 = vmatprep.subr.bf16.mxu0 %v2884
        %4296 = vmatpush1.bf16.msra.mxu0 %v2883
        %4297 = vmatprep.subr.bf16.mxu0 %v2887
        %4298 = vmatpush1.bf16.msra.mxu0 %v2886
        %4299 = vmatprep.subr.bf16.mxu0 %v2890
        %4300 = vmatpush1.bf16.msra.mxu0 %v2889
        %4301 = vmatprep.subr.bf16.mxu0 %v2893
        %4302 = vmatpush1.bf16.msra.mxu0 %v2892
        %4303 = vmatprep.subr.bf16.mxu0 %v2896
        %4304 = vmatpush1.bf16.msra.mxu0 %v2895
        %4305 = vmatprep.subr.bf16.mxu0 %v2899
        %4306 = vmatpush1.bf16.msra.mxu0 %v2898
        %4307 = vmatprep.subr.bf16.mxu0 %v2902
        %4308 = vmatpush1.bf16.msra.mxu0 %v2901
        %4309 = vmatprep.subr.bf16.mxu0 %v2905
        %4310 = vmatpush1.bf16.msra.mxu0 %v2904
        %4311 = vmatprep.mubr.bf16.mxu0 %v3524
        %4312 = vmatmul.mubr.bf16.gmra.mrb[0].mxu0 %v3523
        %v4313 = vpop.f32.mrb[0].mxu0
        %v4314 = vadd.f32 %v4271, %v4313
        %v4315 = vpop.f32.mrb[0].mxu0
        %v4316 = vadd.f32 %v4273, %v4315
        %v4317 = vpop.f32.mrb[0].mxu0
        %v4318 = vadd.f32 %v4275, %v4317
        %v4319 = vpop.f32.mrb[0].mxu0
        %v4320 = vadd.f32 %v4277, %v4319
        %4321 = vdwg.mxu0
        %4322 = vmatprep.subr.bf16.mxu0 %v2908
        %4323 = vmatpush1.bf16.msra.mxu0 %v2907
        %4324 = vmatprep.subr.bf16.mxu0 %v2911
        %4325 = vmatpush1.bf16.msra.mxu0 %v2910
        %4326 = vmatprep.subr.bf16.mxu0 %v2914
        %4327 = vmatpush1.bf16.msra.mxu0 %v2913
        %4328 = vmatprep.subr.bf16.mxu0 %v2917
        %4329 = vmatpush1.bf16.msra.mxu0 %v2916
        %4330 = vmatprep.subr.bf16.mxu0 %v2920
        %4331 = vmatpush1.bf16.msra.mxu0 %v2919
        %4332 = vmatprep.subr.bf16.mxu0 %v2923
        %4333 = vmatpush1.bf16.msra.mxu0 %v2922
        %4334 = vmatprep.subr.bf16.mxu0 %v2926
        %4335 = vmatpush1.bf16.msra.mxu0 %v2925
        %4336 = vmatprep.subr.bf16.mxu0 %v2929
        %4337 = vmatpush1.bf16.msra.mxu0 %v2928
        %4338 = vmatprep.subr.bf16.mxu0 %v2932
        %4339 = vmatpush1.bf16.msra.mxu0 %v2931
        %4340 = vmatprep.subr.bf16.mxu0 %v2935
        %4341 = vmatpush1.bf16.msra.mxu0 %v2934
        %4342 = vmatprep.subr.bf16.mxu0 %v2938
        %4343 = vmatpush1.bf16.msra.mxu0 %v2937
        %4344 = vmatprep.subr.bf16.mxu0 %v2941
        %4345 = vmatpush1.bf16.msra.mxu0 %v2940
        %4346 = vmatprep.subr.bf16.mxu0 %v2944
        %4347 = vmatpush1.bf16.msra.mxu0 %v2943
        %4348 = vmatprep.subr.bf16.mxu0 %v2947
        %4349 = vmatpush1.bf16.msra.mxu0 %v2946
        %4350 = vmatprep.subr.bf16.mxu0 %v2950
        %4351 = vmatpush1.bf16.msra.mxu0 %v2949
        %4352 = vmatprep.subr.bf16.mxu0 %v2953
        %4353 = vmatpush1.bf16.msra.mxu0 %v2952
        %4354 = vmatprep.mubr.bf16.mxu0 %v3526
        %4355 = vmatmul.mubr.bf16.gmra.mrb[0].mxu0 %v3525
        %v4356 = vpop.f32.mrb[0].mxu0
        %v4357 = vadd.f32 %v4314, %v4356
        %v4358 = vpop.f32.mrb[0].mxu0
        %v4359 = vadd.f32 %v4316, %v4358
        %v4360 = vpop.f32.mrb[0].mxu0
        %v4361 = vadd.f32 %v4318, %v4360
        %v4362 = vpop.f32.mrb[0].mxu0
        %v4363 = vadd.f32 %v4320, %v4362
        %4364 = vdwg.mxu0
        %4365 = vmatprep.subr.bf16.mxu0 %v2956
        %4366 = vmatpush1.bf16.msra.mxu0 %v2955
        %4367 = vmatprep.subr.bf16.mxu0 %v2959
        %4368 = vmatpush1.bf16.msra.mxu0 %v2958
        %4369 = vmatprep.subr.bf16.mxu0 %v2962
        %4370 = vmatpush1.bf16.msra.mxu0 %v2961
        %4371 = vmatprep.subr.bf16.mxu0 %v2965
        %4372 = vmatpush1.bf16.msra.mxu0 %v2964
        %4373 = vmatprep.subr.bf16.mxu0 %v2968
        %4374 = vmatpush1.bf16.msra.mxu0 %v2967
        %4375 = vmatprep.subr.bf16.mxu0 %v2971
        %4376 = vmatpush1.bf16.msra.mxu0 %v2970
        %4377 = vmatprep.subr.bf16.mxu0 %v2974
        %4378 = vmatpush1.bf16.msra.mxu0 %v2973
        %4379 = vmatprep.subr.bf16.mxu0 %v2977
        %4380 = vmatpush1.bf16.msra.mxu0 %v2976
        %4381 = vmatprep.subr.bf16.mxu0 %v2980
        %4382 = vmatpush1.bf16.msra.mxu0 %v2979
        %4383 = vmatprep.subr.bf16.mxu0 %v2983
        %4384 = vmatpush1.bf16.msra.mxu0 %v2982
        %4385 = vmatprep.subr.bf16.mxu0 %v2986
        %4386 = vmatpush1.bf16.msra.mxu0 %v2985
        %4387 = vmatprep.subr.bf16.mxu0 %v2989
        %4388 = vmatpush1.bf16.msra.mxu0 %v2988
        %4389 = vmatprep.subr.bf16.mxu0 %v2992
        %4390 = vmatpush1.bf16.msra.mxu0 %v2991
        %4391 = vmatprep.subr.bf16.mxu0 %v2995
        %4392 = vmatpush1.bf16.msra.mxu0 %v2994
        %4393 = vmatprep.subr.bf16.mxu0 %v2998
        %4394 = vmatpush1.bf16.msra.mxu0 %v2997
        %4395 = vmatprep.subr.bf16.mxu0 %v3001
        %4396 = vmatpush1.bf16.msra.mxu0 %v3000
        %4397 = vmatprep.mubr.bf16.mxu0 %v3528
        %4398 = vmatmul.mubr.bf16.gmra.mrb[0].mxu0 %v3527
        %v4399 = vpop.f32.mrb[0].mxu0
        %v4400 = vadd.f32 %v4357, %v4399
        %v4401 = vpop.f32.mrb[0].mxu0
        %v4402 = vadd.f32 %v4359, %v4401
        %v4403 = vpop.f32.mrb[0].mxu0
        %v4404 = vadd.f32 %v4361, %v4403
        %v4405 = vpop.f32.mrb[0].mxu0
        %v4406 = vadd.f32 %v4363, %v4405
        %4407 = vdwg.mxu0
        %4408 = vmatprep.subr.bf16.mxu0 %v3004
        %4409 = vmatpush1.bf16.msra.mxu0 %v3003
        %4410 = vmatprep.subr.bf16.mxu0 %v3007
        %4411 = vmatpush1.bf16.msra.mxu0 %v3006
        %4412 = vmatprep.subr.bf16.mxu0 %v3010
        %4413 = vmatpush1.bf16.msra.mxu0 %v3009
        %4414 = vmatprep.subr.bf16.mxu0 %v3013
        %4415 = vmatpush1.bf16.msra.mxu0 %v3012
        %4416 = vmatprep.subr.bf16.mxu0 %v3016
        %4417 = vmatpush1.bf16.msra.mxu0 %v3015
        %4418 = vmatprep.subr.bf16.mxu0 %v3019
        %4419 = vmatpush1.bf16.msra.mxu0 %v3018
        %4420 = vmatprep.subr.bf16.mxu0 %v3022
        %4421 = vmatpush1.bf16.msra.mxu0 %v3021
        %4422 = vmatprep.subr.bf16.mxu0 %v3025
        %4423 = vmatpush1.bf16.msra.mxu0 %v3024
        %4424 = vmatprep.subr.bf16.mxu0 %v3028
        %4425 = vmatpush1.bf16.msra.mxu0 %v3027
        %4426 = vmatprep.subr.bf16.mxu0 %v3031
        %4427 = vmatpush1.bf16.msra.mxu0 %v3030
        %4428 = vmatprep.subr.bf16.mxu0 %v3034
        %4429 = vmatpush1.bf16.msra.mxu0 %v3033
        %4430 = vmatprep.subr.bf16.mxu0 %v3037
        %4431 = vmatpush1.bf16.msra.mxu0 %v3036
        %4432 = vmatprep.subr.bf16.mxu0 %v3040
        %4433 = vmatpush1.bf16.msra.mxu0 %v3039
        %4434 = vmatprep.subr.bf16.mxu0 %v3043
        %4435 = vmatpush1.bf16.msra.mxu0 %v3042
        %4436 = vmatprep.subr.bf16.mxu0 %v3046
        %4437 = vmatpush1.bf16.msra.mxu0 %v3045
        %4438 = vmatprep.subr.bf16.mxu0 %v3049
        %4439 = vmatpush1.bf16.msra.mxu0 %v3048
        %4440 = vmatprep.mubr.bf16.mxu0 %v3530
        %4441 = vmatmul.mubr.bf16.gmra.mrb[0].mxu0 %v3529
        %v4442 = vpop.f32.mrb[0].mxu0
        %v4443 = vadd.f32 %v4400, %v4442
        %v4444 = vpop.f32.mrb[0].mxu0
        %v4445 = vadd.f32 %v4402, %v4444
        %v4446 = vpop.f32.mrb[0].mxu0
        %v4447 = vadd.f32 %v4404, %v4446
        %v4448 = vpop.f32.mrb[0].mxu0
        %v4449 = vadd.f32 %v4406, %v4448
        %4450 = vdwg.mxu0
        %4451 = vmatprep.subr.bf16.mxu0 %v3052
        %4452 = vmatpush1.bf16.msra.mxu0 %v3051
        %4453 = vmatprep.subr.bf16.mxu0 %v3055
        %4454 = vmatpush1.bf16.msra.mxu0 %v3054
        %4455 = vmatprep.subr.bf16.mxu0 %v3058
        %4456 = vmatpush1.bf16.msra.mxu0 %v3057
        %4457 = vmatprep.subr.bf16.mxu0 %v3061
        %4458 = vmatpush1.bf16.msra.mxu0 %v3060
        %4459 = vmatprep.subr.bf16.mxu0 %v3064
        %4460 = vmatpush1.bf16.msra.mxu0 %v3063
        %4461 = vmatprep.subr.bf16.mxu0 %v3067
        %4462 = vmatpush1.bf16.msra.mxu0 %v3066
        %4463 = vmatprep.subr.bf16.mxu0 %v3070
        %4464 = vmatpush1.bf16.msra.mxu0 %v3069
        %4465 = vmatprep.subr.bf16.mxu0 %v3073
        %4466 = vmatpush1.bf16.msra.mxu0 %v3072
        %4467 = vmatprep.subr.bf16.mxu0 %v3076
        %4468 = vmatpush1.bf16.msra.mxu0 %v3075
        %4469 = vmatprep.subr.bf16.mxu0 %v3079
        %4470 = vmatpush1.bf16.msra.mxu0 %v3078
        %4471 = vmatprep.subr.bf16.mxu0 %v3082
        %4472 = vmatpush1.bf16.msra.mxu0 %v3081
        %4473 = vmatprep.subr.bf16.mxu0 %v3085
        %4474 = vmatpush1.bf16.msra.mxu0 %v3084
        %4475 = vmatprep.subr.bf16.mxu0 %v3088
        %4476 = vmatpush1.bf16.msra.mxu0 %v3087
        %4477 = vmatprep.subr.bf16.mxu0 %v3091
        %4478 = vmatpush1.bf16.msra.mxu0 %v3090
        %4479 = vmatprep.subr.bf16.mxu0 %v3094
        %4480 = vmatpush1.bf16.msra.mxu0 %v3093
        %4481 = vmatprep.subr.bf16.mxu0 %v3097
        %4482 = vmatpush1.bf16.msra.mxu0 %v3096
        %4483 = vmatprep.mubr.bf16.mxu0 %v3532
        %4484 = vmatmul.mubr.bf16.gmra.mrb[0].mxu0 %v3531
        %v4485 = vpop.f32.mrb[0].mxu0
        %v4486 = vadd.f32 %v4443, %v4485
        %v4487 = vpop.f32.mrb[0].mxu0
        %v4488 = vadd.f32 %v4445, %v4487
        %v4489 = vpop.f32.mrb[0].mxu0
        %v4490 = vadd.f32 %v4447, %v4489
        %v4491 = vpop.f32.mrb[0].mxu0
        %v4492 = vadd.f32 %v4449, %v4491
        %4493 = vdwg.mxu0
        %4494 = vmatprep.subr.bf16.mxu0 %v3100
        %4495 = vmatpush1.bf16.msra.mxu0 %v3099
        %4496 = vmatprep.subr.bf16.mxu0 %v3103
        %4497 = vmatpush1.bf16.msra.mxu0 %v3102
        %4498 = vmatprep.subr.bf16.mxu0 %v3106
        %4499 = vmatpush1.bf16.msra.mxu0 %v3105
        %4500 = vmatprep.subr.bf16.mxu0 %v3109
        %4501 = vmatpush1.bf16.msra.mxu0 %v3108
        %4502 = vmatprep.subr.bf16.mxu0 %v3112
        %4503 = vmatpush1.bf16.msra.mxu0 %v3111
        %4504 = vmatprep.subr.bf16.mxu0 %v3115
        %4505 = vmatpush1.bf16.msra.mxu0 %v3114
        %4506 = vmatprep.subr.bf16.mxu0 %v3118
        %4507 = vmatpush1.bf16.msra.mxu0 %v3117
        %4508 = vmatprep.subr.bf16.mxu0 %v3121
        %4509 = vmatpush1.bf16.msra.mxu0 %v3120
        %4510 = vmatprep.subr.bf16.mxu0 %v3124
        %4511 = vmatpush1.bf16.msra.mxu0 %v3123
        %4512 = vmatprep.subr.bf16.mxu0 %v3127
        %4513 = vmatpush1.bf16.msra.mxu0 %v3126
        %4514 = vmatprep.subr.bf16.mxu0 %v3130
        %4515 = vmatpush1.bf16.msra.mxu0 %v3129
        %4516 = vmatprep.subr.bf16.mxu0 %v3133
        %4517 = vmatpush1.bf16.msra.mxu0 %v3132
        %4518 = vmatprep.subr.bf16.mxu0 %v3136
        %4519 = vmatpush1.bf16.msra.mxu0 %v3135
        %4520 = vmatprep.subr.bf16.mxu0 %v3139
        %4521 = vmatpush1.bf16.msra.mxu0 %v3138
        %4522 = vmatprep.subr.bf16.mxu0 %v3142
        %4523 = vmatpush1.bf16.msra.mxu0 %v3141
        %4524 = vmatprep.subr.bf16.mxu0 %v3145
        %4525 = vmatpush1.bf16.msra.mxu0 %v3144
        %4526 = vmatprep.mubr.bf16.mxu0 %v3534
        %4527 = vmatmul.mubr.bf16.gmra.mrb[0].mxu0 %v3533
        %v4528 = vpop.f32.mrb[0].mxu0
        %v4529 = vadd.f32 %v4486, %v4528
        %v4530 = vpop.f32.mrb[0].mxu0
        %v4531 = vadd.f32 %v4488, %v4530
        %v4532 = vpop.f32.mrb[0].mxu0
        %v4533 = vadd.f32 %v4490, %v4532
        %v4534 = vpop.f32.mrb[0].mxu0
        %v4535 = vadd.f32 %v4492, %v4534
        %4536 = vdwg.mxu0
        %4537 = vmatprep.subr.bf16.mxu0 %v3148
        %4538 = vmatpush1.bf16.msra.mxu0 %v3147
        %4539 = vmatprep.subr.bf16.mxu0 %v3151
        %4540 = vmatpush1.bf16.msra.mxu0 %v3150
        %4541 = vmatprep.subr.bf16.mxu0 %v3154
        %4542 = vmatpush1.bf16.msra.mxu0 %v3153
        %4543 = vmatprep.subr.bf16.mxu0 %v3157
        %4544 = vmatpush1.bf16.msra.mxu0 %v3156
        %4545 = vmatprep.subr.bf16.mxu0 %v3160
        %4546 = vmatpush1.bf16.msra.mxu0 %v3159
        %4547 = vmatprep.subr.bf16.mxu0 %v3163
        %4548 = vmatpush1.bf16.msra.mxu0 %v3162
        %4549 = vmatprep.subr.bf16.mxu0 %v3166
        %4550 = vmatpush1.bf16.msra.mxu0 %v3165
        %4551 = vmatprep.subr.bf16.mxu0 %v3169
        %4552 = vmatpush1.bf16.msra.mxu0 %v3168
        %4553 = vmatprep.subr.bf16.mxu0 %v3172
        %4554 = vmatpush1.bf16.msra.mxu0 %v3171
        %4555 = vmatprep.subr.bf16.mxu0 %v3175
        %4556 = vmatpush1.bf16.msra.mxu0 %v3174
        %4557 = vmatprep.subr.bf16.mxu0 %v3178
        %4558 = vmatpush1.bf16.msra.mxu0 %v3177
        %4559 = vmatprep.subr.bf16.mxu0 %v3181
        %4560 = vmatpush1.bf16.msra.mxu0 %v3180
        %4561 = vmatprep.subr.bf16.mxu0 %v3184
        %4562 = vmatpush1.bf16.msra.mxu0 %v3183
        %4563 = vmatprep.subr.bf16.mxu0 %v3187
        %4564 = vmatpush1.bf16.msra.mxu0 %v3186
        %4565 = vmatprep.subr.bf16.mxu0 %v3190
        %4566 = vmatpush1.bf16.msra.mxu0 %v3189
        %4567 = vmatprep.subr.bf16.mxu0 %v3193
        %4568 = vmatpush1.bf16.msra.mxu0 %v3192
        %4569 = vmatprep.mubr.bf16.mxu0 %v3536
        %4570 = vmatmul.mubr.bf16.gmra.mrb[0].mxu0 %v3535
        %v4571 = vpop.f32.mrb[0].mxu0
        %v4572 = vadd.f32 %v4529, %v4571
        %v4573 = vpop.f32.mrb[0].mxu0
        %v4574 = vadd.f32 %v4531, %v4573
        %v4575 = vpop.f32.mrb[0].mxu0
        %v4576 = vadd.f32 %v4533, %v4575
        %v4577 = vpop.f32.mrb[0].mxu0
        %v4578 = vadd.f32 %v4535, %v4577
        %4579 = vdwg.mxu0
        %4580 = vmatprep.subr.bf16.mxu0 %v3196
        %4581 = vmatpush1.bf16.msra.mxu0 %v3195
        %4582 = vmatprep.subr.bf16.mxu0 %v3199
        %4583 = vmatpush1.bf16.msra.mxu0 %v3198
        %4584 = vmatprep.subr.bf16.mxu0 %v3202
        %4585 = vmatpush1.bf16.msra.mxu0 %v3201
        %4586 = vmatprep.subr.bf16.mxu0 %v3205
        %4587 = vmatpush1.bf16.msra.mxu0 %v3204
        %4588 = vmatprep.subr.bf16.mxu0 %v3208
        %4589 = vmatpush1.bf16.msra.mxu0 %v3207
        %4590 = vmatprep.subr.bf16.mxu0 %v3211
        %4591 = vmatpush1.bf16.msra.mxu0 %v3210
        %4592 = vmatprep.subr.bf16.mxu0 %v3214
        %4593 = vmatpush1.bf16.msra.mxu0 %v3213
        %4594 = vmatprep.subr.bf16.mxu0 %v3217
        %4595 = vmatpush1.bf16.msra.mxu0 %v3216
        %4596 = vmatprep.subr.bf16.mxu0 %v3220
        %4597 = vmatpush1.bf16.msra.mxu0 %v3219
        %4598 = vmatprep.subr.bf16.mxu0 %v3223
        %4599 = vmatpush1.bf16.msra.mxu0 %v3222
        %4600 = vmatprep.subr.bf16.mxu0 %v3226
        %4601 = vmatpush1.bf16.msra.mxu0 %v3225
        %4602 = vmatprep.subr.bf16.mxu0 %v3229
        %4603 = vmatpush1.bf16.msra.mxu0 %v3228
        %4604 = vmatprep.subr.bf16.mxu0 %v3232
        %4605 = vmatpush1.bf16.msra.mxu0 %v3231
        %4606 = vmatprep.subr.bf16.mxu0 %v3235
        %4607 = vmatpush1.bf16.msra.mxu0 %v3234
        %4608 = vmatprep.subr.bf16.mxu0 %v3238
        %4609 = vmatpush1.bf16.msra.mxu0 %v3237
        %4610 = vmatprep.subr.bf16.mxu0 %v3241
        %4611 = vmatpush1.bf16.msra.mxu0 %v3240
        %4612 = vmatprep.mubr.bf16.mxu0 %v3538
        %4613 = vmatmul.mubr.bf16.gmra.mrb[0].mxu0 %v3537
        %v4614 = vpop.f32.mrb[0].mxu0
        %v4615 = vadd.f32 %v4572, %v4614
        %v4616 = vpop.f32.mrb[0].mxu0
        %v4617 = vadd.f32 %v4574, %v4616
        %v4618 = vpop.f32.mrb[0].mxu0
        %v4619 = vadd.f32 %v4576, %v4618
        %v4620 = vpop.f32.mrb[0].mxu0
        %v4621 = vadd.f32 %v4578, %v4620
        %4622 = vdwg.mxu0
        %4623 = vmatprep.subr.bf16.mxu0 %v3244
        %4624 = vmatpush1.bf16.msra.mxu0 %v3243
        %4625 = vmatprep.subr.bf16.mxu0 %v3247
        %4626 = vmatpush1.bf16.msra.mxu0 %v3246
        %4627 = vmatprep.subr.bf16.mxu0 %v3250
        %4628 = vmatpush1.bf16.msra.mxu0 %v3249
        %4629 = vmatprep.subr.bf16.mxu0 %v3253
        %4630 = vmatpush1.bf16.msra.mxu0 %v3252
        %4631 = vmatprep.subr.bf16.mxu0 %v3256
        %4632 = vmatpush1.bf16.msra.mxu0 %v3255
        %4633 = vmatprep.subr.bf16.mxu0 %v3259
        %4634 = vmatpush1.bf16.msra.mxu0 %v3258
        %4635 = vmatprep.subr.bf16.mxu0 %v3262
        %4636 = vmatpush1.bf16.msra.mxu0 %v3261
        %4637 = vmatprep.subr.bf16.mxu0 %v3265
        %4638 = vmatpush1.bf16.msra.mxu0 %v3264
        %4639 = vmatprep.subr.bf16.mxu0 %v3268
        %4640 = vmatpush1.bf16.msra.mxu0 %v3267
        %4641 = vmatprep.subr.bf16.mxu0 %v3271
        %4642 = vmatpush1.bf16.msra.mxu0 %v3270
        %4643 = vmatprep.subr.bf16.mxu0 %v3274
        %4644 = vmatpush1.bf16.msra.mxu0 %v3273
        %4645 = vmatprep.subr.bf16.mxu0 %v3277
        %4646 = vmatpush1.bf16.msra.mxu0 %v3276
        %4647 = vmatprep.subr.bf16.mxu0 %v3280
        %4648 = vmatpush1.bf16.msra.mxu0 %v3279
        %4649 = vmatprep.subr.bf16.mxu0 %v3283
        %4650 = vmatpush1.bf16.msra.mxu0 %v3282
        %4651 = vmatprep.subr.bf16.mxu0 %v3286
        %4652 = vmatpush1.bf16.msra.mxu0 %v3285
        %4653 = vmatprep.subr.bf16.mxu0 %v3289
        %4654 = vmatpush1.bf16.msra.mxu0 %v3288
        %4655 = vmatprep.mubr.bf16.mxu0 %v3540
        %4656 = vmatmul.mubr.bf16.gmra.mrb[0].mxu0 %v3539
        %v4657 = vpop.f32.mrb[0].mxu0
        %v4658 = vadd.f32 %v4615, %v4657
        %v4659 = vpop.f32.mrb[0].mxu0
        %v4660 = vadd.f32 %v4617, %v4659
        %v4661 = vpop.f32.mrb[0].mxu0
        %v4662 = vadd.f32 %v4619, %v4661
        %v4663 = vpop.f32.mrb[0].mxu0
        %v4664 = vadd.f32 %v4621, %v4663
        %4665 = vdwg.mxu0
        %4666 = vmatprep.subr.bf16.mxu0 0
        %4667 = vmatpush1.bf16.msra.mxu0 %v2093
        %4668 = vmatprep.subr.bf16.mxu0 0
        %4669 = vmatpush1.bf16.msra.mxu0 %v2096
        %4670 = vmatprep.subr.bf16.mxu0 0
        %4671 = vmatpush1.bf16.msra.mxu0 %v2099
        %4672 = vmatprep.subr.bf16.mxu0 0
        %4673 = vmatpush1.bf16.msra.mxu0 %v2102
        %4674 = vmatprep.subr.bf16.mxu0 0
        %4675 = vmatpush1.bf16.msra.mxu0 %v2105
        %4676 = vmatprep.subr.bf16.mxu0 0
        %4677 = vmatpush1.bf16.msra.mxu0 %v2108
        %4678 = vmatprep.subr.bf16.mxu0 0
        %4679 = vmatpush1.bf16.msra.mxu0 %v2111
        %4680 = vmatprep.subr.bf16.mxu0 0
        %4681 = vmatpush1.bf16.msra.mxu0 %v2114
        %4682 = vmatprep.subr.bf16.mxu0 0
        %4683 = vmatpush1.bf16.msra.mxu0 %v2117
        %4684 = vmatprep.subr.bf16.mxu0 0
        %4685 = vmatpush1.bf16.msra.mxu0 %v2120
        %4686 = vmatprep.subr.bf16.mxu0 0
        %4687 = vmatpush1.bf16.msra.mxu0 %v2123
        %4688 = vmatprep.subr.bf16.mxu0 0
        %4689 = vmatpush1.bf16.msra.mxu0 %v2126
        %4690 = vmatprep.subr.bf16.mxu0 0
        %4691 = vmatpush1.bf16.msra.mxu0 %v2129
        %4692 = vmatprep.subr.bf16.mxu0 0
        %4693 = vmatpush1.bf16.msra.mxu0 %v2132
        %4694 = vmatprep.subr.bf16.mxu0 0
        %4695 = vmatpush1.bf16.msra.mxu0 %v2135
        %4696 = vmatprep.subr.bf16.mxu0 0
        %4697 = vmatpush1.bf16.msra.mxu0 %v2138
        %4698 = vmatprep.mubr.bf16.mxu0 %v3492
        %4699 = vmatmul.mubr.bf16.gmra.mrb[0].mxu0 %v3491
        %v4700 = vpop.f32.mrb[0].mxu0
        %v4701 = vadd.f32 0.0, %v4700
        %v4702 = vpop.f32.mrb[0].mxu0
        %v4703 = vpop.f32.mrb[0].mxu0
        %v4704 = vadd.f32 0.0, %v4703
        %v4705 = vpop.f32.mrb[0].mxu0
        %4706 = vdwg.mxu0
        %4707 = vmatprep.subr.bf16.mxu0 0
        %4708 = vmatpush1.bf16.msra.mxu0 %v2141
        %4709 = vmatprep.subr.bf16.mxu0 0
        %4710 = vmatpush1.bf16.msra.mxu0 %v2144
        %4711 = vmatprep.subr.bf16.mxu0 0
        %4712 = vmatpush1.bf16.msra.mxu0 %v2147
        %4713 = vmatprep.subr.bf16.mxu0 0
        %4714 = vmatpush1.bf16.msra.mxu0 %v2150
        %4715 = vmatprep.subr.bf16.mxu0 0
        %4716 = vmatpush1.bf16.msra.mxu0 %v2153
        %4717 = vmatprep.subr.bf16.mxu0 0
        %4718 = vmatpush1.bf16.msra.mxu0 %v2156
        %4719 = vmatprep.subr.bf16.mxu0 0
        %4720 = vmatpush1.bf16.msra.mxu0 %v2159
        %4721 = vmatprep.subr.bf16.mxu0 0
        %4722 = vmatpush1.bf16.msra.mxu0 %v2162
        %4723 = vmatprep.subr.bf16.mxu0 0
        %4724 = vmatpush1.bf16.msra.mxu0 %v2165
        %4725 = vmatprep.subr.bf16.mxu0 0
        %4726 = vmatpush1.bf16.msra.mxu0 %v2168
        %4727 = vmatprep.subr.bf16.mxu0 0
        %4728 = vmatpush1.bf16.msra.mxu0 %v2171
        %4729 = vmatprep.subr.bf16.mxu0 0
        %4730 = vmatpush1.bf16.msra.mxu0 %v2174
        %4731 = vmatprep.subr.bf16.mxu0 0
        %4732 = vmatpush1.bf16.msra.mxu0 %v2177
        %4733 = vmatprep.subr.bf16.mxu0 0
        %4734 = vmatpush1.bf16.msra.mxu0 %v2180
        %4735 = vmatprep.subr.bf16.mxu0 0
        %4736 = vmatpush1.bf16.msra.mxu0 %v2183
        %4737 = vmatprep.subr.bf16.mxu0 0
        %4738 = vmatpush1.bf16.msra.mxu0 %v2186
        %4739 = vmatprep.mubr.bf16.mxu0 %v3494
        %4740 = vmatmul.mubr.bf16.gmra.mrb[0].mxu0 %v3493
        %v4741 = vpop.f32.mrb[0].mxu0
        %v4742 = vadd.f32 %v4701, %v4741
        %v4743 = vpop.f32.mrb[0].mxu0
        %v4744 = vpop.f32.mrb[0].mxu0
        %v4745 = vadd.f32 %v4704, %v4744
        %v4746 = vpop.f32.mrb[0].mxu0
        %4747 = vdwg.mxu0
        %4748 = vmatprep.subr.bf16.mxu0 0
        %4749 = vmatpush1.bf16.msra.mxu0 %v2189
        %4750 = vmatprep.subr.bf16.mxu0 0
        %4751 = vmatpush1.bf16.msra.mxu0 %v2192
        %4752 = vmatprep.subr.bf16.mxu0 0
        %4753 = vmatpush1.bf16.msra.mxu0 %v2195
        %4754 = vmatprep.subr.bf16.mxu0 0
        %4755 = vmatpush1.bf16.msra.mxu0 %v2198
        %4756 = vmatprep.subr.bf16.mxu0 0
        %4757 = vmatpush1.bf16.msra.mxu0 %v2201
        %4758 = vmatprep.subr.bf16.mxu0 0
        %4759 = vmatpush1.bf16.msra.mxu0 %v2204
        %4760 = vmatprep.subr.bf16.mxu0 0
        %4761 = vmatpush1.bf16.msra.mxu0 %v2207
        %4762 = vmatprep.subr.bf16.mxu0 0
        %4763 = vmatpush1.bf16.msra.mxu0 %v2210
        %4764 = vmatprep.subr.bf16.mxu0 0
        %4765 = vmatpush1.bf16.msra.mxu0 %v2213
        %4766 = vmatprep.subr.bf16.mxu0 0
        %4767 = vmatpush1.bf16.msra.mxu0 %v2216
        %4768 = vmatprep.subr.bf16.mxu0 0
        %4769 = vmatpush1.bf16.msra.mxu0 %v2219
        %4770 = vmatprep.subr.bf16.mxu0 0
        %4771 = vmatpush1.bf16.msra.mxu0 %v2222
        %4772 = vmatprep.subr.bf16.mxu0 0
        %4773 = vmatpush1.bf16.msra.mxu0 %v2225
        %4774 = vmatprep.subr.bf16.mxu0 0
        %4775 = vmatpush1.bf16.msra.mxu0 %v2228
        %4776 = vmatprep.subr.bf16.mxu0 0
        %4777 = vmatpush1.bf16.msra.mxu0 %v2231
        %4778 = vmatprep.subr.bf16.mxu0 0
        %4779 = vmatpush1.bf16.msra.mxu0 %v2234
        %4780 = vmatprep.mubr.bf16.mxu0 %v3496
        %4781 = vmatmul.mubr.bf16.gmra.mrb[0].mxu0 %v3495
        %v4782 = vpop.f32.mrb[0].mxu0
        %v4783 = vadd.f32 %v4742, %v4782
        %v4784 = vpop.f32.mrb[0].mxu0
        %v4785 = vpop.f32.mrb[0].mxu0
        %v4786 = vadd.f32 %v4745, %v4785
        %v4787 = vpop.f32.mrb[0].mxu0
        %4788 = vdwg.mxu0
        %4789 = vmatprep.subr.bf16.mxu0 0
        %4790 = vmatpush1.bf16.msra.mxu0 %v2237
        %4791 = vmatprep.subr.bf16.mxu0 0
        %4792 = vmatpush1.bf16.msra.mxu0 %v2240
        %4793 = vmatprep.subr.bf16.mxu0 0
        %4794 = vmatpush1.bf16.msra.mxu0 %v2243
        %4795 = vmatprep.subr.bf16.mxu0 0
        %4796 = vmatpush1.bf16.msra.mxu0 %v2246
        %4797 = vmatprep.subr.bf16.mxu0 0
        %4798 = vmatpush1.bf16.msra.mxu0 %v2249
        %4799 = vmatprep.subr.bf16.mxu0 0
        %4800 = vmatpush1.bf16.msra.mxu0 %v2252
        %4801 = vmatprep.subr.bf16.mxu0 0
        %4802 = vmatpush1.bf16.msra.mxu0 %v2255
        %4803 = vmatprep.subr.bf16.mxu0 0
        %4804 = vmatpush1.bf16.msra.mxu0 %v2258
        %4805 = vmatprep.subr.bf16.mxu0 0
        %4806 = vmatpush1.bf16.msra.mxu0 %v2261
        %4807 = vmatprep.subr.bf16.mxu0 0
        %4808 = vmatpush1.bf16.msra.mxu0 %v2264
        %4809 = vmatprep.subr.bf16.mxu0 0
        %4810 = vmatpush1.bf16.msra.mxu0 %v2267
        %4811 = vmatprep.subr.bf16.mxu0 0
        %4812 = vmatpush1.bf16.msra.mxu0 %v2270
        %4813 = vmatprep.subr.bf16.mxu0 0
        %4814 = vmatpush1.bf16.msra.mxu0 %v2273
        %4815 = vmatprep.subr.bf16.mxu0 0
        %4816 = vmatpush1.bf16.msra.mxu0 %v2276
        %4817 = vmatprep.subr.bf16.mxu0 0
        %4818 = vmatpush1.bf16.msra.mxu0 %v2279
        %4819 = vmatprep.subr.bf16.mxu0 0
        %4820 = vmatpush1.bf16.msra.mxu0 %v2282
        %4821 = vmatprep.mubr.bf16.mxu0 %v3498
        %4822 = vmatmul.mubr.bf16.gmra.mrb[0].mxu0 %v3497
        %v4823 = vpop.f32.mrb[0].mxu0
        %v4824 = vadd.f32 %v4783, %v4823
        %v4825 = vpop.f32.mrb[0].mxu0
        %v4826 = vpop.f32.mrb[0].mxu0
        %v4827 = vadd.f32 %v4786, %v4826
        %v4828 = vpop.f32.mrb[0].mxu0
        %4829 = vdwg.mxu0
        %4830 = vmatprep.subr.bf16.mxu0 0
        %4831 = vmatpush1.bf16.msra.mxu0 %v2285
        %4832 = vmatprep.subr.bf16.mxu0 0
        %4833 = vmatpush1.bf16.msra.mxu0 %v2288
        %4834 = vmatprep.subr.bf16.mxu0 0
        %4835 = vmatpush1.bf16.msra.mxu0 %v2291
        %4836 = vmatprep.subr.bf16.mxu0 0
        %4837 = vmatpush1.bf16.msra.mxu0 %v2294
        %4838 = vmatprep.subr.bf16.mxu0 0
        %4839 = vmatpush1.bf16.msra.mxu0 %v2297
        %4840 = vmatprep.subr.bf16.mxu0 0
        %4841 = vmatpush1.bf16.msra.mxu0 %v2300
        %4842 = vmatprep.subr.bf16.mxu0 0
        %4843 = vmatpush1.bf16.msra.mxu0 %v2303
        %4844 = vmatprep.subr.bf16.mxu0 0
        %4845 = vmatpush1.bf16.msra.mxu0 %v2306
        %4846 = vmatprep.subr.bf16.mxu0 0
        %4847 = vmatpush1.bf16.msra.mxu0 %v2309
        %4848 = vmatprep.subr.bf16.mxu0 0
        %4849 = vmatpush1.bf16.msra.mxu0 %v2312
        %4850 = vmatprep.subr.bf16.mxu0 0
        %4851 = vmatpush1.bf16.msra.mxu0 %v2315
        %4852 = vmatprep.subr.bf16.mxu0 0
        %4853 = vmatpush1.bf16.msra.mxu0 %v2318
        %4854 = vmatprep.subr.bf16.mxu0 0
        %4855 = vmatpush1.bf16.msra.mxu0 %v2321
        %4856 = vmatprep.subr.bf16.mxu0 0
        %4857 = vmatpush1.bf16.msra.mxu0 %v2324
        %4858 = vmatprep.subr.bf16.mxu0 0
        %4859 = vmatpush1.bf16.msra.mxu0 %v2327
        %4860 = vmatprep.subr.bf16.mxu0 0
        %4861 = vmatpush1.bf16.msra.mxu0 %v2330
        %4862 = vmatprep.mubr.bf16.mxu0 %v3500
        %4863 = vmatmul.mubr.bf16.gmra.mrb[0].mxu0 %v3499
        %v4864 = vpop.f32.mrb[0].mxu0
        %v4865 = vadd.f32 %v4824, %v4864
        %v4866 = vpop.f32.mrb[0].mxu0
        %v4867 = vpop.f32.mrb[0].mxu0
        %v4868 = vadd.f32 %v4827, %v4867
        %v4869 = vpop.f32.mrb[0].mxu0
        %4870 = vdwg.mxu0
        %4871 = vmatprep.subr.bf16.mxu0 0
        %4872 = vmatpush1.bf16.msra.mxu0 %v2333
        %4873 = vmatprep.subr.bf16.mxu0 0
        %4874 = vmatpush1.bf16.msra.mxu0 %v2336
        %4875 = vmatprep.subr.bf16.mxu0 0
        %4876 = vmatpush1.bf16.msra.mxu0 %v2339
        %4877 = vmatprep.subr.bf16.mxu0 0
        %4878 = vmatpush1.bf16.msra.mxu0 %v2342
        %4879 = vmatprep.subr.bf16.mxu0 0
        %4880 = vmatpush1.bf16.msra.mxu0 %v2345
        %4881 = vmatprep.subr.bf16.mxu0 0
        %4882 = vmatpush1.bf16.msra.mxu0 %v2348
        %4883 = vmatprep.subr.bf16.mxu0 0
        %4884 = vmatpush1.bf16.msra.mxu0 %v2351
        %4885 = vmatprep.subr.bf16.mxu0 0
        %4886 = vmatpush1.bf16.msra.mxu0 %v2354
        %4887 = vmatprep.subr.bf16.mxu0 0
        %4888 = vmatpush1.bf16.msra.mxu0 %v2357
        %4889 = vmatprep.subr.bf16.mxu0 0
        %4890 = vmatpush1.bf16.msra.mxu0 %v2360
        %4891 = vmatprep.subr.bf16.mxu0 0
        %4892 = vmatpush1.bf16.msra.mxu0 %v2363
        %4893 = vmatprep.subr.bf16.mxu0 0
        %4894 = vmatpush1.bf16.msra.mxu0 %v2366
        %4895 = vmatprep.subr.bf16.mxu0 0
        %4896 = vmatpush1.bf16.msra.mxu0 %v2369
        %4897 = vmatprep.subr.bf16.mxu0 0
        %4898 = vmatpush1.bf16.msra.mxu0 %v2372
        %4899 = vmatprep.subr.bf16.mxu0 0
        %4900 = vmatpush1.bf16.msra.mxu0 %v2375
        %4901 = vmatprep.subr.bf16.mxu0 0
        %4902 = vmatpush1.bf16.msra.mxu0 %v2378
        %4903 = vmatprep.mubr.bf16.mxu0 %v3502
        %4904 = vmatmul.mubr.bf16.gmra.mrb[0].mxu0 %v3501
        %v4905 = vpop.f32.mrb[0].mxu0
        %v4906 = vadd.f32 %v4865, %v4905
        %v4907 = vpop.f32.mrb[0].mxu0
        %v4908 = vpop.f32.mrb[0].mxu0
        %v4909 = vadd.f32 %v4868, %v4908
        %v4910 = vpop.f32.mrb[0].mxu0
        %4911 = vdwg.mxu0
        %4912 = vmatprep.subr.bf16.mxu0 0
        %4913 = vmatpush1.bf16.msra.mxu0 %v2381
        %4914 = vmatprep.subr.bf16.mxu0 0
        %4915 = vmatpush1.bf16.msra.mxu0 %v2384
        %4916 = vmatprep.subr.bf16.mxu0 0
        %4917 = vmatpush1.bf16.msra.mxu0 %v2387
        %4918 = vmatprep.subr.bf16.mxu0 0
        %4919 = vmatpush1.bf16.msra.mxu0 %v2390
        %4920 = vmatprep.subr.bf16.mxu0 0
        %4921 = vmatpush1.bf16.msra.mxu0 %v2393
        %4922 = vmatprep.subr.bf16.mxu0 0
        %4923 = vmatpush1.bf16.msra.mxu0 %v2396
        %4924 = vmatprep.subr.bf16.mxu0 0
        %4925 = vmatpush1.bf16.msra.mxu0 %v2399
        %4926 = vmatprep.subr.bf16.mxu0 0
        %4927 = vmatpush1.bf16.msra.mxu0 %v2402
        %4928 = vmatprep.subr.bf16.mxu0 0
        %4929 = vmatpush1.bf16.msra.mxu0 %v2405
        %4930 = vmatprep.subr.bf16.mxu0 0
        %4931 = vmatpush1.bf16.msra.mxu0 %v2408
        %4932 = vmatprep.subr.bf16.mxu0 0
        %4933 = vmatpush1.bf16.msra.mxu0 %v2411
        %4934 = vmatprep.subr.bf16.mxu0 0
        %4935 = vmatpush1.bf16.msra.mxu0 %v2414
        %4936 = vmatprep.subr.bf16.mxu0 0
        %4937 = vmatpush1.bf16.msra.mxu0 %v2417
        %4938 = vmatprep.subr.bf16.mxu0 0
        %4939 = vmatpush1.bf16.msra.mxu0 %v2420
        %4940 = vmatprep.subr.bf16.mxu0 0
        %4941 = vmatpush1.bf16.msra.mxu0 %v2423
        %4942 = vmatprep.subr.bf16.mxu0 0
        %4943 = vmatpush1.bf16.msra.mxu0 %v2426
        %4944 = vmatprep.mubr.bf16.mxu0 %v3504
        %4945 = vmatmul.mubr.bf16.gmra.mrb[0].mxu0 %v3503
        %v4946 = vpop.f32.mrb[0].mxu0
        %v4947 = vadd.f32 %v4906, %v4946
        %v4948 = vpop.f32.mrb[0].mxu0
        %v4949 = vpop.f32.mrb[0].mxu0
        %v4950 = vadd.f32 %v4909, %v4949
        %v4951 = vpop.f32.mrb[0].mxu0
        %4952 = vdwg.mxu0
        %4953 = vmatprep.subr.bf16.mxu0 0
        %4954 = vmatpush1.bf16.msra.mxu0 %v2429
        %4955 = vmatprep.subr.bf16.mxu0 0
        %4956 = vmatpush1.bf16.msra.mxu0 %v2432
        %4957 = vmatprep.subr.bf16.mxu0 0
        %4958 = vmatpush1.bf16.msra.mxu0 %v2435
        %4959 = vmatprep.subr.bf16.mxu0 0
        %4960 = vmatpush1.bf16.msra.mxu0 %v2438
        %4961 = vmatprep.subr.bf16.mxu0 0
        %4962 = vmatpush1.bf16.msra.mxu0 %v2441
        %4963 = vmatprep.subr.bf16.mxu0 0
        %4964 = vmatpush1.bf16.msra.mxu0 %v2444
        %4965 = vmatprep.subr.bf16.mxu0 0
        %4966 = vmatpush1.bf16.msra.mxu0 %v2447
        %4967 = vmatprep.subr.bf16.mxu0 0
        %4968 = vmatpush1.bf16.msra.mxu0 %v2450
        %4969 = vmatprep.subr.bf16.mxu0 0
        %4970 = vmatpush1.bf16.msra.mxu0 %v2453
        %4971 = vmatprep.subr.bf16.mxu0 0
        %4972 = vmatpush1.bf16.msra.mxu0 %v2456
        %4973 = vmatprep.subr.bf16.mxu0 0
        %4974 = vmatpush1.bf16.msra.mxu0 %v2459
        %4975 = vmatprep.subr.bf16.mxu0 0
        %4976 = vmatpush1.bf16.msra.mxu0 %v2462
        %4977 = vmatprep.subr.bf16.mxu0 0
        %4978 = vmatpush1.bf16.msra.mxu0 %v2465
        %4979 = vmatprep.subr.bf16.mxu0 0
        %4980 = vmatpush1.bf16.msra.mxu0 %v2468
        %4981 = vmatprep.subr.bf16.mxu0 0
        %4982 = vmatpush1.bf16.msra.mxu0 %v2471
        %4983 = vmatprep.subr.bf16.mxu0 0
        %4984 = vmatpush1.bf16.msra.mxu0 %v2474
        %4985 = vmatprep.mubr.bf16.mxu0 %v3506
        %4986 = vmatmul.mubr.bf16.gmra.mrb[0].mxu0 %v3505
        %v4987 = vpop.f32.mrb[0].mxu0
        %v4988 = vadd.f32 %v4947, %v4987
        %v4989 = vpop.f32.mrb[0].mxu0
        %v4990 = vpop.f32.mrb[0].mxu0
        %v4991 = vadd.f32 %v4950, %v4990
        %v4992 = vpop.f32.mrb[0].mxu0
        %4993 = vdwg.mxu0
        %4994 = vmatprep.subr.bf16.mxu0 0
        %4995 = vmatpush1.bf16.msra.mxu0 %v2477
        %4996 = vmatprep.subr.bf16.mxu0 0
        %4997 = vmatpush1.bf16.msra.mxu0 %v2480
        %4998 = vmatprep.subr.bf16.mxu0 0
        %4999 = vmatpush1.bf16.msra.mxu0 %v2483
        %5000 = vmatprep.subr.bf16.mxu0 0
        %5001 = vmatpush1.bf16.msra.mxu0 %v2486
        %5002 = vmatprep.subr.bf16.mxu0 0
        %5003 = vmatpush1.bf16.msra.mxu0 %v2489
        %5004 = vmatprep.subr.bf16.mxu0 0
        %5005 = vmatpush1.bf16.msra.mxu0 %v2492
        %5006 = vmatprep.subr.bf16.mxu0 0
        %5007 = vmatpush1.bf16.msra.mxu0 %v2495
        %5008 = vmatprep.subr.bf16.mxu0 0
        %5009 = vmatpush1.bf16.msra.mxu0 %v2498
        %5010 = vmatprep.subr.bf16.mxu0 0
        %5011 = vmatpush1.bf16.msra.mxu0 %v2501
        %5012 = vmatprep.subr.bf16.mxu0 0
        %5013 = vmatpush1.bf16.msra.mxu0 %v2504
        %5014 = vmatprep.subr.bf16.mxu0 0
        %5015 = vmatpush1.bf16.msra.mxu0 %v2507
        %5016 = vmatprep.subr.bf16.mxu0 0
        %5017 = vmatpush1.bf16.msra.mxu0 %v2510
        %5018 = vmatprep.subr.bf16.mxu0 0
        %5019 = vmatpush1.bf16.msra.mxu0 %v2513
        %5020 = vmatprep.subr.bf16.mxu0 0
        %5021 = vmatpush1.bf16.msra.mxu0 %v2516
        %5022 = vmatprep.subr.bf16.mxu0 0
        %5023 = vmatpush1.bf16.msra.mxu0 %v2519
        %5024 = vmatprep.subr.bf16.mxu0 0
        %5025 = vmatpush1.bf16.msra.mxu0 %v2522
        %5026 = vmatprep.mubr.bf16.mxu0 %v3508
        %5027 = vmatmul.mubr.bf16.gmra.mrb[0].mxu0 %v3507
        %v5028 = vpop.f32.mrb[0].mxu0
        %v5029 = vadd.f32 %v4988, %v5028
        %v5030 = vpop.f32.mrb[0].mxu0
        %v5031 = vpop.f32.mrb[0].mxu0
        %v5032 = vadd.f32 %v4991, %v5031
        %v5033 = vpop.f32.mrb[0].mxu0
        %5034 = vdwg.mxu0
        %5035 = vmatprep.subr.bf16.mxu0 0
        %5036 = vmatpush1.bf16.msra.mxu0 %v2525
        %5037 = vmatprep.subr.bf16.mxu0 0
        %5038 = vmatpush1.bf16.msra.mxu0 %v2528
        %5039 = vmatprep.subr.bf16.mxu0 0
        %5040 = vmatpush1.bf16.msra.mxu0 %v2531
        %5041 = vmatprep.subr.bf16.mxu0 0
        %5042 = vmatpush1.bf16.msra.mxu0 %v2534
        %5043 = vmatprep.subr.bf16.mxu0 0
        %5044 = vmatpush1.bf16.msra.mxu0 %v2537
        %5045 = vmatprep.subr.bf16.mxu0 0
        %5046 = vmatpush1.bf16.msra.mxu0 %v2540
        %5047 = vmatprep.subr.bf16.mxu0 0
        %5048 = vmatpush1.bf16.msra.mxu0 %v2543
        %5049 = vmatprep.subr.bf16.mxu0 0
        %5050 = vmatpush1.bf16.msra.mxu0 %v2546
        %5051 = vmatprep.subr.bf16.mxu0 0
        %5052 = vmatpush1.bf16.msra.mxu0 %v2549
        %5053 = vmatprep.subr.bf16.mxu0 0
        %5054 = vmatpush1.bf16.msra.mxu0 %v2552
        %5055 = vmatprep.subr.bf16.mxu0 0
        %5056 = vmatpush1.bf16.msra.mxu0 %v2555
        %5057 = vmatprep.subr.bf16.mxu0 0
        %5058 = vmatpush1.bf16.msra.mxu0 %v2558
        %5059 = vmatprep.subr.bf16.mxu0 0
        %5060 = vmatpush1.bf16.msra.mxu0 %v2561
        %5061 = vmatprep.subr.bf16.mxu0 0
        %5062 = vmatpush1.bf16.msra.mxu0 %v2564
        %5063 = vmatprep.subr.bf16.mxu0 0
        %5064 = vmatpush1.bf16.msra.mxu0 %v2567
        %5065 = vmatprep.subr.bf16.mxu0 0
        %5066 = vmatpush1.bf16.msra.mxu0 %v2570
        %5067 = vmatprep.mubr.bf16.mxu0 %v3510
        %5068 = vmatmul.mubr.bf16.gmra.mrb[0].mxu0 %v3509
        %v5069 = vpop.f32.mrb[0].mxu0
        %v5070 = vadd.f32 %v5029, %v5069
        %v5071 = vpop.f32.mrb[0].mxu0
        %v5072 = vpop.f32.mrb[0].mxu0
        %v5073 = vadd.f32 %v5032, %v5072
        %v5074 = vpop.f32.mrb[0].mxu0
        %5075 = vdwg.mxu0
        %5076 = vmatprep.subr.bf16.mxu0 0
        %5077 = vmatpush1.bf16.msra.mxu0 %v2573
        %5078 = vmatprep.subr.bf16.mxu0 0
        %5079 = vmatpush1.bf16.msra.mxu0 %v2576
        %5080 = vmatprep.subr.bf16.mxu0 0
        %5081 = vmatpush1.bf16.msra.mxu0 %v2579
        %5082 = vmatprep.subr.bf16.mxu0 0
        %5083 = vmatpush1.bf16.msra.mxu0 %v2582
        %5084 = vmatprep.subr.bf16.mxu0 0
        %5085 = vmatpush1.bf16.msra.mxu0 %v2585
        %5086 = vmatprep.subr.bf16.mxu0 0
        %5087 = vmatpush1.bf16.msra.mxu0 %v2588
        %5088 = vmatprep.subr.bf16.mxu0 0
        %5089 = vmatpush1.bf16.msra.mxu0 %v2591
        %5090 = vmatprep.subr.bf16.mxu0 0
        %5091 = vmatpush1.bf16.msra.mxu0 %v2594
        %5092 = vmatprep.subr.bf16.mxu0 0
        %5093 = vmatpush1.bf16.msra.mxu0 %v2597
        %5094 = vmatprep.subr.bf16.mxu0 0
        %5095 = vmatpush1.bf16.msra.mxu0 %v2600
        %5096 = vmatprep.subr.bf16.mxu0 0
        %5097 = vmatpush1.bf16.msra.mxu0 %v2603
        %5098 = vmatprep.subr.bf16.mxu0 0
        %5099 = vmatpush1.bf16.msra.mxu0 %v2606
        %5100 = vmatprep.subr.bf16.mxu0 0
        %5101 = vmatpush1.bf16.msra.mxu0 %v2609
        %5102 = vmatprep.subr.bf16.mxu0 0
        %5103 = vmatpush1.bf16.msra.mxu0 %v2612
        %5104 = vmatprep.subr.bf16.mxu0 0
        %5105 = vmatpush1.bf16.msra.mxu0 %v2615
        %5106 = vmatprep.subr.bf16.mxu0 0
        %5107 = vmatpush1.bf16.msra.mxu0 %v2618
        %5108 = vmatprep.mubr.bf16.mxu0 %v3512
        %5109 = vmatmul.mubr.bf16.gmra.mrb[0].mxu0 %v3511
        %v5110 = vpop.f32.mrb[0].mxu0
        %v5111 = vadd.f32 %v5070, %v5110
        %v5112 = vpop.f32.mrb[0].mxu0
        %v5113 = vpop.f32.mrb[0].mxu0
        %v5114 = vadd.f32 %v5073, %v5113
        %v5115 = vpop.f32.mrb[0].mxu0
        %5116 = vdwg.mxu0
        %5117 = vmatprep.subr.bf16.mxu0 0
        %5118 = vmatpush1.bf16.msra.mxu0 %v2621
        %5119 = vmatprep.subr.bf16.mxu0 0
        %5120 = vmatpush1.bf16.msra.mxu0 %v2624
        %5121 = vmatprep.subr.bf16.mxu0 0
        %5122 = vmatpush1.bf16.msra.mxu0 %v2627
        %5123 = vmatprep.subr.bf16.mxu0 0
        %5124 = vmatpush1.bf16.msra.mxu0 %v2630
        %5125 = vmatprep.subr.bf16.mxu0 0
        %5126 = vmatpush1.bf16.msra.mxu0 %v2633
        %5127 = vmatprep.subr.bf16.mxu0 0
        %5128 = vmatpush1.bf16.msra.mxu0 %v2636
        %5129 = vmatprep.subr.bf16.mxu0 0
        %5130 = vmatpush1.bf16.msra.mxu0 %v2639
        %5131 = vmatprep.subr.bf16.mxu0 0
        %5132 = vmatpush1.bf16.msra.mxu0 %v2642
        %5133 = vmatprep.subr.bf16.mxu0 0
        %5134 = vmatpush1.bf16.msra.mxu0 %v2645
        %5135 = vmatprep.subr.bf16.mxu0 0
        %5136 = vmatpush1.bf16.msra.mxu0 %v2648
        %5137 = vmatprep.subr.bf16.mxu0 0
        %5138 = vmatpush1.bf16.msra.mxu0 %v2651
        %5139 = vmatprep.subr.bf16.mxu0 0
        %5140 = vmatpush1.bf16.msra.mxu0 %v2654
        %5141 = vmatprep.subr.bf16.mxu0 0
        %5142 = vmatpush1.bf16.msra.mxu0 %v2657
        %5143 = vmatprep.subr.bf16.mxu0 0
        %5144 = vmatpush1.bf16.msra.mxu0 %v2660
        %5145 = vmatprep.subr.bf16.mxu0 0
        %5146 = vmatpush1.bf16.msra.mxu0 %v2663
        %5147 = vmatprep.subr.bf16.mxu0 0
        %5148 = vmatpush1.bf16.msra.mxu0 %v2666
        %5149 = vmatprep.mubr.bf16.mxu0 %v3514
        %5150 = vmatmul.mubr.bf16.gmra.mrb[0].mxu0 %v3513
        %v5151 = vpop.f32.mrb[0].mxu0
        %v5152 = vadd.f32 %v5111, %v5151
        %v5153 = vpop.f32.mrb[0].mxu0
        %v5154 = vpop.f32.mrb[0].mxu0
        %v5155 = vadd.f32 %v5114, %v5154
        %v5156 = vpop.f32.mrb[0].mxu0
        %5157 = vdwg.mxu0
        %5158 = vmatprep.subr.bf16.mxu0 0
        %5159 = vmatpush1.bf16.msra.mxu0 %v2669
        %5160 = vmatprep.subr.bf16.mxu0 0
        %5161 = vmatpush1.bf16.msra.mxu0 %v2672
        %5162 = vmatprep.subr.bf16.mxu0 0
        %5163 = vmatpush1.bf16.msra.mxu0 %v2675
        %5164 = vmatprep.subr.bf16.mxu0 0
        %5165 = vmatpush1.bf16.msra.mxu0 %v2678
        %5166 = vmatprep.subr.bf16.mxu0 0
        %5167 = vmatpush1.bf16.msra.mxu0 %v2681
        %5168 = vmatprep.subr.bf16.mxu0 0
        %5169 = vmatpush1.bf16.msra.mxu0 %v2684
        %5170 = vmatprep.subr.bf16.mxu0 0
        %5171 = vmatpush1.bf16.msra.mxu0 %v2687
        %5172 = vmatprep.subr.bf16.mxu0 0
        %5173 = vmatpush1.bf16.msra.mxu0 %v2690
        %5174 = vmatprep.subr.bf16.mxu0 0
        %5175 = vmatpush1.bf16.msra.mxu0 %v2693
        %5176 = vmatprep.subr.bf16.mxu0 0
        %5177 = vmatpush1.bf16.msra.mxu0 %v2696
        %5178 = vmatprep.subr.bf16.mxu0 0
        %5179 = vmatpush1.bf16.msra.mxu0 %v2699
        %5180 = vmatprep.subr.bf16.mxu0 0
        %5181 = vmatpush1.bf16.msra.mxu0 %v2702
        %5182 = vmatprep.subr.bf16.mxu0 0
        %5183 = vmatpush1.bf16.msra.mxu0 %v2705
        %5184 = vmatprep.subr.bf16.mxu0 0
        %5185 = vmatpush1.bf16.msra.mxu0 %v2708
        %5186 = vmatprep.subr.bf16.mxu0 0
        %5187 = vmatpush1.bf16.msra.mxu0 %v2711
        %5188 = vmatprep.subr.bf16.mxu0 0
        %5189 = vmatpush1.bf16.msra.mxu0 %v2714
        %5190 = vmatprep.mubr.bf16.mxu0 %v3516
        %5191 = vmatmul.mubr.bf16.gmra.mrb[0].mxu0 %v3515
        %v5192 = vpop.f32.mrb[0].mxu0
        %v5193 = vadd.f32 %v5152, %v5192
        %v5194 = vpop.f32.mrb[0].mxu0
        %v5195 = vpop.f32.mrb[0].mxu0
        %v5196 = vadd.f32 %v5155, %v5195
        %v5197 = vpop.f32.mrb[0].mxu0
        %5198 = vdwg.mxu0
        %5199 = vmatprep.subr.bf16.mxu0 0
        %5200 = vmatpush1.bf16.msra.mxu0 %v2717
        %5201 = vmatprep.subr.bf16.mxu0 0
        %5202 = vmatpush1.bf16.msra.mxu0 %v2720
        %5203 = vmatprep.subr.bf16.mxu0 0
        %5204 = vmatpush1.bf16.msra.mxu0 %v2723
        %5205 = vmatprep.subr.bf16.mxu0 0
        %5206 = vmatpush1.bf16.msra.mxu0 %v2726
        %5207 = vmatprep.subr.bf16.mxu0 0
        %5208 = vmatpush1.bf16.msra.mxu0 %v2729
        %5209 = vmatprep.subr.bf16.mxu0 0
        %5210 = vmatpush1.bf16.msra.mxu0 %v2732
        %5211 = vmatprep.subr.bf16.mxu0 0
        %5212 = vmatpush1.bf16.msra.mxu0 %v2735
        %5213 = vmatprep.subr.bf16.mxu0 0
        %5214 = vmatpush1.bf16.msra.mxu0 %v2738
        %5215 = vmatprep.subr.bf16.mxu0 0
        %5216 = vmatpush1.bf16.msra.mxu0 %v2741
        %5217 = vmatprep.subr.bf16.mxu0 0
        %5218 = vmatpush1.bf16.msra.mxu0 %v2744
        %5219 = vmatprep.subr.bf16.mxu0 0
        %5220 = vmatpush1.bf16.msra.mxu0 %v2747
        %5221 = vmatprep.subr.bf16.mxu0 0
        %5222 = vmatpush1.bf16.msra.mxu0 %v2750
        %5223 = vmatprep.subr.bf16.mxu0 0
        %5224 = vmatpush1.bf16.msra.mxu0 %v2753
        %5225 = vmatprep.subr.bf16.mxu0 0
        %5226 = vmatpush1.bf16.msra.mxu0 %v2756
        %5227 = vmatprep.subr.bf16.mxu0 0
        %5228 = vmatpush1.bf16.msra.mxu0 %v2759
        %5229 = vmatprep.subr.bf16.mxu0 0
        %5230 = vmatpush1.bf16.msra.mxu0 %v2762
        %5231 = vmatprep.mubr.bf16.mxu0 %v3518
        %5232 = vmatmul.mubr.bf16.gmra.mrb[0].mxu0 %v3517
        %v5233 = vpop.f32.mrb[0].mxu0
        %v5234 = vadd.f32 %v5193, %v5233
        %v5235 = vpop.f32.mrb[0].mxu0
        %v5236 = vpop.f32.mrb[0].mxu0
        %v5237 = vadd.f32 %v5196, %v5236
        %v5238 = vpop.f32.mrb[0].mxu0
        %5239 = vdwg.mxu0
        %5240 = vmatprep.subr.bf16.mxu0 0
        %5241 = vmatpush1.bf16.msra.mxu0 %v2765
        %5242 = vmatprep.subr.bf16.mxu0 0
        %5243 = vmatpush1.bf16.msra.mxu0 %v2768
        %5244 = vmatprep.subr.bf16.mxu0 0
        %5245 = vmatpush1.bf16.msra.mxu0 %v2771
        %5246 = vmatprep.subr.bf16.mxu0 0
        %5247 = vmatpush1.bf16.msra.mxu0 %v2774
        %5248 = vmatprep.subr.bf16.mxu0 0
        %5249 = vmatpush1.bf16.msra.mxu0 %v2777
        %5250 = vmatprep.subr.bf16.mxu0 0
        %5251 = vmatpush1.bf16.msra.mxu0 %v2780
        %5252 = vmatprep.subr.bf16.mxu0 0
        %5253 = vmatpush1.bf16.msra.mxu0 %v2783
        %5254 = vmatprep.subr.bf16.mxu0 0
        %5255 = vmatpush1.bf16.msra.mxu0 %v2786
        %5256 = vmatprep.subr.bf16.mxu0 0
        %5257 = vmatpush1.bf16.msra.mxu0 %v2789
        %5258 = vmatprep.subr.bf16.mxu0 0
        %5259 = vmatpush1.bf16.msra.mxu0 %v2792
        %5260 = vmatprep.subr.bf16.mxu0 0
        %5261 = vmatpush1.bf16.msra.mxu0 %v2795
        %5262 = vmatprep.subr.bf16.mxu0 0
        %5263 = vmatpush1.bf16.msra.mxu0 %v2798
        %5264 = vmatprep.subr.bf16.mxu0 0
        %5265 = vmatpush1.bf16.msra.mxu0 %v2801
        %5266 = vmatprep.subr.bf16.mxu0 0
        %5267 = vmatpush1.bf16.msra.mxu0 %v2804
        %5268 = vmatprep.subr.bf16.mxu0 0
        %5269 = vmatpush1.bf16.msra.mxu0 %v2807
        %5270 = vmatprep.subr.bf16.mxu0 0
        %5271 = vmatpush1.bf16.msra.mxu0 %v2810
        %5272 = vmatprep.mubr.bf16.mxu0 %v3520
        %5273 = vmatmul.mubr.bf16.gmra.mrb[0].mxu0 %v3519
        %v5274 = vpop.f32.mrb[0].mxu0
        %v5275 = vadd.f32 %v5234, %v5274
        %v5276 = vpop.f32.mrb[0].mxu0
        %v5277 = vpop.f32.mrb[0].mxu0
        %v5278 = vadd.f32 %v5237, %v5277
        %v5279 = vpop.f32.mrb[0].mxu0
        %5280 = vdwg.mxu0
        %5281 = vmatprep.subr.bf16.mxu0 0
        %5282 = vmatpush1.bf16.msra.mxu0 %v2813
        %5283 = vmatprep.subr.bf16.mxu0 0
        %5284 = vmatpush1.bf16.msra.mxu0 %v2816
        %5285 = vmatprep.subr.bf16.mxu0 0
        %5286 = vmatpush1.bf16.msra.mxu0 %v2819
        %5287 = vmatprep.subr.bf16.mxu0 0
        %5288 = vmatpush1.bf16.msra.mxu0 %v2822
        %5289 = vmatprep.subr.bf16.mxu0 0
        %5290 = vmatpush1.bf16.msra.mxu0 %v2825
        %5291 = vmatprep.subr.bf16.mxu0 0
        %5292 = vmatpush1.bf16.msra.mxu0 %v2828
        %5293 = vmatprep.subr.bf16.mxu0 0
        %5294 = vmatpush1.bf16.msra.mxu0 %v2831
        %5295 = vmatprep.subr.bf16.mxu0 0
        %5296 = vmatpush1.bf16.msra.mxu0 %v2834
        %5297 = vmatprep.subr.bf16.mxu0 0
        %5298 = vmatpush1.bf16.msra.mxu0 %v2837
        %5299 = vmatprep.subr.bf16.mxu0 0
        %5300 = vmatpush1.bf16.msra.mxu0 %v2840
        %5301 = vmatprep.subr.bf16.mxu0 0
        %5302 = vmatpush1.bf16.msra.mxu0 %v2843
        %5303 = vmatprep.subr.bf16.mxu0 0
        %5304 = vmatpush1.bf16.msra.mxu0 %v2846
        %5305 = vmatprep.subr.bf16.mxu0 0
        %5306 = vmatpush1.bf16.msra.mxu0 %v2849
        %5307 = vmatprep.subr.bf16.mxu0 0
        %5308 = vmatpush1.bf16.msra.mxu0 %v2852
        %5309 = vmatprep.subr.bf16.mxu0 0
        %5310 = vmatpush1.bf16.msra.mxu0 %v2855
        %5311 = vmatprep.subr.bf16.mxu0 0
        %5312 = vmatpush1.bf16.msra.mxu0 %v2858
        %5313 = vmatprep.mubr.bf16.mxu0 %v3522
        %5314 = vmatmul.mubr.bf16.gmra.mrb[0].mxu0 %v3521
        %v5315 = vpop.f32.mrb[0].mxu0
        %v5316 = vadd.f32 %v5275, %v5315
        %v5317 = vpop.f32.mrb[0].mxu0
        %v5318 = vpop.f32.mrb[0].mxu0
        %v5319 = vadd.f32 %v5278, %v5318
        %v5320 = vpop.f32.mrb[0].mxu0
        %5321 = vdwg.mxu0
        %5322 = vmatprep.subr.bf16.mxu0 0
        %5323 = vmatpush1.bf16.msra.mxu0 %v2861
        %5324 = vmatprep.subr.bf16.mxu0 0
        %5325 = vmatpush1.bf16.msra.mxu0 %v2864
        %5326 = vmatprep.subr.bf16.mxu0 0
        %5327 = vmatpush1.bf16.msra.mxu0 %v2867
        %5328 = vmatprep.subr.bf16.mxu0 0
        %5329 = vmatpush1.bf16.msra.mxu0 %v2870
        %5330 = vmatprep.subr.bf16.mxu0 0
        %5331 = vmatpush1.bf16.msra.mxu0 %v2873
        %5332 = vmatprep.subr.bf16.mxu0 0
        %5333 = vmatpush1.bf16.msra.mxu0 %v2876
        %5334 = vmatprep.subr.bf16.mxu0 0
        %5335 = vmatpush1.bf16.msra.mxu0 %v2879
        %5336 = vmatprep.subr.bf16.mxu0 0
        %5337 = vmatpush1.bf16.msra.mxu0 %v2882
        %5338 = vmatprep.subr.bf16.mxu0 0
        %5339 = vmatpush1.bf16.msra.mxu0 %v2885
        %5340 = vmatprep.subr.bf16.mxu0 0
        %5341 = vmatpush1.bf16.msra.mxu0 %v2888
        %5342 = vmatprep.subr.bf16.mxu0 0
        %5343 = vmatpush1.bf16.msra.mxu0 %v2891
        %5344 = vmatprep.subr.bf16.mxu0 0
        %5345 = vmatpush1.bf16.msra.mxu0 %v2894
        %5346 = vmatprep.subr.bf16.mxu0 0
        %5347 = vmatpush1.bf16.msra.mxu0 %v2897
        %5348 = vmatprep.subr.bf16.mxu0 0
        %5349 = vmatpush1.bf16.msra.mxu0 %v2900
        %5350 = vmatprep.subr.bf16.mxu0 0
        %5351 = vmatpush1.bf16.msra.mxu0 %v2903
        %5352 = vmatprep.subr.bf16.mxu0 0
        %5353 = vmatpush1.bf16.msra.mxu0 %v2906
        %5354 = vmatprep.mubr.bf16.mxu0 %v3524
        %5355 = vmatmul.mubr.bf16.gmra.mrb[0].mxu0 %v3523
        %v5356 = vpop.f32.mrb[0].mxu0
        %v5357 = vadd.f32 %v5316, %v5356
        %v5358 = vpop.f32.mrb[0].mxu0
        %v5359 = vpop.f32.mrb[0].mxu0
        %v5360 = vadd.f32 %v5319, %v5359
        %v5361 = vpop.f32.mrb[0].mxu0
        %5362 = vdwg.mxu0
        %5363 = vmatprep.subr.bf16.mxu0 0
        %5364 = vmatpush1.bf16.msra.mxu0 %v2909
        %5365 = vmatprep.subr.bf16.mxu0 0
        %5366 = vmatpush1.bf16.msra.mxu0 %v2912
        %5367 = vmatprep.subr.bf16.mxu0 0
        %5368 = vmatpush1.bf16.msra.mxu0 %v2915
        %5369 = vmatprep.subr.bf16.mxu0 0
        %5370 = vmatpush1.bf16.msra.mxu0 %v2918
        %5371 = vmatprep.subr.bf16.mxu0 0
        %5372 = vmatpush1.bf16.msra.mxu0 %v2921
        %5373 = vmatprep.subr.bf16.mxu0 0
        %5374 = vmatpush1.bf16.msra.mxu0 %v2924
        %5375 = vmatprep.subr.bf16.mxu0 0
        %5376 = vmatpush1.bf16.msra.mxu0 %v2927
        %5377 = vmatprep.subr.bf16.mxu0 0
        %5378 = vmatpush1.bf16.msra.mxu0 %v2930
        %5379 = vmatprep.subr.bf16.mxu0 0
        %5380 = vmatpush1.bf16.msra.mxu0 %v2933
        %5381 = vmatprep.subr.bf16.mxu0 0
        %5382 = vmatpush1.bf16.msra.mxu0 %v2936
        %5383 = vmatprep.subr.bf16.mxu0 0
        %5384 = vmatpush1.bf16.msra.mxu0 %v2939
        %5385 = vmatprep.subr.bf16.mxu0 0
        %5386 = vmatpush1.bf16.msra.mxu0 %v2942
        %5387 = vmatprep.subr.bf16.mxu0 0
        %5388 = vmatpush1.bf16.msra.mxu0 %v2945
        %5389 = vmatprep.subr.bf16.mxu0 0
        %5390 = vmatpush1.bf16.msra.mxu0 %v2948
        %5391 = vmatprep.subr.bf16.mxu0 0
        %5392 = vmatpush1.bf16.msra.mxu0 %v2951
        %5393 = vmatprep.subr.bf16.mxu0 0
        %5394 = vmatpush1.bf16.msra.mxu0 %v2954
        %5395 = vmatprep.mubr.bf16.mxu0 %v3526
        %5396 = vmatmul.mubr.bf16.gmra.mrb[0].mxu0 %v3525
        %v5397 = vpop.f32.mrb[0].mxu0
        %v5398 = vadd.f32 %v5357, %v5397
        %v5399 = vpop.f32.mrb[0].mxu0
        %v5400 = vpop.f32.mrb[0].mxu0
        %v5401 = vadd.f32 %v5360, %v5400
        %v5402 = vpop.f32.mrb[0].mxu0
        %5403 = vdwg.mxu0
        %5404 = vmatprep.subr.bf16.mxu0 0
        %5405 = vmatpush1.bf16.msra.mxu0 %v2957
        %5406 = vmatprep.subr.bf16.mxu0 0
        %5407 = vmatpush1.bf16.msra.mxu0 %v2960
        %5408 = vmatprep.subr.bf16.mxu0 0
        %5409 = vmatpush1.bf16.msra.mxu0 %v2963
        %5410 = vmatprep.subr.bf16.mxu0 0
        %5411 = vmatpush1.bf16.msra.mxu0 %v2966
        %5412 = vmatprep.subr.bf16.mxu0 0
        %5413 = vmatpush1.bf16.msra.mxu0 %v2969
        %5414 = vmatprep.subr.bf16.mxu0 0
        %5415 = vmatpush1.bf16.msra.mxu0 %v2972
        %5416 = vmatprep.subr.bf16.mxu0 0
        %5417 = vmatpush1.bf16.msra.mxu0 %v2975
        %5418 = vmatprep.subr.bf16.mxu0 0
        %5419 = vmatpush1.bf16.msra.mxu0 %v2978
        %5420 = vmatprep.subr.bf16.mxu0 0
        %5421 = vmatpush1.bf16.msra.mxu0 %v2981
        %5422 = vmatprep.subr.bf16.mxu0 0
        %5423 = vmatpush1.bf16.msra.mxu0 %v2984
        %5424 = vmatprep.subr.bf16.mxu0 0
        %5425 = vmatpush1.bf16.msra.mxu0 %v2987
        %5426 = vmatprep.subr.bf16.mxu0 0
        %5427 = vmatpush1.bf16.msra.mxu0 %v2990
        %5428 = vmatprep.subr.bf16.mxu0 0
        %5429 = vmatpush1.bf16.msra.mxu0 %v2993
        %5430 = vmatprep.subr.bf16.mxu0 0
        %5431 = vmatpush1.bf16.msra.mxu0 %v2996
        %5432 = vmatprep.subr.bf16.mxu0 0
        %5433 = vmatpush1.bf16.msra.mxu0 %v2999
        %5434 = vmatprep.subr.bf16.mxu0 0
        %5435 = vmatpush1.bf16.msra.mxu0 %v3002
        %5436 = vmatprep.mubr.bf16.mxu0 %v3528
        %5437 = vmatmul.mubr.bf16.gmra.mrb[0].mxu0 %v3527
        %v5438 = vpop.f32.mrb[0].mxu0
        %v5439 = vadd.f32 %v5398, %v5438
        %v5440 = vpop.f32.mrb[0].mxu0
        %v5441 = vpop.f32.mrb[0].mxu0
        %v5442 = vadd.f32 %v5401, %v5441
        %v5443 = vpop.f32.mrb[0].mxu0
        %5444 = vdwg.mxu0
        %5445 = vmatprep.subr.bf16.mxu0 0
        %5446 = vmatpush1.bf16.msra.mxu0 %v3005
        %5447 = vmatprep.subr.bf16.mxu0 0
        %5448 = vmatpush1.bf16.msra.mxu0 %v3008
        %5449 = vmatprep.subr.bf16.mxu0 0
        %5450 = vmatpush1.bf16.msra.mxu0 %v3011
        %5451 = vmatprep.subr.bf16.mxu0 0
        %5452 = vmatpush1.bf16.msra.mxu0 %v3014
        %5453 = vmatprep.subr.bf16.mxu0 0
        %5454 = vmatpush1.bf16.msra.mxu0 %v3017
        %5455 = vmatprep.subr.bf16.mxu0 0
        %5456 = vmatpush1.bf16.msra.mxu0 %v3020
        %5457 = vmatprep.subr.bf16.mxu0 0
        %5458 = vmatpush1.bf16.msra.mxu0 %v3023
        %5459 = vmatprep.subr.bf16.mxu0 0
        %5460 = vmatpush1.bf16.msra.mxu0 %v3026
        %5461 = vmatprep.subr.bf16.mxu0 0
        %5462 = vmatpush1.bf16.msra.mxu0 %v3029
        %5463 = vmatprep.subr.bf16.mxu0 0
        %5464 = vmatpush1.bf16.msra.mxu0 %v3032
        %5465 = vmatprep.subr.bf16.mxu0 0
        %5466 = vmatpush1.bf16.msra.mxu0 %v3035
        %5467 = vmatprep.subr.bf16.mxu0 0
        %5468 = vmatpush1.bf16.msra.mxu0 %v3038
        %5469 = vmatprep.subr.bf16.mxu0 0
        %5470 = vmatpush1.bf16.msra.mxu0 %v3041
        %5471 = vmatprep.subr.bf16.mxu0 0
        %5472 = vmatpush1.bf16.msra.mxu0 %v3044
        %5473 = vmatprep.subr.bf16.mxu0 0
        %5474 = vmatpush1.bf16.msra.mxu0 %v3047
        %5475 = vmatprep.subr.bf16.mxu0 0
        %5476 = vmatpush1.bf16.msra.mxu0 %v3050
        %5477 = vmatprep.mubr.bf16.mxu0 %v3530
        %5478 = vmatmul.mubr.bf16.gmra.mrb[0].mxu0 %v3529
        %v5479 = vpop.f32.mrb[0].mxu0
        %v5480 = vadd.f32 %v5439, %v5479
        %v5481 = vpop.f32.mrb[0].mxu0
        %v5482 = vpop.f32.mrb[0].mxu0
        %v5483 = vadd.f32 %v5442, %v5482
        %v5484 = vpop.f32.mrb[0].mxu0
        %5485 = vdwg.mxu0
        %5486 = vmatprep.subr.bf16.mxu0 0
        %5487 = vmatpush1.bf16.msra.mxu0 %v3053
        %5488 = vmatprep.subr.bf16.mxu0 0
        %5489 = vmatpush1.bf16.msra.mxu0 %v3056
        %5490 = vmatprep.subr.bf16.mxu0 0
        %5491 = vmatpush1.bf16.msra.mxu0 %v3059
        %5492 = vmatprep.subr.bf16.mxu0 0
        %5493 = vmatpush1.bf16.msra.mxu0 %v3062
        %5494 = vmatprep.subr.bf16.mxu0 0
        %5495 = vmatpush1.bf16.msra.mxu0 %v3065
        %5496 = vmatprep.subr.bf16.mxu0 0
        %5497 = vmatpush1.bf16.msra.mxu0 %v3068
        %5498 = vmatprep.subr.bf16.mxu0 0
        %5499 = vmatpush1.bf16.msra.mxu0 %v3071
        %5500 = vmatprep.subr.bf16.mxu0 0
        %5501 = vmatpush1.bf16.msra.mxu0 %v3074
        %5502 = vmatprep.subr.bf16.mxu0 0
        %5503 = vmatpush1.bf16.msra.mxu0 %v3077
        %5504 = vmatprep.subr.bf16.mxu0 0
        %5505 = vmatpush1.bf16.msra.mxu0 %v3080
        %5506 = vmatprep.subr.bf16.mxu0 0
        %5507 = vmatpush1.bf16.msra.mxu0 %v3083
        %5508 = vmatprep.subr.bf16.mxu0 0
        %5509 = vmatpush1.bf16.msra.mxu0 %v3086
        %5510 = vmatprep.subr.bf16.mxu0 0
        %5511 = vmatpush1.bf16.msra.mxu0 %v3089
        %5512 = vmatprep.subr.bf16.mxu0 0
        %5513 = vmatpush1.bf16.msra.mxu0 %v3092
        %5514 = vmatprep.subr.bf16.mxu0 0
        %5515 = vmatpush1.bf16.msra.mxu0 %v3095
        %5516 = vmatprep.subr.bf16.mxu0 0
        %5517 = vmatpush1.bf16.msra.mxu0 %v3098
        %5518 = vmatprep.mubr.bf16.mxu0 %v3532
        %5519 = vmatmul.mubr.bf16.gmra.mrb[0].mxu0 %v3531
        %v5520 = vpop.f32.mrb[0].mxu0
        %v5521 = vadd.f32 %v5480, %v5520
        %v5522 = vpop.f32.mrb[0].mxu0
        %v5523 = vpop.f32.mrb[0].mxu0
        %v5524 = vadd.f32 %v5483, %v5523
        %v5525 = vpop.f32.mrb[0].mxu0
        %5526 = vdwg.mxu0
        %5527 = vmatprep.subr.bf16.mxu0 0
        %5528 = vmatpush1.bf16.msra.mxu0 %v3101
        %5529 = vmatprep.subr.bf16.mxu0 0
        %5530 = vmatpush1.bf16.msra.mxu0 %v3104
        %5531 = vmatprep.subr.bf16.mxu0 0
        %5532 = vmatpush1.bf16.msra.mxu0 %v3107
        %5533 = vmatprep.subr.bf16.mxu0 0
        %5534 = vmatpush1.bf16.msra.mxu0 %v3110
        %5535 = vmatprep.subr.bf16.mxu0 0
        %5536 = vmatpush1.bf16.msra.mxu0 %v3113
        %5537 = vmatprep.subr.bf16.mxu0 0
        %5538 = vmatpush1.bf16.msra.mxu0 %v3116
        %5539 = vmatprep.subr.bf16.mxu0 0
        %5540 = vmatpush1.bf16.msra.mxu0 %v3119
        %5541 = vmatprep.subr.bf16.mxu0 0
        %5542 = vmatpush1.bf16.msra.mxu0 %v3122
        %5543 = vmatprep.subr.bf16.mxu0 0
        %5544 = vmatpush1.bf16.msra.mxu0 %v3125
        %5545 = vmatprep.subr.bf16.mxu0 0
        %5546 = vmatpush1.bf16.msra.mxu0 %v3128
        %5547 = vmatprep.subr.bf16.mxu0 0
        %5548 = vmatpush1.bf16.msra.mxu0 %v3131
        %5549 = vmatprep.subr.bf16.mxu0 0
        %5550 = vmatpush1.bf16.msra.mxu0 %v3134
        %5551 = vmatprep.subr.bf16.mxu0 0
        %5552 = vmatpush1.bf16.msra.mxu0 %v3137
        %5553 = vmatprep.subr.bf16.mxu0 0
        %5554 = vmatpush1.bf16.msra.mxu0 %v3140
        %5555 = vmatprep.subr.bf16.mxu0 0
        %5556 = vmatpush1.bf16.msra.mxu0 %v3143
        %5557 = vmatprep.subr.bf16.mxu0 0
        %5558 = vmatpush1.bf16.msra.mxu0 %v3146
        %5559 = vmatprep.mubr.bf16.mxu0 %v3534
        %5560 = vmatmul.mubr.bf16.gmra.mrb[0].mxu0 %v3533
        %v5561 = vpop.f32.mrb[0].mxu0
        %v5562 = vadd.f32 %v5521, %v5561
        %v5563 = vpop.f32.mrb[0].mxu0
        %v5564 = vpop.f32.mrb[0].mxu0
        %v5565 = vadd.f32 %v5524, %v5564
        %v5566 = vpop.f32.mrb[0].mxu0
        %5567 = vdwg.mxu0
        %5568 = vmatprep.subr.bf16.mxu0 0
        %5569 = vmatpush1.bf16.msra.mxu0 %v3149
        %5570 = vmatprep.subr.bf16.mxu0 0
        %5571 = vmatpush1.bf16.msra.mxu0 %v3152
        %5572 = vmatprep.subr.bf16.mxu0 0
        %5573 = vmatpush1.bf16.msra.mxu0 %v3155
        %5574 = vmatprep.subr.bf16.mxu0 0
        %5575 = vmatpush1.bf16.msra.mxu0 %v3158
        %5576 = vmatprep.subr.bf16.mxu0 0
        %5577 = vmatpush1.bf16.msra.mxu0 %v3161
        %5578 = vmatprep.subr.bf16.mxu0 0
        %5579 = vmatpush1.bf16.msra.mxu0 %v3164
        %5580 = vmatprep.subr.bf16.mxu0 0
        %5581 = vmatpush1.bf16.msra.mxu0 %v3167
        %5582 = vmatprep.subr.bf16.mxu0 0
        %5583 = vmatpush1.bf16.msra.mxu0 %v3170
        %5584 = vmatprep.subr.bf16.mxu0 0
        %5585 = vmatpush1.bf16.msra.mxu0 %v3173
        %5586 = vmatprep.subr.bf16.mxu0 0
        %5587 = vmatpush1.bf16.msra.mxu0 %v3176
        %5588 = vmatprep.subr.bf16.mxu0 0
        %5589 = vmatpush1.bf16.msra.mxu0 %v3179
        %5590 = vmatprep.subr.bf16.mxu0 0
        %5591 = vmatpush1.bf16.msra.mxu0 %v3182
        %5592 = vmatprep.subr.bf16.mxu0 0
        %5593 = vmatpush1.bf16.msra.mxu0 %v3185
        %5594 = vmatprep.subr.bf16.mxu0 0
        %5595 = vmatpush1.bf16.msra.mxu0 %v3188
        %5596 = vmatprep.subr.bf16.mxu0 0
        %5597 = vmatpush1.bf16.msra.mxu0 %v3191
        %5598 = vmatprep.subr.bf16.mxu0 0
        %5599 = vmatpush1.bf16.msra.mxu0 %v3194
        %5600 = vmatprep.mubr.bf16.mxu0 %v3536
        %5601 = vmatmul.mubr.bf16.gmra.mrb[0].mxu0 %v3535
        %v5602 = vpop.f32.mrb[0].mxu0
        %v5603 = vadd.f32 %v5562, %v5602
        %v5604 = vpop.f32.mrb[0].mxu0
        %v5605 = vpop.f32.mrb[0].mxu0
        %v5606 = vadd.f32 %v5565, %v5605
        %v5607 = vpop.f32.mrb[0].mxu0
        %5608 = vdwg.mxu0
        %5609 = vmatprep.subr.bf16.mxu0 0
        %5610 = vmatpush1.bf16.msra.mxu0 %v3197
        %5611 = vmatprep.subr.bf16.mxu0 0
        %5612 = vmatpush1.bf16.msra.mxu0 %v3200
        %5613 = vmatprep.subr.bf16.mxu0 0
        %5614 = vmatpush1.bf16.msra.mxu0 %v3203
        %5615 = vmatprep.subr.bf16.mxu0 0
        %5616 = vmatpush1.bf16.msra.mxu0 %v3206
        %5617 = vmatprep.subr.bf16.mxu0 0
        %5618 = vmatpush1.bf16.msra.mxu0 %v3209
        %5619 = vmatprep.subr.bf16.mxu0 0
        %5620 = vmatpush1.bf16.msra.mxu0 %v3212
        %5621 = vmatprep.subr.bf16.mxu0 0
        %5622 = vmatpush1.bf16.msra.mxu0 %v3215
        %5623 = vmatprep.subr.bf16.mxu0 0
        %5624 = vmatpush1.bf16.msra.mxu0 %v3218
        %5625 = vmatprep.subr.bf16.mxu0 0
        %5626 = vmatpush1.bf16.msra.mxu0 %v3221
        %5627 = vmatprep.subr.bf16.mxu0 0
        %5628 = vmatpush1.bf16.msra.mxu0 %v3224
        %5629 = vmatprep.subr.bf16.mxu0 0
        %5630 = vmatpush1.bf16.msra.mxu0 %v3227
        %5631 = vmatprep.subr.bf16.mxu0 0
        %5632 = vmatpush1.bf16.msra.mxu0 %v3230
        %5633 = vmatprep.subr.bf16.mxu0 0
        %5634 = vmatpush1.bf16.msra.mxu0 %v3233
        %5635 = vmatprep.subr.bf16.mxu0 0
        %5636 = vmatpush1.bf16.msra.mxu0 %v3236
        %5637 = vmatprep.subr.bf16.mxu0 0
        %5638 = vmatpush1.bf16.msra.mxu0 %v3239
        %5639 = vmatprep.subr.bf16.mxu0 0
        %5640 = vmatpush1.bf16.msra.mxu0 %v3242
        %5641 = vmatprep.mubr.bf16.mxu0 %v3538
        %5642 = vmatmul.mubr.bf16.gmra.mrb[0].mxu0 %v3537
        %v5643 = vpop.f32.mrb[0].mxu0
        %v5644 = vadd.f32 %v5603, %v5643
        %v5645 = vpop.f32.mrb[0].mxu0
        %v5646 = vpop.f32.mrb[0].mxu0
        %v5647 = vadd.f32 %v5606, %v5646
        %v5648 = vpop.f32.mrb[0].mxu0
        %5649 = vdwg.mxu0
        %5650 = vmatprep.subr.bf16.mxu0 0
        %5651 = vmatpush1.bf16.msra.mxu0 %v3245
        %5652 = vmatprep.subr.bf16.mxu0 0
        %5653 = vmatpush1.bf16.msra.mxu0 %v3248
        %5654 = vmatprep.subr.bf16.mxu0 0
        %5655 = vmatpush1.bf16.msra.mxu0 %v3251
        %5656 = vmatprep.subr.bf16.mxu0 0
        %5657 = vmatpush1.bf16.msra.mxu0 %v3254
        %5658 = vmatprep.subr.bf16.mxu0 0
        %5659 = vmatpush1.bf16.msra.mxu0 %v3257
        %5660 = vmatprep.subr.bf16.mxu0 0
        %5661 = vmatpush1.bf16.msra.mxu0 %v3260
        %5662 = vmatprep.subr.bf16.mxu0 0
        %5663 = vmatpush1.bf16.msra.mxu0 %v3263
        %5664 = vmatprep.subr.bf16.mxu0 0
        %5665 = vmatpush1.bf16.msra.mxu0 %v3266
        %5666 = vmatprep.subr.bf16.mxu0 0
        %5667 = vmatpush1.bf16.msra.mxu0 %v3269
        %5668 = vmatprep.subr.bf16.mxu0 0
        %5669 = vmatpush1.bf16.msra.mxu0 %v3272
        %5670 = vmatprep.subr.bf16.mxu0 0
        %5671 = vmatpush1.bf16.msra.mxu0 %v3275
        %5672 = vmatprep.subr.bf16.mxu0 0
        %5673 = vmatpush1.bf16.msra.mxu0 %v3278
        %5674 = vmatprep.subr.bf16.mxu0 0
        %5675 = vmatpush1.bf16.msra.mxu0 %v3281
        %5676 = vmatprep.subr.bf16.mxu0 0
        %5677 = vmatpush1.bf16.msra.mxu0 %v3284
        %5678 = vmatprep.subr.bf16.mxu0 0
        %5679 = vmatpush1.bf16.msra.mxu0 %v3287
        %5680 = vmatprep.subr.bf16.mxu0 0
        %5681 = vmatpush1.bf16.msra.mxu0 %v3290
        %5682 = vmatprep.mubr.bf16.mxu0 %v3540
        %5683 = vmatmul.mubr.bf16.gmra.mrb[0].mxu0 %v3539
        %v5684 = vpop.f32.mrb[0].mxu0
        %v5685 = vadd.f32 %v5644, %v5684
        %v5686 = vpop.f32.mrb[0].mxu0
        %v5687 = vpop.f32.mrb[0].mxu0
        %v5688 = vadd.f32 %v5647, %v5687
        %v5689 = vpop.f32.mrb[0].mxu0
        %5690 = vdwg.mxu0
        %v5691 = vld [vmem:[%s1481] sm:$0x7]
        %v5693 = vlaneseq
        %v5694 = vshrl.u32 %v5693, 7
        %v5695 = vsub.s32 0, %v5694
        %v5696 = vrot.slane %v5691, %v5695
        %v5697 = vlaneseq
        %v5698 = vshrl.u32 %v5697, 7
        %v5699 = vsub.s32 1, %v5698
        %v5700 = vrot.slane %v5691, %v5699
        %v5701 = vlaneseq
        %v5702 = vshrl.u32 %v5701, 7
        %v5703 = vsub.s32 2, %v5702
        %v5704 = vrot.slane %v5691, %v5703
        %v5708 = vmul.f32 %v4658, %v5696
        %v5709 = vmul.f32 %v4660, %v5700
        %v5710 = vmul.f32 %v5685, %v5704
        %v5711 = vmul.f32 %v4662, %v5696
        %v5712 = vmul.f32 %v4664, %v5700
        %v5713 = vmul.f32 %v5688, %v5704
        %v5714 = vld [vmem:[%s1486] sm:$0x7]
        %v5716 = vlaneseq
        %v5717 = vshrl.u32 %v5716, 7
        %v5718 = vsub.s32 0, %v5717
        %v5719 = vrot.slane %v5714, %v5718
        %v5720 = vlaneseq
        %v5721 = vshrl.u32 %v5720, 7
        %v5722 = vsub.s32 1, %v5721
        %v5723 = vrot.slane %v5714, %v5722
        %v5724 = vlaneseq
        %v5725 = vshrl.u32 %v5724, 7
        %v5726 = vsub.s32 2, %v5725
        %v5727 = vrot.slane %v5714, %v5726
        %v5731 = vadd.f32 %v5708, %v5719
        %v5732 = vadd.f32 %v5709, %v5723
        %v5733 = vadd.f32 %v5710, %v5727
        %v5734 = vadd.f32 %v5711, %v5719
        %v5735 = vadd.f32 %v5712, %v5723
        %v5736 = vadd.f32 %v5713, %v5727
        %5737 = vst [vmem:[%s1469] sm:$0xff] %v5731
        %5738 = vst [vmem:[%s1469 + $0x8] sm:$0xff] %v5732
        %5739 = vst [vmem:[%s1469 + $0x10] sm:$0xff] %v5733
        %5740 = vst [vmem:[%s1469 + $0x18] sm:$0xff] %v5734
        %5741 = vst [vmem:[%s1469 + $0x20] sm:$0xff] %v5735
        %5742 = vst [vmem:[%s1469 + $0x28] sm:$0xff] %v5736
        %s5743 = sand.u32 %s141, 1
        %s5744 = sand.u32 %s141, 1
        %s5745 = smul.addr %s5744, 48
        %s5746 = scalar_lea.vmem [#allocation3], %s5745
        // Predicated region
        $region60: #{recognizer_forward.11} parent=54 // pred_check
          %p5747 = pneg %p151
        $region61: #{recognizer_forward.11} parent=54 // pred_check_branch
          %5749 = sbr.rel (%p5747) target = $region63
        $region62: #{recognizer_forward.11} parent=54 // pred_region
          %s5750 = smul.u32 2, %s19
          %s5751 = smul.u32 3, %s20
          %s5752 = smul.addr %s5750, 24
          %s5753 = sadd.s32 %s5751, %s5752
          %s5754 = smul.addr %s5753, 8
          %s5755 = scalar_lea.vmem %s4, %s5754
          // Predicated region
          $region64: #{recognizer_forward.11} parent=62 // pred_check
            _
          $region65: #{recognizer_forward.11} parent=62 // pred_check_branch
            %5757 = sbr.rel (0) target = $region67
          $region66: #{recognizer_forward.11} parent=62 // pred_region
            // Predicated region
            $region68: #{recognizer_forward.11} parent=66 // pred_check
              _
            $region69: #{recognizer_forward.11} parent=66 // pred_check_branch
              %5759 = sbr.rel (0) target = $region71
            $region70: #{recognizer_forward.11} parent=66 // pred_region
              loop: start=0, step=1, limit=1
              $region72: #{recognizer_forward.11} parent=70 // loop_pre_header
                _
              $region73: #{recognizer_forward.11} parent=70 // loop_header
                %s5761 = sphi 0, %s5765
                %p5762 = scmp.ge.s32.totalorder %s5761, 1
                %s5766 = sphi %s5746, %s5746
                %s5767 = sphi %s5755, %s5755
              $region74: #{recognizer_forward.11} parent=70 // loop_header_branch
                %5764 = sbr.rel (%p5762) target = $region78
              $region75: #{recognizer_forward.11} parent=70 // loop_body
                %v5768 = vld [vmem:[%s5766] sm:$0xff]
                %5769 = vst [vmem:[%s5767] sm:$0xff] %v5768
                %v5770 = vld [vmem:[%s5766 + $0x8] sm:$0xff]
                %5771 = vst [vmem:[%s5767 + $0x8] sm:$0xff] %v5770
                %v5772 = vld [vmem:[%s5766 + $0x10] sm:$0xff]
                %5773 = vst [vmem:[%s5767 + $0x10] sm:$0xff] %v5772
                %v5774 = vld [vmem:[%s5766 + $0x18] sm:$0xff]
                %5775 = vst [vmem:[%s5767 + $0xc0] sm:$0xff] %v5774
                %v5776 = vld [vmem:[%s5766 + $0x20] sm:$0xff]
                %5777 = vst [vmem:[%s5767 + $0xc8] sm:$0xff] %v5776
                %v5778 = vld [vmem:[%s5766 + $0x28] sm:$0xff]
                %5779 = vst [vmem:[%s5767 + $0xd0] sm:$0xff] %v5778
              $region76: #{recognizer_forward.11} parent=70 // loop_footer
                %s5765 = sadd.s32 1, %s5761
              $region77: #{recognizer_forward.11} parent=70 // loop_footer_branch
                %5760 = sbr.rel target = $region73
              $region78: #{recognizer_forward.11} parent=70 // loop_exit
                _
            $region71: #{recognizer_forward.11} parent=66 // pred_fallthru
              _
            // Predicated region
            $region79: #{recognizer_forward.11} parent=66 // pred_check
              _
            $region80: #{recognizer_forward.11} parent=66 // pred_check_branch
              %5781 = sbr.rel target = $region82
            $region81: #{recognizer_forward.11} parent=66 // pred_region
              _
            $region82: #{recognizer_forward.11} parent=66 // pred_fallthru
              _
          $region67: #{recognizer_forward.11} parent=62 // pred_fallthru
            _
          %5782 = vnop
        $region63: #{recognizer_forward.11} parent=54 // pred_fallthru
          _
      $region55: #{recognizer_forward.11} parent=5 // pred_fallthru
        _
      %p5783 = scmp.le.s32.totalorder 2, %s10
      // Predicated region
      $region83: #{recognizer_forward.11} parent=5 // pred_check
        %p5784 = pneg %p5783
      $region84: #{recognizer_forward.11} parent=5 // pred_check_branch
        %5786 = sbr.rel (%p5784) target = $region86
      $region85: #{recognizer_forward.11} parent=5 // pred_region
        %s5787 = ssub.s32 %s10, 2
        // Predicated region
        $region87: #{recognizer_forward.11} parent=85 // pred_check
          %p5788 = pneg %p157
        $region88: #{recognizer_forward.11} parent=85 // pred_check_branch
          %5790 = sbr.rel (%p5788) target = $region90
        $region89: #{recognizer_forward.11} parent=85 // pred_region
          %s5791 = sand.u32 %s142, 1
          %s5792 = sand.u32 %s142, 1
          %s5793 = smul.addr %s5792, 48
          %s5794 = scalar_lea.vmem [#allocation3], %s5793
        $region90: #{recognizer_forward.11} parent=85 // pred_fallthru
          _
      $region86: #{recognizer_forward.11} parent=5 // pred_fallthru
        _
    $region6: #{recognizer_forward.11} parent=1 // loop_footer
      %s14 = sadd.s32 1, %s10
    $region7: #{recognizer_forward.11} parent=1 // loop_footer_branch
      %9 = sbr.rel target = $region3
    $region8: #{recognizer_forward.11} parent=1 // loop_exit
      _

</llo_original>
